<compile_context>
chip_gen: v5e
topology: v5e:2x2
jax: 0.10.0
libtpu: 0.0.40
codegen_flags: <defaults>
</compile_context>

<pallas_src>
import numpy as np

import jax
import jax.numpy as jnp
from jax import lax
from jax.experimental import pallas as pl
from jax.experimental.pallas import tpu as pltpu


# Encoder dimensions (fixed for this DeepSVDD instantiation).
_H = 16          # spatial size (H == W)
_CIN = 4
_C1 = 8
_C2 = 16
_LATENT = 32
_RP = 128        # lane stride of one padded input row   (>= (H+2)*CIN, mult of 128)
_RA = 256        # lane stride of one padded conv1 row    (>= (H+2)*C1,  mult of 128)


# ----------------------------------------------------------------------------
# Pallas kernel: conv1 -> ReLU -> conv2 -> ReLU -> flatten -> Linear (fused)
# ----------------------------------------------------------------------------
def _deep_svdd_kernel(xp_ref, w1_ref, w2_ref, wfc_ref, out_ref, a1p_ref):
    """xp_ref : (NB, 18*_RP)   zero-padded input, row r at lanes [r*_RP, r*_RP+72)
    w1_ref : (3*_RP, _RA)    conv1 row-Toeplitz weight (pad columns are zero)
    w2_ref : (3*_RA, H*C2)   conv2 row-Toeplitz weight
    wfc_ref: (H, H*C2, L)    FC weight, sliced per conv2 output row
    out_ref: (NB, L)         latent output
    a1p_ref: (NB, 18*_RA)    VMEM scratch: zero-padded ReLU(conv1), row-flat
    """
    nb = xp_ref.shape[0]
    latent = out_ref.shape[1]

    # Zero only the top / bottom padding rows of the conv1 activation buffer.
    # Side padding and the unused tail lanes of every row come out as exact
    # zeros of the Toeplitz matmul below.  Done every step -> correct even
    # when the grid is sharded across TensorCores.
    zrow = jnp.zeros((nb, _RA), jnp.float32)
    a1p_ref[:, 0:_RA] = zrow
    a1p_ref[:, (_H + 1) * _RA:(_H + 2) * _RA] = zrow

    # conv1 (+ReLU): one dense matmul per output row.  Each consumes three
    # consecutive padded input rows (a 128-aligned lane slice) and emits one
    # padded activation row (a 128-aligned lane-dense store).
    w1 = w1_ref[...]
    for h in range(_H):
        lhs = xp_ref[:, h * _RP:(h + 3) * _RP]                        # (NB, 384)
        row = jnp.dot(lhs, w1, preferred_element_type=jnp.float32)    # (NB, 256)
        a1p_ref[:, (h + 1) * _RA:(h + 2) * _RA] = jnp.maximum(row, 0.0)

    # conv2 (+ReLU) fused with the final Linear: each conv2 output row is a
    # lane-dense (NB, W*C2) tile that is immediately contracted against the
    # matching (W*C2, latent) slice of the FC weight, so the flattened
    # activation never exists (not in HBM, not even as a full VMEM tensor).
    w2 = w2_ref[...]
    acc = jnp.zeros((nb, latent), jnp.float32)
    for h in range(_H):
        lhs2 = a1p_ref[:, h * _RA:(h + 3) * _RA]                      # (NB, 768)
        row2 = jnp.maximum(
            jnp.dot(lhs2, w2, preferred_element_type=jnp.float32), 0.0)  # (NB, 256)
        acc = acc + jnp.dot(row2, wfc_ref[h],
                            preferred_element_type=jnp.float32)
    out_ref[...] = acc.astype(out_ref.dtype)


# ----------------------------------------------------------------------------
# Wrappers
# ----------------------------------------------------------------------------
def _pick_batch_block(n):
    """Largest convenient batch block; >=2 grid steps when n allows (v7x)."""
    if n % 8 == 0 and n >= 16:
        return min(32, max(8, (n // 2) // 8 * 8))   # 8-aligned, grid >= 2
    if n <= 32:
        return n                                    # full-dim block, grid == 1
    return 32                                       # 8-aligned, partial tail block OK


def _fused_call(xp, w1t, w2t, wfc):
    n = xp.shape[0]
    nb = _pick_batch_block(n)
    latent = wfc.shape[-1]
    return pl.pallas_call(
        _deep_svdd_kernel,
        out_shape=jax.ShapeDtypeStruct((n, latent), jnp.float32),
        grid=(pl.cdiv(n, nb),),
        in_specs=[
            pl.BlockSpec((nb, (_H + 2) * _RP), lambda i: (i, 0)),
            pl.BlockSpec(w1t.shape, lambda i: (0, 0)),
            pl.BlockSpec(w2t.shape, lambda i: (0, 0)),
            pl.BlockSpec(wfc.shape, lambda i: (0, 0, 0)),
        ],
        out_specs=pl.BlockSpec((nb, latent), lambda i: (i, 0)),
        scratch_shapes=[pltpu.VMEM((nb, (_H + 2) * _RA), jnp.float32)],
        compiler_params=pltpu.CompilerParams(dimension_semantics=("parallel",)),
    )(xp, w1t, w2t, wfc)


@jax.jit
def _deep_svdd_forward(w1t, w2t, wfc, x_nchw):
    n = x_nchw.shape[0]
    # NCHW -> padded, row-flattened (h', (w', c)) layout expected by the kernel.
    # These are trivial layout ops on a ~4 KiB/image tensor that fuse into one
    # XLA copy; they replace the in-kernel zero-padding stores of the previous
    # version (the input is read from HBM exactly once either way).
    x = jnp.transpose(x_nchw, (0, 2, 3, 1))                     # (N, H, W, Cin)
    x = jnp.pad(x, ((0, 0), (1, 1), (1, 1), (0, 0)))            # (N, H+2, W+2, Cin)
    x = x.reshape(n, _H + 2, (_H + 2) * _CIN)
    x = jnp.pad(x, ((0, 0), (0, 0), (0, _RP - (_H + 2) * _CIN)))
    xp = x.reshape(n, (_H + 2) * _RP)                           # (N, 2304)
    return _fused_call(xp, w1t, w2t, wfc)


# ----------------------------------------------------------------------------
# One-time weight re-arrangement (init time, plain numpy)
# ----------------------------------------------------------------------------
def _build_kernel_weights(w_conv1, w_conv2, w_fc):
    """Row-Toeplitz conv weights + (h, w, c)-permuted FC weight."""
    w1 = np.asarray(w_conv1, np.float32)          # (C1, CIN, 3, 3)  PyTorch layout
    w2 = np.asarray(w_conv2, np.float32)          # (C2, C1, 3, 3)
    wf = np.asarray(w_fc, np.float32)             # (L, C2*H*W)

    w1t = np.zeros((3 * _RP, _RA), np.float32)
    w2t = np.zeros((3 * _RA, _H * _C2), np.float32)
    for kh in range(3):
        for kw in range(3):
            for w in range(_H):
                wi = w + kw                        # padded input column
                r1 = kh * _RP + wi * _CIN
                c1 = (w + 1) * _C1                 # padded output column
                w1t[r1:r1 + _CIN, c1:c1 + _C1] = w1[:, :, kh, kw].T
                r2 = kh * _RA + wi * _C1
                c2 = w * _C2                       # unpadded output column
                w2t[r2:r2 + _C1, c2:c2 + _C2] = w2[:, :, kh, kw].T

    # PyTorch flattens NCHW as (c, h, w); permute the FC rows to the kernel's
    # per-row (w, c) order so the flatten disappears.
    wfc = wf.reshape(_LATENT, _C2, _H, _H).transpose(2, 3, 1, 0)   # (h, w, c, d)
    wfc = wfc.reshape(_H, _H * _C2, _LATENT)
    return jnp.asarray(w1t), jnp.asarray(w2t), jnp.asarray(wfc)


# ----------------------------------------------------------------------------
# DeepSVDD (Pallas version)
# ----------------------------------------------------------------------------
class DeepSVDDPallas:
    def __init__(self, key):
        k1, k2, k3 = jax.random.split(key, 3)
        # Deterministic synthetic parameters; biases removed as in DeepSVDD.
        # TODO(synk): set_init_weights / bias stripping are init-time parameter
        # surgery, not forward ops; modeled by constructing no-bias weights.
        self.w_conv1 = jax.random.normal(k1, (_C1, _CIN, 3, 3), jnp.float32) * 0.1
        self.w_conv2 = jax.random.normal(k2, (_C2, _C1, 3, 3), jnp.float32) * 0.1
        self.w_fc = jax.random.normal(k3, (_LATENT, _C2 * _H * _H), jnp.float32) * 0.02
        self.latent_dim = _LATENT
        self.w1t, self.w2t, self.wfc = _build_kernel_weights(
            self.w_conv1, self.w_conv2, self.w_fc)

    def __call__(self, x_nchw):
        return _deep_svdd_forward(self.w1t, self.w2t, self.wfc, x_nchw)


# ----------------------------------------------------------------------------
# Pure-JAX reference (correctness check only)
# ----------------------------------------------------------------------------
def _reference_forward(model, x_nchw):
    x = jnp.transpose(x_nchw, (0, 2, 3, 1))
    for w in (model.w_conv1, model.w_conv2):
        w_hwio = jnp.transpose(w, (2, 3, 1, 0))
        x = lax.conv_general_dilated(
            x, w_hwio, window_strides=(1, 1), padding="SAME",
            dimension_numbers=("NHWC", "HWIO", "NHWC"))
        x = jnp.maximum(x, 0.0)
    n = x.shape[0]
    x_flat = jnp.transpose(x, (0, 3, 1, 2)).reshape(n, -1)   # PyTorch NCHW flatten
    return x_flat @ model.w_fc.T


if __name__ == "__main__":
    key = jax.random.PRNGKey(0)
    kx, kp = jax.random.split(key)
    x = jax.random.normal(kx, (2, 4, 16, 16), jnp.float32)   # NCHW, like PyTorch

    model = DeepSVDDPallas(kp)
    out = jax.block_until_ready(model(x))

    ref = jax.block_until_ready(_reference_forward(model, x))
    assert out.shape == (2, model.latent_dim)
    assert jnp.allclose(out, ref, rtol=1e-4, atol=1e-4), "mismatch vs reference"

    print("KERNEL_OK")
</pallas_src>

<mosaic_0001>
module attributes {stable_mosaic.version = 11 : i64} {
  func.func @_deep_svdd_kernel(%arg0: i32, %arg1: memref<2x2304xf32, #tpu.memory_space<vmem>>, %arg2: memref<384x256xf32, #tpu.memory_space<vmem>>, %arg3: memref<768x256xf32, #tpu.memory_space<vmem>>, %arg4: memref<16x256x32xf32, #tpu.memory_space<vmem>>, %arg5: memref<2x32xf32, #tpu.memory_space<vmem>>, %arg6: memref<2x4608xf32, #tpu.memory_space<vmem>>) attributes {dimension_semantics = [#tpu.dimension_semantics<parallel>], iteration_bounds = array<i64: 1>, scalar_prefetch = 0 : i64, scratch_operands = 1 : i64, tpu.core_type = #tpu.core_type<tc>, window_params = [{transform_indices = @transform_0, window_bounds = array<i64: 2, 2304>}, {pipeline_mode = #tpu.pipeline_mode<synchronous>, transform_indices = @transform_1, window_bounds = array<i64: 384, 256>}, {pipeline_mode = #tpu.pipeline_mode<synchronous>, transform_indices = @transform_2, window_bounds = array<i64: 768, 256>}, {pipeline_mode = #tpu.pipeline_mode<synchronous>, transform_indices = @transform_3, window_bounds = array<i64: 16, 256, 32>}, {transform_indices = @transform_4, window_bounds = array<i64: 2, 32>}]} {
    %cst = arith.constant 0.000000e+00 : f32
    %0 = vector.broadcast %cst : f32 to vector<2x256xf32>
    %c0 = arith.constant 0 : index
    %c0_0 = arith.constant 0 : index
    %1 = vector.load %arg6[%c0, %c0_0] : memref<2x4608xf32, #tpu.memory_space<vmem>>, vector<2x256xf32>
    tpu.vector_store %arg6[%c0, %c0_0], %0 {strides = array<i32>} : memref<2x4608xf32, #tpu.memory_space<vmem>>, vector<2x256xf32>,
    %c0_1 = arith.constant 0 : index
    %c4352 = arith.constant 4352 : index
    %2 = vector.load %arg6[%c0_1, %c4352] : memref<2x4608xf32, #tpu.memory_space<vmem>>, vector<2x256xf32>
    tpu.vector_store %arg6[%c0_1, %c4352], %0 {strides = array<i32>} : memref<2x4608xf32, #tpu.memory_space<vmem>>, vector<2x256xf32>,
    %c0_2 = arith.constant 0 : index
    %c0_3 = arith.constant 0 : index
    %3 = vector.load %arg2[%c0_2, %c0_3] : memref<384x256xf32, #tpu.memory_space<vmem>>, vector<384x256xf32>
    %c0_4 = arith.constant 0 : index
    %c0_5 = arith.constant 0 : index
    %4 = vector.load %arg1[%c0_4, %c0_5] : memref<2x2304xf32, #tpu.memory_space<vmem>>, vector<2x384xf32>
    %cst_6 = arith.constant dense<0.000000e+00> : vector<2x256xf32>
    %5 = tpu.matmul %4, %3, %cst_6 {dimension_numbers = #tpu.dot_dimension_numbers<[1], [0], [0], [1], [0, 0, 1, 1], [], []>} : vector<2x384xf32>, vector<384x256xf32>, vector<2x256xf32> -> vector<2x256xf32>
    %cst_7 = arith.constant 0.000000e+00 : f32
    %6 = vector.broadcast %cst_7 : f32 to vector<2x256xf32>
    %7 = arith.maximumf %5, %6 : vector<2x256xf32>
    %c0_8 = arith.constant 0 : index
    %c256 = arith.constant 256 : index
    %8 = vector.load %arg6[%c0_8, %c256] : memref<2x4608xf32, #tpu.memory_space<vmem>>, vector<2x256xf32>
    tpu.vector_store %arg6[%c0_8, %c256], %7 {strides = array<i32>} : memref<2x4608xf32, #tpu.memory_space<vmem>>, vector<2x256xf32>,
    %c0_9 = arith.constant 0 : index
    %c128 = arith.constant 128 : index
    %9 = vector.load %arg1[%c0_9, %c128] : memref<2x2304xf32, #tpu.memory_space<vmem>>, vector<2x384xf32>
    %cst_10 = arith.constant dense<0.000000e+00> : vector<2x256xf32>
    %10 = tpu.matmul %9, %3, %cst_10 {dimension_numbers = #tpu.dot_dimension_numbers<[1], [0], [0], [1], [0, 0, 1, 1], [], []>} : vector<2x384xf32>, vector<384x256xf32>, vector<2x256xf32> -> vector<2x256xf32>
    %cst_11 = arith.constant 0.000000e+00 : f32
    %11 = vector.broadcast %cst_11 : f32 to vector<2x256xf32>
    %12 = arith.maximumf %10, %11 : vector<2x256xf32>
    %c0_12 = arith.constant 0 : index
    %c512 = arith.constant 512 : index
    %13 = vector.load %arg6[%c0_12, %c512] : memref<2x4608xf32, #tpu.memory_space<vmem>>, vector<2x256xf32>
    tpu.vector_store %arg6[%c0_12, %c512], %12 {strides = array<i32>} : memref<2x4608xf32, #tpu.memory_space<vmem>>, vector<2x256xf32>,
    %c0_13 = arith.constant 0 : index
    %c256_14 = arith.constant 256 : index
    %14 = vector.load %arg1[%c0_13, %c256_14] : memref<2x2304xf32, #tpu.memory_space<vmem>>, vector<2x384xf32>
    %cst_15 = arith.constant dense<0.000000e+00> : vector<2x256xf32>
    %15 = tpu.matmul %14, %3, %cst_15 {dimension_numbers = #tpu.dot_dimension_numbers<[1], [0], [0], [1], [0, 0, 1, 1], [], []>} : vector<2x384xf32>, vector<384x256xf32>, vector<2x256xf32> -> vector<2x256xf32>
    %cst_16 = arith.constant 0.000000e+00 : f32
    %16 = vector.broadcast %cst_16 : f32 to vector<2x256xf32>
    %17 = arith.maximumf %15, %16 : vector<2x256xf32>
    %c0_17 = arith.constant 0 : index
    %c768 = arith.constant 768 : index
    %18 = vector.load %arg6[%c0_17, %c768] : memref<2x4608xf32, #tpu.memory_space<vmem>>, vector<2x256xf32>
    tpu.vector_store %arg6[%c0_17, %c768], %17 {strides = array<i32>} : memref<2x4608xf32, #tpu.memory_space<vmem>>, vector<2x256xf32>,
    %c0_18 = arith.constant 0 : index
    %c384 = arith.constant 384 : index
    %19 = vector.load %arg1[%c0_18, %c384] : memref<2x2304xf32, #tpu.memory_space<vmem>>, vector<2x384xf32>
    %cst_19 = arith.constant dense<0.000000e+00> : vector<2x256xf32>
    %20 = tpu.matmul %19, %3, %cst_19 {dimension_numbers = #tpu.dot_dimension_numbers<[1], [0], [0], [1], [0, 0, 1, 1], [], []>} : vector<2x384xf32>, vector<384x256xf32>, vector<2x256xf32> -> vector<2x256xf32>
    %cst_20 = arith.constant 0.000000e+00 : f32
    %21 = vector.broadcast %cst_20 : f32 to vector<2x256xf32>
    %22 = arith.maximumf %20, %21 : vector<2x256xf32>
    %c0_21 = arith.constant 0 : index
    %c1024 = arith.constant 1024 : index
    %23 = vector.load %arg6[%c0_21, %c1024] : memref<2x4608xf32, #tpu.memory_space<vmem>>, vector<2x256xf32>
    tpu.vector_store %arg6[%c0_21, %c1024], %22 {strides = array<i32>} : memref<2x4608xf32, #tpu.memory_space<vmem>>, vector<2x256xf32>,
    %c0_22 = arith.constant 0 : index
    %c512_23 = arith.constant 512 : index
    %24 = vector.load %arg1[%c0_22, %c512_23] : memref<2x2304xf32, #tpu.memory_space<vmem>>, vector<2x384xf32>
    %cst_24 = arith.constant dense<0.000000e+00> : vector<2x256xf32>
    %25 = tpu.matmul %24, %3, %cst_24 {dimension_numbers = #tpu.dot_dimension_numbers<[1], [0], [0], [1], [0, 0, 1, 1], [], []>} : vector<2x384xf32>, vector<384x256xf32>, vector<2x256xf32> -> vector<2x256xf32>
    %cst_25 = arith.constant 0.000000e+00 : f32
    %26 = vector.broadcast %cst_25 : f32 to vector<2x256xf32>
    %27 = arith.maximumf %25, %26 : vector<2x256xf32>
    %c0_26 = arith.constant 0 : index
    %c1280 = arith.constant 1280 : index
    %28 = vector.load %arg6[%c0_26, %c1280] : memref<2x4608xf32, #tpu.memory_space<vmem>>, vector<2x256xf32>
    tpu.vector_store %arg6[%c0_26, %c1280], %27 {strides = array<i32>} : memref<2x4608xf32, #tpu.memory_space<vmem>>, vector<2x256xf32>,
    %c0_27 = arith.constant 0 : index
    %c640 = arith.constant 640 : index
    %29 = vector.load %arg1[%c0_27, %c640] : memref<2x2304xf32, #tpu.memory_space<vmem>>, vector<2x384xf32>
    %cst_28 = arith.constant dense<0.000000e+00> : vector<2x256xf32>
    %30 = tpu.matmul %29, %3, %cst_28 {dimension_numbers = #tpu.dot_dimension_numbers<[1], [0], [0], [1], [0, 0, 1, 1], [], []>} : vector<2x384xf32>, vector<384x256xf32>, vector<2x256xf32> -> vector<2x256xf32>
    %cst_29 = arith.constant 0.000000e+00 : f32
    %31 = vector.broadcast %cst_29 : f32 to vector<2x256xf32>
    %32 = arith.maximumf %30, %31 : vector<2x256xf32>
    %c0_30 = arith.constant 0 : index
    %c1536 = arith.constant 1536 : index
    %33 = vector.load %arg6[%c0_30, %c1536] : memref<2x4608xf32, #tpu.memory_space<vmem>>, vector<2x256xf32>
    tpu.vector_store %arg6[%c0_30, %c1536], %32 {strides = array<i32>} : memref<2x4608xf32, #tpu.memory_space<vmem>>, vector<2x256xf32>,
    %c0_31 = arith.constant 0 : index
    %c768_32 = arith.constant 768 : index
    %34 = vector.load %arg1[%c0_31, %c768_32] : memref<2x2304xf32, #tpu.memory_space<vmem>>, vector<2x384xf32>
    %cst_33 = arith.constant dense<0.000000e+00> : vector<2x256xf32>
    %35 = tpu.matmul %34, %3, %cst_33 {dimension_numbers = #tpu.dot_dimension_numbers<[1], [0], [0], [1], [0, 0, 1, 1], [], []>} : vector<2x384xf32>, vector<384x256xf32>, vector<2x256xf32> -> vector<2x256xf32>
    %cst_34 = arith.constant 0.000000e+00 : f32
    %36 = vector.broadcast %cst_34 : f32 to vector<2x256xf32>
    %37 = arith.maximumf %35, %36 : vector<2x256xf32>
    %c0_35 = arith.constant 0 : index
    %c1792 = arith.constant 1792 : index
    %38 = vector.load %arg6[%c0_35, %c1792] : memref<2x4608xf32, #tpu.memory_space<vmem>>, vector<2x256xf32>
    tpu.vector_store %arg6[%c0_35, %c1792], %37 {strides = array<i32>} : memref<2x4608xf32, #tpu.memory_space<vmem>>, vector<2x256xf32>,
    %c0_36 = arith.constant 0 : index
    %c896 = arith.constant 896 : index
    %39 = vector.load %arg1[%c0_36, %c896] : memref<2x2304xf32, #tpu.memory_space<vmem>>, vector<2x384xf32>
    %cst_37 = arith.constant dense<0.000000e+00> : vector<2x256xf32>
    %40 = tpu.matmul %39, %3, %cst_37 {dimension_numbers = #tpu.dot_dimension_numbers<[1], [0], [0], [1], [0, 0, 1, 1], [], []>} : vector<2x384xf32>, vector<384x256xf32>, vector<2x256xf32> -> vector<2x256xf32>
    %cst_38 = arith.constant 0.000000e+00 : f32
    %41 = vector.broadcast %cst_38 : f32 to vector<2x256xf32>
    %42 = arith.maximumf %40, %41 : vector<2x256xf32>
    %c0_39 = arith.constant 0 : index
    %c2048 = arith.constant 2048 : index
    %43 = vector.load %arg6[%c0_39, %c2048] : memref<2x4608xf32, #tpu.memory_space<vmem>>, vector<2x256xf32>
    tpu.vector_store %arg6[%c0_39, %c2048], %42 {strides = array<i32>} : memref<2x4608xf32, #tpu.memory_space<vmem>>, vector<2x256xf32>,
    %c0_40 = arith.constant 0 : index
    %c1024_41 = arith.constant 1024 : index
    %44 = vector.load %arg1[%c0_40, %c1024_41] : memref<2x2304xf32, #tpu.memory_space<vmem>>, vector<2x384xf32>
    %cst_42 = arith.constant dense<0.000000e+00> : vector<2x256xf32>
    %45 = tpu.matmul %44, %3, %cst_42 {dimension_numbers = #tpu.dot_dimension_numbers<[1], [0], [0], [1], [0, 0, 1, 1], [], []>} : vector<2x384xf32>, vector<384x256xf32>, vector<2x256xf32> -> vector<2x256xf32>
    %cst_43 = arith.constant 0.000000e+00 : f32
    %46 = vector.broadcast %cst_43 : f32 to vector<2x256xf32>
    %47 = arith.maximumf %45, %46 : vector<2x256xf32>
    %c0_44 = arith.constant 0 : index
    %c2304 = arith.constant 2304 : index
    %48 = vector.load %arg6[%c0_44, %c2304] : memref<2x4608xf32, #tpu.memory_space<vmem>>, vector<2x256xf32>
    tpu.vector_store %arg6[%c0_44, %c2304], %47 {strides = array<i32>} : memref<2x4608xf32, #tpu.memory_space<vmem>>, vector<2x256xf32>,
    %c0_45 = arith.constant 0 : index
    %c1152 = arith.constant 1152 : index
    %49 = vector.load %arg1[%c0_45, %c1152] : memref<2x2304xf32, #tpu.memory_space<vmem>>, vector<2x384xf32>
    %cst_46 = arith.constant dense<0.000000e+00> : vector<2x256xf32>
    %50 = tpu.matmul %49, %3, %cst_46 {dimension_numbers = #tpu.dot_dimension_numbers<[1], [0], [0], [1], [0, 0, 1, 1], [], []>} : vector<2x384xf32>, vector<384x256xf32>, vector<2x256xf32> -> vector<2x256xf32>
    %cst_47 = arith.constant 0.000000e+00 : f32
    %51 = vector.broadcast %cst_47 : f32 to vector<2x256xf32>
    %52 = arith.maximumf %50, %51 : vector<2x256xf32>
    %c0_48 = arith.constant 0 : index
    %c2560 = arith.constant 2560 : index
    %53 = vector.load %arg6[%c0_48, %c2560] : memref<2x4608xf32, #tpu.memory_space<vmem>>, vector<2x256xf32>
    tpu.vector_store %arg6[%c0_48, %c2560], %52 {strides = array<i32>} : memref<2x4608xf32, #tpu.memory_space<vmem>>, vector<2x256xf32>,
    %c0_49 = arith.constant 0 : index
    %c1280_50 = arith.constant 1280 : index
    %54 = vector.load %arg1[%c0_49, %c1280_50] : memref<2x2304xf32, #tpu.memory_space<vmem>>, vector<2x384xf32>
    %cst_51 = arith.constant dense<0.000000e+00> : vector<2x256xf32>
    %55 = tpu.matmul %54, %3, %cst_51 {dimension_numbers = #tpu.dot_dimension_numbers<[1], [0], [0], [1], [0, 0, 1, 1], [], []>} : vector<2x384xf32>, vector<384x256xf32>, vector<2x256xf32> -> vector<2x256xf32>
    %cst_52 = arith.constant 0.000000e+00 : f32
    %56 = vector.broadcast %cst_52 : f32 to vector<2x256xf32>
    %57 = arith.maximumf %55, %56 : vector<2x256xf32>
    %c0_53 = arith.constant 0 : index
    %c2816 = arith.constant 2816 : index
    %58 = vector.load %arg6[%c0_53, %c2816] : memref<2x4608xf32, #tpu.memory_space<vmem>>, vector<2x256xf32>
    tpu.vector_store %arg6[%c0_53, %c2816], %57 {strides = array<i32>} : memref<2x4608xf32, #tpu.memory_space<vmem>>, vector<2x256xf32>,
    %c0_54 = arith.constant 0 : index
    %c1408 = arith.constant 1408 : index
    %59 = vector.load %arg1[%c0_54, %c1408] : memref<2x2304xf32, #tpu.memory_space<vmem>>, vector<2x384xf32>
    %cst_55 = arith.constant dense<0.000000e+00> : vector<2x256xf32>
    %60 = tpu.matmul %59, %3, %cst_55 {dimension_numbers = #tpu.dot_dimension_numbers<[1], [0], [0], [1], [0, 0, 1, 1], [], []>} : vector<2x384xf32>, vector<384x256xf32>, vector<2x256xf32> -> vector<2x256xf32>
    %cst_56 = arith.constant 0.000000e+00 : f32
    %61 = vector.broadcast %cst_56 : f32 to vector<2x256xf32>
    %62 = arith.maximumf %60, %61 : vector<2x256xf32>
    %c0_57 = arith.constant 0 : index
    %c3072 = arith.constant 3072 : index
    %63 = vector.load %arg6[%c0_57, %c3072] : memref<2x4608xf32, #tpu.memory_space<vmem>>, vector<2x256xf32>
    tpu.vector_store %arg6[%c0_57, %c3072], %62 {strides = array<i32>} : memref<2x4608xf32, #tpu.memory_space<vmem>>, vector<2x256xf32>,
    %c0_58 = arith.constant 0 : index
    %c1536_59 = arith.constant 1536 : index
    %64 = vector.load %arg1[%c0_58, %c1536_59] : memref<2x2304xf32, #tpu.memory_space<vmem>>, vector<2x384xf32>
    %cst_60 = arith.constant dense<0.000000e+00> : vector<2x256xf32>
    %65 = tpu.matmul %64, %3, %cst_60 {dimension_numbers = #tpu.dot_dimension_numbers<[1], [0], [0], [1], [0, 0, 1, 1], [], []>} : vector<2x384xf32>, vector<384x256xf32>, vector<2x256xf32> -> vector<2x256xf32>
    %cst_61 = arith.constant 0.000000e+00 : f32
    %66 = vector.broadcast %cst_61 : f32 to vector<2x256xf32>
    %67 = arith.maximumf %65, %66 : vector<2x256xf32>
    %c0_62 = arith.constant 0 : index
    %c3328 = arith.constant 3328 : index
    %68 = vector.load %arg6[%c0_62, %c3328] : memref<2x4608xf32, #tpu.memory_space<vmem>>, vector<2x256xf32>
    tpu.vector_store %arg6[%c0_62, %c3328], %67 {strides = array<i32>} : memref<2x4608xf32, #tpu.memory_space<vmem>>, vector<2x256xf32>,
    %c0_63 = arith.constant 0 : index
    %c1664 = arith.constant 1664 : index
    %69 = vector.load %arg1[%c0_63, %c1664] : memref<2x2304xf32, #tpu.memory_space<vmem>>, vector<2x384xf32>
    %cst_64 = arith.constant dense<0.000000e+00> : vector<2x256xf32>
    %70 = tpu.matmul %69, %3, %cst_64 {dimension_numbers = #tpu.dot_dimension_numbers<[1], [0], [0], [1], [0, 0, 1, 1], [], []>} : vector<2x384xf32>, vector<384x256xf32>, vector<2x256xf32> -> vector<2x256xf32>
    %cst_65 = arith.constant 0.000000e+00 : f32
    %71 = vector.broadcast %cst_65 : f32 to vector<2x256xf32>
    %72 = arith.maximumf %70, %71 : vector<2x256xf32>
    %c0_66 = arith.constant 0 : index
    %c3584 = arith.constant 3584 : index
    %73 = vector.load %arg6[%c0_66, %c3584] : memref<2x4608xf32, #tpu.memory_space<vmem>>, vector<2x256xf32>
    tpu.vector_store %arg6[%c0_66, %c3584], %72 {strides = array<i32>} : memref<2x4608xf32, #tpu.memory_space<vmem>>, vector<2x256xf32>,
    %c0_67 = arith.constant 0 : index
    %c1792_68 = arith.constant 1792 : index
    %74 = vector.load %arg1[%c0_67, %c1792_68] : memref<2x2304xf32, #tpu.memory_space<vmem>>, vector<2x384xf32>
    %cst_69 = arith.constant dense<0.000000e+00> : vector<2x256xf32>
    %75 = tpu.matmul %74, %3, %cst_69 {dimension_numbers = #tpu.dot_dimension_numbers<[1], [0], [0], [1], [0, 0, 1, 1], [], []>} : vector<2x384xf32>, vector<384x256xf32>, vector<2x256xf32> -> vector<2x256xf32>
    %cst_70 = arith.constant 0.000000e+00 : f32
    %76 = vector.broadcast %cst_70 : f32 to vector<2x256xf32>
    %77 = arith.maximumf %75, %76 : vector<2x256xf32>
    %c0_71 = arith.constant 0 : index
    %c3840 = arith.constant 3840 : index
    %78 = vector.load %arg6[%c0_71, %c3840] : memref<2x4608xf32, #tpu.memory_space<vmem>>, vector<2x256xf32>
    tpu.vector_store %arg6[%c0_71, %c3840], %77 {strides = array<i32>} : memref<2x4608xf32, #tpu.memory_space<vmem>>, vector<2x256xf32>,
    %c0_72 = arith.constant 0 : index
    %c1920 = arith.constant 1920 : index
    %79 = vector.load %arg1[%c0_72, %c1920] : memref<2x2304xf32, #tpu.memory_space<vmem>>, vector<2x384xf32>
    %cst_73 = arith.constant dense<0.000000e+00> : vector<2x256xf32>
    %80 = tpu.matmul %79, %3, %cst_73 {dimension_numbers = #tpu.dot_dimension_numbers<[1], [0], [0], [1], [0, 0, 1, 1], [], []>} : vector<2x384xf32>, vector<384x256xf32>, vector<2x256xf32> -> vector<2x256xf32>
    %cst_74 = arith.constant 0.000000e+00 : f32
    %81 = vector.broadcast %cst_74 : f32 to vector<2x256xf32>
    %82 = arith.maximumf %80, %81 : vector<2x256xf32>
    %c0_75 = arith.constant 0 : index
    %c4096 = arith.constant 4096 : index
    %83 = vector.load %arg6[%c0_75, %c4096] : memref<2x4608xf32, #tpu.memory_space<vmem>>, vector<2x256xf32>
    tpu.vector_store %arg6[%c0_75, %c4096], %82 {strides = array<i32>} : memref<2x4608xf32, #tpu.memory_space<vmem>>, vector<2x256xf32>,
    %c0_76 = arith.constant 0 : index
    %c0_77 = arith.constant 0 : index
    %84 = vector.load %arg3[%c0_76, %c0_77] : memref<768x256xf32, #tpu.memory_space<vmem>>, vector<768x256xf32>
    %cst_78 = arith.constant 0.000000e+00 : f32
    %85 = vector.broadcast %cst_78 : f32 to vector<2x32xf32>
    %c0_79 = arith.constant 0 : index
    %c0_80 = arith.constant 0 : index
    %86 = vector.load %arg6[%c0_79, %c0_80] : memref<2x4608xf32, #tpu.memory_space<vmem>>, vector<2x768xf32>
    %cst_81 = arith.constant dense<0.000000e+00> : vector<2x256xf32>
    %87 = tpu.matmul %86, %84, %cst_81 {dimension_numbers = #tpu.dot_dimension_numbers<[1], [0], [0], [1], [0, 0, 1, 1], [], []>} : vector<2x768xf32>, vector<768x256xf32>, vector<2x256xf32> -> vector<2x256xf32>
    %cst_82 = arith.constant 0.000000e+00 : f32
    %88 = vector.broadcast %cst_82 : f32 to vector<2x256xf32>
    %89 = arith.maximumf %87, %88 : vector<2x256xf32>
    %c0_83 = arith.constant 0 : index
    %c0_84 = arith.constant 0 : index
    %c0_85 = arith.constant 0 : index
    %90 = vector.load %arg4[%c0_83, %c0_84, %c0_85] : memref<16x256x32xf32, #tpu.memory_space<vmem>>, vector<1x256x32xf32>
    %91 = vector.shape_cast %90 : vector<1x256x32xf32> to vector<256x32xf32>
    %cst_86 = arith.constant dense<0.000000e+00> : vector<2x32xf32>
    %92 = tpu.matmul %89, %91, %cst_86 {dimension_numbers = #tpu.dot_dimension_numbers<[1], [0], [0], [1], [0, 0, 1, 1], [], []>} : vector<2x256xf32>, vector<256x32xf32>, vector<2x32xf32> -> vector<2x32xf32>
    %93 = arith.addf %85, %92 : vector<2x32xf32>
    %c0_87 = arith.constant 0 : index
    %c256_88 = arith.constant 256 : index
    %94 = vector.load %arg6[%c0_87, %c256_88] : memref<2x4608xf32, #tpu.memory_space<vmem>>, vector<2x768xf32>
    %cst_89 = arith.constant dense<0.000000e+00> : vector<2x256xf32>
    %95 = tpu.matmul %94, %84, %cst_89 {dimension_numbers = #tpu.dot_dimension_numbers<[1], [0], [0], [1], [0, 0, 1, 1], [], []>} : vector<2x768xf32>, vector<768x256xf32>, vector<2x256xf32> -> vector<2x256xf32>
    %cst_90 = arith.constant 0.000000e+00 : f32
    %96 = vector.broadcast %cst_90 : f32 to vector<2x256xf32>
    %97 = arith.maximumf %95, %96 : vector<2x256xf32>
    %c1 = arith.constant 1 : index
    %c0_91 = arith.constant 0 : index
    %c0_92 = arith.constant 0 : index
    %98 = vector.load %arg4[%c1, %c0_91, %c0_92] : memref<16x256x32xf32, #tpu.memory_space<vmem>>, vector<1x256x32xf32>
    %99 = vector.shape_cast %98 : vector<1x256x32xf32> to vector<256x32xf32>
    %cst_93 = arith.constant dense<0.000000e+00> : vector<2x32xf32>
    %100 = tpu.matmul %97, %99, %cst_93 {dimension_numbers = #tpu.dot_dimension_numbers<[1], [0], [0], [1], [0, 0, 1, 1], [], []>} : vector<2x256xf32>, vector<256x32xf32>, vector<2x32xf32> -> vector<2x32xf32>
    %101 = arith.addf %93, %100 : vector<2x32xf32>
    %c0_94 = arith.constant 0 : index
    %c512_95 = arith.constant 512 : index
    %102 = vector.load %arg6[%c0_94, %c512_95] : memref<2x4608xf32, #tpu.memory_space<vmem>>, vector<2x768xf32>
    %cst_96 = arith.constant dense<0.000000e+00> : vector<2x256xf32>
    %103 = tpu.matmul %102, %84, %cst_96 {dimension_numbers = #tpu.dot_dimension_numbers<[1], [0], [0], [1], [0, 0, 1, 1], [], []>} : vector<2x768xf32>, vector<768x256xf32>, vector<2x256xf32> -> vector<2x256xf32>
    %cst_97 = arith.constant 0.000000e+00 : f32
    %104 = vector.broadcast %cst_97 : f32 to vector<2x256xf32>
    %105 = arith.maximumf %103, %104 : vector<2x256xf32>
    %c2 = arith.constant 2 : index
    %c0_98 = arith.constant 0 : index
    %c0_99 = arith.constant 0 : index
    %106 = vector.load %arg4[%c2, %c0_98, %c0_99] : memref<16x256x32xf32, #tpu.memory_space<vmem>>, vector<1x256x32xf32>
    %107 = vector.shape_cast %106 : vector<1x256x32xf32> to vector<256x32xf32>
    %cst_100 = arith.constant dense<0.000000e+00> : vector<2x32xf32>
    %108 = tpu.matmul %105, %107, %cst_100 {dimension_numbers = #tpu.dot_dimension_numbers<[1], [0], [0], [1], [0, 0, 1, 1], [], []>} : vector<2x256xf32>, vector<256x32xf32>, vector<2x32xf32> -> vector<2x32xf32>
    %109 = arith.addf %101, %108 : vector<2x32xf32>
    %c0_101 = arith.constant 0 : index
    %c768_102 = arith.constant 768 : index
    %110 = vector.load %arg6[%c0_101, %c768_102] : memref<2x4608xf32, #tpu.memory_space<vmem>>, vector<2x768xf32>
    %cst_103 = arith.constant dense<0.000000e+00> : vector<2x256xf32>
    %111 = tpu.matmul %110, %84, %cst_103 {dimension_numbers = #tpu.dot_dimension_numbers<[1], [0], [0], [1], [0, 0, 1, 1], [], []>} : vector<2x768xf32>, vector<768x256xf32>, vector<2x256xf32> -> vector<2x256xf32>
    %cst_104 = arith.constant 0.000000e+00 : f32
    %112 = vector.broadcast %cst_104 : f32 to vector<2x256xf32>
    %113 = arith.maximumf %111, %112 : vector<2x256xf32>
    %c3 = arith.constant 3 : index
    %c0_105 = arith.constant 0 : index
    %c0_106 = arith.constant 0 : index
    %114 = vector.load %arg4[%c3, %c0_105, %c0_106] : memref<16x256x32xf32, #tpu.memory_space<vmem>>, vector<1x256x32xf32>
    %115 = vector.shape_cast %114 : vector<1x256x32xf32> to vector<256x32xf32>
    %cst_107 = arith.constant dense<0.000000e+00> : vector<2x32xf32>
    %116 = tpu.matmul %113, %115, %cst_107 {dimension_numbers = #tpu.dot_dimension_numbers<[1], [0], [0], [1], [0, 0, 1, 1], [], []>} : vector<2x256xf32>, vector<256x32xf32>, vector<2x32xf32> -> vector<2x32xf32>
    %117 = arith.addf %109, %116 : vector<2x32xf32>
    %c0_108 = arith.constant 0 : index
    %c1024_109 = arith.constant 1024 : index
    %118 = vector.load %arg6[%c0_108, %c1024_109] : memref<2x4608xf32, #tpu.memory_space<vmem>>, vector<2x768xf32>
    %cst_110 = arith.constant dense<0.000000e+00> : vector<2x256xf32>
    %119 = tpu.matmul %118, %84, %cst_110 {dimension_numbers = #tpu.dot_dimension_numbers<[1], [0], [0], [1], [0, 0, 1, 1], [], []>} : vector<2x768xf32>, vector<768x256xf32>, vector<2x256xf32> -> vector<2x256xf32>
    %cst_111 = arith.constant 0.000000e+00 : f32
    %120 = vector.broadcast %cst_111 : f32 to vector<2x256xf32>
    %121 = arith.maximumf %119, %120 : vector<2x256xf32>
    %c4 = arith.constant 4 : index
    %c0_112 = arith.constant 0 : index
    %c0_113 = arith.constant 0 : index
    %122 = vector.load %arg4[%c4, %c0_112, %c0_113] : memref<16x256x32xf32, #tpu.memory_space<vmem>>, vector<1x256x32xf32>
    %123 = vector.shape_cast %122 : vector<1x256x32xf32> to vector<256x32xf32>
    %cst_114 = arith.constant dense<0.000000e+00> : vector<2x32xf32>
    %124 = tpu.matmul %121, %123, %cst_114 {dimension_numbers = #tpu.dot_dimension_numbers<[1], [0], [0], [1], [0, 0, 1, 1], [], []>} : vector<2x256xf32>, vector<256x32xf32>, vector<2x32xf32> -> vector<2x32xf32>
    %125 = arith.addf %117, %124 : vector<2x32xf32>
    %c0_115 = arith.constant 0 : index
    %c1280_116 = arith.constant 1280 : index
    %126 = vector.load %arg6[%c0_115, %c1280_116] : memref<2x4608xf32, #tpu.memory_space<vmem>>, vector<2x768xf32>
    %cst_117 = arith.constant dense<0.000000e+00> : vector<2x256xf32>
    %127 = tpu.matmul %126, %84, %cst_117 {dimension_numbers = #tpu.dot_dimension_numbers<[1], [0], [0], [1], [0, 0, 1, 1], [], []>} : vector<2x768xf32>, vector<768x256xf32>, vector<2x256xf32> -> vector<2x256xf32>
    %cst_118 = arith.constant 0.000000e+00 : f32
    %128 = vector.broadcast %cst_118 : f32 to vector<2x256xf32>
    %129 = arith.maximumf %127, %128 : vector<2x256xf32>
    %c5 = arith.constant 5 : index
    %c0_119 = arith.constant 0 : index
    %c0_120 = arith.constant 0 : index
    %130 = vector.load %arg4[%c5, %c0_119, %c0_120] : memref<16x256x32xf32, #tpu.memory_space<vmem>>, vector<1x256x32xf32>
    %131 = vector.shape_cast %130 : vector<1x256x32xf32> to vector<256x32xf32>
    %cst_121 = arith.constant dense<0.000000e+00> : vector<2x32xf32>
    %132 = tpu.matmul %129, %131, %cst_121 {dimension_numbers = #tpu.dot_dimension_numbers<[1], [0], [0], [1], [0, 0, 1, 1], [], []>} : vector<2x256xf32>, vector<256x32xf32>, vector<2x32xf32> -> vector<2x32xf32>
    %133 = arith.addf %125, %132 : vector<2x32xf32>
    %c0_122 = arith.constant 0 : index
    %c1536_123 = arith.constant 1536 : index
    %134 = vector.load %arg6[%c0_122, %c1536_123] : memref<2x4608xf32, #tpu.memory_space<vmem>>, vector<2x768xf32>
    %cst_124 = arith.constant dense<0.000000e+00> : vector<2x256xf32>
    %135 = tpu.matmul %134, %84, %cst_124 {dimension_numbers = #tpu.dot_dimension_numbers<[1], [0], [0], [1], [0, 0, 1, 1], [], []>} : vector<2x768xf32>, vector<768x256xf32>, vector<2x256xf32> -> vector<2x256xf32>
    %cst_125 = arith.constant 0.000000e+00 : f32
    %136 = vector.broadcast %cst_125 : f32 to vector<2x256xf32>
    %137 = arith.maximumf %135, %136 : vector<2x256xf32>
    %c6 = arith.constant 6 : index
    %c0_126 = arith.constant 0 : index
    %c0_127 = arith.constant 0 : index
    %138 = vector.load %arg4[%c6, %c0_126, %c0_127] : memref<16x256x32xf32, #tpu.memory_space<vmem>>, vector<1x256x32xf32>
    %139 = vector.shape_cast %138 : vector<1x256x32xf32> to vector<256x32xf32>
    %cst_128 = arith.constant dense<0.000000e+00> : vector<2x32xf32>
    %140 = tpu.matmul %137, %139, %cst_128 {dimension_numbers = #tpu.dot_dimension_numbers<[1], [0], [0], [1], [0, 0, 1, 1], [], []>} : vector<2x256xf32>, vector<256x32xf32>, vector<2x32xf32> -> vector<2x32xf32>
    %141 = arith.addf %133, %140 : vector<2x32xf32>
    %c0_129 = arith.constant 0 : index
    %c1792_130 = arith.constant 1792 : index
    %142 = vector.load %arg6[%c0_129, %c1792_130] : memref<2x4608xf32, #tpu.memory_space<vmem>>, vector<2x768xf32>
    %cst_131 = arith.constant dense<0.000000e+00> : vector<2x256xf32>
    %143 = tpu.matmul %142, %84, %cst_131 {dimension_numbers = #tpu.dot_dimension_numbers<[1], [0], [0], [1], [0, 0, 1, 1], [], []>} : vector<2x768xf32>, vector<768x256xf32>, vector<2x256xf32> -> vector<2x256xf32>
    %cst_132 = arith.constant 0.000000e+00 : f32
    %144 = vector.broadcast %cst_132 : f32 to vector<2x256xf32>
    %145 = arith.maximumf %143, %144 : vector<2x256xf32>
    %c7 = arith.constant 7 : index
    %c0_133 = arith.constant 0 : index
    %c0_134 = arith.constant 0 : index
    %146 = vector.load %arg4[%c7, %c0_133, %c0_134] : memref<16x256x32xf32, #tpu.memory_space<vmem>>, vector<1x256x32xf32>
    %147 = vector.shape_cast %146 : vector<1x256x32xf32> to vector<256x32xf32>
    %cst_135 = arith.constant dense<0.000000e+00> : vector<2x32xf32>
    %148 = tpu.matmul %145, %147, %cst_135 {dimension_numbers = #tpu.dot_dimension_numbers<[1], [0], [0], [1], [0, 0, 1, 1], [], []>} : vector<2x256xf32>, vector<256x32xf32>, vector<2x32xf32> -> vector<2x32xf32>
    %149 = arith.addf %141, %148 : vector<2x32xf32>
    %c0_136 = arith.constant 0 : index
    %c2048_137 = arith.constant 2048 : index
    %150 = vector.load %arg6[%c0_136, %c2048_137] : memref<2x4608xf32, #tpu.memory_space<vmem>>, vector<2x768xf32>
    %cst_138 = arith.constant dense<0.000000e+00> : vector<2x256xf32>
    %151 = tpu.matmul %150, %84, %cst_138 {dimension_numbers = #tpu.dot_dimension_numbers<[1], [0], [0], [1], [0, 0, 1, 1], [], []>} : vector<2x768xf32>, vector<768x256xf32>, vector<2x256xf32> -> vector<2x256xf32>
    %cst_139 = arith.constant 0.000000e+00 : f32
    %152 = vector.broadcast %cst_139 : f32 to vector<2x256xf32>
    %153 = arith.maximumf %151, %152 : vector<2x256xf32>
    %c8 = arith.constant 8 : index
    %c0_140 = arith.constant 0 : index
    %c0_141 = arith.constant 0 : index
    %154 = vector.load %arg4[%c8, %c0_140, %c0_141] : memref<16x256x32xf32, #tpu.memory_space<vmem>>, vector<1x256x32xf32>
    %155 = vector.shape_cast %154 : vector<1x256x32xf32> to vector<256x32xf32>
    %cst_142 = arith.constant dense<0.000000e+00> : vector<2x32xf32>
    %156 = tpu.matmul %153, %155, %cst_142 {dimension_numbers = #tpu.dot_dimension_numbers<[1], [0], [0], [1], [0, 0, 1, 1], [], []>} : vector<2x256xf32>, vector<256x32xf32>, vector<2x32xf32> -> vector<2x32xf32>
    %157 = arith.addf %149, %156 : vector<2x32xf32>
    %c0_143 = arith.constant 0 : index
    %c2304_144 = arith.constant 2304 : index
    %158 = vector.load %arg6[%c0_143, %c2304_144] : memref<2x4608xf32, #tpu.memory_space<vmem>>, vector<2x768xf32>
    %cst_145 = arith.constant dense<0.000000e+00> : vector<2x256xf32>
    %159 = tpu.matmul %158, %84, %cst_145 {dimension_numbers = #tpu.dot_dimension_numbers<[1], [0], [0], [1], [0, 0, 1, 1], [], []>} : vector<2x768xf32>, vector<768x256xf32>, vector<2x256xf32> -> vector<2x256xf32>
    %cst_146 = arith.constant 0.000000e+00 : f32
    %160 = vector.broadcast %cst_146 : f32 to vector<2x256xf32>
    %161 = arith.maximumf %159, %160 : vector<2x256xf32>
    %c9 = arith.constant 9 : index
    %c0_147 = arith.constant 0 : index
    %c0_148 = arith.constant 0 : index
    %162 = vector.load %arg4[%c9, %c0_147, %c0_148] : memref<16x256x32xf32, #tpu.memory_space<vmem>>, vector<1x256x32xf32>
    %163 = vector.shape_cast %162 : vector<1x256x32xf32> to vector<256x32xf32>
    %cst_149 = arith.constant dense<0.000000e+00> : vector<2x32xf32>
    %164 = tpu.matmul %161, %163, %cst_149 {dimension_numbers = #tpu.dot_dimension_numbers<[1], [0], [0], [1], [0, 0, 1, 1], [], []>} : vector<2x256xf32>, vector<256x32xf32>, vector<2x32xf32> -> vector<2x32xf32>
    %165 = arith.addf %157, %164 : vector<2x32xf32>
    %c0_150 = arith.constant 0 : index
    %c2560_151 = arith.constant 2560 : index
    %166 = vector.load %arg6[%c0_150, %c2560_151] : memref<2x4608xf32, #tpu.memory_space<vmem>>, vector<2x768xf32>
    %cst_152 = arith.constant dense<0.000000e+00> : vector<2x256xf32>
    %167 = tpu.matmul %166, %84, %cst_152 {dimension_numbers = #tpu.dot_dimension_numbers<[1], [0], [0], [1], [0, 0, 1, 1], [], []>} : vector<2x768xf32>, vector<768x256xf32>, vector<2x256xf32> -> vector<2x256xf32>
    %cst_153 = arith.constant 0.000000e+00 : f32
    %168 = vector.broadcast %cst_153 : f32 to vector<2x256xf32>
    %169 = arith.maximumf %167, %168 : vector<2x256xf32>
    %c10 = arith.constant 10 : index
    %c0_154 = arith.constant 0 : index
    %c0_155 = arith.constant 0 : index
    %170 = vector.load %arg4[%c10, %c0_154, %c0_155] : memref<16x256x32xf32, #tpu.memory_space<vmem>>, vector<1x256x32xf32>
    %171 = vector.shape_cast %170 : vector<1x256x32xf32> to vector<256x32xf32>
    %cst_156 = arith.constant dense<0.000000e+00> : vector<2x32xf32>
    %172 = tpu.matmul %169, %171, %cst_156 {dimension_numbers = #tpu.dot_dimension_numbers<[1], [0], [0], [1], [0, 0, 1, 1], [], []>} : vector<2x256xf32>, vector<256x32xf32>, vector<2x32xf32> -> vector<2x32xf32>
    %173 = arith.addf %165, %172 : vector<2x32xf32>
    %c0_157 = arith.constant 0 : index
    %c2816_158 = arith.constant 2816 : index
    %174 = vector.load %arg6[%c0_157, %c2816_158] : memref<2x4608xf32, #tpu.memory_space<vmem>>, vector<2x768xf32>
    %cst_159 = arith.constant dense<0.000000e+00> : vector<2x256xf32>
    %175 = tpu.matmul %174, %84, %cst_159 {dimension_numbers = #tpu.dot_dimension_numbers<[1], [0], [0], [1], [0, 0, 1, 1], [], []>} : vector<2x768xf32>, vector<768x256xf32>, vector<2x256xf32> -> vector<2x256xf32>
    %cst_160 = arith.constant 0.000000e+00 : f32
    %176 = vector.broadcast %cst_160 : f32 to vector<2x256xf32>
    %177 = arith.maximumf %175, %176 : vector<2x256xf32>
    %c11 = arith.constant 11 : index
    %c0_161 = arith.constant 0 : index
    %c0_162 = arith.constant 0 : index
    %178 = vector.load %arg4[%c11, %c0_161, %c0_162] : memref<16x256x32xf32, #tpu.memory_space<vmem>>, vector<1x256x32xf32>
    %179 = vector.shape_cast %178 : vector<1x256x32xf32> to vector<256x32xf32>
    %cst_163 = arith.constant dense<0.000000e+00> : vector<2x32xf32>
    %180 = tpu.matmul %177, %179, %cst_163 {dimension_numbers = #tpu.dot_dimension_numbers<[1], [0], [0], [1], [0, 0, 1, 1], [], []>} : vector<2x256xf32>, vector<256x32xf32>, vector<2x32xf32> -> vector<2x32xf32>
    %181 = arith.addf %173, %180 : vector<2x32xf32>
    %c0_164 = arith.constant 0 : index
    %c3072_165 = arith.constant 3072 : index
    %182 = vector.load %arg6[%c0_164, %c3072_165] : memref<2x4608xf32, #tpu.memory_space<vmem>>, vector<2x768xf32>
    %cst_166 = arith.constant dense<0.000000e+00> : vector<2x256xf32>
    %183 = tpu.matmul %182, %84, %cst_166 {dimension_numbers = #tpu.dot_dimension_numbers<[1], [0], [0], [1], [0, 0, 1, 1], [], []>} : vector<2x768xf32>, vector<768x256xf32>, vector<2x256xf32> -> vector<2x256xf32>
    %cst_167 = arith.constant 0.000000e+00 : f32
    %184 = vector.broadcast %cst_167 : f32 to vector<2x256xf32>
    %185 = arith.maximumf %183, %184 : vector<2x256xf32>
    %c12 = arith.constant 12 : index
    %c0_168 = arith.constant 0 : index
    %c0_169 = arith.constant 0 : index
    %186 = vector.load %arg4[%c12, %c0_168, %c0_169] : memref<16x256x32xf32, #tpu.memory_space<vmem>>, vector<1x256x32xf32>
    %187 = vector.shape_cast %186 : vector<1x256x32xf32> to vector<256x32xf32>
    %cst_170 = arith.constant dense<0.000000e+00> : vector<2x32xf32>
    %188 = tpu.matmul %185, %187, %cst_170 {dimension_numbers = #tpu.dot_dimension_numbers<[1], [0], [0], [1], [0, 0, 1, 1], [], []>} : vector<2x256xf32>, vector<256x32xf32>, vector<2x32xf32> -> vector<2x32xf32>
    %189 = arith.addf %181, %188 : vector<2x32xf32>
    %c0_171 = arith.constant 0 : index
    %c3328_172 = arith.constant 3328 : index
    %190 = vector.load %arg6[%c0_171, %c3328_172] : memref<2x4608xf32, #tpu.memory_space<vmem>>, vector<2x768xf32>
    %cst_173 = arith.constant dense<0.000000e+00> : vector<2x256xf32>
    %191 = tpu.matmul %190, %84, %cst_173 {dimension_numbers = #tpu.dot_dimension_numbers<[1], [0], [0], [1], [0, 0, 1, 1], [], []>} : vector<2x768xf32>, vector<768x256xf32>, vector<2x256xf32> -> vector<2x256xf32>
    %cst_174 = arith.constant 0.000000e+00 : f32
    %192 = vector.broadcast %cst_174 : f32 to vector<2x256xf32>
    %193 = arith.maximumf %191, %192 : vector<2x256xf32>
    %c13 = arith.constant 13 : index
    %c0_175 = arith.constant 0 : index
    %c0_176 = arith.constant 0 : index
    %194 = vector.load %arg4[%c13, %c0_175, %c0_176] : memref<16x256x32xf32, #tpu.memory_space<vmem>>, vector<1x256x32xf32>
    %195 = vector.shape_cast %194 : vector<1x256x32xf32> to vector<256x32xf32>
    %cst_177 = arith.constant dense<0.000000e+00> : vector<2x32xf32>
    %196 = tpu.matmul %193, %195, %cst_177 {dimension_numbers = #tpu.dot_dimension_numbers<[1], [0], [0], [1], [0, 0, 1, 1], [], []>} : vector<2x256xf32>, vector<256x32xf32>, vector<2x32xf32> -> vector<2x32xf32>
    %197 = arith.addf %189, %196 : vector<2x32xf32>
    %c0_178 = arith.constant 0 : index
    %c3584_179 = arith.constant 3584 : index
    %198 = vector.load %arg6[%c0_178, %c3584_179] : memref<2x4608xf32, #tpu.memory_space<vmem>>, vector<2x768xf32>
    %cst_180 = arith.constant dense<0.000000e+00> : vector<2x256xf32>
    %199 = tpu.matmul %198, %84, %cst_180 {dimension_numbers = #tpu.dot_dimension_numbers<[1], [0], [0], [1], [0, 0, 1, 1], [], []>} : vector<2x768xf32>, vector<768x256xf32>, vector<2x256xf32> -> vector<2x256xf32>
    %cst_181 = arith.constant 0.000000e+00 : f32
    %200 = vector.broadcast %cst_181 : f32 to vector<2x256xf32>
    %201 = arith.maximumf %199, %200 : vector<2x256xf32>
    %c14 = arith.constant 14 : index
    %c0_182 = arith.constant 0 : index
    %c0_183 = arith.constant 0 : index
    %202 = vector.load %arg4[%c14, %c0_182, %c0_183] : memref<16x256x32xf32, #tpu.memory_space<vmem>>, vector<1x256x32xf32>
    %203 = vector.shape_cast %202 : vector<1x256x32xf32> to vector<256x32xf32>
    %cst_184 = arith.constant dense<0.000000e+00> : vector<2x32xf32>
    %204 = tpu.matmul %201, %203, %cst_184 {dimension_numbers = #tpu.dot_dimension_numbers<[1], [0], [0], [1], [0, 0, 1, 1], [], []>} : vector<2x256xf32>, vector<256x32xf32>, vector<2x32xf32> -> vector<2x32xf32>
    %205 = arith.addf %197, %204 : vector<2x32xf32>
    %c0_185 = arith.constant 0 : index
    %c3840_186 = arith.constant 3840 : index
    %206 = vector.load %arg6[%c0_185, %c3840_186] : memref<2x4608xf32, #tpu.memory_space<vmem>>, vector<2x768xf32>
    %cst_187 = arith.constant dense<0.000000e+00> : vector<2x256xf32>
    %207 = tpu.matmul %206, %84, %cst_187 {dimension_numbers = #tpu.dot_dimension_numbers<[1], [0], [0], [1], [0, 0, 1, 1], [], []>} : vector<2x768xf32>, vector<768x256xf32>, vector<2x256xf32> -> vector<2x256xf32>
    %cst_188 = arith.constant 0.000000e+00 : f32
    %208 = vector.broadcast %cst_188 : f32 to vector<2x256xf32>
    %209 = arith.maximumf %207, %208 : vector<2x256xf32>
    %c15 = arith.constant 15 : index
    %c0_189 = arith.constant 0 : index
    %c0_190 = arith.constant 0 : index
    %210 = vector.load %arg4[%c15, %c0_189, %c0_190] : memref<16x256x32xf32, #tpu.memory_space<vmem>>, vector<1x256x32xf32>
    %211 = vector.shape_cast %210 : vector<1x256x32xf32> to vector<256x32xf32>
    %cst_191 = arith.constant dense<0.000000e+00> : vector<2x32xf32>
    %212 = tpu.matmul %209, %211, %cst_191 {dimension_numbers = #tpu.dot_dimension_numbers<[1], [0], [0], [1], [0, 0, 1, 1], [], []>} : vector<2x256xf32>, vector<256x32xf32>, vector<2x32xf32> -> vector<2x32xf32>
    %213 = arith.addf %205, %212 : vector<2x32xf32>
    %c0_192 = arith.constant 0 : index
    %c0_193 = arith.constant 0 : index
    %214 = vector.load %arg5[%c0_192, %c0_193] : memref<2x32xf32, #tpu.memory_space<vmem>>, vector<2x32xf32>
    tpu.vector_store %arg5[%c0_192, %c0_193], %213 {strides = array<i32>} : memref<2x32xf32, #tpu.memory_space<vmem>>, vector<2x32xf32>,
    return
  }
  func.func @transform_0(%arg0: i32) -> (i32, i32) {
    %c0_i32 = arith.constant 0 : i32
    %c0_i32_0 = arith.constant 0 : i32
    return %arg0, %c0_i32 : i32, i32
  }
  func.func @transform_1(%arg0: i32) -> (i32, i32) {
    %c0_i32 = arith.constant 0 : i32
    %c0_i32_0 = arith.constant 0 : i32
    %c0_i32_1 = arith.constant 0 : i32
    return %c0_i32, %c0_i32_0 : i32, i32
  }
  func.func @transform_2(%arg0: i32) -> (i32, i32) {
    %c0_i32 = arith.constant 0 : i32
    %c0_i32_0 = arith.constant 0 : i32
    %c0_i32_1 = arith.constant 0 : i32
    return %c0_i32, %c0_i32_0 : i32, i32
  }
  func.func @transform_3(%arg0: i32) -> (i32, i32, i32) {
    %c0_i32 = arith.constant 0 : i32
    %c0_i32_0 = arith.constant 0 : i32
    %c0_i32_1 = arith.constant 0 : i32
    %c0_i32_2 = arith.constant 0 : i32
    return %c0_i32, %c0_i32_0, %c0_i32_1 : i32, i32, i32
  }
  func.func @transform_4(%arg0: i32) -> (i32, i32) {
    %c0_i32 = arith.constant 0 : i32
    %c0_i32_0 = arith.constant 0 : i32
    return %arg0, %c0_i32 : i32, i32
  }
}

</mosaic_0001>

<llo_original>
// kernel: _deep_svdd_forward.1
$region0: #{_deep_svdd_forward.1}
  #allocation0 [shape = 'u32[]', space=smem, size = 0x4, offset = 0x4, fixed_abs, tag = 'smem constant byte address 0x4 - core index']
  #allocation1 [shape = 'u32[72,128]{1,0:T(1,128)}', space=vmem, size = 0x9000, scoped, tag = 'internal scratch']
  #allocation2 [shape = 'f32[2,4608]{1,0:T(2,128)}', space=vmem, size = 0x9000, scoped, tag = 'scratch operand']
  %s0 = inlined_call_operand.vmem [shape: f32[2,2304], index: 0, kind: input, shape index: {}]
  %s1 = inlined_call_operand.vmem [shape: f32[384,256], index: 1, kind: input, shape index: {}]
  %s2 = inlined_call_operand.vmem [shape: f32[768,256], index: 2, kind: input, shape index: {}]
  %s3 = inlined_call_operand.vmem [shape: f32[16,256,32], index: 3, kind: input, shape index: {}]
  %s4 = inlined_call_operand.hbm [shape: f32[2,32], index: 4, kind: output, shape index: {}]
  %s5 = sld [smem:[#allocation0]]
  $region26: #{_deep_svdd_forward.1} parent=0
    _
  %s7 = ssub.s32 1, %s5
  %s8 = scalar_select 0, %s7, %s5
  $region1: #{_deep_svdd_forward.1} parent=0
    #allocation3 [shape = 'u8[1024]{0}', space=vmem, size = 0x400, scoped, tag = 'output window, operand 0, single buffered']
    #allocation4 [shape = 's32[1]{0}', space=sflag, size = 0x4, scoped, tag = 'scoped memory for _deep_svdd_forward.1']
    %9 = vsyncpa [#allocation4], 0
    // Predicated region
    $region2: #{_deep_svdd_forward.1} parent=1 // pred_check
      _
    $region3: #{_deep_svdd_forward.1} parent=1 // pred_check_branch
      %11 = sbr.rel (0) target = $region5
    $region4: #{_deep_svdd_forward.1} parent=1 // pred_region
      _
    $region5: #{_deep_svdd_forward.1} parent=1 // pred_fallthru
      _
    // Predicated region
    $region6: #{_deep_svdd_forward.1} parent=1 // pred_check
      _
    $region7: #{_deep_svdd_forward.1} parent=1 // pred_check_branch
      %13 = sbr.rel (0) target = $region9
    $region8: #{_deep_svdd_forward.1} parent=1 // pred_region
      _
    $region9: #{_deep_svdd_forward.1} parent=1 // pred_fallthru
      _
    // Predicated region
    $region10: #{_deep_svdd_forward.1} parent=1 // pred_check
      _
    $region11: #{_deep_svdd_forward.1} parent=1 // pred_check_branch
      %15 = sbr.rel (0) target = $region13
    $region12: #{_deep_svdd_forward.1} parent=1 // pred_region
      _
    $region13: #{_deep_svdd_forward.1} parent=1 // pred_fallthru
      _
    // Predicated region
    $region14: #{_deep_svdd_forward.1} parent=1 // pred_check
      _
    $region15: #{_deep_svdd_forward.1} parent=1 // pred_check_branch
      %17 = sbr.rel (0) target = $region17
    $region16: #{_deep_svdd_forward.1} parent=1 // pred_region
      _
    $region17: #{_deep_svdd_forward.1} parent=1 // pred_fallthru
      _
    %18 = vst [vmem:[#allocation2] sm:$0xf] 0.0
    %19 = vst [vmem:[#allocation2 + $0x44] sm:$0xf] 0.0
    %v20 = vld [vmem:[%s1] sm:$0xff]
    %v21 = vld [vmem:[%s1 + $0x8] sm:$0xff]
    %v22 = vld [vmem:[%s1 + $0x10] sm:$0xff]
    %v23 = vld [vmem:[%s1 + $0x18] sm:$0xff]
    %v24 = vld [vmem:[%s1 + $0x20] sm:$0xff]
    %v25 = vld [vmem:[%s1 + $0x28] sm:$0xff]
    %v26 = vld [vmem:[%s1 + $0x30] sm:$0xff]
    %v27 = vld [vmem:[%s1 + $0x38] sm:$0xff]
    %v28 = vld [vmem:[%s1 + $0x40] sm:$0xff]
    %v29 = vld [vmem:[%s1 + $0x48] sm:$0xff]
    %v30 = vld [vmem:[%s1 + $0x50] sm:$0xff]
    %v31 = vld [vmem:[%s1 + $0x58] sm:$0xff]
    %v32 = vld [vmem:[%s1 + $0x60] sm:$0xff]
    %v33 = vld [vmem:[%s1 + $0x68] sm:$0xff]
    %v34 = vld [vmem:[%s1 + $0x70] sm:$0xff]
    %v35 = vld [vmem:[%s1 + $0x78] sm:$0xff]
    %v36 = vld [vmem:[%s1 + $0x80] sm:$0xff]
    %v37 = vld [vmem:[%s1 + $0x88] sm:$0xff]
    %v38 = vld [vmem:[%s1 + $0x90] sm:$0xff]
    %v39 = vld [vmem:[%s1 + $0x98] sm:$0xff]
    %v40 = vld [vmem:[%s1 + $0xa0] sm:$0xff]
    %v41 = vld [vmem:[%s1 + $0xa8] sm:$0xff]
    %v42 = vld [vmem:[%s1 + $0xb0] sm:$0xff]
    %v43 = vld [vmem:[%s1 + $0xb8] sm:$0xff]
    %v44 = vld [vmem:[%s1 + $0xc0] sm:$0xff]
    %v45 = vld [vmem:[%s1 + $0xc8] sm:$0xff]
    %v46 = vld [vmem:[%s1 + $0xd0] sm:$0xff]
    %v47 = vld [vmem:[%s1 + $0xd8] sm:$0xff]
    %v48 = vld [vmem:[%s1 + $0xe0] sm:$0xff]
    %v49 = vld [vmem:[%s1 + $0xe8] sm:$0xff]
    %v50 = vld [vmem:[%s1 + $0xf0] sm:$0xff]
    %v51 = vld [vmem:[%s1 + $0xf8] sm:$0xff]
    %v52 = vld [vmem:[%s1 + $0x100] sm:$0xff]
    %v53 = vld [vmem:[%s1 + $0x108] sm:$0xff]
    %v54 = vld [vmem:[%s1 + $0x110] sm:$0xff]
    %v55 = vld [vmem:[%s1 + $0x118] sm:$0xff]
    %v56 = vld [vmem:[%s1 + $0x120] sm:$0xff]
    %v57 = vld [vmem:[%s1 + $0x128] sm:$0xff]
    %v58 = vld [vmem:[%s1 + $0x130] sm:$0xff]
    %v59 = vld [vmem:[%s1 + $0x138] sm:$0xff]
    %v60 = vld [vmem:[%s1 + $0x140] sm:$0xff]
    %v61 = vld [vmem:[%s1 + $0x148] sm:$0xff]
    %v62 = vld [vmem:[%s1 + $0x150] sm:$0xff]
    %v63 = vld [vmem:[%s1 + $0x158] sm:$0xff]
    %v64 = vld [vmem:[%s1 + $0x160] sm:$0xff]
    %v65 = vld [vmem:[%s1 + $0x168] sm:$0xff]
    %v66 = vld [vmem:[%s1 + $0x170] sm:$0xff]
    %v67 = vld [vmem:[%s1 + $0x178] sm:$0xff]
    %v68 = vld [vmem:[%s1 + $0x180] sm:$0xff]
    %v69 = vld [vmem:[%s1 + $0x188] sm:$0xff]
    %v70 = vld [vmem:[%s1 + $0x190] sm:$0xff]
    %v71 = vld [vmem:[%s1 + $0x198] sm:$0xff]
    %v72 = vld [vmem:[%s1 + $0x1a0] sm:$0xff]
    %v73 = vld [vmem:[%s1 + $0x1a8] sm:$0xff]
    %v74 = vld [vmem:[%s1 + $0x1b0] sm:$0xff]
    %v75 = vld [vmem:[%s1 + $0x1b8] sm:$0xff]
    %v76 = vld [vmem:[%s1 + $0x1c0] sm:$0xff]
    %v77 = vld [vmem:[%s1 + $0x1c8] sm:$0xff]
    %v78 = vld [vmem:[%s1 + $0x1d0] sm:$0xff]
    %v79 = vld [vmem:[%s1 + $0x1d8] sm:$0xff]
    %v80 = vld [vmem:[%s1 + $0x1e0] sm:$0xff]
    %v81 = vld [vmem:[%s1 + $0x1e8] sm:$0xff]
    %v82 = vld [vmem:[%s1 + $0x1f0] sm:$0xff]
    %v83 = vld [vmem:[%s1 + $0x1f8] sm:$0xff]
    %v84 = vld [vmem:[%s1 + $0x200] sm:$0xff]
    %v85 = vld [vmem:[%s1 + $0x208] sm:$0xff]
    %v86 = vld [vmem:[%s1 + $0x210] sm:$0xff]
    %v87 = vld [vmem:[%s1 + $0x218] sm:$0xff]
    %v88 = vld [vmem:[%s1 + $0x220] sm:$0xff]
    %v89 = vld [vmem:[%s1 + $0x228] sm:$0xff]
    %v90 = vld [vmem:[%s1 + $0x230] sm:$0xff]
    %v91 = vld [vmem:[%s1 + $0x238] sm:$0xff]
    %v92 = vld [vmem:[%s1 + $0x240] sm:$0xff]
    %v93 = vld [vmem:[%s1 + $0x248] sm:$0xff]
    %v94 = vld [vmem:[%s1 + $0x250] sm:$0xff]
    %v95 = vld [vmem:[%s1 + $0x258] sm:$0xff]
    %v96 = vld [vmem:[%s1 + $0x260] sm:$0xff]
    %v97 = vld [vmem:[%s1 + $0x268] sm:$0xff]
    %v98 = vld [vmem:[%s1 + $0x270] sm:$0xff]
    %v99 = vld [vmem:[%s1 + $0x278] sm:$0xff]
    %v100 = vld [vmem:[%s1 + $0x280] sm:$0xff]
    %v101 = vld [vmem:[%s1 + $0x288] sm:$0xff]
    %v102 = vld [vmem:[%s1 + $0x290] sm:$0xff]
    %v103 = vld [vmem:[%s1 + $0x298] sm:$0xff]
    %v104 = vld [vmem:[%s1 + $0x2a0] sm:$0xff]
    %v105 = vld [vmem:[%s1 + $0x2a8] sm:$0xff]
    %v106 = vld [vmem:[%s1 + $0x2b0] sm:$0xff]
    %v107 = vld [vmem:[%s1 + $0x2b8] sm:$0xff]
    %v108 = vld [vmem:[%s1 + $0x2c0] sm:$0xff]
    %v109 = vld [vmem:[%s1 + $0x2c8] sm:$0xff]
    %v110 = vld [vmem:[%s1 + $0x2d0] sm:$0xff]
    %v111 = vld [vmem:[%s1 + $0x2d8] sm:$0xff]
    %v112 = vld [vmem:[%s1 + $0x2e0] sm:$0xff]
    %v113 = vld [vmem:[%s1 + $0x2e8] sm:$0xff]
    %v114 = vld [vmem:[%s1 + $0x2f0] sm:$0xff]
    %v115 = vld [vmem:[%s1 + $0x2f8] sm:$0xff]
    %v116 = vld [vmem:[%s0] sm:$0x3f]
    %118 = vst [vmem:[#allocation1] ss:$4 sm:$0xff] %v116
    %v119 = vld.sshfl [vmem:[#allocation1] sm:$0xff pattern:$0x73625140]
    %v120 = vld.sshfl [vmem:[#allocation1 + $0x8] sm:$0xff pattern:$0x73625140]
    %v121 = vld.sshfl [vmem:[#allocation1 + $0x10] sm:$0xff pattern:$0x73625140]
    %125 = vmatpush.msra.mxu0 %v50
    %126 = vmatpush.msra.mxu0 %v48
    %127 = vmatpush.msra.mxu0 %v46
    %128 = vmatpush.msra.mxu0 %v44
    %129 = vmatpush.msra.mxu0 %v42
    %130 = vmatpush.msra.mxu0 %v40
    %131 = vmatpush.msra.mxu0 %v38
    %132 = vmatpush.msra.mxu0 %v36
    %133 = vmatpush.msra.mxu0 %v34
    %134 = vmatpush.msra.mxu0 %v32
    %135 = vmatpush.msra.mxu0 %v30
    %136 = vmatpush.msra.mxu0 %v28
    %137 = vmatpush.msra.mxu0 %v26
    %138 = vmatpush.msra.mxu0 %v24
    %139 = vmatpush.msra.mxu0 %v22
    %140 = vmatpush.msra.mxu0 %v20
    %141 = vmatmul.f32.gmra.mxu0 %v119
    %v142 = vpop.f32.mrf.mxu0
    %v143 = vadd.f32 0.0, %v142
    %144 = vdwg.mxu0
    %145 = vmatpush.msra.mxu0 %v82
    %146 = vmatpush.msra.mxu0 %v80
    %147 = vmatpush.msra.mxu0 %v78
    %148 = vmatpush.msra.mxu0 %v76
    %149 = vmatpush.msra.mxu0 %v74
    %150 = vmatpush.msra.mxu0 %v72
    %151 = vmatpush.msra.mxu0 %v70
    %152 = vmatpush.msra.mxu0 %v68
    %153 = vmatpush.msra.mxu0 %v66
    %154 = vmatpush.msra.mxu0 %v64
    %155 = vmatpush.msra.mxu0 %v62
    %156 = vmatpush.msra.mxu0 %v60
    %157 = vmatpush.msra.mxu0 %v58
    %158 = vmatpush.msra.mxu0 %v56
    %159 = vmatpush.msra.mxu0 %v54
    %160 = vmatpush.msra.mxu0 %v52
    %161 = vmatmul.f32.gmra.mxu0 %v120
    %v162 = vpop.f32.mrf.mxu0
    %v163 = vadd.f32 %v143, %v162
    %164 = vdwg.mxu0
    %165 = vmatpush.msra.mxu0 %v114
    %166 = vmatpush.msra.mxu0 %v112
    %167 = vmatpush.msra.mxu0 %v110
    %168 = vmatpush.msra.mxu0 %v108
    %169 = vmatpush.msra.mxu0 %v106
    %170 = vmatpush.msra.mxu0 %v104
    %171 = vmatpush.msra.mxu0 %v102
    %172 = vmatpush.msra.mxu0 %v100
    %173 = vmatpush.msra.mxu0 %v98
    %174 = vmatpush.msra.mxu0 %v96
    %175 = vmatpush.msra.mxu0 %v94
    %176 = vmatpush.msra.mxu0 %v92
    %177 = vmatpush.msra.mxu0 %v90
    %178 = vmatpush.msra.mxu0 %v88
    %179 = vmatpush.msra.mxu0 %v86
    %180 = vmatpush.msra.mxu0 %v84
    %181 = vmatmul.f32.gmra.mxu0 %v121
    %v182 = vpop.f32.mrf.mxu0
    %v183 = vadd.f32 %v163, %v182
    %184 = vdwg.mxu0
    %185 = vmatpush.msra.mxu0 %v51
    %186 = vmatpush.msra.mxu0 %v49
    %187 = vmatpush.msra.mxu0 %v47
    %188 = vmatpush.msra.mxu0 %v45
    %189 = vmatpush.msra.mxu0 %v43
    %190 = vmatpush.msra.mxu0 %v41
    %191 = vmatpush.msra.mxu0 %v39
    %192 = vmatpush.msra.mxu0 %v37
    %193 = vmatpush.msra.mxu0 %v35
    %194 = vmatpush.msra.mxu0 %v33
    %195 = vmatpush.msra.mxu0 %v31
    %196 = vmatpush.msra.mxu0 %v29
    %197 = vmatpush.msra.mxu0 %v27
    %198 = vmatpush.msra.mxu0 %v25
    %199 = vmatpush.msra.mxu0 %v23
    %200 = vmatpush.msra.mxu0 %v21
    %201 = vmatmul.f32.gmra.mxu0 %v119
    %v202 = vpop.f32.mrf.mxu0
    %v203 = vadd.f32 0.0, %v202
    %204 = vdwg.mxu0
    %205 = vmatpush.msra.mxu0 %v83
    %206 = vmatpush.msra.mxu0 %v81
    %207 = vmatpush.msra.mxu0 %v79
    %208 = vmatpush.msra.mxu0 %v77
    %209 = vmatpush.msra.mxu0 %v75
    %210 = vmatpush.msra.mxu0 %v73
    %211 = vmatpush.msra.mxu0 %v71
    %212 = vmatpush.msra.mxu0 %v69
    %213 = vmatpush.msra.mxu0 %v67
    %214 = vmatpush.msra.mxu0 %v65
    %215 = vmatpush.msra.mxu0 %v63
    %216 = vmatpush.msra.mxu0 %v61
    %217 = vmatpush.msra.mxu0 %v59
    %218 = vmatpush.msra.mxu0 %v57
    %219 = vmatpush.msra.mxu0 %v55
    %220 = vmatpush.msra.mxu0 %v53
    %221 = vmatmul.f32.gmra.mxu0 %v120
    %v222 = vpop.f32.mrf.mxu0
    %v223 = vadd.f32 %v203, %v222
    %224 = vdwg.mxu0
    %225 = vmatpush.msra.mxu0 %v115
    %226 = vmatpush.msra.mxu0 %v113
    %227 = vmatpush.msra.mxu0 %v111
    %228 = vmatpush.msra.mxu0 %v109
    %229 = vmatpush.msra.mxu0 %v107
    %230 = vmatpush.msra.mxu0 %v105
    %231 = vmatpush.msra.mxu0 %v103
    %232 = vmatpush.msra.mxu0 %v101
    %233 = vmatpush.msra.mxu0 %v99
    %234 = vmatpush.msra.mxu0 %v97
    %235 = vmatpush.msra.mxu0 %v95
    %236 = vmatpush.msra.mxu0 %v93
    %237 = vmatpush.msra.mxu0 %v91
    %238 = vmatpush.msra.mxu0 %v89
    %239 = vmatpush.msra.mxu0 %v87
    %240 = vmatpush.msra.mxu0 %v85
    %241 = vmatmul.f32.gmra.mxu0 %v121
    %v242 = vpop.f32.mrf.mxu0
    %v243 = vadd.f32 %v223, %v242
    %244 = vdwg.mxu0
    %v245 = vmax.f32 %v183, 0.0
    %v246 = vmax.f32 %v243, 0.0
    %v249 = vrot.slane %v246, 6
    %vm250 = vcmask 1041408
    %v251 = vsel %vm250, %v245, %v249
    %253 = vst [vmem:[#allocation2 + $0x4] sm:$0xf] %v251
    %v254 = vld [vmem:[%s0 + $0x2] sm:$0x3f]
    %256 = vst [vmem:[#allocation1] ss:$4 sm:$0xff] %v254
    %v257 = vld.sshfl [vmem:[#allocation1] sm:$0xff pattern:$0x73625140]
    %v258 = vld.sshfl [vmem:[#allocation1 + $0x8] sm:$0xff pattern:$0x73625140]
    %v259 = vld.sshfl [vmem:[#allocation1 + $0x10] sm:$0xff pattern:$0x73625140]
    %263 = vmatpush.msra.mxu0 %v50
    %264 = vmatpush.msra.mxu0 %v48
    %265 = vmatpush.msra.mxu0 %v46
    %266 = vmatpush.msra.mxu0 %v44
    %267 = vmatpush.msra.mxu0 %v42
    %268 = vmatpush.msra.mxu0 %v40
    %269 = vmatpush.msra.mxu0 %v38
    %270 = vmatpush.msra.mxu0 %v36
    %271 = vmatpush.msra.mxu0 %v34
    %272 = vmatpush.msra.mxu0 %v32
    %273 = vmatpush.msra.mxu0 %v30
    %274 = vmatpush.msra.mxu0 %v28
    %275 = vmatpush.msra.mxu0 %v26
    %276 = vmatpush.msra.mxu0 %v24
    %277 = vmatpush.msra.mxu0 %v22
    %278 = vmatpush.msra.mxu0 %v20
    %279 = vmatmul.f32.gmra.mxu0 %v257
    %v280 = vpop.f32.mrf.mxu0
    %v281 = vadd.f32 0.0, %v280
    %282 = vdwg.mxu0
    %283 = vmatpush.msra.mxu0 %v82
    %284 = vmatpush.msra.mxu0 %v80
    %285 = vmatpush.msra.mxu0 %v78
    %286 = vmatpush.msra.mxu0 %v76
    %287 = vmatpush.msra.mxu0 %v74
    %288 = vmatpush.msra.mxu0 %v72
    %289 = vmatpush.msra.mxu0 %v70
    %290 = vmatpush.msra.mxu0 %v68
    %291 = vmatpush.msra.mxu0 %v66
    %292 = vmatpush.msra.mxu0 %v64
    %293 = vmatpush.msra.mxu0 %v62
    %294 = vmatpush.msra.mxu0 %v60
    %295 = vmatpush.msra.mxu0 %v58
    %296 = vmatpush.msra.mxu0 %v56
    %297 = vmatpush.msra.mxu0 %v54
    %298 = vmatpush.msra.mxu0 %v52
    %299 = vmatmul.f32.gmra.mxu0 %v258
    %v300 = vpop.f32.mrf.mxu0
    %v301 = vadd.f32 %v281, %v300
    %302 = vdwg.mxu0
    %303 = vmatpush.msra.mxu0 %v114
    %304 = vmatpush.msra.mxu0 %v112
    %305 = vmatpush.msra.mxu0 %v110
    %306 = vmatpush.msra.mxu0 %v108
    %307 = vmatpush.msra.mxu0 %v106
    %308 = vmatpush.msra.mxu0 %v104
    %309 = vmatpush.msra.mxu0 %v102
    %310 = vmatpush.msra.mxu0 %v100
    %311 = vmatpush.msra.mxu0 %v98
    %312 = vmatpush.msra.mxu0 %v96
    %313 = vmatpush.msra.mxu0 %v94
    %314 = vmatpush.msra.mxu0 %v92
    %315 = vmatpush.msra.mxu0 %v90
    %316 = vmatpush.msra.mxu0 %v88
    %317 = vmatpush.msra.mxu0 %v86
    %318 = vmatpush.msra.mxu0 %v84
    %319 = vmatmul.f32.gmra.mxu0 %v259
    %v320 = vpop.f32.mrf.mxu0
    %v321 = vadd.f32 %v301, %v320
    %322 = vdwg.mxu0
    %323 = vmatpush.msra.mxu0 %v51
    %324 = vmatpush.msra.mxu0 %v49
    %325 = vmatpush.msra.mxu0 %v47
    %326 = vmatpush.msra.mxu0 %v45
    %327 = vmatpush.msra.mxu0 %v43
    %328 = vmatpush.msra.mxu0 %v41
    %329 = vmatpush.msra.mxu0 %v39
    %330 = vmatpush.msra.mxu0 %v37
    %331 = vmatpush.msra.mxu0 %v35
    %332 = vmatpush.msra.mxu0 %v33
    %333 = vmatpush.msra.mxu0 %v31
    %334 = vmatpush.msra.mxu0 %v29
    %335 = vmatpush.msra.mxu0 %v27
    %336 = vmatpush.msra.mxu0 %v25
    %337 = vmatpush.msra.mxu0 %v23
    %338 = vmatpush.msra.mxu0 %v21
    %339 = vmatmul.f32.gmra.mxu0 %v257
    %v340 = vpop.f32.mrf.mxu0
    %v341 = vadd.f32 0.0, %v340
    %342 = vdwg.mxu0
    %343 = vmatpush.msra.mxu0 %v83
    %344 = vmatpush.msra.mxu0 %v81
    %345 = vmatpush.msra.mxu0 %v79
    %346 = vmatpush.msra.mxu0 %v77
    %347 = vmatpush.msra.mxu0 %v75
    %348 = vmatpush.msra.mxu0 %v73
    %349 = vmatpush.msra.mxu0 %v71
    %350 = vmatpush.msra.mxu0 %v69
    %351 = vmatpush.msra.mxu0 %v67
    %352 = vmatpush.msra.mxu0 %v65
    %353 = vmatpush.msra.mxu0 %v63
    %354 = vmatpush.msra.mxu0 %v61
    %355 = vmatpush.msra.mxu0 %v59
    %356 = vmatpush.msra.mxu0 %v57
    %357 = vmatpush.msra.mxu0 %v55
    %358 = vmatpush.msra.mxu0 %v53
    %359 = vmatmul.f32.gmra.mxu0 %v258
    %v360 = vpop.f32.mrf.mxu0
    %v361 = vadd.f32 %v341, %v360
    %362 = vdwg.mxu0
    %363 = vmatpush.msra.mxu0 %v115
    %364 = vmatpush.msra.mxu0 %v113
    %365 = vmatpush.msra.mxu0 %v111
    %366 = vmatpush.msra.mxu0 %v109
    %367 = vmatpush.msra.mxu0 %v107
    %368 = vmatpush.msra.mxu0 %v105
    %369 = vmatpush.msra.mxu0 %v103
    %370 = vmatpush.msra.mxu0 %v101
    %371 = vmatpush.msra.mxu0 %v99
    %372 = vmatpush.msra.mxu0 %v97
    %373 = vmatpush.msra.mxu0 %v95
    %374 = vmatpush.msra.mxu0 %v93
    %375 = vmatpush.msra.mxu0 %v91
    %376 = vmatpush.msra.mxu0 %v89
    %377 = vmatpush.msra.mxu0 %v87
    %378 = vmatpush.msra.mxu0 %v85
    %379 = vmatmul.f32.gmra.mxu0 %v259
    %v380 = vpop.f32.mrf.mxu0
    %v381 = vadd.f32 %v361, %v380
    %382 = vdwg.mxu0
    %v383 = vmax.f32 %v321, 0.0
    %v384 = vmax.f32 %v381, 0.0
    %v387 = vrot.slane %v384, 6
    %v388 = vsel %vm250, %v383, %v387
    %390 = vst [vmem:[#allocation2 + $0x8] sm:$0xf] %v388
    %v391 = vld [vmem:[%s0 + $0x4] sm:$0x3f]
    %393 = vst [vmem:[#allocation1] ss:$4 sm:$0xff] %v391
    %v394 = vld.sshfl [vmem:[#allocation1] sm:$0xff pattern:$0x73625140]
    %v395 = vld.sshfl [vmem:[#allocation1 + $0x8] sm:$0xff pattern:$0x73625140]
    %v396 = vld.sshfl [vmem:[#allocation1 + $0x10] sm:$0xff pattern:$0x73625140]
    %400 = vmatpush.msra.mxu0 %v50
    %401 = vmatpush.msra.mxu0 %v48
    %402 = vmatpush.msra.mxu0 %v46
    %403 = vmatpush.msra.mxu0 %v44
    %404 = vmatpush.msra.mxu0 %v42
    %405 = vmatpush.msra.mxu0 %v40
    %406 = vmatpush.msra.mxu0 %v38
    %407 = vmatpush.msra.mxu0 %v36
    %408 = vmatpush.msra.mxu0 %v34
    %409 = vmatpush.msra.mxu0 %v32
    %410 = vmatpush.msra.mxu0 %v30
    %411 = vmatpush.msra.mxu0 %v28
    %412 = vmatpush.msra.mxu0 %v26
    %413 = vmatpush.msra.mxu0 %v24
    %414 = vmatpush.msra.mxu0 %v22
    %415 = vmatpush.msra.mxu0 %v20
    %416 = vmatmul.f32.gmra.mxu0 %v394
    %v417 = vpop.f32.mrf.mxu0
    %v418 = vadd.f32 0.0, %v417
    %419 = vdwg.mxu0
    %420 = vmatpush.msra.mxu0 %v82
    %421 = vmatpush.msra.mxu0 %v80
    %422 = vmatpush.msra.mxu0 %v78
    %423 = vmatpush.msra.mxu0 %v76
    %424 = vmatpush.msra.mxu0 %v74
    %425 = vmatpush.msra.mxu0 %v72
    %426 = vmatpush.msra.mxu0 %v70
    %427 = vmatpush.msra.mxu0 %v68
    %428 = vmatpush.msra.mxu0 %v66
    %429 = vmatpush.msra.mxu0 %v64
    %430 = vmatpush.msra.mxu0 %v62
    %431 = vmatpush.msra.mxu0 %v60
    %432 = vmatpush.msra.mxu0 %v58
    %433 = vmatpush.msra.mxu0 %v56
    %434 = vmatpush.msra.mxu0 %v54
    %435 = vmatpush.msra.mxu0 %v52
    %436 = vmatmul.f32.gmra.mxu0 %v395
    %v437 = vpop.f32.mrf.mxu0
    %v438 = vadd.f32 %v418, %v437
    %439 = vdwg.mxu0
    %440 = vmatpush.msra.mxu0 %v114
    %441 = vmatpush.msra.mxu0 %v112
    %442 = vmatpush.msra.mxu0 %v110
    %443 = vmatpush.msra.mxu0 %v108
    %444 = vmatpush.msra.mxu0 %v106
    %445 = vmatpush.msra.mxu0 %v104
    %446 = vmatpush.msra.mxu0 %v102
    %447 = vmatpush.msra.mxu0 %v100
    %448 = vmatpush.msra.mxu0 %v98
    %449 = vmatpush.msra.mxu0 %v96
    %450 = vmatpush.msra.mxu0 %v94
    %451 = vmatpush.msra.mxu0 %v92
    %452 = vmatpush.msra.mxu0 %v90
    %453 = vmatpush.msra.mxu0 %v88
    %454 = vmatpush.msra.mxu0 %v86
    %455 = vmatpush.msra.mxu0 %v84
    %456 = vmatmul.f32.gmra.mxu0 %v396
    %v457 = vpop.f32.mrf.mxu0
    %v458 = vadd.f32 %v438, %v457
    %459 = vdwg.mxu0
    %460 = vmatpush.msra.mxu0 %v51
    %461 = vmatpush.msra.mxu0 %v49
    %462 = vmatpush.msra.mxu0 %v47
    %463 = vmatpush.msra.mxu0 %v45
    %464 = vmatpush.msra.mxu0 %v43
    %465 = vmatpush.msra.mxu0 %v41
    %466 = vmatpush.msra.mxu0 %v39
    %467 = vmatpush.msra.mxu0 %v37
    %468 = vmatpush.msra.mxu0 %v35
    %469 = vmatpush.msra.mxu0 %v33
    %470 = vmatpush.msra.mxu0 %v31
    %471 = vmatpush.msra.mxu0 %v29
    %472 = vmatpush.msra.mxu0 %v27
    %473 = vmatpush.msra.mxu0 %v25
    %474 = vmatpush.msra.mxu0 %v23
    %475 = vmatpush.msra.mxu0 %v21
    %476 = vmatmul.f32.gmra.mxu0 %v394
    %v477 = vpop.f32.mrf.mxu0
    %v478 = vadd.f32 0.0, %v477
    %479 = vdwg.mxu0
    %480 = vmatpush.msra.mxu0 %v83
    %481 = vmatpush.msra.mxu0 %v81
    %482 = vmatpush.msra.mxu0 %v79
    %483 = vmatpush.msra.mxu0 %v77
    %484 = vmatpush.msra.mxu0 %v75
    %485 = vmatpush.msra.mxu0 %v73
    %486 = vmatpush.msra.mxu0 %v71
    %487 = vmatpush.msra.mxu0 %v69
    %488 = vmatpush.msra.mxu0 %v67
    %489 = vmatpush.msra.mxu0 %v65
    %490 = vmatpush.msra.mxu0 %v63
    %491 = vmatpush.msra.mxu0 %v61
    %492 = vmatpush.msra.mxu0 %v59
    %493 = vmatpush.msra.mxu0 %v57
    %494 = vmatpush.msra.mxu0 %v55
    %495 = vmatpush.msra.mxu0 %v53
    %496 = vmatmul.f32.gmra.mxu0 %v395
    %v497 = vpop.f32.mrf.mxu0
    %v498 = vadd.f32 %v478, %v497
    %499 = vdwg.mxu0
    %500 = vmatpush.msra.mxu0 %v115
    %501 = vmatpush.msra.mxu0 %v113
    %502 = vmatpush.msra.mxu0 %v111
    %503 = vmatpush.msra.mxu0 %v109
    %504 = vmatpush.msra.mxu0 %v107
    %505 = vmatpush.msra.mxu0 %v105
    %506 = vmatpush.msra.mxu0 %v103
    %507 = vmatpush.msra.mxu0 %v101
    %508 = vmatpush.msra.mxu0 %v99
    %509 = vmatpush.msra.mxu0 %v97
    %510 = vmatpush.msra.mxu0 %v95
    %511 = vmatpush.msra.mxu0 %v93
    %512 = vmatpush.msra.mxu0 %v91
    %513 = vmatpush.msra.mxu0 %v89
    %514 = vmatpush.msra.mxu0 %v87
    %515 = vmatpush.msra.mxu0 %v85
    %516 = vmatmul.f32.gmra.mxu0 %v396
    %v517 = vpop.f32.mrf.mxu0
    %v518 = vadd.f32 %v498, %v517
    %519 = vdwg.mxu0
    %v520 = vmax.f32 %v458, 0.0
    %v521 = vmax.f32 %v518, 0.0
    %v524 = vrot.slane %v521, 6
    %v525 = vsel %vm250, %v520, %v524
    %527 = vst [vmem:[#allocation2 + $0xc] sm:$0xf] %v525
    %v528 = vld [vmem:[%s0 + $0x6] sm:$0x3f]
    %530 = vst [vmem:[#allocation1] ss:$4 sm:$0xff] %v528
    %v531 = vld.sshfl [vmem:[#allocation1] sm:$0xff pattern:$0x73625140]
    %v532 = vld.sshfl [vmem:[#allocation1 + $0x8] sm:$0xff pattern:$0x73625140]
    %v533 = vld.sshfl [vmem:[#allocation1 + $0x10] sm:$0xff pattern:$0x73625140]
    %537 = vmatpush.msra.mxu0 %v50
    %538 = vmatpush.msra.mxu0 %v48
    %539 = vmatpush.msra.mxu0 %v46
    %540 = vmatpush.msra.mxu0 %v44
    %541 = vmatpush.msra.mxu0 %v42
    %542 = vmatpush.msra.mxu0 %v40
    %543 = vmatpush.msra.mxu0 %v38
    %544 = vmatpush.msra.mxu0 %v36
    %545 = vmatpush.msra.mxu0 %v34
    %546 = vmatpush.msra.mxu0 %v32
    %547 = vmatpush.msra.mxu0 %v30
    %548 = vmatpush.msra.mxu0 %v28
    %549 = vmatpush.msra.mxu0 %v26
    %550 = vmatpush.msra.mxu0 %v24
    %551 = vmatpush.msra.mxu0 %v22
    %552 = vmatpush.msra.mxu0 %v20
    %553 = vmatmul.f32.gmra.mxu0 %v531
    %v554 = vpop.f32.mrf.mxu0
    %v555 = vadd.f32 0.0, %v554
    %556 = vdwg.mxu0
    %557 = vmatpush.msra.mxu0 %v82
    %558 = vmatpush.msra.mxu0 %v80
    %559 = vmatpush.msra.mxu0 %v78
    %560 = vmatpush.msra.mxu0 %v76
    %561 = vmatpush.msra.mxu0 %v74
    %562 = vmatpush.msra.mxu0 %v72
    %563 = vmatpush.msra.mxu0 %v70
    %564 = vmatpush.msra.mxu0 %v68
    %565 = vmatpush.msra.mxu0 %v66
    %566 = vmatpush.msra.mxu0 %v64
    %567 = vmatpush.msra.mxu0 %v62
    %568 = vmatpush.msra.mxu0 %v60
    %569 = vmatpush.msra.mxu0 %v58
    %570 = vmatpush.msra.mxu0 %v56
    %571 = vmatpush.msra.mxu0 %v54
    %572 = vmatpush.msra.mxu0 %v52
    %573 = vmatmul.f32.gmra.mxu0 %v532
    %v574 = vpop.f32.mrf.mxu0
    %v575 = vadd.f32 %v555, %v574
    %576 = vdwg.mxu0
    %577 = vmatpush.msra.mxu0 %v114
    %578 = vmatpush.msra.mxu0 %v112
    %579 = vmatpush.msra.mxu0 %v110
    %580 = vmatpush.msra.mxu0 %v108
    %581 = vmatpush.msra.mxu0 %v106
    %582 = vmatpush.msra.mxu0 %v104
    %583 = vmatpush.msra.mxu0 %v102
    %584 = vmatpush.msra.mxu0 %v100
    %585 = vmatpush.msra.mxu0 %v98
    %586 = vmatpush.msra.mxu0 %v96
    %587 = vmatpush.msra.mxu0 %v94
    %588 = vmatpush.msra.mxu0 %v92
    %589 = vmatpush.msra.mxu0 %v90
    %590 = vmatpush.msra.mxu0 %v88
    %591 = vmatpush.msra.mxu0 %v86
    %592 = vmatpush.msra.mxu0 %v84
    %593 = vmatmul.f32.gmra.mxu0 %v533
    %v594 = vpop.f32.mrf.mxu0
    %v595 = vadd.f32 %v575, %v594
    %596 = vdwg.mxu0
    %597 = vmatpush.msra.mxu0 %v51
    %598 = vmatpush.msra.mxu0 %v49
    %599 = vmatpush.msra.mxu0 %v47
    %600 = vmatpush.msra.mxu0 %v45
    %601 = vmatpush.msra.mxu0 %v43
    %602 = vmatpush.msra.mxu0 %v41
    %603 = vmatpush.msra.mxu0 %v39
    %604 = vmatpush.msra.mxu0 %v37
    %605 = vmatpush.msra.mxu0 %v35
    %606 = vmatpush.msra.mxu0 %v33
    %607 = vmatpush.msra.mxu0 %v31
    %608 = vmatpush.msra.mxu0 %v29
    %609 = vmatpush.msra.mxu0 %v27
    %610 = vmatpush.msra.mxu0 %v25
    %611 = vmatpush.msra.mxu0 %v23
    %612 = vmatpush.msra.mxu0 %v21
    %613 = vmatmul.f32.gmra.mxu0 %v531
    %v614 = vpop.f32.mrf.mxu0
    %v615 = vadd.f32 0.0, %v614
    %616 = vdwg.mxu0
    %617 = vmatpush.msra.mxu0 %v83
    %618 = vmatpush.msra.mxu0 %v81
    %619 = vmatpush.msra.mxu0 %v79
    %620 = vmatpush.msra.mxu0 %v77
    %621 = vmatpush.msra.mxu0 %v75
    %622 = vmatpush.msra.mxu0 %v73
    %623 = vmatpush.msra.mxu0 %v71
    %624 = vmatpush.msra.mxu0 %v69
    %625 = vmatpush.msra.mxu0 %v67
    %626 = vmatpush.msra.mxu0 %v65
    %627 = vmatpush.msra.mxu0 %v63
    %628 = vmatpush.msra.mxu0 %v61
    %629 = vmatpush.msra.mxu0 %v59
    %630 = vmatpush.msra.mxu0 %v57
    %631 = vmatpush.msra.mxu0 %v55
    %632 = vmatpush.msra.mxu0 %v53
    %633 = vmatmul.f32.gmra.mxu0 %v532
    %v634 = vpop.f32.mrf.mxu0
    %v635 = vadd.f32 %v615, %v634
    %636 = vdwg.mxu0
    %637 = vmatpush.msra.mxu0 %v115
    %638 = vmatpush.msra.mxu0 %v113
    %639 = vmatpush.msra.mxu0 %v111
    %640 = vmatpush.msra.mxu0 %v109
    %641 = vmatpush.msra.mxu0 %v107
    %642 = vmatpush.msra.mxu0 %v105
    %643 = vmatpush.msra.mxu0 %v103
    %644 = vmatpush.msra.mxu0 %v101
    %645 = vmatpush.msra.mxu0 %v99
    %646 = vmatpush.msra.mxu0 %v97
    %647 = vmatpush.msra.mxu0 %v95
    %648 = vmatpush.msra.mxu0 %v93
    %649 = vmatpush.msra.mxu0 %v91
    %650 = vmatpush.msra.mxu0 %v89
    %651 = vmatpush.msra.mxu0 %v87
    %652 = vmatpush.msra.mxu0 %v85
    %653 = vmatmul.f32.gmra.mxu0 %v533
    %v654 = vpop.f32.mrf.mxu0
    %v655 = vadd.f32 %v635, %v654
    %656 = vdwg.mxu0
    %v657 = vmax.f32 %v595, 0.0
    %v658 = vmax.f32 %v655, 0.0
    %v661 = vrot.slane %v658, 6
    %v662 = vsel %vm250, %v657, %v661
    %664 = vst [vmem:[#allocation2 + $0x10] sm:$0xf] %v662
    %v665 = vld [vmem:[%s0 + $0x8] sm:$0x3f]
    %667 = vst [vmem:[#allocation1] ss:$4 sm:$0xff] %v665
    %v668 = vld.sshfl [vmem:[#allocation1] sm:$0xff pattern:$0x73625140]
    %v669 = vld.sshfl [vmem:[#allocation1 + $0x8] sm:$0xff pattern:$0x73625140]
    %v670 = vld.sshfl [vmem:[#allocation1 + $0x10] sm:$0xff pattern:$0x73625140]
    %674 = vmatpush.msra.mxu0 %v50
    %675 = vmatpush.msra.mxu0 %v48
    %676 = vmatpush.msra.mxu0 %v46
    %677 = vmatpush.msra.mxu0 %v44
    %678 = vmatpush.msra.mxu0 %v42
    %679 = vmatpush.msra.mxu0 %v40
    %680 = vmatpush.msra.mxu0 %v38
    %681 = vmatpush.msra.mxu0 %v36
    %682 = vmatpush.msra.mxu0 %v34
    %683 = vmatpush.msra.mxu0 %v32
    %684 = vmatpush.msra.mxu0 %v30
    %685 = vmatpush.msra.mxu0 %v28
    %686 = vmatpush.msra.mxu0 %v26
    %687 = vmatpush.msra.mxu0 %v24
    %688 = vmatpush.msra.mxu0 %v22
    %689 = vmatpush.msra.mxu0 %v20
    %690 = vmatmul.f32.gmra.mxu0 %v668
    %v691 = vpop.f32.mrf.mxu0
    %v692 = vadd.f32 0.0, %v691
    %693 = vdwg.mxu0
    %694 = vmatpush.msra.mxu0 %v82
    %695 = vmatpush.msra.mxu0 %v80
    %696 = vmatpush.msra.mxu0 %v78
    %697 = vmatpush.msra.mxu0 %v76
    %698 = vmatpush.msra.mxu0 %v74
    %699 = vmatpush.msra.mxu0 %v72
    %700 = vmatpush.msra.mxu0 %v70
    %701 = vmatpush.msra.mxu0 %v68
    %702 = vmatpush.msra.mxu0 %v66
    %703 = vmatpush.msra.mxu0 %v64
    %704 = vmatpush.msra.mxu0 %v62
    %705 = vmatpush.msra.mxu0 %v60
    %706 = vmatpush.msra.mxu0 %v58
    %707 = vmatpush.msra.mxu0 %v56
    %708 = vmatpush.msra.mxu0 %v54
    %709 = vmatpush.msra.mxu0 %v52
    %710 = vmatmul.f32.gmra.mxu0 %v669
    %v711 = vpop.f32.mrf.mxu0
    %v712 = vadd.f32 %v692, %v711
    %713 = vdwg.mxu0
    %714 = vmatpush.msra.mxu0 %v114
    %715 = vmatpush.msra.mxu0 %v112
    %716 = vmatpush.msra.mxu0 %v110
    %717 = vmatpush.msra.mxu0 %v108
    %718 = vmatpush.msra.mxu0 %v106
    %719 = vmatpush.msra.mxu0 %v104
    %720 = vmatpush.msra.mxu0 %v102
    %721 = vmatpush.msra.mxu0 %v100
    %722 = vmatpush.msra.mxu0 %v98
    %723 = vmatpush.msra.mxu0 %v96
    %724 = vmatpush.msra.mxu0 %v94
    %725 = vmatpush.msra.mxu0 %v92
    %726 = vmatpush.msra.mxu0 %v90
    %727 = vmatpush.msra.mxu0 %v88
    %728 = vmatpush.msra.mxu0 %v86
    %729 = vmatpush.msra.mxu0 %v84
    %730 = vmatmul.f32.gmra.mxu0 %v670
    %v731 = vpop.f32.mrf.mxu0
    %v732 = vadd.f32 %v712, %v731
    %733 = vdwg.mxu0
    %734 = vmatpush.msra.mxu0 %v51
    %735 = vmatpush.msra.mxu0 %v49
    %736 = vmatpush.msra.mxu0 %v47
    %737 = vmatpush.msra.mxu0 %v45
    %738 = vmatpush.msra.mxu0 %v43
    %739 = vmatpush.msra.mxu0 %v41
    %740 = vmatpush.msra.mxu0 %v39
    %741 = vmatpush.msra.mxu0 %v37
    %742 = vmatpush.msra.mxu0 %v35
    %743 = vmatpush.msra.mxu0 %v33
    %744 = vmatpush.msra.mxu0 %v31
    %745 = vmatpush.msra.mxu0 %v29
    %746 = vmatpush.msra.mxu0 %v27
    %747 = vmatpush.msra.mxu0 %v25
    %748 = vmatpush.msra.mxu0 %v23
    %749 = vmatpush.msra.mxu0 %v21
    %750 = vmatmul.f32.gmra.mxu0 %v668
    %v751 = vpop.f32.mrf.mxu0
    %v752 = vadd.f32 0.0, %v751
    %753 = vdwg.mxu0
    %754 = vmatpush.msra.mxu0 %v83
    %755 = vmatpush.msra.mxu0 %v81
    %756 = vmatpush.msra.mxu0 %v79
    %757 = vmatpush.msra.mxu0 %v77
    %758 = vmatpush.msra.mxu0 %v75
    %759 = vmatpush.msra.mxu0 %v73
    %760 = vmatpush.msra.mxu0 %v71
    %761 = vmatpush.msra.mxu0 %v69
    %762 = vmatpush.msra.mxu0 %v67
    %763 = vmatpush.msra.mxu0 %v65
    %764 = vmatpush.msra.mxu0 %v63
    %765 = vmatpush.msra.mxu0 %v61
    %766 = vmatpush.msra.mxu0 %v59
    %767 = vmatpush.msra.mxu0 %v57
    %768 = vmatpush.msra.mxu0 %v55
    %769 = vmatpush.msra.mxu0 %v53
    %770 = vmatmul.f32.gmra.mxu0 %v669
    %v771 = vpop.f32.mrf.mxu0
    %v772 = vadd.f32 %v752, %v771
    %773 = vdwg.mxu0
    %774 = vmatpush.msra.mxu0 %v115
    %775 = vmatpush.msra.mxu0 %v113
    %776 = vmatpush.msra.mxu0 %v111
    %777 = vmatpush.msra.mxu0 %v109
    %778 = vmatpush.msra.mxu0 %v107
    %779 = vmatpush.msra.mxu0 %v105
    %780 = vmatpush.msra.mxu0 %v103
    %781 = vmatpush.msra.mxu0 %v101
    %782 = vmatpush.msra.mxu0 %v99
    %783 = vmatpush.msra.mxu0 %v97
    %784 = vmatpush.msra.mxu0 %v95
    %785 = vmatpush.msra.mxu0 %v93
    %786 = vmatpush.msra.mxu0 %v91
    %787 = vmatpush.msra.mxu0 %v89
    %788 = vmatpush.msra.mxu0 %v87
    %789 = vmatpush.msra.mxu0 %v85
    %790 = vmatmul.f32.gmra.mxu0 %v670
    %v791 = vpop.f32.mrf.mxu0
    %v792 = vadd.f32 %v772, %v791
    %793 = vdwg.mxu0
    %v794 = vmax.f32 %v732, 0.0
    %v795 = vmax.f32 %v792, 0.0
    %v798 = vrot.slane %v795, 6
    %v799 = vsel %vm250, %v794, %v798
    %801 = vst [vmem:[#allocation2 + $0x14] sm:$0xf] %v799
    %v802 = vld [vmem:[%s0 + $0xa] sm:$0x3f]
    %804 = vst [vmem:[#allocation1] ss:$4 sm:$0xff] %v802
    %v805 = vld.sshfl [vmem:[#allocation1] sm:$0xff pattern:$0x73625140]
    %v806 = vld.sshfl [vmem:[#allocation1 + $0x8] sm:$0xff pattern:$0x73625140]
    %v807 = vld.sshfl [vmem:[#allocation1 + $0x10] sm:$0xff pattern:$0x73625140]
    %811 = vmatpush.msra.mxu0 %v50
    %812 = vmatpush.msra.mxu0 %v48
    %813 = vmatpush.msra.mxu0 %v46
    %814 = vmatpush.msra.mxu0 %v44
    %815 = vmatpush.msra.mxu0 %v42
    %816 = vmatpush.msra.mxu0 %v40
    %817 = vmatpush.msra.mxu0 %v38
    %818 = vmatpush.msra.mxu0 %v36
    %819 = vmatpush.msra.mxu0 %v34
    %820 = vmatpush.msra.mxu0 %v32
    %821 = vmatpush.msra.mxu0 %v30
    %822 = vmatpush.msra.mxu0 %v28
    %823 = vmatpush.msra.mxu0 %v26
    %824 = vmatpush.msra.mxu0 %v24
    %825 = vmatpush.msra.mxu0 %v22
    %826 = vmatpush.msra.mxu0 %v20
    %827 = vmatmul.f32.gmra.mxu0 %v805
    %v828 = vpop.f32.mrf.mxu0
    %v829 = vadd.f32 0.0, %v828
    %830 = vdwg.mxu0
    %831 = vmatpush.msra.mxu0 %v82
    %832 = vmatpush.msra.mxu0 %v80
    %833 = vmatpush.msra.mxu0 %v78
    %834 = vmatpush.msra.mxu0 %v76
    %835 = vmatpush.msra.mxu0 %v74
    %836 = vmatpush.msra.mxu0 %v72
    %837 = vmatpush.msra.mxu0 %v70
    %838 = vmatpush.msra.mxu0 %v68
    %839 = vmatpush.msra.mxu0 %v66
    %840 = vmatpush.msra.mxu0 %v64
    %841 = vmatpush.msra.mxu0 %v62
    %842 = vmatpush.msra.mxu0 %v60
    %843 = vmatpush.msra.mxu0 %v58
    %844 = vmatpush.msra.mxu0 %v56
    %845 = vmatpush.msra.mxu0 %v54
    %846 = vmatpush.msra.mxu0 %v52
    %847 = vmatmul.f32.gmra.mxu0 %v806
    %v848 = vpop.f32.mrf.mxu0
    %v849 = vadd.f32 %v829, %v848
    %850 = vdwg.mxu0
    %851 = vmatpush.msra.mxu0 %v114
    %852 = vmatpush.msra.mxu0 %v112
    %853 = vmatpush.msra.mxu0 %v110
    %854 = vmatpush.msra.mxu0 %v108
    %855 = vmatpush.msra.mxu0 %v106
    %856 = vmatpush.msra.mxu0 %v104
    %857 = vmatpush.msra.mxu0 %v102
    %858 = vmatpush.msra.mxu0 %v100
    %859 = vmatpush.msra.mxu0 %v98
    %860 = vmatpush.msra.mxu0 %v96
    %861 = vmatpush.msra.mxu0 %v94
    %862 = vmatpush.msra.mxu0 %v92
    %863 = vmatpush.msra.mxu0 %v90
    %864 = vmatpush.msra.mxu0 %v88
    %865 = vmatpush.msra.mxu0 %v86
    %866 = vmatpush.msra.mxu0 %v84
    %867 = vmatmul.f32.gmra.mxu0 %v807
    %v868 = vpop.f32.mrf.mxu0
    %v869 = vadd.f32 %v849, %v868
    %870 = vdwg.mxu0
    %871 = vmatpush.msra.mxu0 %v51
    %872 = vmatpush.msra.mxu0 %v49
    %873 = vmatpush.msra.mxu0 %v47
    %874 = vmatpush.msra.mxu0 %v45
    %875 = vmatpush.msra.mxu0 %v43
    %876 = vmatpush.msra.mxu0 %v41
    %877 = vmatpush.msra.mxu0 %v39
    %878 = vmatpush.msra.mxu0 %v37
    %879 = vmatpush.msra.mxu0 %v35
    %880 = vmatpush.msra.mxu0 %v33
    %881 = vmatpush.msra.mxu0 %v31
    %882 = vmatpush.msra.mxu0 %v29
    %883 = vmatpush.msra.mxu0 %v27
    %884 = vmatpush.msra.mxu0 %v25
    %885 = vmatpush.msra.mxu0 %v23
    %886 = vmatpush.msra.mxu0 %v21
    %887 = vmatmul.f32.gmra.mxu0 %v805
    %v888 = vpop.f32.mrf.mxu0
    %v889 = vadd.f32 0.0, %v888
    %890 = vdwg.mxu0
    %891 = vmatpush.msra.mxu0 %v83
    %892 = vmatpush.msra.mxu0 %v81
    %893 = vmatpush.msra.mxu0 %v79
    %894 = vmatpush.msra.mxu0 %v77
    %895 = vmatpush.msra.mxu0 %v75
    %896 = vmatpush.msra.mxu0 %v73
    %897 = vmatpush.msra.mxu0 %v71
    %898 = vmatpush.msra.mxu0 %v69
    %899 = vmatpush.msra.mxu0 %v67
    %900 = vmatpush.msra.mxu0 %v65
    %901 = vmatpush.msra.mxu0 %v63
    %902 = vmatpush.msra.mxu0 %v61
    %903 = vmatpush.msra.mxu0 %v59
    %904 = vmatpush.msra.mxu0 %v57
    %905 = vmatpush.msra.mxu0 %v55
    %906 = vmatpush.msra.mxu0 %v53
    %907 = vmatmul.f32.gmra.mxu0 %v806
    %v908 = vpop.f32.mrf.mxu0
    %v909 = vadd.f32 %v889, %v908
    %910 = vdwg.mxu0
    %911 = vmatpush.msra.mxu0 %v115
    %912 = vmatpush.msra.mxu0 %v113
    %913 = vmatpush.msra.mxu0 %v111
    %914 = vmatpush.msra.mxu0 %v109
    %915 = vmatpush.msra.mxu0 %v107
    %916 = vmatpush.msra.mxu0 %v105
    %917 = vmatpush.msra.mxu0 %v103
    %918 = vmatpush.msra.mxu0 %v101
    %919 = vmatpush.msra.mxu0 %v99
    %920 = vmatpush.msra.mxu0 %v97
    %921 = vmatpush.msra.mxu0 %v95
    %922 = vmatpush.msra.mxu0 %v93
    %923 = vmatpush.msra.mxu0 %v91
    %924 = vmatpush.msra.mxu0 %v89
    %925 = vmatpush.msra.mxu0 %v87
    %926 = vmatpush.msra.mxu0 %v85
    %927 = vmatmul.f32.gmra.mxu0 %v807
    %v928 = vpop.f32.mrf.mxu0
    %v929 = vadd.f32 %v909, %v928
    %930 = vdwg.mxu0
    %v931 = vmax.f32 %v869, 0.0
    %v932 = vmax.f32 %v929, 0.0
    %v935 = vrot.slane %v932, 6
    %v936 = vsel %vm250, %v931, %v935
    %938 = vst [vmem:[#allocation2 + $0x18] sm:$0xf] %v936
    %v939 = vld [vmem:[%s0 + $0xc] sm:$0x3f]
    %941 = vst [vmem:[#allocation1] ss:$4 sm:$0xff] %v939
    %v942 = vld.sshfl [vmem:[#allocation1] sm:$0xff pattern:$0x73625140]
    %v943 = vld.sshfl [vmem:[#allocation1 + $0x8] sm:$0xff pattern:$0x73625140]
    %v944 = vld.sshfl [vmem:[#allocation1 + $0x10] sm:$0xff pattern:$0x73625140]
    %948 = vmatpush.msra.mxu0 %v50
    %949 = vmatpush.msra.mxu0 %v48
    %950 = vmatpush.msra.mxu0 %v46
    %951 = vmatpush.msra.mxu0 %v44
    %952 = vmatpush.msra.mxu0 %v42
    %953 = vmatpush.msra.mxu0 %v40
    %954 = vmatpush.msra.mxu0 %v38
    %955 = vmatpush.msra.mxu0 %v36
    %956 = vmatpush.msra.mxu0 %v34
    %957 = vmatpush.msra.mxu0 %v32
    %958 = vmatpush.msra.mxu0 %v30
    %959 = vmatpush.msra.mxu0 %v28
    %960 = vmatpush.msra.mxu0 %v26
    %961 = vmatpush.msra.mxu0 %v24
    %962 = vmatpush.msra.mxu0 %v22
    %963 = vmatpush.msra.mxu0 %v20
    %964 = vmatmul.f32.gmra.mxu0 %v942
    %v965 = vpop.f32.mrf.mxu0
    %v966 = vadd.f32 0.0, %v965
    %967 = vdwg.mxu0
    %968 = vmatpush.msra.mxu0 %v82
    %969 = vmatpush.msra.mxu0 %v80
    %970 = vmatpush.msra.mxu0 %v78
    %971 = vmatpush.msra.mxu0 %v76
    %972 = vmatpush.msra.mxu0 %v74
    %973 = vmatpush.msra.mxu0 %v72
    %974 = vmatpush.msra.mxu0 %v70
    %975 = vmatpush.msra.mxu0 %v68
    %976 = vmatpush.msra.mxu0 %v66
    %977 = vmatpush.msra.mxu0 %v64
    %978 = vmatpush.msra.mxu0 %v62
    %979 = vmatpush.msra.mxu0 %v60
    %980 = vmatpush.msra.mxu0 %v58
    %981 = vmatpush.msra.mxu0 %v56
    %982 = vmatpush.msra.mxu0 %v54
    %983 = vmatpush.msra.mxu0 %v52
    %984 = vmatmul.f32.gmra.mxu0 %v943
    %v985 = vpop.f32.mrf.mxu0
    %v986 = vadd.f32 %v966, %v985
    %987 = vdwg.mxu0
    %988 = vmatpush.msra.mxu0 %v114
    %989 = vmatpush.msra.mxu0 %v112
    %990 = vmatpush.msra.mxu0 %v110
    %991 = vmatpush.msra.mxu0 %v108
    %992 = vmatpush.msra.mxu0 %v106
    %993 = vmatpush.msra.mxu0 %v104
    %994 = vmatpush.msra.mxu0 %v102
    %995 = vmatpush.msra.mxu0 %v100
    %996 = vmatpush.msra.mxu0 %v98
    %997 = vmatpush.msra.mxu0 %v96
    %998 = vmatpush.msra.mxu0 %v94
    %999 = vmatpush.msra.mxu0 %v92
    %1000 = vmatpush.msra.mxu0 %v90
    %1001 = vmatpush.msra.mxu0 %v88
    %1002 = vmatpush.msra.mxu0 %v86
    %1003 = vmatpush.msra.mxu0 %v84
    %1004 = vmatmul.f32.gmra.mxu0 %v944
    %v1005 = vpop.f32.mrf.mxu0
    %v1006 = vadd.f32 %v986, %v1005
    %1007 = vdwg.mxu0
    %1008 = vmatpush.msra.mxu0 %v51
    %1009 = vmatpush.msra.mxu0 %v49
    %1010 = vmatpush.msra.mxu0 %v47
    %1011 = vmatpush.msra.mxu0 %v45
    %1012 = vmatpush.msra.mxu0 %v43
    %1013 = vmatpush.msra.mxu0 %v41
    %1014 = vmatpush.msra.mxu0 %v39
    %1015 = vmatpush.msra.mxu0 %v37
    %1016 = vmatpush.msra.mxu0 %v35
    %1017 = vmatpush.msra.mxu0 %v33
    %1018 = vmatpush.msra.mxu0 %v31
    %1019 = vmatpush.msra.mxu0 %v29
    %1020 = vmatpush.msra.mxu0 %v27
    %1021 = vmatpush.msra.mxu0 %v25
    %1022 = vmatpush.msra.mxu0 %v23
    %1023 = vmatpush.msra.mxu0 %v21
    %1024 = vmatmul.f32.gmra.mxu0 %v942
    %v1025 = vpop.f32.mrf.mxu0
    %v1026 = vadd.f32 0.0, %v1025
    %1027 = vdwg.mxu0
    %1028 = vmatpush.msra.mxu0 %v83
    %1029 = vmatpush.msra.mxu0 %v81
    %1030 = vmatpush.msra.mxu0 %v79
    %1031 = vmatpush.msra.mxu0 %v77
    %1032 = vmatpush.msra.mxu0 %v75
    %1033 = vmatpush.msra.mxu0 %v73
    %1034 = vmatpush.msra.mxu0 %v71
    %1035 = vmatpush.msra.mxu0 %v69
    %1036 = vmatpush.msra.mxu0 %v67
    %1037 = vmatpush.msra.mxu0 %v65
    %1038 = vmatpush.msra.mxu0 %v63
    %1039 = vmatpush.msra.mxu0 %v61
    %1040 = vmatpush.msra.mxu0 %v59
    %1041 = vmatpush.msra.mxu0 %v57
    %1042 = vmatpush.msra.mxu0 %v55
    %1043 = vmatpush.msra.mxu0 %v53
    %1044 = vmatmul.f32.gmra.mxu0 %v943
    %v1045 = vpop.f32.mrf.mxu0
    %v1046 = vadd.f32 %v1026, %v1045
    %1047 = vdwg.mxu0
    %1048 = vmatpush.msra.mxu0 %v115
    %1049 = vmatpush.msra.mxu0 %v113
    %1050 = vmatpush.msra.mxu0 %v111
    %1051 = vmatpush.msra.mxu0 %v109
    %1052 = vmatpush.msra.mxu0 %v107
    %1053 = vmatpush.msra.mxu0 %v105
    %1054 = vmatpush.msra.mxu0 %v103
    %1055 = vmatpush.msra.mxu0 %v101
    %1056 = vmatpush.msra.mxu0 %v99
    %1057 = vmatpush.msra.mxu0 %v97
    %1058 = vmatpush.msra.mxu0 %v95
    %1059 = vmatpush.msra.mxu0 %v93
    %1060 = vmatpush.msra.mxu0 %v91
    %1061 = vmatpush.msra.mxu0 %v89
    %1062 = vmatpush.msra.mxu0 %v87
    %1063 = vmatpush.msra.mxu0 %v85
    %1064 = vmatmul.f32.gmra.mxu0 %v944
    %v1065 = vpop.f32.mrf.mxu0
    %v1066 = vadd.f32 %v1046, %v1065
    %1067 = vdwg.mxu0
    %v1068 = vmax.f32 %v1006, 0.0
    %v1069 = vmax.f32 %v1066, 0.0
    %v1072 = vrot.slane %v1069, 6
    %v1073 = vsel %vm250, %v1068, %v1072
    %1075 = vst [vmem:[#allocation2 + $0x1c] sm:$0xf] %v1073
    %v1076 = vld [vmem:[%s0 + $0xe] sm:$0x3f]
    %1078 = vst [vmem:[#allocation1] ss:$4 sm:$0xff] %v1076
    %v1079 = vld.sshfl [vmem:[#allocation1] sm:$0xff pattern:$0x73625140]
    %v1080 = vld.sshfl [vmem:[#allocation1 + $0x8] sm:$0xff pattern:$0x73625140]
    %v1081 = vld.sshfl [vmem:[#allocation1 + $0x10] sm:$0xff pattern:$0x73625140]
    %1085 = vmatpush.msra.mxu0 %v50
    %1086 = vmatpush.msra.mxu0 %v48
    %1087 = vmatpush.msra.mxu0 %v46
    %1088 = vmatpush.msra.mxu0 %v44
    %1089 = vmatpush.msra.mxu0 %v42
    %1090 = vmatpush.msra.mxu0 %v40
    %1091 = vmatpush.msra.mxu0 %v38
    %1092 = vmatpush.msra.mxu0 %v36
    %1093 = vmatpush.msra.mxu0 %v34
    %1094 = vmatpush.msra.mxu0 %v32
    %1095 = vmatpush.msra.mxu0 %v30
    %1096 = vmatpush.msra.mxu0 %v28
    %1097 = vmatpush.msra.mxu0 %v26
    %1098 = vmatpush.msra.mxu0 %v24
    %1099 = vmatpush.msra.mxu0 %v22
    %1100 = vmatpush.msra.mxu0 %v20
    %1101 = vmatmul.f32.gmra.mxu0 %v1079
    %v1102 = vpop.f32.mrf.mxu0
    %v1103 = vadd.f32 0.0, %v1102
    %1104 = vdwg.mxu0
    %1105 = vmatpush.msra.mxu0 %v82
    %1106 = vmatpush.msra.mxu0 %v80
    %1107 = vmatpush.msra.mxu0 %v78
    %1108 = vmatpush.msra.mxu0 %v76
    %1109 = vmatpush.msra.mxu0 %v74
    %1110 = vmatpush.msra.mxu0 %v72
    %1111 = vmatpush.msra.mxu0 %v70
    %1112 = vmatpush.msra.mxu0 %v68
    %1113 = vmatpush.msra.mxu0 %v66
    %1114 = vmatpush.msra.mxu0 %v64
    %1115 = vmatpush.msra.mxu0 %v62
    %1116 = vmatpush.msra.mxu0 %v60
    %1117 = vmatpush.msra.mxu0 %v58
    %1118 = vmatpush.msra.mxu0 %v56
    %1119 = vmatpush.msra.mxu0 %v54
    %1120 = vmatpush.msra.mxu0 %v52
    %1121 = vmatmul.f32.gmra.mxu0 %v1080
    %v1122 = vpop.f32.mrf.mxu0
    %v1123 = vadd.f32 %v1103, %v1122
    %1124 = vdwg.mxu0
    %1125 = vmatpush.msra.mxu0 %v114
    %1126 = vmatpush.msra.mxu0 %v112
    %1127 = vmatpush.msra.mxu0 %v110
    %1128 = vmatpush.msra.mxu0 %v108
    %1129 = vmatpush.msra.mxu0 %v106
    %1130 = vmatpush.msra.mxu0 %v104
    %1131 = vmatpush.msra.mxu0 %v102
    %1132 = vmatpush.msra.mxu0 %v100
    %1133 = vmatpush.msra.mxu0 %v98
    %1134 = vmatpush.msra.mxu0 %v96
    %1135 = vmatpush.msra.mxu0 %v94
    %1136 = vmatpush.msra.mxu0 %v92
    %1137 = vmatpush.msra.mxu0 %v90
    %1138 = vmatpush.msra.mxu0 %v88
    %1139 = vmatpush.msra.mxu0 %v86
    %1140 = vmatpush.msra.mxu0 %v84
    %1141 = vmatmul.f32.gmra.mxu0 %v1081
    %v1142 = vpop.f32.mrf.mxu0
    %v1143 = vadd.f32 %v1123, %v1142
    %1144 = vdwg.mxu0
    %1145 = vmatpush.msra.mxu0 %v51
    %1146 = vmatpush.msra.mxu0 %v49
    %1147 = vmatpush.msra.mxu0 %v47
    %1148 = vmatpush.msra.mxu0 %v45
    %1149 = vmatpush.msra.mxu0 %v43
    %1150 = vmatpush.msra.mxu0 %v41
    %1151 = vmatpush.msra.mxu0 %v39
    %1152 = vmatpush.msra.mxu0 %v37
    %1153 = vmatpush.msra.mxu0 %v35
    %1154 = vmatpush.msra.mxu0 %v33
    %1155 = vmatpush.msra.mxu0 %v31
    %1156 = vmatpush.msra.mxu0 %v29
    %1157 = vmatpush.msra.mxu0 %v27
    %1158 = vmatpush.msra.mxu0 %v25
    %1159 = vmatpush.msra.mxu0 %v23
    %1160 = vmatpush.msra.mxu0 %v21
    %1161 = vmatmul.f32.gmra.mxu0 %v1079
    %v1162 = vpop.f32.mrf.mxu0
    %v1163 = vadd.f32 0.0, %v1162
    %1164 = vdwg.mxu0
    %1165 = vmatpush.msra.mxu0 %v83
    %1166 = vmatpush.msra.mxu0 %v81
    %1167 = vmatpush.msra.mxu0 %v79
    %1168 = vmatpush.msra.mxu0 %v77
    %1169 = vmatpush.msra.mxu0 %v75
    %1170 = vmatpush.msra.mxu0 %v73
    %1171 = vmatpush.msra.mxu0 %v71
    %1172 = vmatpush.msra.mxu0 %v69
    %1173 = vmatpush.msra.mxu0 %v67
    %1174 = vmatpush.msra.mxu0 %v65
    %1175 = vmatpush.msra.mxu0 %v63
    %1176 = vmatpush.msra.mxu0 %v61
    %1177 = vmatpush.msra.mxu0 %v59
    %1178 = vmatpush.msra.mxu0 %v57
    %1179 = vmatpush.msra.mxu0 %v55
    %1180 = vmatpush.msra.mxu0 %v53
    %1181 = vmatmul.f32.gmra.mxu0 %v1080
    %v1182 = vpop.f32.mrf.mxu0
    %v1183 = vadd.f32 %v1163, %v1182
    %1184 = vdwg.mxu0
    %1185 = vmatpush.msra.mxu0 %v115
    %1186 = vmatpush.msra.mxu0 %v113
    %1187 = vmatpush.msra.mxu0 %v111
    %1188 = vmatpush.msra.mxu0 %v109
    %1189 = vmatpush.msra.mxu0 %v107
    %1190 = vmatpush.msra.mxu0 %v105
    %1191 = vmatpush.msra.mxu0 %v103
    %1192 = vmatpush.msra.mxu0 %v101
    %1193 = vmatpush.msra.mxu0 %v99
    %1194 = vmatpush.msra.mxu0 %v97
    %1195 = vmatpush.msra.mxu0 %v95
    %1196 = vmatpush.msra.mxu0 %v93
    %1197 = vmatpush.msra.mxu0 %v91
    %1198 = vmatpush.msra.mxu0 %v89
    %1199 = vmatpush.msra.mxu0 %v87
    %1200 = vmatpush.msra.mxu0 %v85
    %1201 = vmatmul.f32.gmra.mxu0 %v1081
    %v1202 = vpop.f32.mrf.mxu0
    %v1203 = vadd.f32 %v1183, %v1202
    %1204 = vdwg.mxu0
    %v1205 = vmax.f32 %v1143, 0.0
    %v1206 = vmax.f32 %v1203, 0.0
    %v1209 = vrot.slane %v1206, 6
    %v1210 = vsel %vm250, %v1205, %v1209
    %1212 = vst [vmem:[#allocation2 + $0x20] sm:$0xf] %v1210
    %v1213 = vld [vmem:[%s0 + $0x10] sm:$0x3f]
    %1215 = vst [vmem:[#allocation1] ss:$4 sm:$0xff] %v1213
    %v1216 = vld.sshfl [vmem:[#allocation1] sm:$0xff pattern:$0x73625140]
    %v1217 = vld.sshfl [vmem:[#allocation1 + $0x8] sm:$0xff pattern:$0x73625140]
    %v1218 = vld.sshfl [vmem:[#allocation1 + $0x10] sm:$0xff pattern:$0x73625140]
    %1222 = vmatpush.msra.mxu0 %v50
    %1223 = vmatpush.msra.mxu0 %v48
    %1224 = vmatpush.msra.mxu0 %v46
    %1225 = vmatpush.msra.mxu0 %v44
    %1226 = vmatpush.msra.mxu0 %v42
    %1227 = vmatpush.msra.mxu0 %v40
    %1228 = vmatpush.msra.mxu0 %v38
    %1229 = vmatpush.msra.mxu0 %v36
    %1230 = vmatpush.msra.mxu0 %v34
    %1231 = vmatpush.msra.mxu0 %v32
    %1232 = vmatpush.msra.mxu0 %v30
    %1233 = vmatpush.msra.mxu0 %v28
    %1234 = vmatpush.msra.mxu0 %v26
    %1235 = vmatpush.msra.mxu0 %v24
    %1236 = vmatpush.msra.mxu0 %v22
    %1237 = vmatpush.msra.mxu0 %v20
    %1238 = vmatmul.f32.gmra.mxu0 %v1216
    %v1239 = vpop.f32.mrf.mxu0
    %v1240 = vadd.f32 0.0, %v1239
    %1241 = vdwg.mxu0
    %1242 = vmatpush.msra.mxu0 %v82
    %1243 = vmatpush.msra.mxu0 %v80
    %1244 = vmatpush.msra.mxu0 %v78
    %1245 = vmatpush.msra.mxu0 %v76
    %1246 = vmatpush.msra.mxu0 %v74
    %1247 = vmatpush.msra.mxu0 %v72
    %1248 = vmatpush.msra.mxu0 %v70
    %1249 = vmatpush.msra.mxu0 %v68
    %1250 = vmatpush.msra.mxu0 %v66
    %1251 = vmatpush.msra.mxu0 %v64
    %1252 = vmatpush.msra.mxu0 %v62
    %1253 = vmatpush.msra.mxu0 %v60
    %1254 = vmatpush.msra.mxu0 %v58
    %1255 = vmatpush.msra.mxu0 %v56
    %1256 = vmatpush.msra.mxu0 %v54
    %1257 = vmatpush.msra.mxu0 %v52
    %1258 = vmatmul.f32.gmra.mxu0 %v1217
    %v1259 = vpop.f32.mrf.mxu0
    %v1260 = vadd.f32 %v1240, %v1259
    %1261 = vdwg.mxu0
    %1262 = vmatpush.msra.mxu0 %v114
    %1263 = vmatpush.msra.mxu0 %v112
    %1264 = vmatpush.msra.mxu0 %v110
    %1265 = vmatpush.msra.mxu0 %v108
    %1266 = vmatpush.msra.mxu0 %v106
    %1267 = vmatpush.msra.mxu0 %v104
    %1268 = vmatpush.msra.mxu0 %v102
    %1269 = vmatpush.msra.mxu0 %v100
    %1270 = vmatpush.msra.mxu0 %v98
    %1271 = vmatpush.msra.mxu0 %v96
    %1272 = vmatpush.msra.mxu0 %v94
    %1273 = vmatpush.msra.mxu0 %v92
    %1274 = vmatpush.msra.mxu0 %v90
    %1275 = vmatpush.msra.mxu0 %v88
    %1276 = vmatpush.msra.mxu0 %v86
    %1277 = vmatpush.msra.mxu0 %v84
    %1278 = vmatmul.f32.gmra.mxu0 %v1218
    %v1279 = vpop.f32.mrf.mxu0
    %v1280 = vadd.f32 %v1260, %v1279
    %1281 = vdwg.mxu0
    %1282 = vmatpush.msra.mxu0 %v51
    %1283 = vmatpush.msra.mxu0 %v49
    %1284 = vmatpush.msra.mxu0 %v47
    %1285 = vmatpush.msra.mxu0 %v45
    %1286 = vmatpush.msra.mxu0 %v43
    %1287 = vmatpush.msra.mxu0 %v41
    %1288 = vmatpush.msra.mxu0 %v39
    %1289 = vmatpush.msra.mxu0 %v37
    %1290 = vmatpush.msra.mxu0 %v35
    %1291 = vmatpush.msra.mxu0 %v33
    %1292 = vmatpush.msra.mxu0 %v31
    %1293 = vmatpush.msra.mxu0 %v29
    %1294 = vmatpush.msra.mxu0 %v27
    %1295 = vmatpush.msra.mxu0 %v25
    %1296 = vmatpush.msra.mxu0 %v23
    %1297 = vmatpush.msra.mxu0 %v21
    %1298 = vmatmul.f32.gmra.mxu0 %v1216
    %v1299 = vpop.f32.mrf.mxu0
    %v1300 = vadd.f32 0.0, %v1299
    %1301 = vdwg.mxu0
    %1302 = vmatpush.msra.mxu0 %v83
    %1303 = vmatpush.msra.mxu0 %v81
    %1304 = vmatpush.msra.mxu0 %v79
    %1305 = vmatpush.msra.mxu0 %v77
    %1306 = vmatpush.msra.mxu0 %v75
    %1307 = vmatpush.msra.mxu0 %v73
    %1308 = vmatpush.msra.mxu0 %v71
    %1309 = vmatpush.msra.mxu0 %v69
    %1310 = vmatpush.msra.mxu0 %v67
    %1311 = vmatpush.msra.mxu0 %v65
    %1312 = vmatpush.msra.mxu0 %v63
    %1313 = vmatpush.msra.mxu0 %v61
    %1314 = vmatpush.msra.mxu0 %v59
    %1315 = vmatpush.msra.mxu0 %v57
    %1316 = vmatpush.msra.mxu0 %v55
    %1317 = vmatpush.msra.mxu0 %v53
    %1318 = vmatmul.f32.gmra.mxu0 %v1217
    %v1319 = vpop.f32.mrf.mxu0
    %v1320 = vadd.f32 %v1300, %v1319
    %1321 = vdwg.mxu0
    %1322 = vmatpush.msra.mxu0 %v115
    %1323 = vmatpush.msra.mxu0 %v113
    %1324 = vmatpush.msra.mxu0 %v111
    %1325 = vmatpush.msra.mxu0 %v109
    %1326 = vmatpush.msra.mxu0 %v107
    %1327 = vmatpush.msra.mxu0 %v105
    %1328 = vmatpush.msra.mxu0 %v103
    %1329 = vmatpush.msra.mxu0 %v101
    %1330 = vmatpush.msra.mxu0 %v99
    %1331 = vmatpush.msra.mxu0 %v97
    %1332 = vmatpush.msra.mxu0 %v95
    %1333 = vmatpush.msra.mxu0 %v93
    %1334 = vmatpush.msra.mxu0 %v91
    %1335 = vmatpush.msra.mxu0 %v89
    %1336 = vmatpush.msra.mxu0 %v87
    %1337 = vmatpush.msra.mxu0 %v85
    %1338 = vmatmul.f32.gmra.mxu0 %v1218
    %v1339 = vpop.f32.mrf.mxu0
    %v1340 = vadd.f32 %v1320, %v1339
    %1341 = vdwg.mxu0
    %v1342 = vmax.f32 %v1280, 0.0
    %v1343 = vmax.f32 %v1340, 0.0
    %v1346 = vrot.slane %v1343, 6
    %v1347 = vsel %vm250, %v1342, %v1346
    %1349 = vst [vmem:[#allocation2 + $0x24] sm:$0xf] %v1347
    %v1350 = vld [vmem:[%s0 + $0x12] sm:$0x3f]
    %1352 = vst [vmem:[#allocation1] ss:$4 sm:$0xff] %v1350
    %v1353 = vld.sshfl [vmem:[#allocation1] sm:$0xff pattern:$0x73625140]
    %v1354 = vld.sshfl [vmem:[#allocation1 + $0x8] sm:$0xff pattern:$0x73625140]
    %v1355 = vld.sshfl [vmem:[#allocation1 + $0x10] sm:$0xff pattern:$0x73625140]
    %1359 = vmatpush.msra.mxu0 %v50
    %1360 = vmatpush.msra.mxu0 %v48
    %1361 = vmatpush.msra.mxu0 %v46
    %1362 = vmatpush.msra.mxu0 %v44
    %1363 = vmatpush.msra.mxu0 %v42
    %1364 = vmatpush.msra.mxu0 %v40
    %1365 = vmatpush.msra.mxu0 %v38
    %1366 = vmatpush.msra.mxu0 %v36
    %1367 = vmatpush.msra.mxu0 %v34
    %1368 = vmatpush.msra.mxu0 %v32
    %1369 = vmatpush.msra.mxu0 %v30
    %1370 = vmatpush.msra.mxu0 %v28
    %1371 = vmatpush.msra.mxu0 %v26
    %1372 = vmatpush.msra.mxu0 %v24
    %1373 = vmatpush.msra.mxu0 %v22
    %1374 = vmatpush.msra.mxu0 %v20
    %1375 = vmatmul.f32.gmra.mxu0 %v1353
    %v1376 = vpop.f32.mrf.mxu0
    %v1377 = vadd.f32 0.0, %v1376
    %1378 = vdwg.mxu0
    %1379 = vmatpush.msra.mxu0 %v82
    %1380 = vmatpush.msra.mxu0 %v80
    %1381 = vmatpush.msra.mxu0 %v78
    %1382 = vmatpush.msra.mxu0 %v76
    %1383 = vmatpush.msra.mxu0 %v74
    %1384 = vmatpush.msra.mxu0 %v72
    %1385 = vmatpush.msra.mxu0 %v70
    %1386 = vmatpush.msra.mxu0 %v68
    %1387 = vmatpush.msra.mxu0 %v66
    %1388 = vmatpush.msra.mxu0 %v64
    %1389 = vmatpush.msra.mxu0 %v62
    %1390 = vmatpush.msra.mxu0 %v60
    %1391 = vmatpush.msra.mxu0 %v58
    %1392 = vmatpush.msra.mxu0 %v56
    %1393 = vmatpush.msra.mxu0 %v54
    %1394 = vmatpush.msra.mxu0 %v52
    %1395 = vmatmul.f32.gmra.mxu0 %v1354
    %v1396 = vpop.f32.mrf.mxu0
    %v1397 = vadd.f32 %v1377, %v1396
    %1398 = vdwg.mxu0
    %1399 = vmatpush.msra.mxu0 %v114
    %1400 = vmatpush.msra.mxu0 %v112
    %1401 = vmatpush.msra.mxu0 %v110
    %1402 = vmatpush.msra.mxu0 %v108
    %1403 = vmatpush.msra.mxu0 %v106
    %1404 = vmatpush.msra.mxu0 %v104
    %1405 = vmatpush.msra.mxu0 %v102
    %1406 = vmatpush.msra.mxu0 %v100
    %1407 = vmatpush.msra.mxu0 %v98
    %1408 = vmatpush.msra.mxu0 %v96
    %1409 = vmatpush.msra.mxu0 %v94
    %1410 = vmatpush.msra.mxu0 %v92
    %1411 = vmatpush.msra.mxu0 %v90
    %1412 = vmatpush.msra.mxu0 %v88
    %1413 = vmatpush.msra.mxu0 %v86
    %1414 = vmatpush.msra.mxu0 %v84
    %1415 = vmatmul.f32.gmra.mxu0 %v1355
    %v1416 = vpop.f32.mrf.mxu0
    %v1417 = vadd.f32 %v1397, %v1416
    %1418 = vdwg.mxu0
    %1419 = vmatpush.msra.mxu0 %v51
    %1420 = vmatpush.msra.mxu0 %v49
    %1421 = vmatpush.msra.mxu0 %v47
    %1422 = vmatpush.msra.mxu0 %v45
    %1423 = vmatpush.msra.mxu0 %v43
    %1424 = vmatpush.msra.mxu0 %v41
    %1425 = vmatpush.msra.mxu0 %v39
    %1426 = vmatpush.msra.mxu0 %v37
    %1427 = vmatpush.msra.mxu0 %v35
    %1428 = vmatpush.msra.mxu0 %v33
    %1429 = vmatpush.msra.mxu0 %v31
    %1430 = vmatpush.msra.mxu0 %v29
    %1431 = vmatpush.msra.mxu0 %v27
    %1432 = vmatpush.msra.mxu0 %v25
    %1433 = vmatpush.msra.mxu0 %v23
    %1434 = vmatpush.msra.mxu0 %v21
    %1435 = vmatmul.f32.gmra.mxu0 %v1353
    %v1436 = vpop.f32.mrf.mxu0
    %v1437 = vadd.f32 0.0, %v1436
    %1438 = vdwg.mxu0
    %1439 = vmatpush.msra.mxu0 %v83
    %1440 = vmatpush.msra.mxu0 %v81
    %1441 = vmatpush.msra.mxu0 %v79
    %1442 = vmatpush.msra.mxu0 %v77
    %1443 = vmatpush.msra.mxu0 %v75
    %1444 = vmatpush.msra.mxu0 %v73
    %1445 = vmatpush.msra.mxu0 %v71
    %1446 = vmatpush.msra.mxu0 %v69
    %1447 = vmatpush.msra.mxu0 %v67
    %1448 = vmatpush.msra.mxu0 %v65
    %1449 = vmatpush.msra.mxu0 %v63
    %1450 = vmatpush.msra.mxu0 %v61
    %1451 = vmatpush.msra.mxu0 %v59
    %1452 = vmatpush.msra.mxu0 %v57
    %1453 = vmatpush.msra.mxu0 %v55
    %1454 = vmatpush.msra.mxu0 %v53
    %1455 = vmatmul.f32.gmra.mxu0 %v1354
    %v1456 = vpop.f32.mrf.mxu0
    %v1457 = vadd.f32 %v1437, %v1456
    %1458 = vdwg.mxu0
    %1459 = vmatpush.msra.mxu0 %v115
    %1460 = vmatpush.msra.mxu0 %v113
    %1461 = vmatpush.msra.mxu0 %v111
    %1462 = vmatpush.msra.mxu0 %v109
    %1463 = vmatpush.msra.mxu0 %v107
    %1464 = vmatpush.msra.mxu0 %v105
    %1465 = vmatpush.msra.mxu0 %v103
    %1466 = vmatpush.msra.mxu0 %v101
    %1467 = vmatpush.msra.mxu0 %v99
    %1468 = vmatpush.msra.mxu0 %v97
    %1469 = vmatpush.msra.mxu0 %v95
    %1470 = vmatpush.msra.mxu0 %v93
    %1471 = vmatpush.msra.mxu0 %v91
    %1472 = vmatpush.msra.mxu0 %v89
    %1473 = vmatpush.msra.mxu0 %v87
    %1474 = vmatpush.msra.mxu0 %v85
    %1475 = vmatmul.f32.gmra.mxu0 %v1355
    %v1476 = vpop.f32.mrf.mxu0
    %v1477 = vadd.f32 %v1457, %v1476
    %1478 = vdwg.mxu0
    %v1479 = vmax.f32 %v1417, 0.0
    %v1480 = vmax.f32 %v1477, 0.0
    %v1483 = vrot.slane %v1480, 6
    %v1484 = vsel %vm250, %v1479, %v1483
    %1486 = vst [vmem:[#allocation2 + $0x28] sm:$0xf] %v1484
    %v1487 = vld [vmem:[%s0 + $0x14] sm:$0x3f]
    %1489 = vst [vmem:[#allocation1] ss:$4 sm:$0xff] %v1487
    %v1490 = vld.sshfl [vmem:[#allocation1] sm:$0xff pattern:$0x73625140]
    %v1491 = vld.sshfl [vmem:[#allocation1 + $0x8] sm:$0xff pattern:$0x73625140]
    %v1492 = vld.sshfl [vmem:[#allocation1 + $0x10] sm:$0xff pattern:$0x73625140]
    %1496 = vmatpush.msra.mxu0 %v50
    %1497 = vmatpush.msra.mxu0 %v48
    %1498 = vmatpush.msra.mxu0 %v46
    %1499 = vmatpush.msra.mxu0 %v44
    %1500 = vmatpush.msra.mxu0 %v42
    %1501 = vmatpush.msra.mxu0 %v40
    %1502 = vmatpush.msra.mxu0 %v38
    %1503 = vmatpush.msra.mxu0 %v36
    %1504 = vmatpush.msra.mxu0 %v34
    %1505 = vmatpush.msra.mxu0 %v32
    %1506 = vmatpush.msra.mxu0 %v30
    %1507 = vmatpush.msra.mxu0 %v28
    %1508 = vmatpush.msra.mxu0 %v26
    %1509 = vmatpush.msra.mxu0 %v24
    %1510 = vmatpush.msra.mxu0 %v22
    %1511 = vmatpush.msra.mxu0 %v20
    %1512 = vmatmul.f32.gmra.mxu0 %v1490
    %v1513 = vpop.f32.mrf.mxu0
    %v1514 = vadd.f32 0.0, %v1513
    %1515 = vdwg.mxu0
    %1516 = vmatpush.msra.mxu0 %v82
    %1517 = vmatpush.msra.mxu0 %v80
    %1518 = vmatpush.msra.mxu0 %v78
    %1519 = vmatpush.msra.mxu0 %v76
    %1520 = vmatpush.msra.mxu0 %v74
    %1521 = vmatpush.msra.mxu0 %v72
    %1522 = vmatpush.msra.mxu0 %v70
    %1523 = vmatpush.msra.mxu0 %v68
    %1524 = vmatpush.msra.mxu0 %v66
    %1525 = vmatpush.msra.mxu0 %v64
    %1526 = vmatpush.msra.mxu0 %v62
    %1527 = vmatpush.msra.mxu0 %v60
    %1528 = vmatpush.msra.mxu0 %v58
    %1529 = vmatpush.msra.mxu0 %v56
    %1530 = vmatpush.msra.mxu0 %v54
    %1531 = vmatpush.msra.mxu0 %v52
    %1532 = vmatmul.f32.gmra.mxu0 %v1491
    %v1533 = vpop.f32.mrf.mxu0
    %v1534 = vadd.f32 %v1514, %v1533
    %1535 = vdwg.mxu0
    %1536 = vmatpush.msra.mxu0 %v114
    %1537 = vmatpush.msra.mxu0 %v112
    %1538 = vmatpush.msra.mxu0 %v110
    %1539 = vmatpush.msra.mxu0 %v108
    %1540 = vmatpush.msra.mxu0 %v106
    %1541 = vmatpush.msra.mxu0 %v104
    %1542 = vmatpush.msra.mxu0 %v102
    %1543 = vmatpush.msra.mxu0 %v100
    %1544 = vmatpush.msra.mxu0 %v98
    %1545 = vmatpush.msra.mxu0 %v96
    %1546 = vmatpush.msra.mxu0 %v94
    %1547 = vmatpush.msra.mxu0 %v92
    %1548 = vmatpush.msra.mxu0 %v90
    %1549 = vmatpush.msra.mxu0 %v88
    %1550 = vmatpush.msra.mxu0 %v86
    %1551 = vmatpush.msra.mxu0 %v84
    %1552 = vmatmul.f32.gmra.mxu0 %v1492
    %v1553 = vpop.f32.mrf.mxu0
    %v1554 = vadd.f32 %v1534, %v1553
    %1555 = vdwg.mxu0
    %1556 = vmatpush.msra.mxu0 %v51
    %1557 = vmatpush.msra.mxu0 %v49
    %1558 = vmatpush.msra.mxu0 %v47
    %1559 = vmatpush.msra.mxu0 %v45
    %1560 = vmatpush.msra.mxu0 %v43
    %1561 = vmatpush.msra.mxu0 %v41
    %1562 = vmatpush.msra.mxu0 %v39
    %1563 = vmatpush.msra.mxu0 %v37
    %1564 = vmatpush.msra.mxu0 %v35
    %1565 = vmatpush.msra.mxu0 %v33
    %1566 = vmatpush.msra.mxu0 %v31
    %1567 = vmatpush.msra.mxu0 %v29
    %1568 = vmatpush.msra.mxu0 %v27
    %1569 = vmatpush.msra.mxu0 %v25
    %1570 = vmatpush.msra.mxu0 %v23
    %1571 = vmatpush.msra.mxu0 %v21
    %1572 = vmatmul.f32.gmra.mxu0 %v1490
    %v1573 = vpop.f32.mrf.mxu0
    %v1574 = vadd.f32 0.0, %v1573
    %1575 = vdwg.mxu0
    %1576 = vmatpush.msra.mxu0 %v83
    %1577 = vmatpush.msra.mxu0 %v81
    %1578 = vmatpush.msra.mxu0 %v79
    %1579 = vmatpush.msra.mxu0 %v77
    %1580 = vmatpush.msra.mxu0 %v75
    %1581 = vmatpush.msra.mxu0 %v73
    %1582 = vmatpush.msra.mxu0 %v71
    %1583 = vmatpush.msra.mxu0 %v69
    %1584 = vmatpush.msra.mxu0 %v67
    %1585 = vmatpush.msra.mxu0 %v65
    %1586 = vmatpush.msra.mxu0 %v63
    %1587 = vmatpush.msra.mxu0 %v61
    %1588 = vmatpush.msra.mxu0 %v59
    %1589 = vmatpush.msra.mxu0 %v57
    %1590 = vmatpush.msra.mxu0 %v55
    %1591 = vmatpush.msra.mxu0 %v53
    %1592 = vmatmul.f32.gmra.mxu0 %v1491
    %v1593 = vpop.f32.mrf.mxu0
    %v1594 = vadd.f32 %v1574, %v1593
    %1595 = vdwg.mxu0
    %1596 = vmatpush.msra.mxu0 %v115
    %1597 = vmatpush.msra.mxu0 %v113
    %1598 = vmatpush.msra.mxu0 %v111
    %1599 = vmatpush.msra.mxu0 %v109
    %1600 = vmatpush.msra.mxu0 %v107
    %1601 = vmatpush.msra.mxu0 %v105
    %1602 = vmatpush.msra.mxu0 %v103
    %1603 = vmatpush.msra.mxu0 %v101
    %1604 = vmatpush.msra.mxu0 %v99
    %1605 = vmatpush.msra.mxu0 %v97
    %1606 = vmatpush.msra.mxu0 %v95
    %1607 = vmatpush.msra.mxu0 %v93
    %1608 = vmatpush.msra.mxu0 %v91
    %1609 = vmatpush.msra.mxu0 %v89
    %1610 = vmatpush.msra.mxu0 %v87
    %1611 = vmatpush.msra.mxu0 %v85
    %1612 = vmatmul.f32.gmra.mxu0 %v1492
    %v1613 = vpop.f32.mrf.mxu0
    %v1614 = vadd.f32 %v1594, %v1613
    %1615 = vdwg.mxu0
    %v1616 = vmax.f32 %v1554, 0.0
    %v1617 = vmax.f32 %v1614, 0.0
    %v1620 = vrot.slane %v1617, 6
    %v1621 = vsel %vm250, %v1616, %v1620
    %1623 = vst [vmem:[#allocation2 + $0x2c] sm:$0xf] %v1621
    %v1624 = vld [vmem:[%s0 + $0x16] sm:$0x3f]
    %1626 = vst [vmem:[#allocation1] ss:$4 sm:$0xff] %v1624
    %v1627 = vld.sshfl [vmem:[#allocation1] sm:$0xff pattern:$0x73625140]
    %v1628 = vld.sshfl [vmem:[#allocation1 + $0x8] sm:$0xff pattern:$0x73625140]
    %v1629 = vld.sshfl [vmem:[#allocation1 + $0x10] sm:$0xff pattern:$0x73625140]
    %1633 = vmatpush.msra.mxu0 %v50
    %1634 = vmatpush.msra.mxu0 %v48
    %1635 = vmatpush.msra.mxu0 %v46
    %1636 = vmatpush.msra.mxu0 %v44
    %1637 = vmatpush.msra.mxu0 %v42
    %1638 = vmatpush.msra.mxu0 %v40
    %1639 = vmatpush.msra.mxu0 %v38
    %1640 = vmatpush.msra.mxu0 %v36
    %1641 = vmatpush.msra.mxu0 %v34
    %1642 = vmatpush.msra.mxu0 %v32
    %1643 = vmatpush.msra.mxu0 %v30
    %1644 = vmatpush.msra.mxu0 %v28
    %1645 = vmatpush.msra.mxu0 %v26
    %1646 = vmatpush.msra.mxu0 %v24
    %1647 = vmatpush.msra.mxu0 %v22
    %1648 = vmatpush.msra.mxu0 %v20
    %1649 = vmatmul.f32.gmra.mxu0 %v1627
    %v1650 = vpop.f32.mrf.mxu0
    %v1651 = vadd.f32 0.0, %v1650
    %1652 = vdwg.mxu0
    %1653 = vmatpush.msra.mxu0 %v82
    %1654 = vmatpush.msra.mxu0 %v80
    %1655 = vmatpush.msra.mxu0 %v78
    %1656 = vmatpush.msra.mxu0 %v76
    %1657 = vmatpush.msra.mxu0 %v74
    %1658 = vmatpush.msra.mxu0 %v72
    %1659 = vmatpush.msra.mxu0 %v70
    %1660 = vmatpush.msra.mxu0 %v68
    %1661 = vmatpush.msra.mxu0 %v66
    %1662 = vmatpush.msra.mxu0 %v64
    %1663 = vmatpush.msra.mxu0 %v62
    %1664 = vmatpush.msra.mxu0 %v60
    %1665 = vmatpush.msra.mxu0 %v58
    %1666 = vmatpush.msra.mxu0 %v56
    %1667 = vmatpush.msra.mxu0 %v54
    %1668 = vmatpush.msra.mxu0 %v52
    %1669 = vmatmul.f32.gmra.mxu0 %v1628
    %v1670 = vpop.f32.mrf.mxu0
    %v1671 = vadd.f32 %v1651, %v1670
    %1672 = vdwg.mxu0
    %1673 = vmatpush.msra.mxu0 %v114
    %1674 = vmatpush.msra.mxu0 %v112
    %1675 = vmatpush.msra.mxu0 %v110
    %1676 = vmatpush.msra.mxu0 %v108
    %1677 = vmatpush.msra.mxu0 %v106
    %1678 = vmatpush.msra.mxu0 %v104
    %1679 = vmatpush.msra.mxu0 %v102
    %1680 = vmatpush.msra.mxu0 %v100
    %1681 = vmatpush.msra.mxu0 %v98
    %1682 = vmatpush.msra.mxu0 %v96
    %1683 = vmatpush.msra.mxu0 %v94
    %1684 = vmatpush.msra.mxu0 %v92
    %1685 = vmatpush.msra.mxu0 %v90
    %1686 = vmatpush.msra.mxu0 %v88
    %1687 = vmatpush.msra.mxu0 %v86
    %1688 = vmatpush.msra.mxu0 %v84
    %1689 = vmatmul.f32.gmra.mxu0 %v1629
    %v1690 = vpop.f32.mrf.mxu0
    %v1691 = vadd.f32 %v1671, %v1690
    %1692 = vdwg.mxu0
    %1693 = vmatpush.msra.mxu0 %v51
    %1694 = vmatpush.msra.mxu0 %v49
    %1695 = vmatpush.msra.mxu0 %v47
    %1696 = vmatpush.msra.mxu0 %v45
    %1697 = vmatpush.msra.mxu0 %v43
    %1698 = vmatpush.msra.mxu0 %v41
    %1699 = vmatpush.msra.mxu0 %v39
    %1700 = vmatpush.msra.mxu0 %v37
    %1701 = vmatpush.msra.mxu0 %v35
    %1702 = vmatpush.msra.mxu0 %v33
    %1703 = vmatpush.msra.mxu0 %v31
    %1704 = vmatpush.msra.mxu0 %v29
    %1705 = vmatpush.msra.mxu0 %v27
    %1706 = vmatpush.msra.mxu0 %v25
    %1707 = vmatpush.msra.mxu0 %v23
    %1708 = vmatpush.msra.mxu0 %v21
    %1709 = vmatmul.f32.gmra.mxu0 %v1627
    %v1710 = vpop.f32.mrf.mxu0
    %v1711 = vadd.f32 0.0, %v1710
    %1712 = vdwg.mxu0
    %1713 = vmatpush.msra.mxu0 %v83
    %1714 = vmatpush.msra.mxu0 %v81
    %1715 = vmatpush.msra.mxu0 %v79
    %1716 = vmatpush.msra.mxu0 %v77
    %1717 = vmatpush.msra.mxu0 %v75
    %1718 = vmatpush.msra.mxu0 %v73
    %1719 = vmatpush.msra.mxu0 %v71
    %1720 = vmatpush.msra.mxu0 %v69
    %1721 = vmatpush.msra.mxu0 %v67
    %1722 = vmatpush.msra.mxu0 %v65
    %1723 = vmatpush.msra.mxu0 %v63
    %1724 = vmatpush.msra.mxu0 %v61
    %1725 = vmatpush.msra.mxu0 %v59
    %1726 = vmatpush.msra.mxu0 %v57
    %1727 = vmatpush.msra.mxu0 %v55
    %1728 = vmatpush.msra.mxu0 %v53
    %1729 = vmatmul.f32.gmra.mxu0 %v1628
    %v1730 = vpop.f32.mrf.mxu0
    %v1731 = vadd.f32 %v1711, %v1730
    %1732 = vdwg.mxu0
    %1733 = vmatpush.msra.mxu0 %v115
    %1734 = vmatpush.msra.mxu0 %v113
    %1735 = vmatpush.msra.mxu0 %v111
    %1736 = vmatpush.msra.mxu0 %v109
    %1737 = vmatpush.msra.mxu0 %v107
    %1738 = vmatpush.msra.mxu0 %v105
    %1739 = vmatpush.msra.mxu0 %v103
    %1740 = vmatpush.msra.mxu0 %v101
    %1741 = vmatpush.msra.mxu0 %v99
    %1742 = vmatpush.msra.mxu0 %v97
    %1743 = vmatpush.msra.mxu0 %v95
    %1744 = vmatpush.msra.mxu0 %v93
    %1745 = vmatpush.msra.mxu0 %v91
    %1746 = vmatpush.msra.mxu0 %v89
    %1747 = vmatpush.msra.mxu0 %v87
    %1748 = vmatpush.msra.mxu0 %v85
    %1749 = vmatmul.f32.gmra.mxu0 %v1629
    %v1750 = vpop.f32.mrf.mxu0
    %v1751 = vadd.f32 %v1731, %v1750
    %1752 = vdwg.mxu0
    %v1753 = vmax.f32 %v1691, 0.0
    %v1754 = vmax.f32 %v1751, 0.0
    %v1757 = vrot.slane %v1754, 6
    %v1758 = vsel %vm250, %v1753, %v1757
    %1760 = vst [vmem:[#allocation2 + $0x30] sm:$0xf] %v1758
    %v1761 = vld [vmem:[%s0 + $0x18] sm:$0x3f]
    %1763 = vst [vmem:[#allocation1] ss:$4 sm:$0xff] %v1761
    %v1764 = vld.sshfl [vmem:[#allocation1] sm:$0xff pattern:$0x73625140]
    %v1765 = vld.sshfl [vmem:[#allocation1 + $0x8] sm:$0xff pattern:$0x73625140]
    %v1766 = vld.sshfl [vmem:[#allocation1 + $0x10] sm:$0xff pattern:$0x73625140]
    %1770 = vmatpush.msra.mxu0 %v50
    %1771 = vmatpush.msra.mxu0 %v48
    %1772 = vmatpush.msra.mxu0 %v46
    %1773 = vmatpush.msra.mxu0 %v44
    %1774 = vmatpush.msra.mxu0 %v42
    %1775 = vmatpush.msra.mxu0 %v40
    %1776 = vmatpush.msra.mxu0 %v38
    %1777 = vmatpush.msra.mxu0 %v36
    %1778 = vmatpush.msra.mxu0 %v34
    %1779 = vmatpush.msra.mxu0 %v32
    %1780 = vmatpush.msra.mxu0 %v30
    %1781 = vmatpush.msra.mxu0 %v28
    %1782 = vmatpush.msra.mxu0 %v26
    %1783 = vmatpush.msra.mxu0 %v24
    %1784 = vmatpush.msra.mxu0 %v22
    %1785 = vmatpush.msra.mxu0 %v20
    %1786 = vmatmul.f32.gmra.mxu0 %v1764
    %v1787 = vpop.f32.mrf.mxu0
    %v1788 = vadd.f32 0.0, %v1787
    %1789 = vdwg.mxu0
    %1790 = vmatpush.msra.mxu0 %v82
    %1791 = vmatpush.msra.mxu0 %v80
    %1792 = vmatpush.msra.mxu0 %v78
    %1793 = vmatpush.msra.mxu0 %v76
    %1794 = vmatpush.msra.mxu0 %v74
    %1795 = vmatpush.msra.mxu0 %v72
    %1796 = vmatpush.msra.mxu0 %v70
    %1797 = vmatpush.msra.mxu0 %v68
    %1798 = vmatpush.msra.mxu0 %v66
    %1799 = vmatpush.msra.mxu0 %v64
    %1800 = vmatpush.msra.mxu0 %v62
    %1801 = vmatpush.msra.mxu0 %v60
    %1802 = vmatpush.msra.mxu0 %v58
    %1803 = vmatpush.msra.mxu0 %v56
    %1804 = vmatpush.msra.mxu0 %v54
    %1805 = vmatpush.msra.mxu0 %v52
    %1806 = vmatmul.f32.gmra.mxu0 %v1765
    %v1807 = vpop.f32.mrf.mxu0
    %v1808 = vadd.f32 %v1788, %v1807
    %1809 = vdwg.mxu0
    %1810 = vmatpush.msra.mxu0 %v114
    %1811 = vmatpush.msra.mxu0 %v112
    %1812 = vmatpush.msra.mxu0 %v110
    %1813 = vmatpush.msra.mxu0 %v108
    %1814 = vmatpush.msra.mxu0 %v106
    %1815 = vmatpush.msra.mxu0 %v104
    %1816 = vmatpush.msra.mxu0 %v102
    %1817 = vmatpush.msra.mxu0 %v100
    %1818 = vmatpush.msra.mxu0 %v98
    %1819 = vmatpush.msra.mxu0 %v96
    %1820 = vmatpush.msra.mxu0 %v94
    %1821 = vmatpush.msra.mxu0 %v92
    %1822 = vmatpush.msra.mxu0 %v90
    %1823 = vmatpush.msra.mxu0 %v88
    %1824 = vmatpush.msra.mxu0 %v86
    %1825 = vmatpush.msra.mxu0 %v84
    %1826 = vmatmul.f32.gmra.mxu0 %v1766
    %v1827 = vpop.f32.mrf.mxu0
    %v1828 = vadd.f32 %v1808, %v1827
    %1829 = vdwg.mxu0
    %1830 = vmatpush.msra.mxu0 %v51
    %1831 = vmatpush.msra.mxu0 %v49
    %1832 = vmatpush.msra.mxu0 %v47
    %1833 = vmatpush.msra.mxu0 %v45
    %1834 = vmatpush.msra.mxu0 %v43
    %1835 = vmatpush.msra.mxu0 %v41
    %1836 = vmatpush.msra.mxu0 %v39
    %1837 = vmatpush.msra.mxu0 %v37
    %1838 = vmatpush.msra.mxu0 %v35
    %1839 = vmatpush.msra.mxu0 %v33
    %1840 = vmatpush.msra.mxu0 %v31
    %1841 = vmatpush.msra.mxu0 %v29
    %1842 = vmatpush.msra.mxu0 %v27
    %1843 = vmatpush.msra.mxu0 %v25
    %1844 = vmatpush.msra.mxu0 %v23
    %1845 = vmatpush.msra.mxu0 %v21
    %1846 = vmatmul.f32.gmra.mxu0 %v1764
    %v1847 = vpop.f32.mrf.mxu0
    %v1848 = vadd.f32 0.0, %v1847
    %1849 = vdwg.mxu0
    %1850 = vmatpush.msra.mxu0 %v83
    %1851 = vmatpush.msra.mxu0 %v81
    %1852 = vmatpush.msra.mxu0 %v79
    %1853 = vmatpush.msra.mxu0 %v77
    %1854 = vmatpush.msra.mxu0 %v75
    %1855 = vmatpush.msra.mxu0 %v73
    %1856 = vmatpush.msra.mxu0 %v71
    %1857 = vmatpush.msra.mxu0 %v69
    %1858 = vmatpush.msra.mxu0 %v67
    %1859 = vmatpush.msra.mxu0 %v65
    %1860 = vmatpush.msra.mxu0 %v63
    %1861 = vmatpush.msra.mxu0 %v61
    %1862 = vmatpush.msra.mxu0 %v59
    %1863 = vmatpush.msra.mxu0 %v57
    %1864 = vmatpush.msra.mxu0 %v55
    %1865 = vmatpush.msra.mxu0 %v53
    %1866 = vmatmul.f32.gmra.mxu0 %v1765
    %v1867 = vpop.f32.mrf.mxu0
    %v1868 = vadd.f32 %v1848, %v1867
    %1869 = vdwg.mxu0
    %1870 = vmatpush.msra.mxu0 %v115
    %1871 = vmatpush.msra.mxu0 %v113
    %1872 = vmatpush.msra.mxu0 %v111
    %1873 = vmatpush.msra.mxu0 %v109
    %1874 = vmatpush.msra.mxu0 %v107
    %1875 = vmatpush.msra.mxu0 %v105
    %1876 = vmatpush.msra.mxu0 %v103
    %1877 = vmatpush.msra.mxu0 %v101
    %1878 = vmatpush.msra.mxu0 %v99
    %1879 = vmatpush.msra.mxu0 %v97
    %1880 = vmatpush.msra.mxu0 %v95
    %1881 = vmatpush.msra.mxu0 %v93
    %1882 = vmatpush.msra.mxu0 %v91
    %1883 = vmatpush.msra.mxu0 %v89
    %1884 = vmatpush.msra.mxu0 %v87
    %1885 = vmatpush.msra.mxu0 %v85
    %1886 = vmatmul.f32.gmra.mxu0 %v1766
    %v1887 = vpop.f32.mrf.mxu0
    %v1888 = vadd.f32 %v1868, %v1887
    %1889 = vdwg.mxu0
    %v1890 = vmax.f32 %v1828, 0.0
    %v1891 = vmax.f32 %v1888, 0.0
    %v1894 = vrot.slane %v1891, 6
    %v1895 = vsel %vm250, %v1890, %v1894
    %1897 = vst [vmem:[#allocation2 + $0x34] sm:$0xf] %v1895
    %v1898 = vld [vmem:[%s0 + $0x1a] sm:$0x3f]
    %1900 = vst [vmem:[#allocation1] ss:$4 sm:$0xff] %v1898
    %v1901 = vld.sshfl [vmem:[#allocation1] sm:$0xff pattern:$0x73625140]
    %v1902 = vld.sshfl [vmem:[#allocation1 + $0x8] sm:$0xff pattern:$0x73625140]
    %v1903 = vld.sshfl [vmem:[#allocation1 + $0x10] sm:$0xff pattern:$0x73625140]
    %1907 = vmatpush.msra.mxu0 %v50
    %1908 = vmatpush.msra.mxu0 %v48
    %1909 = vmatpush.msra.mxu0 %v46
    %1910 = vmatpush.msra.mxu0 %v44
    %1911 = vmatpush.msra.mxu0 %v42
    %1912 = vmatpush.msra.mxu0 %v40
    %1913 = vmatpush.msra.mxu0 %v38
    %1914 = vmatpush.msra.mxu0 %v36
    %1915 = vmatpush.msra.mxu0 %v34
    %1916 = vmatpush.msra.mxu0 %v32
    %1917 = vmatpush.msra.mxu0 %v30
    %1918 = vmatpush.msra.mxu0 %v28
    %1919 = vmatpush.msra.mxu0 %v26
    %1920 = vmatpush.msra.mxu0 %v24
    %1921 = vmatpush.msra.mxu0 %v22
    %1922 = vmatpush.msra.mxu0 %v20
    %1923 = vmatmul.f32.gmra.mxu0 %v1901
    %v1924 = vpop.f32.mrf.mxu0
    %v1925 = vadd.f32 0.0, %v1924
    %1926 = vdwg.mxu0
    %1927 = vmatpush.msra.mxu0 %v82
    %1928 = vmatpush.msra.mxu0 %v80
    %1929 = vmatpush.msra.mxu0 %v78
    %1930 = vmatpush.msra.mxu0 %v76
    %1931 = vmatpush.msra.mxu0 %v74
    %1932 = vmatpush.msra.mxu0 %v72
    %1933 = vmatpush.msra.mxu0 %v70
    %1934 = vmatpush.msra.mxu0 %v68
    %1935 = vmatpush.msra.mxu0 %v66
    %1936 = vmatpush.msra.mxu0 %v64
    %1937 = vmatpush.msra.mxu0 %v62
    %1938 = vmatpush.msra.mxu0 %v60
    %1939 = vmatpush.msra.mxu0 %v58
    %1940 = vmatpush.msra.mxu0 %v56
    %1941 = vmatpush.msra.mxu0 %v54
    %1942 = vmatpush.msra.mxu0 %v52
    %1943 = vmatmul.f32.gmra.mxu0 %v1902
    %v1944 = vpop.f32.mrf.mxu0
    %v1945 = vadd.f32 %v1925, %v1944
    %1946 = vdwg.mxu0
    %1947 = vmatpush.msra.mxu0 %v114
    %1948 = vmatpush.msra.mxu0 %v112
    %1949 = vmatpush.msra.mxu0 %v110
    %1950 = vmatpush.msra.mxu0 %v108
    %1951 = vmatpush.msra.mxu0 %v106
    %1952 = vmatpush.msra.mxu0 %v104
    %1953 = vmatpush.msra.mxu0 %v102
    %1954 = vmatpush.msra.mxu0 %v100
    %1955 = vmatpush.msra.mxu0 %v98
    %1956 = vmatpush.msra.mxu0 %v96
    %1957 = vmatpush.msra.mxu0 %v94
    %1958 = vmatpush.msra.mxu0 %v92
    %1959 = vmatpush.msra.mxu0 %v90
    %1960 = vmatpush.msra.mxu0 %v88
    %1961 = vmatpush.msra.mxu0 %v86
    %1962 = vmatpush.msra.mxu0 %v84
    %1963 = vmatmul.f32.gmra.mxu0 %v1903
    %v1964 = vpop.f32.mrf.mxu0
    %v1965 = vadd.f32 %v1945, %v1964
    %1966 = vdwg.mxu0
    %1967 = vmatpush.msra.mxu0 %v51
    %1968 = vmatpush.msra.mxu0 %v49
    %1969 = vmatpush.msra.mxu0 %v47
    %1970 = vmatpush.msra.mxu0 %v45
    %1971 = vmatpush.msra.mxu0 %v43
    %1972 = vmatpush.msra.mxu0 %v41
    %1973 = vmatpush.msra.mxu0 %v39
    %1974 = vmatpush.msra.mxu0 %v37
    %1975 = vmatpush.msra.mxu0 %v35
    %1976 = vmatpush.msra.mxu0 %v33
    %1977 = vmatpush.msra.mxu0 %v31
    %1978 = vmatpush.msra.mxu0 %v29
    %1979 = vmatpush.msra.mxu0 %v27
    %1980 = vmatpush.msra.mxu0 %v25
    %1981 = vmatpush.msra.mxu0 %v23
    %1982 = vmatpush.msra.mxu0 %v21
    %1983 = vmatmul.f32.gmra.mxu0 %v1901
    %v1984 = vpop.f32.mrf.mxu0
    %v1985 = vadd.f32 0.0, %v1984
    %1986 = vdwg.mxu0
    %1987 = vmatpush.msra.mxu0 %v83
    %1988 = vmatpush.msra.mxu0 %v81
    %1989 = vmatpush.msra.mxu0 %v79
    %1990 = vmatpush.msra.mxu0 %v77
    %1991 = vmatpush.msra.mxu0 %v75
    %1992 = vmatpush.msra.mxu0 %v73
    %1993 = vmatpush.msra.mxu0 %v71
    %1994 = vmatpush.msra.mxu0 %v69
    %1995 = vmatpush.msra.mxu0 %v67
    %1996 = vmatpush.msra.mxu0 %v65
    %1997 = vmatpush.msra.mxu0 %v63
    %1998 = vmatpush.msra.mxu0 %v61
    %1999 = vmatpush.msra.mxu0 %v59
    %2000 = vmatpush.msra.mxu0 %v57
    %2001 = vmatpush.msra.mxu0 %v55
    %2002 = vmatpush.msra.mxu0 %v53
    %2003 = vmatmul.f32.gmra.mxu0 %v1902
    %v2004 = vpop.f32.mrf.mxu0
    %v2005 = vadd.f32 %v1985, %v2004
    %2006 = vdwg.mxu0
    %2007 = vmatpush.msra.mxu0 %v115
    %2008 = vmatpush.msra.mxu0 %v113
    %2009 = vmatpush.msra.mxu0 %v111
    %2010 = vmatpush.msra.mxu0 %v109
    %2011 = vmatpush.msra.mxu0 %v107
    %2012 = vmatpush.msra.mxu0 %v105
    %2013 = vmatpush.msra.mxu0 %v103
    %2014 = vmatpush.msra.mxu0 %v101
    %2015 = vmatpush.msra.mxu0 %v99
    %2016 = vmatpush.msra.mxu0 %v97
    %2017 = vmatpush.msra.mxu0 %v95
    %2018 = vmatpush.msra.mxu0 %v93
    %2019 = vmatpush.msra.mxu0 %v91
    %2020 = vmatpush.msra.mxu0 %v89
    %2021 = vmatpush.msra.mxu0 %v87
    %2022 = vmatpush.msra.mxu0 %v85
    %2023 = vmatmul.f32.gmra.mxu0 %v1903
    %v2024 = vpop.f32.mrf.mxu0
    %v2025 = vadd.f32 %v2005, %v2024
    %2026 = vdwg.mxu0
    %v2027 = vmax.f32 %v1965, 0.0
    %v2028 = vmax.f32 %v2025, 0.0
    %v2031 = vrot.slane %v2028, 6
    %v2032 = vsel %vm250, %v2027, %v2031
    %2034 = vst [vmem:[#allocation2 + $0x38] sm:$0xf] %v2032
    %v2035 = vld [vmem:[%s0 + $0x1c] sm:$0x3f]
    %2037 = vst [vmem:[#allocation1] ss:$4 sm:$0xff] %v2035
    %v2038 = vld.sshfl [vmem:[#allocation1] sm:$0xff pattern:$0x73625140]
    %v2039 = vld.sshfl [vmem:[#allocation1 + $0x8] sm:$0xff pattern:$0x73625140]
    %v2040 = vld.sshfl [vmem:[#allocation1 + $0x10] sm:$0xff pattern:$0x73625140]
    %2044 = vmatpush.msra.mxu0 %v50
    %2045 = vmatpush.msra.mxu0 %v48
    %2046 = vmatpush.msra.mxu0 %v46
    %2047 = vmatpush.msra.mxu0 %v44
    %2048 = vmatpush.msra.mxu0 %v42
    %2049 = vmatpush.msra.mxu0 %v40
    %2050 = vmatpush.msra.mxu0 %v38
    %2051 = vmatpush.msra.mxu0 %v36
    %2052 = vmatpush.msra.mxu0 %v34
    %2053 = vmatpush.msra.mxu0 %v32
    %2054 = vmatpush.msra.mxu0 %v30
    %2055 = vmatpush.msra.mxu0 %v28
    %2056 = vmatpush.msra.mxu0 %v26
    %2057 = vmatpush.msra.mxu0 %v24
    %2058 = vmatpush.msra.mxu0 %v22
    %2059 = vmatpush.msra.mxu0 %v20
    %2060 = vmatmul.f32.gmra.mxu0 %v2038
    %v2061 = vpop.f32.mrf.mxu0
    %v2062 = vadd.f32 0.0, %v2061
    %2063 = vdwg.mxu0
    %2064 = vmatpush.msra.mxu0 %v82
    %2065 = vmatpush.msra.mxu0 %v80
    %2066 = vmatpush.msra.mxu0 %v78
    %2067 = vmatpush.msra.mxu0 %v76
    %2068 = vmatpush.msra.mxu0 %v74
    %2069 = vmatpush.msra.mxu0 %v72
    %2070 = vmatpush.msra.mxu0 %v70
    %2071 = vmatpush.msra.mxu0 %v68
    %2072 = vmatpush.msra.mxu0 %v66
    %2073 = vmatpush.msra.mxu0 %v64
    %2074 = vmatpush.msra.mxu0 %v62
    %2075 = vmatpush.msra.mxu0 %v60
    %2076 = vmatpush.msra.mxu0 %v58
    %2077 = vmatpush.msra.mxu0 %v56
    %2078 = vmatpush.msra.mxu0 %v54
    %2079 = vmatpush.msra.mxu0 %v52
    %2080 = vmatmul.f32.gmra.mxu0 %v2039
    %v2081 = vpop.f32.mrf.mxu0
    %v2082 = vadd.f32 %v2062, %v2081
    %2083 = vdwg.mxu0
    %2084 = vmatpush.msra.mxu0 %v114
    %2085 = vmatpush.msra.mxu0 %v112
    %2086 = vmatpush.msra.mxu0 %v110
    %2087 = vmatpush.msra.mxu0 %v108
    %2088 = vmatpush.msra.mxu0 %v106
    %2089 = vmatpush.msra.mxu0 %v104
    %2090 = vmatpush.msra.mxu0 %v102
    %2091 = vmatpush.msra.mxu0 %v100
    %2092 = vmatpush.msra.mxu0 %v98
    %2093 = vmatpush.msra.mxu0 %v96
    %2094 = vmatpush.msra.mxu0 %v94
    %2095 = vmatpush.msra.mxu0 %v92
    %2096 = vmatpush.msra.mxu0 %v90
    %2097 = vmatpush.msra.mxu0 %v88
    %2098 = vmatpush.msra.mxu0 %v86
    %2099 = vmatpush.msra.mxu0 %v84
    %2100 = vmatmul.f32.gmra.mxu0 %v2040
    %v2101 = vpop.f32.mrf.mxu0
    %v2102 = vadd.f32 %v2082, %v2101
    %2103 = vdwg.mxu0
    %2104 = vmatpush.msra.mxu0 %v51
    %2105 = vmatpush.msra.mxu0 %v49
    %2106 = vmatpush.msra.mxu0 %v47
    %2107 = vmatpush.msra.mxu0 %v45
    %2108 = vmatpush.msra.mxu0 %v43
    %2109 = vmatpush.msra.mxu0 %v41
    %2110 = vmatpush.msra.mxu0 %v39
    %2111 = vmatpush.msra.mxu0 %v37
    %2112 = vmatpush.msra.mxu0 %v35
    %2113 = vmatpush.msra.mxu0 %v33
    %2114 = vmatpush.msra.mxu0 %v31
    %2115 = vmatpush.msra.mxu0 %v29
    %2116 = vmatpush.msra.mxu0 %v27
    %2117 = vmatpush.msra.mxu0 %v25
    %2118 = vmatpush.msra.mxu0 %v23
    %2119 = vmatpush.msra.mxu0 %v21
    %2120 = vmatmul.f32.gmra.mxu0 %v2038
    %v2121 = vpop.f32.mrf.mxu0
    %v2122 = vadd.f32 0.0, %v2121
    %2123 = vdwg.mxu0
    %2124 = vmatpush.msra.mxu0 %v83
    %2125 = vmatpush.msra.mxu0 %v81
    %2126 = vmatpush.msra.mxu0 %v79
    %2127 = vmatpush.msra.mxu0 %v77
    %2128 = vmatpush.msra.mxu0 %v75
    %2129 = vmatpush.msra.mxu0 %v73
    %2130 = vmatpush.msra.mxu0 %v71
    %2131 = vmatpush.msra.mxu0 %v69
    %2132 = vmatpush.msra.mxu0 %v67
    %2133 = vmatpush.msra.mxu0 %v65
    %2134 = vmatpush.msra.mxu0 %v63
    %2135 = vmatpush.msra.mxu0 %v61
    %2136 = vmatpush.msra.mxu0 %v59
    %2137 = vmatpush.msra.mxu0 %v57
    %2138 = vmatpush.msra.mxu0 %v55
    %2139 = vmatpush.msra.mxu0 %v53
    %2140 = vmatmul.f32.gmra.mxu0 %v2039
    %v2141 = vpop.f32.mrf.mxu0
    %v2142 = vadd.f32 %v2122, %v2141
    %2143 = vdwg.mxu0
    %2144 = vmatpush.msra.mxu0 %v115
    %2145 = vmatpush.msra.mxu0 %v113
    %2146 = vmatpush.msra.mxu0 %v111
    %2147 = vmatpush.msra.mxu0 %v109
    %2148 = vmatpush.msra.mxu0 %v107
    %2149 = vmatpush.msra.mxu0 %v105
    %2150 = vmatpush.msra.mxu0 %v103
    %2151 = vmatpush.msra.mxu0 %v101
    %2152 = vmatpush.msra.mxu0 %v99
    %2153 = vmatpush.msra.mxu0 %v97
    %2154 = vmatpush.msra.mxu0 %v95
    %2155 = vmatpush.msra.mxu0 %v93
    %2156 = vmatpush.msra.mxu0 %v91
    %2157 = vmatpush.msra.mxu0 %v89
    %2158 = vmatpush.msra.mxu0 %v87
    %2159 = vmatpush.msra.mxu0 %v85
    %2160 = vmatmul.f32.gmra.mxu0 %v2040
    %v2161 = vpop.f32.mrf.mxu0
    %v2162 = vadd.f32 %v2142, %v2161
    %2163 = vdwg.mxu0
    %v2164 = vmax.f32 %v2102, 0.0
    %v2165 = vmax.f32 %v2162, 0.0
    %v2168 = vrot.slane %v2165, 6
    %v2169 = vsel %vm250, %v2164, %v2168
    %2171 = vst [vmem:[#allocation2 + $0x3c] sm:$0xf] %v2169
    %v2172 = vld [vmem:[%s0 + $0x1e] sm:$0x3f]
    %2174 = vst [vmem:[#allocation1] ss:$4 sm:$0xff] %v2172
    %v2175 = vld.sshfl [vmem:[#allocation1] sm:$0xff pattern:$0x73625140]
    %v2176 = vld.sshfl [vmem:[#allocation1 + $0x8] sm:$0xff pattern:$0x73625140]
    %v2177 = vld.sshfl [vmem:[#allocation1 + $0x10] sm:$0xff pattern:$0x73625140]
    %2181 = vmatpush.msra.mxu0 %v50
    %2182 = vmatpush.msra.mxu0 %v48
    %2183 = vmatpush.msra.mxu0 %v46
    %2184 = vmatpush.msra.mxu0 %v44
    %2185 = vmatpush.msra.mxu0 %v42
    %2186 = vmatpush.msra.mxu0 %v40
    %2187 = vmatpush.msra.mxu0 %v38
    %2188 = vmatpush.msra.mxu0 %v36
    %2189 = vmatpush.msra.mxu0 %v34
    %2190 = vmatpush.msra.mxu0 %v32
    %2191 = vmatpush.msra.mxu0 %v30
    %2192 = vmatpush.msra.mxu0 %v28
    %2193 = vmatpush.msra.mxu0 %v26
    %2194 = vmatpush.msra.mxu0 %v24
    %2195 = vmatpush.msra.mxu0 %v22
    %2196 = vmatpush.msra.mxu0 %v20
    %2197 = vmatmul.f32.gmra.mxu0 %v2175
    %v2198 = vpop.f32.mrf.mxu0
    %v2199 = vadd.f32 0.0, %v2198
    %2200 = vdwg.mxu0
    %2201 = vmatpush.msra.mxu0 %v82
    %2202 = vmatpush.msra.mxu0 %v80
    %2203 = vmatpush.msra.mxu0 %v78
    %2204 = vmatpush.msra.mxu0 %v76
    %2205 = vmatpush.msra.mxu0 %v74
    %2206 = vmatpush.msra.mxu0 %v72
    %2207 = vmatpush.msra.mxu0 %v70
    %2208 = vmatpush.msra.mxu0 %v68
    %2209 = vmatpush.msra.mxu0 %v66
    %2210 = vmatpush.msra.mxu0 %v64
    %2211 = vmatpush.msra.mxu0 %v62
    %2212 = vmatpush.msra.mxu0 %v60
    %2213 = vmatpush.msra.mxu0 %v58
    %2214 = vmatpush.msra.mxu0 %v56
    %2215 = vmatpush.msra.mxu0 %v54
    %2216 = vmatpush.msra.mxu0 %v52
    %2217 = vmatmul.f32.gmra.mxu0 %v2176
    %v2218 = vpop.f32.mrf.mxu0
    %v2219 = vadd.f32 %v2199, %v2218
    %2220 = vdwg.mxu0
    %2221 = vmatpush.msra.mxu0 %v114
    %2222 = vmatpush.msra.mxu0 %v112
    %2223 = vmatpush.msra.mxu0 %v110
    %2224 = vmatpush.msra.mxu0 %v108
    %2225 = vmatpush.msra.mxu0 %v106
    %2226 = vmatpush.msra.mxu0 %v104
    %2227 = vmatpush.msra.mxu0 %v102
    %2228 = vmatpush.msra.mxu0 %v100
    %2229 = vmatpush.msra.mxu0 %v98
    %2230 = vmatpush.msra.mxu0 %v96
    %2231 = vmatpush.msra.mxu0 %v94
    %2232 = vmatpush.msra.mxu0 %v92
    %2233 = vmatpush.msra.mxu0 %v90
    %2234 = vmatpush.msra.mxu0 %v88
    %2235 = vmatpush.msra.mxu0 %v86
    %2236 = vmatpush.msra.mxu0 %v84
    %2237 = vmatmul.f32.gmra.mxu0 %v2177
    %v2238 = vpop.f32.mrf.mxu0
    %v2239 = vadd.f32 %v2219, %v2238
    %2240 = vdwg.mxu0
    %2241 = vmatpush.msra.mxu0 %v51
    %2242 = vmatpush.msra.mxu0 %v49
    %2243 = vmatpush.msra.mxu0 %v47
    %2244 = vmatpush.msra.mxu0 %v45
    %2245 = vmatpush.msra.mxu0 %v43
    %2246 = vmatpush.msra.mxu0 %v41
    %2247 = vmatpush.msra.mxu0 %v39
    %2248 = vmatpush.msra.mxu0 %v37
    %2249 = vmatpush.msra.mxu0 %v35
    %2250 = vmatpush.msra.mxu0 %v33
    %2251 = vmatpush.msra.mxu0 %v31
    %2252 = vmatpush.msra.mxu0 %v29
    %2253 = vmatpush.msra.mxu0 %v27
    %2254 = vmatpush.msra.mxu0 %v25
    %2255 = vmatpush.msra.mxu0 %v23
    %2256 = vmatpush.msra.mxu0 %v21
    %2257 = vmatmul.f32.gmra.mxu0 %v2175
    %v2258 = vpop.f32.mrf.mxu0
    %v2259 = vadd.f32 0.0, %v2258
    %2260 = vdwg.mxu0
    %2261 = vmatpush.msra.mxu0 %v83
    %2262 = vmatpush.msra.mxu0 %v81
    %2263 = vmatpush.msra.mxu0 %v79
    %2264 = vmatpush.msra.mxu0 %v77
    %2265 = vmatpush.msra.mxu0 %v75
    %2266 = vmatpush.msra.mxu0 %v73
    %2267 = vmatpush.msra.mxu0 %v71
    %2268 = vmatpush.msra.mxu0 %v69
    %2269 = vmatpush.msra.mxu0 %v67
    %2270 = vmatpush.msra.mxu0 %v65
    %2271 = vmatpush.msra.mxu0 %v63
    %2272 = vmatpush.msra.mxu0 %v61
    %2273 = vmatpush.msra.mxu0 %v59
    %2274 = vmatpush.msra.mxu0 %v57
    %2275 = vmatpush.msra.mxu0 %v55
    %2276 = vmatpush.msra.mxu0 %v53
    %2277 = vmatmul.f32.gmra.mxu0 %v2176
    %v2278 = vpop.f32.mrf.mxu0
    %v2279 = vadd.f32 %v2259, %v2278
    %2280 = vdwg.mxu0
    %2281 = vmatpush.msra.mxu0 %v115
    %2282 = vmatpush.msra.mxu0 %v113
    %2283 = vmatpush.msra.mxu0 %v111
    %2284 = vmatpush.msra.mxu0 %v109
    %2285 = vmatpush.msra.mxu0 %v107
    %2286 = vmatpush.msra.mxu0 %v105
    %2287 = vmatpush.msra.mxu0 %v103
    %2288 = vmatpush.msra.mxu0 %v101
    %2289 = vmatpush.msra.mxu0 %v99
    %2290 = vmatpush.msra.mxu0 %v97
    %2291 = vmatpush.msra.mxu0 %v95
    %2292 = vmatpush.msra.mxu0 %v93
    %2293 = vmatpush.msra.mxu0 %v91
    %2294 = vmatpush.msra.mxu0 %v89
    %2295 = vmatpush.msra.mxu0 %v87
    %2296 = vmatpush.msra.mxu0 %v85
    %2297 = vmatmul.f32.gmra.mxu0 %v2177
    %v2298 = vpop.f32.mrf.mxu0
    %v2299 = vadd.f32 %v2279, %v2298
    %2300 = vdwg.mxu0
    %v2301 = vmax.f32 %v2239, 0.0
    %v2302 = vmax.f32 %v2299, 0.0
    %v2305 = vrot.slane %v2302, 6
    %v2306 = vsel %vm250, %v2301, %v2305
    %2308 = vst [vmem:[#allocation2 + $0x40] sm:$0xf] %v2306
    %v2309 = vld [vmem:[%s2] sm:$0xff]
    %v2310 = vld [vmem:[%s2 + $0x8] sm:$0xff]
    %v2311 = vld [vmem:[%s2 + $0x10] sm:$0xff]
    %v2312 = vld [vmem:[%s2 + $0x18] sm:$0xff]
    %v2313 = vld [vmem:[%s2 + $0x20] sm:$0xff]
    %v2314 = vld [vmem:[%s2 + $0x28] sm:$0xff]
    %v2315 = vld [vmem:[%s2 + $0x30] sm:$0xff]
    %v2316 = vld [vmem:[%s2 + $0x38] sm:$0xff]
    %v2317 = vld [vmem:[%s2 + $0x40] sm:$0xff]
    %v2318 = vld [vmem:[%s2 + $0x48] sm:$0xff]
    %v2319 = vld [vmem:[%s2 + $0x50] sm:$0xff]
    %v2320 = vld [vmem:[%s2 + $0x58] sm:$0xff]
    %v2321 = vld [vmem:[%s2 + $0x60] sm:$0xff]
    %v2322 = vld [vmem:[%s2 + $0x68] sm:$0xff]
    %v2323 = vld [vmem:[%s2 + $0x70] sm:$0xff]
    %v2324 = vld [vmem:[%s2 + $0x78] sm:$0xff]
    %v2325 = vld [vmem:[%s2 + $0x80] sm:$0xff]
    %v2326 = vld [vmem:[%s2 + $0x88] sm:$0xff]
    %v2327 = vld [vmem:[%s2 + $0x90] sm:$0xff]
    %v2328 = vld [vmem:[%s2 + $0x98] sm:$0xff]
    %v2329 = vld [vmem:[%s2 + $0xa0] sm:$0xff]
    %v2330 = vld [vmem:[%s2 + $0xa8] sm:$0xff]
    %v2331 = vld [vmem:[%s2 + $0xb0] sm:$0xff]
    %v2332 = vld [vmem:[%s2 + $0xb8] sm:$0xff]
    %v2333 = vld [vmem:[%s2 + $0xc0] sm:$0xff]
    %v2334 = vld [vmem:[%s2 + $0xc8] sm:$0xff]
    %v2335 = vld [vmem:[%s2 + $0xd0] sm:$0xff]
    %v2336 = vld [vmem:[%s2 + $0xd8] sm:$0xff]
    %v2337 = vld [vmem:[%s2 + $0xe0] sm:$0xff]
    %v2338 = vld [vmem:[%s2 + $0xe8] sm:$0xff]
    %v2339 = vld [vmem:[%s2 + $0xf0] sm:$0xff]
    %v2340 = vld [vmem:[%s2 + $0xf8] sm:$0xff]
    %v2341 = vld [vmem:[%s2 + $0x100] sm:$0xff]
    %v2342 = vld [vmem:[%s2 + $0x108] sm:$0xff]
    %v2343 = vld [vmem:[%s2 + $0x110] sm:$0xff]
    %v2344 = vld [vmem:[%s2 + $0x118] sm:$0xff]
    %v2345 = vld [vmem:[%s2 + $0x120] sm:$0xff]
    %v2346 = vld [vmem:[%s2 + $0x128] sm:$0xff]
    %v2347 = vld [vmem:[%s2 + $0x130] sm:$0xff]
    %v2348 = vld [vmem:[%s2 + $0x138] sm:$0xff]
    %v2349 = vld [vmem:[%s2 + $0x140] sm:$0xff]
    %v2350 = vld [vmem:[%s2 + $0x148] sm:$0xff]
    %v2351 = vld [vmem:[%s2 + $0x150] sm:$0xff]
    %v2352 = vld [vmem:[%s2 + $0x158] sm:$0xff]
    %v2353 = vld [vmem:[%s2 + $0x160] sm:$0xff]
    %v2354 = vld [vmem:[%s2 + $0x168] sm:$0xff]
    %v2355 = vld [vmem:[%s2 + $0x170] sm:$0xff]
    %v2356 = vld [vmem:[%s2 + $0x178] sm:$0xff]
    %v2357 = vld [vmem:[%s2 + $0x180] sm:$0xff]
    %v2358 = vld [vmem:[%s2 + $0x188] sm:$0xff]
    %v2359 = vld [vmem:[%s2 + $0x190] sm:$0xff]
    %v2360 = vld [vmem:[%s2 + $0x198] sm:$0xff]
    %v2361 = vld [vmem:[%s2 + $0x1a0] sm:$0xff]
    %v2362 = vld [vmem:[%s2 + $0x1a8] sm:$0xff]
    %v2363 = vld [vmem:[%s2 + $0x1b0] sm:$0xff]
    %v2364 = vld [vmem:[%s2 + $0x1b8] sm:$0xff]
    %v2365 = vld [vmem:[%s2 + $0x1c0] sm:$0xff]
    %v2366 = vld [vmem:[%s2 + $0x1c8] sm:$0xff]
    %v2367 = vld [vmem:[%s2 + $0x1d0] sm:$0xff]
    %v2368 = vld [vmem:[%s2 + $0x1d8] sm:$0xff]
    %v2369 = vld [vmem:[%s2 + $0x1e0] sm:$0xff]
    %v2370 = vld [vmem:[%s2 + $0x1e8] sm:$0xff]
    %v2371 = vld [vmem:[%s2 + $0x1f0] sm:$0xff]
    %v2372 = vld [vmem:[%s2 + $0x1f8] sm:$0xff]
    %v2373 = vld [vmem:[%s2 + $0x200] sm:$0xff]
    %v2374 = vld [vmem:[%s2 + $0x208] sm:$0xff]
    %v2375 = vld [vmem:[%s2 + $0x210] sm:$0xff]
    %v2376 = vld [vmem:[%s2 + $0x218] sm:$0xff]
    %v2377 = vld [vmem:[%s2 + $0x220] sm:$0xff]
    %v2378 = vld [vmem:[%s2 + $0x228] sm:$0xff]
    %v2379 = vld [vmem:[%s2 + $0x230] sm:$0xff]
    %v2380 = vld [vmem:[%s2 + $0x238] sm:$0xff]
    %v2381 = vld [vmem:[%s2 + $0x240] sm:$0xff]
    %v2382 = vld [vmem:[%s2 + $0x248] sm:$0xff]
    %v2383 = vld [vmem:[%s2 + $0x250] sm:$0xff]
    %v2384 = vld [vmem:[%s2 + $0x258] sm:$0xff]
    %v2385 = vld [vmem:[%s2 + $0x260] sm:$0xff]
    %v2386 = vld [vmem:[%s2 + $0x268] sm:$0xff]
    %v2387 = vld [vmem:[%s2 + $0x270] sm:$0xff]
    %v2388 = vld [vmem:[%s2 + $0x278] sm:$0xff]
    %v2389 = vld [vmem:[%s2 + $0x280] sm:$0xff]
    %v2390 = vld [vmem:[%s2 + $0x288] sm:$0xff]
    %v2391 = vld [vmem:[%s2 + $0x290] sm:$0xff]
    %v2392 = vld [vmem:[%s2 + $0x298] sm:$0xff]
    %v2393 = vld [vmem:[%s2 + $0x2a0] sm:$0xff]
    %v2394 = vld [vmem:[%s2 + $0x2a8] sm:$0xff]
    %v2395 = vld [vmem:[%s2 + $0x2b0] sm:$0xff]
    %v2396 = vld [vmem:[%s2 + $0x2b8] sm:$0xff]
    %v2397 = vld [vmem:[%s2 + $0x2c0] sm:$0xff]
    %v2398 = vld [vmem:[%s2 + $0x2c8] sm:$0xff]
    %v2399 = vld [vmem:[%s2 + $0x2d0] sm:$0xff]
    %v2400 = vld [vmem:[%s2 + $0x2d8] sm:$0xff]
    %v2401 = vld [vmem:[%s2 + $0x2e0] sm:$0xff]
    %v2402 = vld [vmem:[%s2 + $0x2e8] sm:$0xff]
    %v2403 = vld [vmem:[%s2 + $0x2f0] sm:$0xff]
    %v2404 = vld [vmem:[%s2 + $0x2f8] sm:$0xff]
    %v2405 = vld [vmem:[%s2 + $0x300] sm:$0xff]
    %v2406 = vld [vmem:[%s2 + $0x308] sm:$0xff]
    %v2407 = vld [vmem:[%s2 + $0x310] sm:$0xff]
    %v2408 = vld [vmem:[%s2 + $0x318] sm:$0xff]
    %v2409 = vld [vmem:[%s2 + $0x320] sm:$0xff]
    %v2410 = vld [vmem:[%s2 + $0x328] sm:$0xff]
    %v2411 = vld [vmem:[%s2 + $0x330] sm:$0xff]
    %v2412 = vld [vmem:[%s2 + $0x338] sm:$0xff]
    %v2413 = vld [vmem:[%s2 + $0x340] sm:$0xff]
    %v2414 = vld [vmem:[%s2 + $0x348] sm:$0xff]
    %v2415 = vld [vmem:[%s2 + $0x350] sm:$0xff]
    %v2416 = vld [vmem:[%s2 + $0x358] sm:$0xff]
    %v2417 = vld [vmem:[%s2 + $0x360] sm:$0xff]
    %v2418 = vld [vmem:[%s2 + $0x368] sm:$0xff]
    %v2419 = vld [vmem:[%s2 + $0x370] sm:$0xff]
    %v2420 = vld [vmem:[%s2 + $0x378] sm:$0xff]
    %v2421 = vld [vmem:[%s2 + $0x380] sm:$0xff]
    %v2422 = vld [vmem:[%s2 + $0x388] sm:$0xff]
    %v2423 = vld [vmem:[%s2 + $0x390] sm:$0xff]
    %v2424 = vld [vmem:[%s2 + $0x398] sm:$0xff]
    %v2425 = vld [vmem:[%s2 + $0x3a0] sm:$0xff]
    %v2426 = vld [vmem:[%s2 + $0x3a8] sm:$0xff]
    %v2427 = vld [vmem:[%s2 + $0x3b0] sm:$0xff]
    %v2428 = vld [vmem:[%s2 + $0x3b8] sm:$0xff]
    %v2429 = vld [vmem:[%s2 + $0x3c0] sm:$0xff]
    %v2430 = vld [vmem:[%s2 + $0x3c8] sm:$0xff]
    %v2431 = vld [vmem:[%s2 + $0x3d0] sm:$0xff]
    %v2432 = vld [vmem:[%s2 + $0x3d8] sm:$0xff]
    %v2433 = vld [vmem:[%s2 + $0x3e0] sm:$0xff]
    %v2434 = vld [vmem:[%s2 + $0x3e8] sm:$0xff]
    %v2435 = vld [vmem:[%s2 + $0x3f0] sm:$0xff]
    %v2436 = vld [vmem:[%s2 + $0x3f8] sm:$0xff]
    %v2437 = vld [vmem:[%s2 + $0x400] sm:$0xff]
    %v2438 = vld [vmem:[%s2 + $0x408] sm:$0xff]
    %v2439 = vld [vmem:[%s2 + $0x410] sm:$0xff]
    %v2440 = vld [vmem:[%s2 + $0x418] sm:$0xff]
    %v2441 = vld [vmem:[%s2 + $0x420] sm:$0xff]
    %v2442 = vld [vmem:[%s2 + $0x428] sm:$0xff]
    %v2443 = vld [vmem:[%s2 + $0x430] sm:$0xff]
    %v2444 = vld [vmem:[%s2 + $0x438] sm:$0xff]
    %v2445 = vld [vmem:[%s2 + $0x440] sm:$0xff]
    %v2446 = vld [vmem:[%s2 + $0x448] sm:$0xff]
    %v2447 = vld [vmem:[%s2 + $0x450] sm:$0xff]
    %v2448 = vld [vmem:[%s2 + $0x458] sm:$0xff]
    %v2449 = vld [vmem:[%s2 + $0x460] sm:$0xff]
    %v2450 = vld [vmem:[%s2 + $0x468] sm:$0xff]
    %v2451 = vld [vmem:[%s2 + $0x470] sm:$0xff]
    %v2452 = vld [vmem:[%s2 + $0x478] sm:$0xff]
    %v2453 = vld [vmem:[%s2 + $0x480] sm:$0xff]
    %v2454 = vld [vmem:[%s2 + $0x488] sm:$0xff]
    %v2455 = vld [vmem:[%s2 + $0x490] sm:$0xff]
    %v2456 = vld [vmem:[%s2 + $0x498] sm:$0xff]
    %v2457 = vld [vmem:[%s2 + $0x4a0] sm:$0xff]
    %v2458 = vld [vmem:[%s2 + $0x4a8] sm:$0xff]
    %v2459 = vld [vmem:[%s2 + $0x4b0] sm:$0xff]
    %v2460 = vld [vmem:[%s2 + $0x4b8] sm:$0xff]
    %v2461 = vld [vmem:[%s2 + $0x4c0] sm:$0xff]
    %v2462 = vld [vmem:[%s2 + $0x4c8] sm:$0xff]
    %v2463 = vld [vmem:[%s2 + $0x4d0] sm:$0xff]
    %v2464 = vld [vmem:[%s2 + $0x4d8] sm:$0xff]
    %v2465 = vld [vmem:[%s2 + $0x4e0] sm:$0xff]
    %v2466 = vld [vmem:[%s2 + $0x4e8] sm:$0xff]
    %v2467 = vld [vmem:[%s2 + $0x4f0] sm:$0xff]
    %v2468 = vld [vmem:[%s2 + $0x4f8] sm:$0xff]
    %v2469 = vld [vmem:[%s2 + $0x500] sm:$0xff]
    %v2470 = vld [vmem:[%s2 + $0x508] sm:$0xff]
    %v2471 = vld [vmem:[%s2 + $0x510] sm:$0xff]
    %v2472 = vld [vmem:[%s2 + $0x518] sm:$0xff]
    %v2473 = vld [vmem:[%s2 + $0x520] sm:$0xff]
    %v2474 = vld [vmem:[%s2 + $0x528] sm:$0xff]
    %v2475 = vld [vmem:[%s2 + $0x530] sm:$0xff]
    %v2476 = vld [vmem:[%s2 + $0x538] sm:$0xff]
    %v2477 = vld [vmem:[%s2 + $0x540] sm:$0xff]
    %v2478 = vld [vmem:[%s2 + $0x548] sm:$0xff]
    %v2479 = vld [vmem:[%s2 + $0x550] sm:$0xff]
    %v2480 = vld [vmem:[%s2 + $0x558] sm:$0xff]
    %v2481 = vld [vmem:[%s2 + $0x560] sm:$0xff]
    %v2482 = vld [vmem:[%s2 + $0x568] sm:$0xff]
    %v2483 = vld [vmem:[%s2 + $0x570] sm:$0xff]
    %v2484 = vld [vmem:[%s2 + $0x578] sm:$0xff]
    %v2485 = vld [vmem:[%s2 + $0x580] sm:$0xff]
    %v2486 = vld [vmem:[%s2 + $0x588] sm:$0xff]
    %v2487 = vld [vmem:[%s2 + $0x590] sm:$0xff]
    %v2488 = vld [vmem:[%s2 + $0x598] sm:$0xff]
    %v2489 = vld [vmem:[%s2 + $0x5a0] sm:$0xff]
    %v2490 = vld [vmem:[%s2 + $0x5a8] sm:$0xff]
    %v2491 = vld [vmem:[%s2 + $0x5b0] sm:$0xff]
    %v2492 = vld [vmem:[%s2 + $0x5b8] sm:$0xff]
    %v2493 = vld [vmem:[%s2 + $0x5c0] sm:$0xff]
    %v2494 = vld [vmem:[%s2 + $0x5c8] sm:$0xff]
    %v2495 = vld [vmem:[%s2 + $0x5d0] sm:$0xff]
    %v2496 = vld [vmem:[%s2 + $0x5d8] sm:$0xff]
    %v2497 = vld [vmem:[%s2 + $0x5e0] sm:$0xff]
    %v2498 = vld [vmem:[%s2 + $0x5e8] sm:$0xff]
    %v2499 = vld [vmem:[%s2 + $0x5f0] sm:$0xff]
    %v2500 = vld [vmem:[%s2 + $0x5f8] sm:$0xff]
    %v2501 = vld [vmem:[#allocation2] sm:$0xff]
    %v2502 = vld [vmem:[#allocation2 + $0x8] sm:$0xf]
    %2505 = vst [vmem:[#allocation1] ss:$4 sm:$0xff] %v2501
    %s2506 = scalar_lea.vmem [#allocation1], 32
    %2507 = vst [vmem:[%s2506] ss:$4 sm:$0xff] %v2502
    %v2508 = vld.sshfl [vmem:[#allocation1] sm:$0xff pattern:$0x73625140]
    %v2509 = vld.sshfl [vmem:[#allocation1 + $0x8] sm:$0xff pattern:$0x73625140]
    %v2510 = vld.sshfl [vmem:[#allocation1 + $0x10] sm:$0xff pattern:$0x73625140]
    %v2511 = vld.sshfl [vmem:[#allocation1 + $0x18] sm:$0xff pattern:$0x73625140]
    %v2512 = vld.sshfl [vmem:[#allocation1 + $0x20] sm:$0xff pattern:$0x73625140]
    %v2513 = vld.sshfl [vmem:[#allocation1 + $0x28] sm:$0xff pattern:$0x73625140]
    %2520 = vmatpush.msra.mxu0 %v2339
    %2521 = vmatpush.msra.mxu0 %v2337
    %2522 = vmatpush.msra.mxu0 %v2335
    %2523 = vmatpush.msra.mxu0 %v2333
    %2524 = vmatpush.msra.mxu0 %v2331
    %2525 = vmatpush.msra.mxu0 %v2329
    %2526 = vmatpush.msra.mxu0 %v2327
    %2527 = vmatpush.msra.mxu0 %v2325
    %2528 = vmatpush.msra.mxu0 %v2323
    %2529 = vmatpush.msra.mxu0 %v2321
    %2530 = vmatpush.msra.mxu0 %v2319
    %2531 = vmatpush.msra.mxu0 %v2317
    %2532 = vmatpush.msra.mxu0 %v2315
    %2533 = vmatpush.msra.mxu0 %v2313
    %2534 = vmatpush.msra.mxu0 %v2311
    %2535 = vmatpush.msra.mxu0 %v2309
    %2536 = vmatmul.f32.gmra.mxu0 %v2508
    %v2537 = vpop.f32.mrf.mxu0
    %v2538 = vadd.f32 0.0, %v2537
    %2539 = vdwg.mxu0
    %2540 = vmatpush.msra.mxu0 %v2371
    %2541 = vmatpush.msra.mxu0 %v2369
    %2542 = vmatpush.msra.mxu0 %v2367
    %2543 = vmatpush.msra.mxu0 %v2365
    %2544 = vmatpush.msra.mxu0 %v2363
    %2545 = vmatpush.msra.mxu0 %v2361
    %2546 = vmatpush.msra.mxu0 %v2359
    %2547 = vmatpush.msra.mxu0 %v2357
    %2548 = vmatpush.msra.mxu0 %v2355
    %2549 = vmatpush.msra.mxu0 %v2353
    %2550 = vmatpush.msra.mxu0 %v2351
    %2551 = vmatpush.msra.mxu0 %v2349
    %2552 = vmatpush.msra.mxu0 %v2347
    %2553 = vmatpush.msra.mxu0 %v2345
    %2554 = vmatpush.msra.mxu0 %v2343
    %2555 = vmatpush.msra.mxu0 %v2341
    %2556 = vmatmul.f32.gmra.mxu0 %v2509
    %v2557 = vpop.f32.mrf.mxu0
    %v2558 = vadd.f32 %v2538, %v2557
    %2559 = vdwg.mxu0
    %2560 = vmatpush.msra.mxu0 %v2403
    %2561 = vmatpush.msra.mxu0 %v2401
    %2562 = vmatpush.msra.mxu0 %v2399
    %2563 = vmatpush.msra.mxu0 %v2397
    %2564 = vmatpush.msra.mxu0 %v2395
    %2565 = vmatpush.msra.mxu0 %v2393
    %2566 = vmatpush.msra.mxu0 %v2391
    %2567 = vmatpush.msra.mxu0 %v2389
    %2568 = vmatpush.msra.mxu0 %v2387
    %2569 = vmatpush.msra.mxu0 %v2385
    %2570 = vmatpush.msra.mxu0 %v2383
    %2571 = vmatpush.msra.mxu0 %v2381
    %2572 = vmatpush.msra.mxu0 %v2379
    %2573 = vmatpush.msra.mxu0 %v2377
    %2574 = vmatpush.msra.mxu0 %v2375
    %2575 = vmatpush.msra.mxu0 %v2373
    %2576 = vmatmul.f32.gmra.mxu0 %v2510
    %v2577 = vpop.f32.mrf.mxu0
    %v2578 = vadd.f32 %v2558, %v2577
    %2579 = vdwg.mxu0
    %2580 = vmatpush.msra.mxu0 %v2435
    %2581 = vmatpush.msra.mxu0 %v2433
    %2582 = vmatpush.msra.mxu0 %v2431
    %2583 = vmatpush.msra.mxu0 %v2429
    %2584 = vmatpush.msra.mxu0 %v2427
    %2585 = vmatpush.msra.mxu0 %v2425
    %2586 = vmatpush.msra.mxu0 %v2423
    %2587 = vmatpush.msra.mxu0 %v2421
    %2588 = vmatpush.msra.mxu0 %v2419
    %2589 = vmatpush.msra.mxu0 %v2417
    %2590 = vmatpush.msra.mxu0 %v2415
    %2591 = vmatpush.msra.mxu0 %v2413
    %2592 = vmatpush.msra.mxu0 %v2411
    %2593 = vmatpush.msra.mxu0 %v2409
    %2594 = vmatpush.msra.mxu0 %v2407
    %2595 = vmatpush.msra.mxu0 %v2405
    %2596 = vmatmul.f32.gmra.mxu0 %v2511
    %v2597 = vpop.f32.mrf.mxu0
    %v2598 = vadd.f32 %v2578, %v2597
    %2599 = vdwg.mxu0
    %2600 = vmatpush.msra.mxu0 %v2467
    %2601 = vmatpush.msra.mxu0 %v2465
    %2602 = vmatpush.msra.mxu0 %v2463
    %2603 = vmatpush.msra.mxu0 %v2461
    %2604 = vmatpush.msra.mxu0 %v2459
    %2605 = vmatpush.msra.mxu0 %v2457
    %2606 = vmatpush.msra.mxu0 %v2455
    %2607 = vmatpush.msra.mxu0 %v2453
    %2608 = vmatpush.msra.mxu0 %v2451
    %2609 = vmatpush.msra.mxu0 %v2449
    %2610 = vmatpush.msra.mxu0 %v2447
    %2611 = vmatpush.msra.mxu0 %v2445
    %2612 = vmatpush.msra.mxu0 %v2443
    %2613 = vmatpush.msra.mxu0 %v2441
    %2614 = vmatpush.msra.mxu0 %v2439
    %2615 = vmatpush.msra.mxu0 %v2437
    %2616 = vmatmul.f32.gmra.mxu0 %v2512
    %v2617 = vpop.f32.mrf.mxu0
    %v2618 = vadd.f32 %v2598, %v2617
    %2619 = vdwg.mxu0
    %2620 = vmatpush.msra.mxu0 %v2499
    %2621 = vmatpush.msra.mxu0 %v2497
    %2622 = vmatpush.msra.mxu0 %v2495
    %2623 = vmatpush.msra.mxu0 %v2493
    %2624 = vmatpush.msra.mxu0 %v2491
    %2625 = vmatpush.msra.mxu0 %v2489
    %2626 = vmatpush.msra.mxu0 %v2487
    %2627 = vmatpush.msra.mxu0 %v2485
    %2628 = vmatpush.msra.mxu0 %v2483
    %2629 = vmatpush.msra.mxu0 %v2481
    %2630 = vmatpush.msra.mxu0 %v2479
    %2631 = vmatpush.msra.mxu0 %v2477
    %2632 = vmatpush.msra.mxu0 %v2475
    %2633 = vmatpush.msra.mxu0 %v2473
    %2634 = vmatpush.msra.mxu0 %v2471
    %2635 = vmatpush.msra.mxu0 %v2469
    %2636 = vmatmul.f32.gmra.mxu0 %v2513
    %v2637 = vpop.f32.mrf.mxu0
    %v2638 = vadd.f32 %v2618, %v2637
    %2639 = vdwg.mxu0
    %2640 = vmatpush.msra.mxu0 %v2340
    %2641 = vmatpush.msra.mxu0 %v2338
    %2642 = vmatpush.msra.mxu0 %v2336
    %2643 = vmatpush.msra.mxu0 %v2334
    %2644 = vmatpush.msra.mxu0 %v2332
    %2645 = vmatpush.msra.mxu0 %v2330
    %2646 = vmatpush.msra.mxu0 %v2328
    %2647 = vmatpush.msra.mxu0 %v2326
    %2648 = vmatpush.msra.mxu0 %v2324
    %2649 = vmatpush.msra.mxu0 %v2322
    %2650 = vmatpush.msra.mxu0 %v2320
    %2651 = vmatpush.msra.mxu0 %v2318
    %2652 = vmatpush.msra.mxu0 %v2316
    %2653 = vmatpush.msra.mxu0 %v2314
    %2654 = vmatpush.msra.mxu0 %v2312
    %2655 = vmatpush.msra.mxu0 %v2310
    %2656 = vmatmul.f32.gmra.mxu0 %v2508
    %v2657 = vpop.f32.mrf.mxu0
    %v2658 = vadd.f32 0.0, %v2657
    %2659 = vdwg.mxu0
    %2660 = vmatpush.msra.mxu0 %v2372
    %2661 = vmatpush.msra.mxu0 %v2370
    %2662 = vmatpush.msra.mxu0 %v2368
    %2663 = vmatpush.msra.mxu0 %v2366
    %2664 = vmatpush.msra.mxu0 %v2364
    %2665 = vmatpush.msra.mxu0 %v2362
    %2666 = vmatpush.msra.mxu0 %v2360
    %2667 = vmatpush.msra.mxu0 %v2358
    %2668 = vmatpush.msra.mxu0 %v2356
    %2669 = vmatpush.msra.mxu0 %v2354
    %2670 = vmatpush.msra.mxu0 %v2352
    %2671 = vmatpush.msra.mxu0 %v2350
    %2672 = vmatpush.msra.mxu0 %v2348
    %2673 = vmatpush.msra.mxu0 %v2346
    %2674 = vmatpush.msra.mxu0 %v2344
    %2675 = vmatpush.msra.mxu0 %v2342
    %2676 = vmatmul.f32.gmra.mxu0 %v2509
    %v2677 = vpop.f32.mrf.mxu0
    %v2678 = vadd.f32 %v2658, %v2677
    %2679 = vdwg.mxu0
    %2680 = vmatpush.msra.mxu0 %v2404
    %2681 = vmatpush.msra.mxu0 %v2402
    %2682 = vmatpush.msra.mxu0 %v2400
    %2683 = vmatpush.msra.mxu0 %v2398
    %2684 = vmatpush.msra.mxu0 %v2396
    %2685 = vmatpush.msra.mxu0 %v2394
    %2686 = vmatpush.msra.mxu0 %v2392
    %2687 = vmatpush.msra.mxu0 %v2390
    %2688 = vmatpush.msra.mxu0 %v2388
    %2689 = vmatpush.msra.mxu0 %v2386
    %2690 = vmatpush.msra.mxu0 %v2384
    %2691 = vmatpush.msra.mxu0 %v2382
    %2692 = vmatpush.msra.mxu0 %v2380
    %2693 = vmatpush.msra.mxu0 %v2378
    %2694 = vmatpush.msra.mxu0 %v2376
    %2695 = vmatpush.msra.mxu0 %v2374
    %2696 = vmatmul.f32.gmra.mxu0 %v2510
    %v2697 = vpop.f32.mrf.mxu0
    %v2698 = vadd.f32 %v2678, %v2697
    %2699 = vdwg.mxu0
    %2700 = vmatpush.msra.mxu0 %v2436
    %2701 = vmatpush.msra.mxu0 %v2434
    %2702 = vmatpush.msra.mxu0 %v2432
    %2703 = vmatpush.msra.mxu0 %v2430
    %2704 = vmatpush.msra.mxu0 %v2428
    %2705 = vmatpush.msra.mxu0 %v2426
    %2706 = vmatpush.msra.mxu0 %v2424
    %2707 = vmatpush.msra.mxu0 %v2422
    %2708 = vmatpush.msra.mxu0 %v2420
    %2709 = vmatpush.msra.mxu0 %v2418
    %2710 = vmatpush.msra.mxu0 %v2416
    %2711 = vmatpush.msra.mxu0 %v2414
    %2712 = vmatpush.msra.mxu0 %v2412
    %2713 = vmatpush.msra.mxu0 %v2410
    %2714 = vmatpush.msra.mxu0 %v2408
    %2715 = vmatpush.msra.mxu0 %v2406
    %2716 = vmatmul.f32.gmra.mxu0 %v2511
    %v2717 = vpop.f32.mrf.mxu0
    %v2718 = vadd.f32 %v2698, %v2717
    %2719 = vdwg.mxu0
    %2720 = vmatpush.msra.mxu0 %v2468
    %2721 = vmatpush.msra.mxu0 %v2466
    %2722 = vmatpush.msra.mxu0 %v2464
    %2723 = vmatpush.msra.mxu0 %v2462
    %2724 = vmatpush.msra.mxu0 %v2460
    %2725 = vmatpush.msra.mxu0 %v2458
    %2726 = vmatpush.msra.mxu0 %v2456
    %2727 = vmatpush.msra.mxu0 %v2454
    %2728 = vmatpush.msra.mxu0 %v2452
    %2729 = vmatpush.msra.mxu0 %v2450
    %2730 = vmatpush.msra.mxu0 %v2448
    %2731 = vmatpush.msra.mxu0 %v2446
    %2732 = vmatpush.msra.mxu0 %v2444
    %2733 = vmatpush.msra.mxu0 %v2442
    %2734 = vmatpush.msra.mxu0 %v2440
    %2735 = vmatpush.msra.mxu0 %v2438
    %2736 = vmatmul.f32.gmra.mxu0 %v2512
    %v2737 = vpop.f32.mrf.mxu0
    %v2738 = vadd.f32 %v2718, %v2737
    %2739 = vdwg.mxu0
    %2740 = vmatpush.msra.mxu0 %v2500
    %2741 = vmatpush.msra.mxu0 %v2498
    %2742 = vmatpush.msra.mxu0 %v2496
    %2743 = vmatpush.msra.mxu0 %v2494
    %2744 = vmatpush.msra.mxu0 %v2492
    %2745 = vmatpush.msra.mxu0 %v2490
    %2746 = vmatpush.msra.mxu0 %v2488
    %2747 = vmatpush.msra.mxu0 %v2486
    %2748 = vmatpush.msra.mxu0 %v2484
    %2749 = vmatpush.msra.mxu0 %v2482
    %2750 = vmatpush.msra.mxu0 %v2480
    %2751 = vmatpush.msra.mxu0 %v2478
    %2752 = vmatpush.msra.mxu0 %v2476
    %2753 = vmatpush.msra.mxu0 %v2474
    %2754 = vmatpush.msra.mxu0 %v2472
    %2755 = vmatpush.msra.mxu0 %v2470
    %2756 = vmatmul.f32.gmra.mxu0 %v2513
    %v2757 = vpop.f32.mrf.mxu0
    %v2758 = vadd.f32 %v2738, %v2757
    %2759 = vdwg.mxu0
    %v2760 = vmax.f32 %v2638, 0.0
    %v2761 = vmax.f32 %v2758, 0.0
    %v2762 = vld [vmem:[%s3] sm:$0xff]
    %v2763 = vld [vmem:[%s3 + $0x8] sm:$0xff]
    %v2764 = vld [vmem:[%s3 + $0x10] sm:$0xff]
    %v2765 = vld [vmem:[%s3 + $0x18] sm:$0xff]
    %v2766 = vld [vmem:[%s3 + $0x20] sm:$0xff]
    %v2767 = vld [vmem:[%s3 + $0x28] sm:$0xff]
    %v2768 = vld [vmem:[%s3 + $0x30] sm:$0xff]
    %v2769 = vld [vmem:[%s3 + $0x38] sm:$0xff]
    %v2770 = vld [vmem:[%s3 + $0x40] sm:$0xff]
    %v2771 = vld [vmem:[%s3 + $0x48] sm:$0xff]
    %v2772 = vld [vmem:[%s3 + $0x50] sm:$0xff]
    %v2773 = vld [vmem:[%s3 + $0x58] sm:$0xff]
    %v2774 = vld [vmem:[%s3 + $0x60] sm:$0xff]
    %v2775 = vld [vmem:[%s3 + $0x68] sm:$0xff]
    %v2776 = vld [vmem:[%s3 + $0x70] sm:$0xff]
    %v2777 = vld [vmem:[%s3 + $0x78] sm:$0xff]
    %v2778 = vld [vmem:[%s3 + $0x80] sm:$0xff]
    %v2779 = vld [vmem:[%s3 + $0x88] sm:$0xff]
    %v2780 = vld [vmem:[%s3 + $0x90] sm:$0xff]
    %v2781 = vld [vmem:[%s3 + $0x98] sm:$0xff]
    %v2782 = vld [vmem:[%s3 + $0xa0] sm:$0xff]
    %v2783 = vld [vmem:[%s3 + $0xa8] sm:$0xff]
    %v2784 = vld [vmem:[%s3 + $0xb0] sm:$0xff]
    %v2785 = vld [vmem:[%s3 + $0xb8] sm:$0xff]
    %v2786 = vld [vmem:[%s3 + $0xc0] sm:$0xff]
    %v2787 = vld [vmem:[%s3 + $0xc8] sm:$0xff]
    %v2788 = vld [vmem:[%s3 + $0xd0] sm:$0xff]
    %v2789 = vld [vmem:[%s3 + $0xd8] sm:$0xff]
    %v2790 = vld [vmem:[%s3 + $0xe0] sm:$0xff]
    %v2791 = vld [vmem:[%s3 + $0xe8] sm:$0xff]
    %v2792 = vld [vmem:[%s3 + $0xf0] sm:$0xff]
    %v2793 = vld [vmem:[%s3 + $0xf8] sm:$0xff]
    %v2794 = vld [vmem:[#allocation2 + $0x4] sm:$0xff]
    %v2795 = vld [vmem:[#allocation2 + $0xc] sm:$0xf]
    %2798 = vst [vmem:[#allocation1] ss:$4 sm:$0xff] %v2794
    %s2799 = scalar_lea.vmem [#allocation1], 32
    %2800 = vst [vmem:[%s2799] ss:$4 sm:$0xff] %v2795
    %v2801 = vld.sshfl [vmem:[#allocation1] sm:$0xff pattern:$0x73625140]
    %v2802 = vld.sshfl [vmem:[#allocation1 + $0x8] sm:$0xff pattern:$0x73625140]
    %v2803 = vld.sshfl [vmem:[#allocation1 + $0x10] sm:$0xff pattern:$0x73625140]
    %v2804 = vld.sshfl [vmem:[#allocation1 + $0x18] sm:$0xff pattern:$0x73625140]
    %v2805 = vld.sshfl [vmem:[#allocation1 + $0x20] sm:$0xff pattern:$0x73625140]
    %v2806 = vld.sshfl [vmem:[#allocation1 + $0x28] sm:$0xff pattern:$0x73625140]
    %2813 = vmatpush.msra.mxu0 %v2339
    %2814 = vmatpush.msra.mxu0 %v2337
    %2815 = vmatpush.msra.mxu0 %v2335
    %2816 = vmatpush.msra.mxu0 %v2333
    %2817 = vmatpush.msra.mxu0 %v2331
    %2818 = vmatpush.msra.mxu0 %v2329
    %2819 = vmatpush.msra.mxu0 %v2327
    %2820 = vmatpush.msra.mxu0 %v2325
    %2821 = vmatpush.msra.mxu0 %v2323
    %2822 = vmatpush.msra.mxu0 %v2321
    %2823 = vmatpush.msra.mxu0 %v2319
    %2824 = vmatpush.msra.mxu0 %v2317
    %2825 = vmatpush.msra.mxu0 %v2315
    %2826 = vmatpush.msra.mxu0 %v2313
    %2827 = vmatpush.msra.mxu0 %v2311
    %2828 = vmatpush.msra.mxu0 %v2309
    %2829 = vmatmul.f32.gmra.mxu0 %v2801
    %v2830 = vpop.f32.mrf.mxu0
    %v2831 = vadd.f32 0.0, %v2830
    %2832 = vdwg.mxu0
    %2833 = vmatpush.msra.mxu0 %v2371
    %2834 = vmatpush.msra.mxu0 %v2369
    %2835 = vmatpush.msra.mxu0 %v2367
    %2836 = vmatpush.msra.mxu0 %v2365
    %2837 = vmatpush.msra.mxu0 %v2363
    %2838 = vmatpush.msra.mxu0 %v2361
    %2839 = vmatpush.msra.mxu0 %v2359
    %2840 = vmatpush.msra.mxu0 %v2357
    %2841 = vmatpush.msra.mxu0 %v2355
    %2842 = vmatpush.msra.mxu0 %v2353
    %2843 = vmatpush.msra.mxu0 %v2351
    %2844 = vmatpush.msra.mxu0 %v2349
    %2845 = vmatpush.msra.mxu0 %v2347
    %2846 = vmatpush.msra.mxu0 %v2345
    %2847 = vmatpush.msra.mxu0 %v2343
    %2848 = vmatpush.msra.mxu0 %v2341
    %2849 = vmatmul.f32.gmra.mxu0 %v2802
    %v2850 = vpop.f32.mrf.mxu0
    %v2851 = vadd.f32 %v2831, %v2850
    %2852 = vdwg.mxu0
    %2853 = vmatpush.msra.mxu0 %v2403
    %2854 = vmatpush.msra.mxu0 %v2401
    %2855 = vmatpush.msra.mxu0 %v2399
    %2856 = vmatpush.msra.mxu0 %v2397
    %2857 = vmatpush.msra.mxu0 %v2395
    %2858 = vmatpush.msra.mxu0 %v2393
    %2859 = vmatpush.msra.mxu0 %v2391
    %2860 = vmatpush.msra.mxu0 %v2389
    %2861 = vmatpush.msra.mxu0 %v2387
    %2862 = vmatpush.msra.mxu0 %v2385
    %2863 = vmatpush.msra.mxu0 %v2383
    %2864 = vmatpush.msra.mxu0 %v2381
    %2865 = vmatpush.msra.mxu0 %v2379
    %2866 = vmatpush.msra.mxu0 %v2377
    %2867 = vmatpush.msra.mxu0 %v2375
    %2868 = vmatpush.msra.mxu0 %v2373
    %2869 = vmatmul.f32.gmra.mxu0 %v2803
    %v2870 = vpop.f32.mrf.mxu0
    %v2871 = vadd.f32 %v2851, %v2870
    %2872 = vdwg.mxu0
    %2873 = vmatpush.msra.mxu0 %v2435
    %2874 = vmatpush.msra.mxu0 %v2433
    %2875 = vmatpush.msra.mxu0 %v2431
    %2876 = vmatpush.msra.mxu0 %v2429
    %2877 = vmatpush.msra.mxu0 %v2427
    %2878 = vmatpush.msra.mxu0 %v2425
    %2879 = vmatpush.msra.mxu0 %v2423
    %2880 = vmatpush.msra.mxu0 %v2421
    %2881 = vmatpush.msra.mxu0 %v2419
    %2882 = vmatpush.msra.mxu0 %v2417
    %2883 = vmatpush.msra.mxu0 %v2415
    %2884 = vmatpush.msra.mxu0 %v2413
    %2885 = vmatpush.msra.mxu0 %v2411
    %2886 = vmatpush.msra.mxu0 %v2409
    %2887 = vmatpush.msra.mxu0 %v2407
    %2888 = vmatpush.msra.mxu0 %v2405
    %2889 = vmatmul.f32.gmra.mxu0 %v2804
    %v2890 = vpop.f32.mrf.mxu0
    %v2891 = vadd.f32 %v2871, %v2890
    %2892 = vdwg.mxu0
    %2893 = vmatpush.msra.mxu0 %v2467
    %2894 = vmatpush.msra.mxu0 %v2465
    %2895 = vmatpush.msra.mxu0 %v2463
    %2896 = vmatpush.msra.mxu0 %v2461
    %2897 = vmatpush.msra.mxu0 %v2459
    %2898 = vmatpush.msra.mxu0 %v2457
    %2899 = vmatpush.msra.mxu0 %v2455
    %2900 = vmatpush.msra.mxu0 %v2453
    %2901 = vmatpush.msra.mxu0 %v2451
    %2902 = vmatpush.msra.mxu0 %v2449
    %2903 = vmatpush.msra.mxu0 %v2447
    %2904 = vmatpush.msra.mxu0 %v2445
    %2905 = vmatpush.msra.mxu0 %v2443
    %2906 = vmatpush.msra.mxu0 %v2441
    %2907 = vmatpush.msra.mxu0 %v2439
    %2908 = vmatpush.msra.mxu0 %v2437
    %2909 = vmatmul.f32.gmra.mxu0 %v2805
    %v2910 = vpop.f32.mrf.mxu0
    %v2911 = vadd.f32 %v2891, %v2910
    %2912 = vdwg.mxu0
    %2913 = vmatpush.msra.mxu0 %v2499
    %2914 = vmatpush.msra.mxu0 %v2497
    %2915 = vmatpush.msra.mxu0 %v2495
    %2916 = vmatpush.msra.mxu0 %v2493
    %2917 = vmatpush.msra.mxu0 %v2491
    %2918 = vmatpush.msra.mxu0 %v2489
    %2919 = vmatpush.msra.mxu0 %v2487
    %2920 = vmatpush.msra.mxu0 %v2485
    %2921 = vmatpush.msra.mxu0 %v2483
    %2922 = vmatpush.msra.mxu0 %v2481
    %2923 = vmatpush.msra.mxu0 %v2479
    %2924 = vmatpush.msra.mxu0 %v2477
    %2925 = vmatpush.msra.mxu0 %v2475
    %2926 = vmatpush.msra.mxu0 %v2473
    %2927 = vmatpush.msra.mxu0 %v2471
    %2928 = vmatpush.msra.mxu0 %v2469
    %2929 = vmatmul.f32.gmra.mxu0 %v2806
    %v2930 = vpop.f32.mrf.mxu0
    %v2931 = vadd.f32 %v2911, %v2930
    %2932 = vdwg.mxu0
    %2933 = vmatpush.msra.mxu0 %v2340
    %2934 = vmatpush.msra.mxu0 %v2338
    %2935 = vmatpush.msra.mxu0 %v2336
    %2936 = vmatpush.msra.mxu0 %v2334
    %2937 = vmatpush.msra.mxu0 %v2332
    %2938 = vmatpush.msra.mxu0 %v2330
    %2939 = vmatpush.msra.mxu0 %v2328
    %2940 = vmatpush.msra.mxu0 %v2326
    %2941 = vmatpush.msra.mxu0 %v2324
    %2942 = vmatpush.msra.mxu0 %v2322
    %2943 = vmatpush.msra.mxu0 %v2320
    %2944 = vmatpush.msra.mxu0 %v2318
    %2945 = vmatpush.msra.mxu0 %v2316
    %2946 = vmatpush.msra.mxu0 %v2314
    %2947 = vmatpush.msra.mxu0 %v2312
    %2948 = vmatpush.msra.mxu0 %v2310
    %2949 = vmatmul.f32.gmra.mxu0 %v2801
    %v2950 = vpop.f32.mrf.mxu0
    %v2951 = vadd.f32 0.0, %v2950
    %2952 = vdwg.mxu0
    %2953 = vmatpush.msra.mxu0 %v2372
    %2954 = vmatpush.msra.mxu0 %v2370
    %2955 = vmatpush.msra.mxu0 %v2368
    %2956 = vmatpush.msra.mxu0 %v2366
    %2957 = vmatpush.msra.mxu0 %v2364
    %2958 = vmatpush.msra.mxu0 %v2362
    %2959 = vmatpush.msra.mxu0 %v2360
    %2960 = vmatpush.msra.mxu0 %v2358
    %2961 = vmatpush.msra.mxu0 %v2356
    %2962 = vmatpush.msra.mxu0 %v2354
    %2963 = vmatpush.msra.mxu0 %v2352
    %2964 = vmatpush.msra.mxu0 %v2350
    %2965 = vmatpush.msra.mxu0 %v2348
    %2966 = vmatpush.msra.mxu0 %v2346
    %2967 = vmatpush.msra.mxu0 %v2344
    %2968 = vmatpush.msra.mxu0 %v2342
    %2969 = vmatmul.f32.gmra.mxu0 %v2802
    %v2970 = vpop.f32.mrf.mxu0
    %v2971 = vadd.f32 %v2951, %v2970
    %2972 = vdwg.mxu0
    %2973 = vmatpush.msra.mxu0 %v2404
    %2974 = vmatpush.msra.mxu0 %v2402
    %2975 = vmatpush.msra.mxu0 %v2400
    %2976 = vmatpush.msra.mxu0 %v2398
    %2977 = vmatpush.msra.mxu0 %v2396
    %2978 = vmatpush.msra.mxu0 %v2394
    %2979 = vmatpush.msra.mxu0 %v2392
    %2980 = vmatpush.msra.mxu0 %v2390
    %2981 = vmatpush.msra.mxu0 %v2388
    %2982 = vmatpush.msra.mxu0 %v2386
    %2983 = vmatpush.msra.mxu0 %v2384
    %2984 = vmatpush.msra.mxu0 %v2382
    %2985 = vmatpush.msra.mxu0 %v2380
    %2986 = vmatpush.msra.mxu0 %v2378
    %2987 = vmatpush.msra.mxu0 %v2376
    %2988 = vmatpush.msra.mxu0 %v2374
    %2989 = vmatmul.f32.gmra.mxu0 %v2803
    %v2990 = vpop.f32.mrf.mxu0
    %v2991 = vadd.f32 %v2971, %v2990
    %2992 = vdwg.mxu0
    %2993 = vmatpush.msra.mxu0 %v2436
    %2994 = vmatpush.msra.mxu0 %v2434
    %2995 = vmatpush.msra.mxu0 %v2432
    %2996 = vmatpush.msra.mxu0 %v2430
    %2997 = vmatpush.msra.mxu0 %v2428
    %2998 = vmatpush.msra.mxu0 %v2426
    %2999 = vmatpush.msra.mxu0 %v2424
    %3000 = vmatpush.msra.mxu0 %v2422
    %3001 = vmatpush.msra.mxu0 %v2420
    %3002 = vmatpush.msra.mxu0 %v2418
    %3003 = vmatpush.msra.mxu0 %v2416
    %3004 = vmatpush.msra.mxu0 %v2414
    %3005 = vmatpush.msra.mxu0 %v2412
    %3006 = vmatpush.msra.mxu0 %v2410
    %3007 = vmatpush.msra.mxu0 %v2408
    %3008 = vmatpush.msra.mxu0 %v2406
    %3009 = vmatmul.f32.gmra.mxu0 %v2804
    %v3010 = vpop.f32.mrf.mxu0
    %v3011 = vadd.f32 %v2991, %v3010
    %3012 = vdwg.mxu0
    %3013 = vmatpush.msra.mxu0 %v2468
    %3014 = vmatpush.msra.mxu0 %v2466
    %3015 = vmatpush.msra.mxu0 %v2464
    %3016 = vmatpush.msra.mxu0 %v2462
    %3017 = vmatpush.msra.mxu0 %v2460
    %3018 = vmatpush.msra.mxu0 %v2458
    %3019 = vmatpush.msra.mxu0 %v2456
    %3020 = vmatpush.msra.mxu0 %v2454
    %3021 = vmatpush.msra.mxu0 %v2452
    %3022 = vmatpush.msra.mxu0 %v2450
    %3023 = vmatpush.msra.mxu0 %v2448
    %3024 = vmatpush.msra.mxu0 %v2446
    %3025 = vmatpush.msra.mxu0 %v2444
    %3026 = vmatpush.msra.mxu0 %v2442
    %3027 = vmatpush.msra.mxu0 %v2440
    %3028 = vmatpush.msra.mxu0 %v2438
    %3029 = vmatmul.f32.gmra.mxu0 %v2805
    %v3030 = vpop.f32.mrf.mxu0
    %v3031 = vadd.f32 %v3011, %v3030
    %3032 = vdwg.mxu0
    %3033 = vmatpush.msra.mxu0 %v2500
    %3034 = vmatpush.msra.mxu0 %v2498
    %3035 = vmatpush.msra.mxu0 %v2496
    %3036 = vmatpush.msra.mxu0 %v2494
    %3037 = vmatpush.msra.mxu0 %v2492
    %3038 = vmatpush.msra.mxu0 %v2490
    %3039 = vmatpush.msra.mxu0 %v2488
    %3040 = vmatpush.msra.mxu0 %v2486
    %3041 = vmatpush.msra.mxu0 %v2484
    %3042 = vmatpush.msra.mxu0 %v2482
    %3043 = vmatpush.msra.mxu0 %v2480
    %3044 = vmatpush.msra.mxu0 %v2478
    %3045 = vmatpush.msra.mxu0 %v2476
    %3046 = vmatpush.msra.mxu0 %v2474
    %3047 = vmatpush.msra.mxu0 %v2472
    %3048 = vmatpush.msra.mxu0 %v2470
    %3049 = vmatmul.f32.gmra.mxu0 %v2806
    %v3050 = vpop.f32.mrf.mxu0
    %v3051 = vadd.f32 %v3031, %v3050
    %3052 = vdwg.mxu0
    %v3053 = vmax.f32 %v2931, 0.0
    %v3054 = vmax.f32 %v3051, 0.0
    %s3055 = scalar_lea.vmem %s3, 256
    %v3056 = vld [vmem:[%s3055] sm:$0xff]
    %v3057 = vld [vmem:[%s3055 + $0x8] sm:$0xff]
    %v3058 = vld [vmem:[%s3055 + $0x10] sm:$0xff]
    %v3059 = vld [vmem:[%s3055 + $0x18] sm:$0xff]
    %v3060 = vld [vmem:[%s3055 + $0x20] sm:$0xff]
    %v3061 = vld [vmem:[%s3055 + $0x28] sm:$0xff]
    %v3062 = vld [vmem:[%s3055 + $0x30] sm:$0xff]
    %v3063 = vld [vmem:[%s3055 + $0x38] sm:$0xff]
    %v3064 = vld [vmem:[%s3055 + $0x40] sm:$0xff]
    %v3065 = vld [vmem:[%s3055 + $0x48] sm:$0xff]
    %v3066 = vld [vmem:[%s3055 + $0x50] sm:$0xff]
    %v3067 = vld [vmem:[%s3055 + $0x58] sm:$0xff]
    %v3068 = vld [vmem:[%s3055 + $0x60] sm:$0xff]
    %v3069 = vld [vmem:[%s3055 + $0x68] sm:$0xff]
    %v3070 = vld [vmem:[%s3055 + $0x70] sm:$0xff]
    %v3071 = vld [vmem:[%s3055 + $0x78] sm:$0xff]
    %v3072 = vld [vmem:[%s3055 + $0x80] sm:$0xff]
    %v3073 = vld [vmem:[%s3055 + $0x88] sm:$0xff]
    %v3074 = vld [vmem:[%s3055 + $0x90] sm:$0xff]
    %v3075 = vld [vmem:[%s3055 + $0x98] sm:$0xff]
    %v3076 = vld [vmem:[%s3055 + $0xa0] sm:$0xff]
    %v3077 = vld [vmem:[%s3055 + $0xa8] sm:$0xff]
    %v3078 = vld [vmem:[%s3055 + $0xb0] sm:$0xff]
    %v3079 = vld [vmem:[%s3055 + $0xb8] sm:$0xff]
    %v3080 = vld [vmem:[%s3055 + $0xc0] sm:$0xff]
    %v3081 = vld [vmem:[%s3055 + $0xc8] sm:$0xff]
    %v3082 = vld [vmem:[%s3055 + $0xd0] sm:$0xff]
    %v3083 = vld [vmem:[%s3055 + $0xd8] sm:$0xff]
    %v3084 = vld [vmem:[%s3055 + $0xe0] sm:$0xff]
    %v3085 = vld [vmem:[%s3055 + $0xe8] sm:$0xff]
    %v3086 = vld [vmem:[%s3055 + $0xf0] sm:$0xff]
    %v3087 = vld [vmem:[%s3055 + $0xf8] sm:$0xff]
    %3088 = vmatpush.msra.mxu0 %v3071
    %3089 = vmatpush.msra.mxu0 %v3070
    %3090 = vmatpush.msra.mxu0 %v3069
    %3091 = vmatpush.msra.mxu0 %v3068
    %3092 = vmatpush.msra.mxu0 %v3067
    %3093 = vmatpush.msra.mxu0 %v3066
    %3094 = vmatpush.msra.mxu0 %v3065
    %3095 = vmatpush.msra.mxu0 %v3064
    %3096 = vmatpush.msra.mxu0 %v3063
    %3097 = vmatpush.msra.mxu0 %v3062
    %3098 = vmatpush.msra.mxu0 %v3061
    %3099 = vmatpush.msra.mxu0 %v3060
    %3100 = vmatpush.msra.mxu0 %v3059
    %3101 = vmatpush.msra.mxu0 %v3058
    %3102 = vmatpush.msra.mxu0 %v3057
    %3103 = vmatpush.msra.mxu0 %v3056
    %3104 = vmatmul.f32.gmra.mxu0 %v3053
    %v3105 = vpop.f32.mrf.mxu0
    %v3106 = vadd.f32 0.0, %v3105
    %3107 = vdwg.mxu0
    %3108 = vmatpush.msra.mxu0 %v3087
    %3109 = vmatpush.msra.mxu0 %v3086
    %3110 = vmatpush.msra.mxu0 %v3085
    %3111 = vmatpush.msra.mxu0 %v3084
    %3112 = vmatpush.msra.mxu0 %v3083
    %3113 = vmatpush.msra.mxu0 %v3082
    %3114 = vmatpush.msra.mxu0 %v3081
    %3115 = vmatpush.msra.mxu0 %v3080
    %3116 = vmatpush.msra.mxu0 %v3079
    %3117 = vmatpush.msra.mxu0 %v3078
    %3118 = vmatpush.msra.mxu0 %v3077
    %3119 = vmatpush.msra.mxu0 %v3076
    %3120 = vmatpush.msra.mxu0 %v3075
    %3121 = vmatpush.msra.mxu0 %v3074
    %3122 = vmatpush.msra.mxu0 %v3073
    %3123 = vmatpush.msra.mxu0 %v3072
    %3124 = vmatmul.f32.gmra.mxu0 %v3054
    %v3125 = vpop.f32.mrf.mxu0
    %v3126 = vadd.f32 %v3106, %v3125
    %3127 = vdwg.mxu0
    %3128 = vmatpush.msra.mxu0 %v2777
    %3129 = vmatpush.msra.mxu0 %v2776
    %3130 = vmatpush.msra.mxu0 %v2775
    %3131 = vmatpush.msra.mxu0 %v2774
    %3132 = vmatpush.msra.mxu0 %v2773
    %3133 = vmatpush.msra.mxu0 %v2772
    %3134 = vmatpush.msra.mxu0 %v2771
    %3135 = vmatpush.msra.mxu0 %v2770
    %3136 = vmatpush.msra.mxu0 %v2769
    %3137 = vmatpush.msra.mxu0 %v2768
    %3138 = vmatpush.msra.mxu0 %v2767
    %3139 = vmatpush.msra.mxu0 %v2766
    %3140 = vmatpush.msra.mxu0 %v2765
    %3141 = vmatpush.msra.mxu0 %v2764
    %3142 = vmatpush.msra.mxu0 %v2763
    %3143 = vmatpush.msra.mxu0 %v2762
    %3144 = vmatmul.f32.gmra.mxu0 %v2760
    %v3145 = vpop.f32.mrf.mxu0
    %v3146 = vadd.f32 %v3126, %v3145
    %3147 = vdwg.mxu0
    %3148 = vmatpush.msra.mxu0 %v2793
    %3149 = vmatpush.msra.mxu0 %v2792
    %3150 = vmatpush.msra.mxu0 %v2791
    %3151 = vmatpush.msra.mxu0 %v2790
    %3152 = vmatpush.msra.mxu0 %v2789
    %3153 = vmatpush.msra.mxu0 %v2788
    %3154 = vmatpush.msra.mxu0 %v2787
    %3155 = vmatpush.msra.mxu0 %v2786
    %3156 = vmatpush.msra.mxu0 %v2785
    %3157 = vmatpush.msra.mxu0 %v2784
    %3158 = vmatpush.msra.mxu0 %v2783
    %3159 = vmatpush.msra.mxu0 %v2782
    %3160 = vmatpush.msra.mxu0 %v2781
    %3161 = vmatpush.msra.mxu0 %v2780
    %3162 = vmatpush.msra.mxu0 %v2779
    %3163 = vmatpush.msra.mxu0 %v2778
    %3164 = vmatmul.f32.gmra.mxu0 %v2761
    %v3165 = vpop.f32.mrf.mxu0
    %v3166 = vadd.f32 %v3146, %v3165
    %3167 = vdwg.mxu0
    %v3168 = vld [vmem:[#allocation2 + $0x8] sm:$0xff]
    %v3169 = vld [vmem:[#allocation2 + $0x10] sm:$0xf]
    %3172 = vst [vmem:[#allocation1] ss:$4 sm:$0xff] %v3168
    %s3173 = scalar_lea.vmem [#allocation1], 32
    %3174 = vst [vmem:[%s3173] ss:$4 sm:$0xff] %v3169
    %v3175 = vld.sshfl [vmem:[#allocation1] sm:$0xff pattern:$0x73625140]
    %v3176 = vld.sshfl [vmem:[#allocation1 + $0x8] sm:$0xff pattern:$0x73625140]
    %v3177 = vld.sshfl [vmem:[#allocation1 + $0x10] sm:$0xff pattern:$0x73625140]
    %v3178 = vld.sshfl [vmem:[#allocation1 + $0x18] sm:$0xff pattern:$0x73625140]
    %v3179 = vld.sshfl [vmem:[#allocation1 + $0x20] sm:$0xff pattern:$0x73625140]
    %v3180 = vld.sshfl [vmem:[#allocation1 + $0x28] sm:$0xff pattern:$0x73625140]
    %3187 = vmatpush.msra.mxu0 %v2339
    %3188 = vmatpush.msra.mxu0 %v2337
    %3189 = vmatpush.msra.mxu0 %v2335
    %3190 = vmatpush.msra.mxu0 %v2333
    %3191 = vmatpush.msra.mxu0 %v2331
    %3192 = vmatpush.msra.mxu0 %v2329
    %3193 = vmatpush.msra.mxu0 %v2327
    %3194 = vmatpush.msra.mxu0 %v2325
    %3195 = vmatpush.msra.mxu0 %v2323
    %3196 = vmatpush.msra.mxu0 %v2321
    %3197 = vmatpush.msra.mxu0 %v2319
    %3198 = vmatpush.msra.mxu0 %v2317
    %3199 = vmatpush.msra.mxu0 %v2315
    %3200 = vmatpush.msra.mxu0 %v2313
    %3201 = vmatpush.msra.mxu0 %v2311
    %3202 = vmatpush.msra.mxu0 %v2309
    %3203 = vmatmul.f32.gmra.mxu0 %v3175
    %v3204 = vpop.f32.mrf.mxu0
    %v3205 = vadd.f32 0.0, %v3204
    %3206 = vdwg.mxu0
    %3207 = vmatpush.msra.mxu0 %v2371
    %3208 = vmatpush.msra.mxu0 %v2369
    %3209 = vmatpush.msra.mxu0 %v2367
    %3210 = vmatpush.msra.mxu0 %v2365
    %3211 = vmatpush.msra.mxu0 %v2363
    %3212 = vmatpush.msra.mxu0 %v2361
    %3213 = vmatpush.msra.mxu0 %v2359
    %3214 = vmatpush.msra.mxu0 %v2357
    %3215 = vmatpush.msra.mxu0 %v2355
    %3216 = vmatpush.msra.mxu0 %v2353
    %3217 = vmatpush.msra.mxu0 %v2351
    %3218 = vmatpush.msra.mxu0 %v2349
    %3219 = vmatpush.msra.mxu0 %v2347
    %3220 = vmatpush.msra.mxu0 %v2345
    %3221 = vmatpush.msra.mxu0 %v2343
    %3222 = vmatpush.msra.mxu0 %v2341
    %3223 = vmatmul.f32.gmra.mxu0 %v3176
    %v3224 = vpop.f32.mrf.mxu0
    %v3225 = vadd.f32 %v3205, %v3224
    %3226 = vdwg.mxu0
    %3227 = vmatpush.msra.mxu0 %v2403
    %3228 = vmatpush.msra.mxu0 %v2401
    %3229 = vmatpush.msra.mxu0 %v2399
    %3230 = vmatpush.msra.mxu0 %v2397
    %3231 = vmatpush.msra.mxu0 %v2395
    %3232 = vmatpush.msra.mxu0 %v2393
    %3233 = vmatpush.msra.mxu0 %v2391
    %3234 = vmatpush.msra.mxu0 %v2389
    %3235 = vmatpush.msra.mxu0 %v2387
    %3236 = vmatpush.msra.mxu0 %v2385
    %3237 = vmatpush.msra.mxu0 %v2383
    %3238 = vmatpush.msra.mxu0 %v2381
    %3239 = vmatpush.msra.mxu0 %v2379
    %3240 = vmatpush.msra.mxu0 %v2377
    %3241 = vmatpush.msra.mxu0 %v2375
    %3242 = vmatpush.msra.mxu0 %v2373
    %3243 = vmatmul.f32.gmra.mxu0 %v3177
    %v3244 = vpop.f32.mrf.mxu0
    %v3245 = vadd.f32 %v3225, %v3244
    %3246 = vdwg.mxu0
    %3247 = vmatpush.msra.mxu0 %v2435
    %3248 = vmatpush.msra.mxu0 %v2433
    %3249 = vmatpush.msra.mxu0 %v2431
    %3250 = vmatpush.msra.mxu0 %v2429
    %3251 = vmatpush.msra.mxu0 %v2427
    %3252 = vmatpush.msra.mxu0 %v2425
    %3253 = vmatpush.msra.mxu0 %v2423
    %3254 = vmatpush.msra.mxu0 %v2421
    %3255 = vmatpush.msra.mxu0 %v2419
    %3256 = vmatpush.msra.mxu0 %v2417
    %3257 = vmatpush.msra.mxu0 %v2415
    %3258 = vmatpush.msra.mxu0 %v2413
    %3259 = vmatpush.msra.mxu0 %v2411
    %3260 = vmatpush.msra.mxu0 %v2409
    %3261 = vmatpush.msra.mxu0 %v2407
    %3262 = vmatpush.msra.mxu0 %v2405
    %3263 = vmatmul.f32.gmra.mxu0 %v3178
    %v3264 = vpop.f32.mrf.mxu0
    %v3265 = vadd.f32 %v3245, %v3264
    %3266 = vdwg.mxu0
    %3267 = vmatpush.msra.mxu0 %v2467
    %3268 = vmatpush.msra.mxu0 %v2465
    %3269 = vmatpush.msra.mxu0 %v2463
    %3270 = vmatpush.msra.mxu0 %v2461
    %3271 = vmatpush.msra.mxu0 %v2459
    %3272 = vmatpush.msra.mxu0 %v2457
    %3273 = vmatpush.msra.mxu0 %v2455
    %3274 = vmatpush.msra.mxu0 %v2453
    %3275 = vmatpush.msra.mxu0 %v2451
    %3276 = vmatpush.msra.mxu0 %v2449
    %3277 = vmatpush.msra.mxu0 %v2447
    %3278 = vmatpush.msra.mxu0 %v2445
    %3279 = vmatpush.msra.mxu0 %v2443
    %3280 = vmatpush.msra.mxu0 %v2441
    %3281 = vmatpush.msra.mxu0 %v2439
    %3282 = vmatpush.msra.mxu0 %v2437
    %3283 = vmatmul.f32.gmra.mxu0 %v3179
    %v3284 = vpop.f32.mrf.mxu0
    %v3285 = vadd.f32 %v3265, %v3284
    %3286 = vdwg.mxu0
    %3287 = vmatpush.msra.mxu0 %v2499
    %3288 = vmatpush.msra.mxu0 %v2497
    %3289 = vmatpush.msra.mxu0 %v2495
    %3290 = vmatpush.msra.mxu0 %v2493
    %3291 = vmatpush.msra.mxu0 %v2491
    %3292 = vmatpush.msra.mxu0 %v2489
    %3293 = vmatpush.msra.mxu0 %v2487
    %3294 = vmatpush.msra.mxu0 %v2485
    %3295 = vmatpush.msra.mxu0 %v2483
    %3296 = vmatpush.msra.mxu0 %v2481
    %3297 = vmatpush.msra.mxu0 %v2479
    %3298 = vmatpush.msra.mxu0 %v2477
    %3299 = vmatpush.msra.mxu0 %v2475
    %3300 = vmatpush.msra.mxu0 %v2473
    %3301 = vmatpush.msra.mxu0 %v2471
    %3302 = vmatpush.msra.mxu0 %v2469
    %3303 = vmatmul.f32.gmra.mxu0 %v3180
    %v3304 = vpop.f32.mrf.mxu0
    %v3305 = vadd.f32 %v3285, %v3304
    %3306 = vdwg.mxu0
    %3307 = vmatpush.msra.mxu0 %v2340
    %3308 = vmatpush.msra.mxu0 %v2338
    %3309 = vmatpush.msra.mxu0 %v2336
    %3310 = vmatpush.msra.mxu0 %v2334
    %3311 = vmatpush.msra.mxu0 %v2332
    %3312 = vmatpush.msra.mxu0 %v2330
    %3313 = vmatpush.msra.mxu0 %v2328
    %3314 = vmatpush.msra.mxu0 %v2326
    %3315 = vmatpush.msra.mxu0 %v2324
    %3316 = vmatpush.msra.mxu0 %v2322
    %3317 = vmatpush.msra.mxu0 %v2320
    %3318 = vmatpush.msra.mxu0 %v2318
    %3319 = vmatpush.msra.mxu0 %v2316
    %3320 = vmatpush.msra.mxu0 %v2314
    %3321 = vmatpush.msra.mxu0 %v2312
    %3322 = vmatpush.msra.mxu0 %v2310
    %3323 = vmatmul.f32.gmra.mxu0 %v3175
    %v3324 = vpop.f32.mrf.mxu0
    %v3325 = vadd.f32 0.0, %v3324
    %3326 = vdwg.mxu0
    %3327 = vmatpush.msra.mxu0 %v2372
    %3328 = vmatpush.msra.mxu0 %v2370
    %3329 = vmatpush.msra.mxu0 %v2368
    %3330 = vmatpush.msra.mxu0 %v2366
    %3331 = vmatpush.msra.mxu0 %v2364
    %3332 = vmatpush.msra.mxu0 %v2362
    %3333 = vmatpush.msra.mxu0 %v2360
    %3334 = vmatpush.msra.mxu0 %v2358
    %3335 = vmatpush.msra.mxu0 %v2356
    %3336 = vmatpush.msra.mxu0 %v2354
    %3337 = vmatpush.msra.mxu0 %v2352
    %3338 = vmatpush.msra.mxu0 %v2350
    %3339 = vmatpush.msra.mxu0 %v2348
    %3340 = vmatpush.msra.mxu0 %v2346
    %3341 = vmatpush.msra.mxu0 %v2344
    %3342 = vmatpush.msra.mxu0 %v2342
    %3343 = vmatmul.f32.gmra.mxu0 %v3176
    %v3344 = vpop.f32.mrf.mxu0
    %v3345 = vadd.f32 %v3325, %v3344
    %3346 = vdwg.mxu0
    %3347 = vmatpush.msra.mxu0 %v2404
    %3348 = vmatpush.msra.mxu0 %v2402
    %3349 = vmatpush.msra.mxu0 %v2400
    %3350 = vmatpush.msra.mxu0 %v2398
    %3351 = vmatpush.msra.mxu0 %v2396
    %3352 = vmatpush.msra.mxu0 %v2394
    %3353 = vmatpush.msra.mxu0 %v2392
    %3354 = vmatpush.msra.mxu0 %v2390
    %3355 = vmatpush.msra.mxu0 %v2388
    %3356 = vmatpush.msra.mxu0 %v2386
    %3357 = vmatpush.msra.mxu0 %v2384
    %3358 = vmatpush.msra.mxu0 %v2382
    %3359 = vmatpush.msra.mxu0 %v2380
    %3360 = vmatpush.msra.mxu0 %v2378
    %3361 = vmatpush.msra.mxu0 %v2376
    %3362 = vmatpush.msra.mxu0 %v2374
    %3363 = vmatmul.f32.gmra.mxu0 %v3177
    %v3364 = vpop.f32.mrf.mxu0
    %v3365 = vadd.f32 %v3345, %v3364
    %3366 = vdwg.mxu0
    %3367 = vmatpush.msra.mxu0 %v2436
    %3368 = vmatpush.msra.mxu0 %v2434
    %3369 = vmatpush.msra.mxu0 %v2432
    %3370 = vmatpush.msra.mxu0 %v2430
    %3371 = vmatpush.msra.mxu0 %v2428
    %3372 = vmatpush.msra.mxu0 %v2426
    %3373 = vmatpush.msra.mxu0 %v2424
    %3374 = vmatpush.msra.mxu0 %v2422
    %3375 = vmatpush.msra.mxu0 %v2420
    %3376 = vmatpush.msra.mxu0 %v2418
    %3377 = vmatpush.msra.mxu0 %v2416
    %3378 = vmatpush.msra.mxu0 %v2414
    %3379 = vmatpush.msra.mxu0 %v2412
    %3380 = vmatpush.msra.mxu0 %v2410
    %3381 = vmatpush.msra.mxu0 %v2408
    %3382 = vmatpush.msra.mxu0 %v2406
    %3383 = vmatmul.f32.gmra.mxu0 %v3178
    %v3384 = vpop.f32.mrf.mxu0
    %v3385 = vadd.f32 %v3365, %v3384
    %3386 = vdwg.mxu0
    %3387 = vmatpush.msra.mxu0 %v2468
    %3388 = vmatpush.msra.mxu0 %v2466
    %3389 = vmatpush.msra.mxu0 %v2464
    %3390 = vmatpush.msra.mxu0 %v2462
    %3391 = vmatpush.msra.mxu0 %v2460
    %3392 = vmatpush.msra.mxu0 %v2458
    %3393 = vmatpush.msra.mxu0 %v2456
    %3394 = vmatpush.msra.mxu0 %v2454
    %3395 = vmatpush.msra.mxu0 %v2452
    %3396 = vmatpush.msra.mxu0 %v2450
    %3397 = vmatpush.msra.mxu0 %v2448
    %3398 = vmatpush.msra.mxu0 %v2446
    %3399 = vmatpush.msra.mxu0 %v2444
    %3400 = vmatpush.msra.mxu0 %v2442
    %3401 = vmatpush.msra.mxu0 %v2440
    %3402 = vmatpush.msra.mxu0 %v2438
    %3403 = vmatmul.f32.gmra.mxu0 %v3179
    %v3404 = vpop.f32.mrf.mxu0
    %v3405 = vadd.f32 %v3385, %v3404
    %3406 = vdwg.mxu0
    %3407 = vmatpush.msra.mxu0 %v2500
    %3408 = vmatpush.msra.mxu0 %v2498
    %3409 = vmatpush.msra.mxu0 %v2496
    %3410 = vmatpush.msra.mxu0 %v2494
    %3411 = vmatpush.msra.mxu0 %v2492
    %3412 = vmatpush.msra.mxu0 %v2490
    %3413 = vmatpush.msra.mxu0 %v2488
    %3414 = vmatpush.msra.mxu0 %v2486
    %3415 = vmatpush.msra.mxu0 %v2484
    %3416 = vmatpush.msra.mxu0 %v2482
    %3417 = vmatpush.msra.mxu0 %v2480
    %3418 = vmatpush.msra.mxu0 %v2478
    %3419 = vmatpush.msra.mxu0 %v2476
    %3420 = vmatpush.msra.mxu0 %v2474
    %3421 = vmatpush.msra.mxu0 %v2472
    %3422 = vmatpush.msra.mxu0 %v2470
    %3423 = vmatmul.f32.gmra.mxu0 %v3180
    %v3424 = vpop.f32.mrf.mxu0
    %v3425 = vadd.f32 %v3405, %v3424
    %3426 = vdwg.mxu0
    %v3427 = vmax.f32 %v3305, 0.0
    %v3428 = vmax.f32 %v3425, 0.0
    %s3429 = scalar_lea.vmem %s3, 512
    %v3430 = vld [vmem:[%s3429] sm:$0xff]
    %v3431 = vld [vmem:[%s3429 + $0x8] sm:$0xff]
    %v3432 = vld [vmem:[%s3429 + $0x10] sm:$0xff]
    %v3433 = vld [vmem:[%s3429 + $0x18] sm:$0xff]
    %v3434 = vld [vmem:[%s3429 + $0x20] sm:$0xff]
    %v3435 = vld [vmem:[%s3429 + $0x28] sm:$0xff]
    %v3436 = vld [vmem:[%s3429 + $0x30] sm:$0xff]
    %v3437 = vld [vmem:[%s3429 + $0x38] sm:$0xff]
    %v3438 = vld [vmem:[%s3429 + $0x40] sm:$0xff]
    %v3439 = vld [vmem:[%s3429 + $0x48] sm:$0xff]
    %v3440 = vld [vmem:[%s3429 + $0x50] sm:$0xff]
    %v3441 = vld [vmem:[%s3429 + $0x58] sm:$0xff]
    %v3442 = vld [vmem:[%s3429 + $0x60] sm:$0xff]
    %v3443 = vld [vmem:[%s3429 + $0x68] sm:$0xff]
    %v3444 = vld [vmem:[%s3429 + $0x70] sm:$0xff]
    %v3445 = vld [vmem:[%s3429 + $0x78] sm:$0xff]
    %v3446 = vld [vmem:[%s3429 + $0x80] sm:$0xff]
    %v3447 = vld [vmem:[%s3429 + $0x88] sm:$0xff]
    %v3448 = vld [vmem:[%s3429 + $0x90] sm:$0xff]
    %v3449 = vld [vmem:[%s3429 + $0x98] sm:$0xff]
    %v3450 = vld [vmem:[%s3429 + $0xa0] sm:$0xff]
    %v3451 = vld [vmem:[%s3429 + $0xa8] sm:$0xff]
    %v3452 = vld [vmem:[%s3429 + $0xb0] sm:$0xff]
    %v3453 = vld [vmem:[%s3429 + $0xb8] sm:$0xff]
    %v3454 = vld [vmem:[%s3429 + $0xc0] sm:$0xff]
    %v3455 = vld [vmem:[%s3429 + $0xc8] sm:$0xff]
    %v3456 = vld [vmem:[%s3429 + $0xd0] sm:$0xff]
    %v3457 = vld [vmem:[%s3429 + $0xd8] sm:$0xff]
    %v3458 = vld [vmem:[%s3429 + $0xe0] sm:$0xff]
    %v3459 = vld [vmem:[%s3429 + $0xe8] sm:$0xff]
    %v3460 = vld [vmem:[%s3429 + $0xf0] sm:$0xff]
    %v3461 = vld [vmem:[%s3429 + $0xf8] sm:$0xff]
    %3462 = vmatpush.msra.mxu0 %v3445
    %3463 = vmatpush.msra.mxu0 %v3444
    %3464 = vmatpush.msra.mxu0 %v3443
    %3465 = vmatpush.msra.mxu0 %v3442
    %3466 = vmatpush.msra.mxu0 %v3441
    %3467 = vmatpush.msra.mxu0 %v3440
    %3468 = vmatpush.msra.mxu0 %v3439
    %3469 = vmatpush.msra.mxu0 %v3438
    %3470 = vmatpush.msra.mxu0 %v3437
    %3471 = vmatpush.msra.mxu0 %v3436
    %3472 = vmatpush.msra.mxu0 %v3435
    %3473 = vmatpush.msra.mxu0 %v3434
    %3474 = vmatpush.msra.mxu0 %v3433
    %3475 = vmatpush.msra.mxu0 %v3432
    %3476 = vmatpush.msra.mxu0 %v3431
    %3477 = vmatpush.msra.mxu0 %v3430
    %3478 = vmatmul.f32.gmra.mxu0 %v3427
    %v3479 = vpop.f32.mrf.mxu0
    %v3480 = vadd.f32 0.0, %v3479
    %3481 = vdwg.mxu0
    %3482 = vmatpush.msra.mxu0 %v3461
    %3483 = vmatpush.msra.mxu0 %v3460
    %3484 = vmatpush.msra.mxu0 %v3459
    %3485 = vmatpush.msra.mxu0 %v3458
    %3486 = vmatpush.msra.mxu0 %v3457
    %3487 = vmatpush.msra.mxu0 %v3456
    %3488 = vmatpush.msra.mxu0 %v3455
    %3489 = vmatpush.msra.mxu0 %v3454
    %3490 = vmatpush.msra.mxu0 %v3453
    %3491 = vmatpush.msra.mxu0 %v3452
    %3492 = vmatpush.msra.mxu0 %v3451
    %3493 = vmatpush.msra.mxu0 %v3450
    %3494 = vmatpush.msra.mxu0 %v3449
    %3495 = vmatpush.msra.mxu0 %v3448
    %3496 = vmatpush.msra.mxu0 %v3447
    %3497 = vmatpush.msra.mxu0 %v3446
    %3498 = vmatmul.f32.gmra.mxu0 %v3428
    %v3499 = vpop.f32.mrf.mxu0
    %v3500 = vadd.f32 %v3480, %v3499
    %3501 = vdwg.mxu0
    %v3502 = vadd.f32 %v3166, %v3500
    %v3503 = vld [vmem:[#allocation2 + $0xc] sm:$0xff]
    %v3504 = vld [vmem:[#allocation2 + $0x14] sm:$0xf]
    %3507 = vst [vmem:[#allocation1] ss:$4 sm:$0xff] %v3503
    %s3508 = scalar_lea.vmem [#allocation1], 32
    %3509 = vst [vmem:[%s3508] ss:$4 sm:$0xff] %v3504
    %v3510 = vld.sshfl [vmem:[#allocation1] sm:$0xff pattern:$0x73625140]
    %v3511 = vld.sshfl [vmem:[#allocation1 + $0x8] sm:$0xff pattern:$0x73625140]
    %v3512 = vld.sshfl [vmem:[#allocation1 + $0x10] sm:$0xff pattern:$0x73625140]
    %v3513 = vld.sshfl [vmem:[#allocation1 + $0x18] sm:$0xff pattern:$0x73625140]
    %v3514 = vld.sshfl [vmem:[#allocation1 + $0x20] sm:$0xff pattern:$0x73625140]
    %v3515 = vld.sshfl [vmem:[#allocation1 + $0x28] sm:$0xff pattern:$0x73625140]
    %3522 = vmatpush.msra.mxu0 %v2339
    %3523 = vmatpush.msra.mxu0 %v2337
    %3524 = vmatpush.msra.mxu0 %v2335
    %3525 = vmatpush.msra.mxu0 %v2333
    %3526 = vmatpush.msra.mxu0 %v2331
    %3527 = vmatpush.msra.mxu0 %v2329
    %3528 = vmatpush.msra.mxu0 %v2327
    %3529 = vmatpush.msra.mxu0 %v2325
    %3530 = vmatpush.msra.mxu0 %v2323
    %3531 = vmatpush.msra.mxu0 %v2321
    %3532 = vmatpush.msra.mxu0 %v2319
    %3533 = vmatpush.msra.mxu0 %v2317
    %3534 = vmatpush.msra.mxu0 %v2315
    %3535 = vmatpush.msra.mxu0 %v2313
    %3536 = vmatpush.msra.mxu0 %v2311
    %3537 = vmatpush.msra.mxu0 %v2309
    %3538 = vmatmul.f32.gmra.mxu0 %v3510
    %v3539 = vpop.f32.mrf.mxu0
    %v3540 = vadd.f32 0.0, %v3539
    %3541 = vdwg.mxu0
    %3542 = vmatpush.msra.mxu0 %v2371
    %3543 = vmatpush.msra.mxu0 %v2369
    %3544 = vmatpush.msra.mxu0 %v2367
    %3545 = vmatpush.msra.mxu0 %v2365
    %3546 = vmatpush.msra.mxu0 %v2363
    %3547 = vmatpush.msra.mxu0 %v2361
    %3548 = vmatpush.msra.mxu0 %v2359
    %3549 = vmatpush.msra.mxu0 %v2357
    %3550 = vmatpush.msra.mxu0 %v2355
    %3551 = vmatpush.msra.mxu0 %v2353
    %3552 = vmatpush.msra.mxu0 %v2351
    %3553 = vmatpush.msra.mxu0 %v2349
    %3554 = vmatpush.msra.mxu0 %v2347
    %3555 = vmatpush.msra.mxu0 %v2345
    %3556 = vmatpush.msra.mxu0 %v2343
    %3557 = vmatpush.msra.mxu0 %v2341
    %3558 = vmatmul.f32.gmra.mxu0 %v3511
    %v3559 = vpop.f32.mrf.mxu0
    %v3560 = vadd.f32 %v3540, %v3559
    %3561 = vdwg.mxu0
    %3562 = vmatpush.msra.mxu0 %v2403
    %3563 = vmatpush.msra.mxu0 %v2401
    %3564 = vmatpush.msra.mxu0 %v2399
    %3565 = vmatpush.msra.mxu0 %v2397
    %3566 = vmatpush.msra.mxu0 %v2395
    %3567 = vmatpush.msra.mxu0 %v2393
    %3568 = vmatpush.msra.mxu0 %v2391
    %3569 = vmatpush.msra.mxu0 %v2389
    %3570 = vmatpush.msra.mxu0 %v2387
    %3571 = vmatpush.msra.mxu0 %v2385
    %3572 = vmatpush.msra.mxu0 %v2383
    %3573 = vmatpush.msra.mxu0 %v2381
    %3574 = vmatpush.msra.mxu0 %v2379
    %3575 = vmatpush.msra.mxu0 %v2377
    %3576 = vmatpush.msra.mxu0 %v2375
    %3577 = vmatpush.msra.mxu0 %v2373
    %3578 = vmatmul.f32.gmra.mxu0 %v3512
    %v3579 = vpop.f32.mrf.mxu0
    %v3580 = vadd.f32 %v3560, %v3579
    %3581 = vdwg.mxu0
    %3582 = vmatpush.msra.mxu0 %v2435
    %3583 = vmatpush.msra.mxu0 %v2433
    %3584 = vmatpush.msra.mxu0 %v2431
    %3585 = vmatpush.msra.mxu0 %v2429
    %3586 = vmatpush.msra.mxu0 %v2427
    %3587 = vmatpush.msra.mxu0 %v2425
    %3588 = vmatpush.msra.mxu0 %v2423
    %3589 = vmatpush.msra.mxu0 %v2421
    %3590 = vmatpush.msra.mxu0 %v2419
    %3591 = vmatpush.msra.mxu0 %v2417
    %3592 = vmatpush.msra.mxu0 %v2415
    %3593 = vmatpush.msra.mxu0 %v2413
    %3594 = vmatpush.msra.mxu0 %v2411
    %3595 = vmatpush.msra.mxu0 %v2409
    %3596 = vmatpush.msra.mxu0 %v2407
    %3597 = vmatpush.msra.mxu0 %v2405
    %3598 = vmatmul.f32.gmra.mxu0 %v3513
    %v3599 = vpop.f32.mrf.mxu0
    %v3600 = vadd.f32 %v3580, %v3599
    %3601 = vdwg.mxu0
    %3602 = vmatpush.msra.mxu0 %v2467
    %3603 = vmatpush.msra.mxu0 %v2465
    %3604 = vmatpush.msra.mxu0 %v2463
    %3605 = vmatpush.msra.mxu0 %v2461
    %3606 = vmatpush.msra.mxu0 %v2459
    %3607 = vmatpush.msra.mxu0 %v2457
    %3608 = vmatpush.msra.mxu0 %v2455
    %3609 = vmatpush.msra.mxu0 %v2453
    %3610 = vmatpush.msra.mxu0 %v2451
    %3611 = vmatpush.msra.mxu0 %v2449
    %3612 = vmatpush.msra.mxu0 %v2447
    %3613 = vmatpush.msra.mxu0 %v2445
    %3614 = vmatpush.msra.mxu0 %v2443
    %3615 = vmatpush.msra.mxu0 %v2441
    %3616 = vmatpush.msra.mxu0 %v2439
    %3617 = vmatpush.msra.mxu0 %v2437
    %3618 = vmatmul.f32.gmra.mxu0 %v3514
    %v3619 = vpop.f32.mrf.mxu0
    %v3620 = vadd.f32 %v3600, %v3619
    %3621 = vdwg.mxu0
    %3622 = vmatpush.msra.mxu0 %v2499
    %3623 = vmatpush.msra.mxu0 %v2497
    %3624 = vmatpush.msra.mxu0 %v2495
    %3625 = vmatpush.msra.mxu0 %v2493
    %3626 = vmatpush.msra.mxu0 %v2491
    %3627 = vmatpush.msra.mxu0 %v2489
    %3628 = vmatpush.msra.mxu0 %v2487
    %3629 = vmatpush.msra.mxu0 %v2485
    %3630 = vmatpush.msra.mxu0 %v2483
    %3631 = vmatpush.msra.mxu0 %v2481
    %3632 = vmatpush.msra.mxu0 %v2479
    %3633 = vmatpush.msra.mxu0 %v2477
    %3634 = vmatpush.msra.mxu0 %v2475
    %3635 = vmatpush.msra.mxu0 %v2473
    %3636 = vmatpush.msra.mxu0 %v2471
    %3637 = vmatpush.msra.mxu0 %v2469
    %3638 = vmatmul.f32.gmra.mxu0 %v3515
    %v3639 = vpop.f32.mrf.mxu0
    %v3640 = vadd.f32 %v3620, %v3639
    %3641 = vdwg.mxu0
    %3642 = vmatpush.msra.mxu0 %v2340
    %3643 = vmatpush.msra.mxu0 %v2338
    %3644 = vmatpush.msra.mxu0 %v2336
    %3645 = vmatpush.msra.mxu0 %v2334
    %3646 = vmatpush.msra.mxu0 %v2332
    %3647 = vmatpush.msra.mxu0 %v2330
    %3648 = vmatpush.msra.mxu0 %v2328
    %3649 = vmatpush.msra.mxu0 %v2326
    %3650 = vmatpush.msra.mxu0 %v2324
    %3651 = vmatpush.msra.mxu0 %v2322
    %3652 = vmatpush.msra.mxu0 %v2320
    %3653 = vmatpush.msra.mxu0 %v2318
    %3654 = vmatpush.msra.mxu0 %v2316
    %3655 = vmatpush.msra.mxu0 %v2314
    %3656 = vmatpush.msra.mxu0 %v2312
    %3657 = vmatpush.msra.mxu0 %v2310
    %3658 = vmatmul.f32.gmra.mxu0 %v3510
    %v3659 = vpop.f32.mrf.mxu0
    %v3660 = vadd.f32 0.0, %v3659
    %3661 = vdwg.mxu0
    %3662 = vmatpush.msra.mxu0 %v2372
    %3663 = vmatpush.msra.mxu0 %v2370
    %3664 = vmatpush.msra.mxu0 %v2368
    %3665 = vmatpush.msra.mxu0 %v2366
    %3666 = vmatpush.msra.mxu0 %v2364
    %3667 = vmatpush.msra.mxu0 %v2362
    %3668 = vmatpush.msra.mxu0 %v2360
    %3669 = vmatpush.msra.mxu0 %v2358
    %3670 = vmatpush.msra.mxu0 %v2356
    %3671 = vmatpush.msra.mxu0 %v2354
    %3672 = vmatpush.msra.mxu0 %v2352
    %3673 = vmatpush.msra.mxu0 %v2350
    %3674 = vmatpush.msra.mxu0 %v2348
    %3675 = vmatpush.msra.mxu0 %v2346
    %3676 = vmatpush.msra.mxu0 %v2344
    %3677 = vmatpush.msra.mxu0 %v2342
    %3678 = vmatmul.f32.gmra.mxu0 %v3511
    %v3679 = vpop.f32.mrf.mxu0
    %v3680 = vadd.f32 %v3660, %v3679
    %3681 = vdwg.mxu0
    %3682 = vmatpush.msra.mxu0 %v2404
    %3683 = vmatpush.msra.mxu0 %v2402
    %3684 = vmatpush.msra.mxu0 %v2400
    %3685 = vmatpush.msra.mxu0 %v2398
    %3686 = vmatpush.msra.mxu0 %v2396
    %3687 = vmatpush.msra.mxu0 %v2394
    %3688 = vmatpush.msra.mxu0 %v2392
    %3689 = vmatpush.msra.mxu0 %v2390
    %3690 = vmatpush.msra.mxu0 %v2388
    %3691 = vmatpush.msra.mxu0 %v2386
    %3692 = vmatpush.msra.mxu0 %v2384
    %3693 = vmatpush.msra.mxu0 %v2382
    %3694 = vmatpush.msra.mxu0 %v2380
    %3695 = vmatpush.msra.mxu0 %v2378
    %3696 = vmatpush.msra.mxu0 %v2376
    %3697 = vmatpush.msra.mxu0 %v2374
    %3698 = vmatmul.f32.gmra.mxu0 %v3512
    %v3699 = vpop.f32.mrf.mxu0
    %v3700 = vadd.f32 %v3680, %v3699
    %3701 = vdwg.mxu0
    %3702 = vmatpush.msra.mxu0 %v2436
    %3703 = vmatpush.msra.mxu0 %v2434
    %3704 = vmatpush.msra.mxu0 %v2432
    %3705 = vmatpush.msra.mxu0 %v2430
    %3706 = vmatpush.msra.mxu0 %v2428
    %3707 = vmatpush.msra.mxu0 %v2426
    %3708 = vmatpush.msra.mxu0 %v2424
    %3709 = vmatpush.msra.mxu0 %v2422
    %3710 = vmatpush.msra.mxu0 %v2420
    %3711 = vmatpush.msra.mxu0 %v2418
    %3712 = vmatpush.msra.mxu0 %v2416
    %3713 = vmatpush.msra.mxu0 %v2414
    %3714 = vmatpush.msra.mxu0 %v2412
    %3715 = vmatpush.msra.mxu0 %v2410
    %3716 = vmatpush.msra.mxu0 %v2408
    %3717 = vmatpush.msra.mxu0 %v2406
    %3718 = vmatmul.f32.gmra.mxu0 %v3513
    %v3719 = vpop.f32.mrf.mxu0
    %v3720 = vadd.f32 %v3700, %v3719
    %3721 = vdwg.mxu0
    %3722 = vmatpush.msra.mxu0 %v2468
    %3723 = vmatpush.msra.mxu0 %v2466
    %3724 = vmatpush.msra.mxu0 %v2464
    %3725 = vmatpush.msra.mxu0 %v2462
    %3726 = vmatpush.msra.mxu0 %v2460
    %3727 = vmatpush.msra.mxu0 %v2458
    %3728 = vmatpush.msra.mxu0 %v2456
    %3729 = vmatpush.msra.mxu0 %v2454
    %3730 = vmatpush.msra.mxu0 %v2452
    %3731 = vmatpush.msra.mxu0 %v2450
    %3732 = vmatpush.msra.mxu0 %v2448
    %3733 = vmatpush.msra.mxu0 %v2446
    %3734 = vmatpush.msra.mxu0 %v2444
    %3735 = vmatpush.msra.mxu0 %v2442
    %3736 = vmatpush.msra.mxu0 %v2440
    %3737 = vmatpush.msra.mxu0 %v2438
    %3738 = vmatmul.f32.gmra.mxu0 %v3514
    %v3739 = vpop.f32.mrf.mxu0
    %v3740 = vadd.f32 %v3720, %v3739
    %3741 = vdwg.mxu0
    %3742 = vmatpush.msra.mxu0 %v2500
    %3743 = vmatpush.msra.mxu0 %v2498
    %3744 = vmatpush.msra.mxu0 %v2496
    %3745 = vmatpush.msra.mxu0 %v2494
    %3746 = vmatpush.msra.mxu0 %v2492
    %3747 = vmatpush.msra.mxu0 %v2490
    %3748 = vmatpush.msra.mxu0 %v2488
    %3749 = vmatpush.msra.mxu0 %v2486
    %3750 = vmatpush.msra.mxu0 %v2484
    %3751 = vmatpush.msra.mxu0 %v2482
    %3752 = vmatpush.msra.mxu0 %v2480
    %3753 = vmatpush.msra.mxu0 %v2478
    %3754 = vmatpush.msra.mxu0 %v2476
    %3755 = vmatpush.msra.mxu0 %v2474
    %3756 = vmatpush.msra.mxu0 %v2472
    %3757 = vmatpush.msra.mxu0 %v2470
    %3758 = vmatmul.f32.gmra.mxu0 %v3515
    %v3759 = vpop.f32.mrf.mxu0
    %v3760 = vadd.f32 %v3740, %v3759
    %3761 = vdwg.mxu0
    %v3762 = vmax.f32 %v3640, 0.0
    %v3763 = vmax.f32 %v3760, 0.0
    %s3764 = scalar_lea.vmem %s3, 768
    %v3765 = vld [vmem:[%s3764] sm:$0xff]
    %v3766 = vld [vmem:[%s3764 + $0x8] sm:$0xff]
    %v3767 = vld [vmem:[%s3764 + $0x10] sm:$0xff]
    %v3768 = vld [vmem:[%s3764 + $0x18] sm:$0xff]
    %v3769 = vld [vmem:[%s3764 + $0x20] sm:$0xff]
    %v3770 = vld [vmem:[%s3764 + $0x28] sm:$0xff]
    %v3771 = vld [vmem:[%s3764 + $0x30] sm:$0xff]
    %v3772 = vld [vmem:[%s3764 + $0x38] sm:$0xff]
    %v3773 = vld [vmem:[%s3764 + $0x40] sm:$0xff]
    %v3774 = vld [vmem:[%s3764 + $0x48] sm:$0xff]
    %v3775 = vld [vmem:[%s3764 + $0x50] sm:$0xff]
    %v3776 = vld [vmem:[%s3764 + $0x58] sm:$0xff]
    %v3777 = vld [vmem:[%s3764 + $0x60] sm:$0xff]
    %v3778 = vld [vmem:[%s3764 + $0x68] sm:$0xff]
    %v3779 = vld [vmem:[%s3764 + $0x70] sm:$0xff]
    %v3780 = vld [vmem:[%s3764 + $0x78] sm:$0xff]
    %v3781 = vld [vmem:[%s3764 + $0x80] sm:$0xff]
    %v3782 = vld [vmem:[%s3764 + $0x88] sm:$0xff]
    %v3783 = vld [vmem:[%s3764 + $0x90] sm:$0xff]
    %v3784 = vld [vmem:[%s3764 + $0x98] sm:$0xff]
    %v3785 = vld [vmem:[%s3764 + $0xa0] sm:$0xff]
    %v3786 = vld [vmem:[%s3764 + $0xa8] sm:$0xff]
    %v3787 = vld [vmem:[%s3764 + $0xb0] sm:$0xff]
    %v3788 = vld [vmem:[%s3764 + $0xb8] sm:$0xff]
    %v3789 = vld [vmem:[%s3764 + $0xc0] sm:$0xff]
    %v3790 = vld [vmem:[%s3764 + $0xc8] sm:$0xff]
    %v3791 = vld [vmem:[%s3764 + $0xd0] sm:$0xff]
    %v3792 = vld [vmem:[%s3764 + $0xd8] sm:$0xff]
    %v3793 = vld [vmem:[%s3764 + $0xe0] sm:$0xff]
    %v3794 = vld [vmem:[%s3764 + $0xe8] sm:$0xff]
    %v3795 = vld [vmem:[%s3764 + $0xf0] sm:$0xff]
    %v3796 = vld [vmem:[%s3764 + $0xf8] sm:$0xff]
    %3797 = vmatpush.msra.mxu0 %v3780
    %3798 = vmatpush.msra.mxu0 %v3779
    %3799 = vmatpush.msra.mxu0 %v3778
    %3800 = vmatpush.msra.mxu0 %v3777
    %3801 = vmatpush.msra.mxu0 %v3776
    %3802 = vmatpush.msra.mxu0 %v3775
    %3803 = vmatpush.msra.mxu0 %v3774
    %3804 = vmatpush.msra.mxu0 %v3773
    %3805 = vmatpush.msra.mxu0 %v3772
    %3806 = vmatpush.msra.mxu0 %v3771
    %3807 = vmatpush.msra.mxu0 %v3770
    %3808 = vmatpush.msra.mxu0 %v3769
    %3809 = vmatpush.msra.mxu0 %v3768
    %3810 = vmatpush.msra.mxu0 %v3767
    %3811 = vmatpush.msra.mxu0 %v3766
    %3812 = vmatpush.msra.mxu0 %v3765
    %3813 = vmatmul.f32.gmra.mxu0 %v3762
    %v3814 = vpop.f32.mrf.mxu0
    %v3815 = vadd.f32 0.0, %v3814
    %3816 = vdwg.mxu0
    %3817 = vmatpush.msra.mxu0 %v3796
    %3818 = vmatpush.msra.mxu0 %v3795
    %3819 = vmatpush.msra.mxu0 %v3794
    %3820 = vmatpush.msra.mxu0 %v3793
    %3821 = vmatpush.msra.mxu0 %v3792
    %3822 = vmatpush.msra.mxu0 %v3791
    %3823 = vmatpush.msra.mxu0 %v3790
    %3824 = vmatpush.msra.mxu0 %v3789
    %3825 = vmatpush.msra.mxu0 %v3788
    %3826 = vmatpush.msra.mxu0 %v3787
    %3827 = vmatpush.msra.mxu0 %v3786
    %3828 = vmatpush.msra.mxu0 %v3785
    %3829 = vmatpush.msra.mxu0 %v3784
    %3830 = vmatpush.msra.mxu0 %v3783
    %3831 = vmatpush.msra.mxu0 %v3782
    %3832 = vmatpush.msra.mxu0 %v3781
    %3833 = vmatmul.f32.gmra.mxu0 %v3763
    %v3834 = vpop.f32.mrf.mxu0
    %v3835 = vadd.f32 %v3815, %v3834
    %3836 = vdwg.mxu0
    %v3837 = vadd.f32 %v3502, %v3835
    %v3838 = vld [vmem:[#allocation2 + $0x10] sm:$0xff]
    %v3839 = vld [vmem:[#allocation2 + $0x18] sm:$0xf]
    %3842 = vst [vmem:[#allocation1] ss:$4 sm:$0xff] %v3838
    %s3843 = scalar_lea.vmem [#allocation1], 32
    %3844 = vst [vmem:[%s3843] ss:$4 sm:$0xff] %v3839
    %v3845 = vld.sshfl [vmem:[#allocation1] sm:$0xff pattern:$0x73625140]
    %v3846 = vld.sshfl [vmem:[#allocation1 + $0x8] sm:$0xff pattern:$0x73625140]
    %v3847 = vld.sshfl [vmem:[#allocation1 + $0x10] sm:$0xff pattern:$0x73625140]
    %v3848 = vld.sshfl [vmem:[#allocation1 + $0x18] sm:$0xff pattern:$0x73625140]
    %v3849 = vld.sshfl [vmem:[#allocation1 + $0x20] sm:$0xff pattern:$0x73625140]
    %v3850 = vld.sshfl [vmem:[#allocation1 + $0x28] sm:$0xff pattern:$0x73625140]
    %3857 = vmatpush.msra.mxu0 %v2339
    %3858 = vmatpush.msra.mxu0 %v2337
    %3859 = vmatpush.msra.mxu0 %v2335
    %3860 = vmatpush.msra.mxu0 %v2333
    %3861 = vmatpush.msra.mxu0 %v2331
    %3862 = vmatpush.msra.mxu0 %v2329
    %3863 = vmatpush.msra.mxu0 %v2327
    %3864 = vmatpush.msra.mxu0 %v2325
    %3865 = vmatpush.msra.mxu0 %v2323
    %3866 = vmatpush.msra.mxu0 %v2321
    %3867 = vmatpush.msra.mxu0 %v2319
    %3868 = vmatpush.msra.mxu0 %v2317
    %3869 = vmatpush.msra.mxu0 %v2315
    %3870 = vmatpush.msra.mxu0 %v2313
    %3871 = vmatpush.msra.mxu0 %v2311
    %3872 = vmatpush.msra.mxu0 %v2309
    %3873 = vmatmul.f32.gmra.mxu0 %v3845
    %v3874 = vpop.f32.mrf.mxu0
    %v3875 = vadd.f32 0.0, %v3874
    %3876 = vdwg.mxu0
    %3877 = vmatpush.msra.mxu0 %v2371
    %3878 = vmatpush.msra.mxu0 %v2369
    %3879 = vmatpush.msra.mxu0 %v2367
    %3880 = vmatpush.msra.mxu0 %v2365
    %3881 = vmatpush.msra.mxu0 %v2363
    %3882 = vmatpush.msra.mxu0 %v2361
    %3883 = vmatpush.msra.mxu0 %v2359
    %3884 = vmatpush.msra.mxu0 %v2357
    %3885 = vmatpush.msra.mxu0 %v2355
    %3886 = vmatpush.msra.mxu0 %v2353
    %3887 = vmatpush.msra.mxu0 %v2351
    %3888 = vmatpush.msra.mxu0 %v2349
    %3889 = vmatpush.msra.mxu0 %v2347
    %3890 = vmatpush.msra.mxu0 %v2345
    %3891 = vmatpush.msra.mxu0 %v2343
    %3892 = vmatpush.msra.mxu0 %v2341
    %3893 = vmatmul.f32.gmra.mxu0 %v3846
    %v3894 = vpop.f32.mrf.mxu0
    %v3895 = vadd.f32 %v3875, %v3894
    %3896 = vdwg.mxu0
    %3897 = vmatpush.msra.mxu0 %v2403
    %3898 = vmatpush.msra.mxu0 %v2401
    %3899 = vmatpush.msra.mxu0 %v2399
    %3900 = vmatpush.msra.mxu0 %v2397
    %3901 = vmatpush.msra.mxu0 %v2395
    %3902 = vmatpush.msra.mxu0 %v2393
    %3903 = vmatpush.msra.mxu0 %v2391
    %3904 = vmatpush.msra.mxu0 %v2389
    %3905 = vmatpush.msra.mxu0 %v2387
    %3906 = vmatpush.msra.mxu0 %v2385
    %3907 = vmatpush.msra.mxu0 %v2383
    %3908 = vmatpush.msra.mxu0 %v2381
    %3909 = vmatpush.msra.mxu0 %v2379
    %3910 = vmatpush.msra.mxu0 %v2377
    %3911 = vmatpush.msra.mxu0 %v2375
    %3912 = vmatpush.msra.mxu0 %v2373
    %3913 = vmatmul.f32.gmra.mxu0 %v3847
    %v3914 = vpop.f32.mrf.mxu0
    %v3915 = vadd.f32 %v3895, %v3914
    %3916 = vdwg.mxu0
    %3917 = vmatpush.msra.mxu0 %v2435
    %3918 = vmatpush.msra.mxu0 %v2433
    %3919 = vmatpush.msra.mxu0 %v2431
    %3920 = vmatpush.msra.mxu0 %v2429
    %3921 = vmatpush.msra.mxu0 %v2427
    %3922 = vmatpush.msra.mxu0 %v2425
    %3923 = vmatpush.msra.mxu0 %v2423
    %3924 = vmatpush.msra.mxu0 %v2421
    %3925 = vmatpush.msra.mxu0 %v2419
    %3926 = vmatpush.msra.mxu0 %v2417
    %3927 = vmatpush.msra.mxu0 %v2415
    %3928 = vmatpush.msra.mxu0 %v2413
    %3929 = vmatpush.msra.mxu0 %v2411
    %3930 = vmatpush.msra.mxu0 %v2409
    %3931 = vmatpush.msra.mxu0 %v2407
    %3932 = vmatpush.msra.mxu0 %v2405
    %3933 = vmatmul.f32.gmra.mxu0 %v3848
    %v3934 = vpop.f32.mrf.mxu0
    %v3935 = vadd.f32 %v3915, %v3934
    %3936 = vdwg.mxu0
    %3937 = vmatpush.msra.mxu0 %v2467
    %3938 = vmatpush.msra.mxu0 %v2465
    %3939 = vmatpush.msra.mxu0 %v2463
    %3940 = vmatpush.msra.mxu0 %v2461
    %3941 = vmatpush.msra.mxu0 %v2459
    %3942 = vmatpush.msra.mxu0 %v2457
    %3943 = vmatpush.msra.mxu0 %v2455
    %3944 = vmatpush.msra.mxu0 %v2453
    %3945 = vmatpush.msra.mxu0 %v2451
    %3946 = vmatpush.msra.mxu0 %v2449
    %3947 = vmatpush.msra.mxu0 %v2447
    %3948 = vmatpush.msra.mxu0 %v2445
    %3949 = vmatpush.msra.mxu0 %v2443
    %3950 = vmatpush.msra.mxu0 %v2441
    %3951 = vmatpush.msra.mxu0 %v2439
    %3952 = vmatpush.msra.mxu0 %v2437
    %3953 = vmatmul.f32.gmra.mxu0 %v3849
    %v3954 = vpop.f32.mrf.mxu0
    %v3955 = vadd.f32 %v3935, %v3954
    %3956 = vdwg.mxu0
    %3957 = vmatpush.msra.mxu0 %v2499
    %3958 = vmatpush.msra.mxu0 %v2497
    %3959 = vmatpush.msra.mxu0 %v2495
    %3960 = vmatpush.msra.mxu0 %v2493
    %3961 = vmatpush.msra.mxu0 %v2491
    %3962 = vmatpush.msra.mxu0 %v2489
    %3963 = vmatpush.msra.mxu0 %v2487
    %3964 = vmatpush.msra.mxu0 %v2485
    %3965 = vmatpush.msra.mxu0 %v2483
    %3966 = vmatpush.msra.mxu0 %v2481
    %3967 = vmatpush.msra.mxu0 %v2479
    %3968 = vmatpush.msra.mxu0 %v2477
    %3969 = vmatpush.msra.mxu0 %v2475
    %3970 = vmatpush.msra.mxu0 %v2473
    %3971 = vmatpush.msra.mxu0 %v2471
    %3972 = vmatpush.msra.mxu0 %v2469
    %3973 = vmatmul.f32.gmra.mxu0 %v3850
    %v3974 = vpop.f32.mrf.mxu0
    %v3975 = vadd.f32 %v3955, %v3974
    %3976 = vdwg.mxu0
    %3977 = vmatpush.msra.mxu0 %v2340
    %3978 = vmatpush.msra.mxu0 %v2338
    %3979 = vmatpush.msra.mxu0 %v2336
    %3980 = vmatpush.msra.mxu0 %v2334
    %3981 = vmatpush.msra.mxu0 %v2332
    %3982 = vmatpush.msra.mxu0 %v2330
    %3983 = vmatpush.msra.mxu0 %v2328
    %3984 = vmatpush.msra.mxu0 %v2326
    %3985 = vmatpush.msra.mxu0 %v2324
    %3986 = vmatpush.msra.mxu0 %v2322
    %3987 = vmatpush.msra.mxu0 %v2320
    %3988 = vmatpush.msra.mxu0 %v2318
    %3989 = vmatpush.msra.mxu0 %v2316
    %3990 = vmatpush.msra.mxu0 %v2314
    %3991 = vmatpush.msra.mxu0 %v2312
    %3992 = vmatpush.msra.mxu0 %v2310
    %3993 = vmatmul.f32.gmra.mxu0 %v3845
    %v3994 = vpop.f32.mrf.mxu0
    %v3995 = vadd.f32 0.0, %v3994
    %3996 = vdwg.mxu0
    %3997 = vmatpush.msra.mxu0 %v2372
    %3998 = vmatpush.msra.mxu0 %v2370
    %3999 = vmatpush.msra.mxu0 %v2368
    %4000 = vmatpush.msra.mxu0 %v2366
    %4001 = vmatpush.msra.mxu0 %v2364
    %4002 = vmatpush.msra.mxu0 %v2362
    %4003 = vmatpush.msra.mxu0 %v2360
    %4004 = vmatpush.msra.mxu0 %v2358
    %4005 = vmatpush.msra.mxu0 %v2356
    %4006 = vmatpush.msra.mxu0 %v2354
    %4007 = vmatpush.msra.mxu0 %v2352
    %4008 = vmatpush.msra.mxu0 %v2350
    %4009 = vmatpush.msra.mxu0 %v2348
    %4010 = vmatpush.msra.mxu0 %v2346
    %4011 = vmatpush.msra.mxu0 %v2344
    %4012 = vmatpush.msra.mxu0 %v2342
    %4013 = vmatmul.f32.gmra.mxu0 %v3846
    %v4014 = vpop.f32.mrf.mxu0
    %v4015 = vadd.f32 %v3995, %v4014
    %4016 = vdwg.mxu0
    %4017 = vmatpush.msra.mxu0 %v2404
    %4018 = vmatpush.msra.mxu0 %v2402
    %4019 = vmatpush.msra.mxu0 %v2400
    %4020 = vmatpush.msra.mxu0 %v2398
    %4021 = vmatpush.msra.mxu0 %v2396
    %4022 = vmatpush.msra.mxu0 %v2394
    %4023 = vmatpush.msra.mxu0 %v2392
    %4024 = vmatpush.msra.mxu0 %v2390
    %4025 = vmatpush.msra.mxu0 %v2388
    %4026 = vmatpush.msra.mxu0 %v2386
    %4027 = vmatpush.msra.mxu0 %v2384
    %4028 = vmatpush.msra.mxu0 %v2382
    %4029 = vmatpush.msra.mxu0 %v2380
    %4030 = vmatpush.msra.mxu0 %v2378
    %4031 = vmatpush.msra.mxu0 %v2376
    %4032 = vmatpush.msra.mxu0 %v2374
    %4033 = vmatmul.f32.gmra.mxu0 %v3847
    %v4034 = vpop.f32.mrf.mxu0
    %v4035 = vadd.f32 %v4015, %v4034
    %4036 = vdwg.mxu0
    %4037 = vmatpush.msra.mxu0 %v2436
    %4038 = vmatpush.msra.mxu0 %v2434
    %4039 = vmatpush.msra.mxu0 %v2432
    %4040 = vmatpush.msra.mxu0 %v2430
    %4041 = vmatpush.msra.mxu0 %v2428
    %4042 = vmatpush.msra.mxu0 %v2426
    %4043 = vmatpush.msra.mxu0 %v2424
    %4044 = vmatpush.msra.mxu0 %v2422
    %4045 = vmatpush.msra.mxu0 %v2420
    %4046 = vmatpush.msra.mxu0 %v2418
    %4047 = vmatpush.msra.mxu0 %v2416
    %4048 = vmatpush.msra.mxu0 %v2414
    %4049 = vmatpush.msra.mxu0 %v2412
    %4050 = vmatpush.msra.mxu0 %v2410
    %4051 = vmatpush.msra.mxu0 %v2408
    %4052 = vmatpush.msra.mxu0 %v2406
    %4053 = vmatmul.f32.gmra.mxu0 %v3848
    %v4054 = vpop.f32.mrf.mxu0
    %v4055 = vadd.f32 %v4035, %v4054
    %4056 = vdwg.mxu0
    %4057 = vmatpush.msra.mxu0 %v2468
    %4058 = vmatpush.msra.mxu0 %v2466
    %4059 = vmatpush.msra.mxu0 %v2464
    %4060 = vmatpush.msra.mxu0 %v2462
    %4061 = vmatpush.msra.mxu0 %v2460
    %4062 = vmatpush.msra.mxu0 %v2458
    %4063 = vmatpush.msra.mxu0 %v2456
    %4064 = vmatpush.msra.mxu0 %v2454
    %4065 = vmatpush.msra.mxu0 %v2452
    %4066 = vmatpush.msra.mxu0 %v2450
    %4067 = vmatpush.msra.mxu0 %v2448
    %4068 = vmatpush.msra.mxu0 %v2446
    %4069 = vmatpush.msra.mxu0 %v2444
    %4070 = vmatpush.msra.mxu0 %v2442
    %4071 = vmatpush.msra.mxu0 %v2440
    %4072 = vmatpush.msra.mxu0 %v2438
    %4073 = vmatmul.f32.gmra.mxu0 %v3849
    %v4074 = vpop.f32.mrf.mxu0
    %v4075 = vadd.f32 %v4055, %v4074
    %4076 = vdwg.mxu0
    %4077 = vmatpush.msra.mxu0 %v2500
    %4078 = vmatpush.msra.mxu0 %v2498
    %4079 = vmatpush.msra.mxu0 %v2496
    %4080 = vmatpush.msra.mxu0 %v2494
    %4081 = vmatpush.msra.mxu0 %v2492
    %4082 = vmatpush.msra.mxu0 %v2490
    %4083 = vmatpush.msra.mxu0 %v2488
    %4084 = vmatpush.msra.mxu0 %v2486
    %4085 = vmatpush.msra.mxu0 %v2484
    %4086 = vmatpush.msra.mxu0 %v2482
    %4087 = vmatpush.msra.mxu0 %v2480
    %4088 = vmatpush.msra.mxu0 %v2478
    %4089 = vmatpush.msra.mxu0 %v2476
    %4090 = vmatpush.msra.mxu0 %v2474
    %4091 = vmatpush.msra.mxu0 %v2472
    %4092 = vmatpush.msra.mxu0 %v2470
    %4093 = vmatmul.f32.gmra.mxu0 %v3850
    %v4094 = vpop.f32.mrf.mxu0
    %v4095 = vadd.f32 %v4075, %v4094
    %4096 = vdwg.mxu0
    %v4097 = vmax.f32 %v3975, 0.0
    %v4098 = vmax.f32 %v4095, 0.0
    %s4099 = scalar_lea.vmem %s3, 1024
    %v4100 = vld [vmem:[%s4099] sm:$0xff]
    %v4101 = vld [vmem:[%s4099 + $0x8] sm:$0xff]
    %v4102 = vld [vmem:[%s4099 + $0x10] sm:$0xff]
    %v4103 = vld [vmem:[%s4099 + $0x18] sm:$0xff]
    %v4104 = vld [vmem:[%s4099 + $0x20] sm:$0xff]
    %v4105 = vld [vmem:[%s4099 + $0x28] sm:$0xff]
    %v4106 = vld [vmem:[%s4099 + $0x30] sm:$0xff]
    %v4107 = vld [vmem:[%s4099 + $0x38] sm:$0xff]
    %v4108 = vld [vmem:[%s4099 + $0x40] sm:$0xff]
    %v4109 = vld [vmem:[%s4099 + $0x48] sm:$0xff]
    %v4110 = vld [vmem:[%s4099 + $0x50] sm:$0xff]
    %v4111 = vld [vmem:[%s4099 + $0x58] sm:$0xff]
    %v4112 = vld [vmem:[%s4099 + $0x60] sm:$0xff]
    %v4113 = vld [vmem:[%s4099 + $0x68] sm:$0xff]
    %v4114 = vld [vmem:[%s4099 + $0x70] sm:$0xff]
    %v4115 = vld [vmem:[%s4099 + $0x78] sm:$0xff]
    %v4116 = vld [vmem:[%s4099 + $0x80] sm:$0xff]
    %v4117 = vld [vmem:[%s4099 + $0x88] sm:$0xff]
    %v4118 = vld [vmem:[%s4099 + $0x90] sm:$0xff]
    %v4119 = vld [vmem:[%s4099 + $0x98] sm:$0xff]
    %v4120 = vld [vmem:[%s4099 + $0xa0] sm:$0xff]
    %v4121 = vld [vmem:[%s4099 + $0xa8] sm:$0xff]
    %v4122 = vld [vmem:[%s4099 + $0xb0] sm:$0xff]
    %v4123 = vld [vmem:[%s4099 + $0xb8] sm:$0xff]
    %v4124 = vld [vmem:[%s4099 + $0xc0] sm:$0xff]
    %v4125 = vld [vmem:[%s4099 + $0xc8] sm:$0xff]
    %v4126 = vld [vmem:[%s4099 + $0xd0] sm:$0xff]
    %v4127 = vld [vmem:[%s4099 + $0xd8] sm:$0xff]
    %v4128 = vld [vmem:[%s4099 + $0xe0] sm:$0xff]
    %v4129 = vld [vmem:[%s4099 + $0xe8] sm:$0xff]
    %v4130 = vld [vmem:[%s4099 + $0xf0] sm:$0xff]
    %v4131 = vld [vmem:[%s4099 + $0xf8] sm:$0xff]
    %4132 = vmatpush.msra.mxu0 %v4115
    %4133 = vmatpush.msra.mxu0 %v4114
    %4134 = vmatpush.msra.mxu0 %v4113
    %4135 = vmatpush.msra.mxu0 %v4112
    %4136 = vmatpush.msra.mxu0 %v4111
    %4137 = vmatpush.msra.mxu0 %v4110
    %4138 = vmatpush.msra.mxu0 %v4109
    %4139 = vmatpush.msra.mxu0 %v4108
    %4140 = vmatpush.msra.mxu0 %v4107
    %4141 = vmatpush.msra.mxu0 %v4106
    %4142 = vmatpush.msra.mxu0 %v4105
    %4143 = vmatpush.msra.mxu0 %v4104
    %4144 = vmatpush.msra.mxu0 %v4103
    %4145 = vmatpush.msra.mxu0 %v4102
    %4146 = vmatpush.msra.mxu0 %v4101
    %4147 = vmatpush.msra.mxu0 %v4100
    %4148 = vmatmul.f32.gmra.mxu0 %v4097
    %v4149 = vpop.f32.mrf.mxu0
    %v4150 = vadd.f32 0.0, %v4149
    %4151 = vdwg.mxu0
    %4152 = vmatpush.msra.mxu0 %v4131
    %4153 = vmatpush.msra.mxu0 %v4130
    %4154 = vmatpush.msra.mxu0 %v4129
    %4155 = vmatpush.msra.mxu0 %v4128
    %4156 = vmatpush.msra.mxu0 %v4127
    %4157 = vmatpush.msra.mxu0 %v4126
    %4158 = vmatpush.msra.mxu0 %v4125
    %4159 = vmatpush.msra.mxu0 %v4124
    %4160 = vmatpush.msra.mxu0 %v4123
    %4161 = vmatpush.msra.mxu0 %v4122
    %4162 = vmatpush.msra.mxu0 %v4121
    %4163 = vmatpush.msra.mxu0 %v4120
    %4164 = vmatpush.msra.mxu0 %v4119
    %4165 = vmatpush.msra.mxu0 %v4118
    %4166 = vmatpush.msra.mxu0 %v4117
    %4167 = vmatpush.msra.mxu0 %v4116
    %4168 = vmatmul.f32.gmra.mxu0 %v4098
    %v4169 = vpop.f32.mrf.mxu0
    %v4170 = vadd.f32 %v4150, %v4169
    %4171 = vdwg.mxu0
    %v4172 = vadd.f32 %v3837, %v4170
    %v4173 = vld [vmem:[#allocation2 + $0x14] sm:$0xff]
    %v4174 = vld [vmem:[#allocation2 + $0x1c] sm:$0xf]
    %4177 = vst [vmem:[#allocation1] ss:$4 sm:$0xff] %v4173
    %s4178 = scalar_lea.vmem [#allocation1], 32
    %4179 = vst [vmem:[%s4178] ss:$4 sm:$0xff] %v4174
    %v4180 = vld.sshfl [vmem:[#allocation1] sm:$0xff pattern:$0x73625140]
    %v4181 = vld.sshfl [vmem:[#allocation1 + $0x8] sm:$0xff pattern:$0x73625140]
    %v4182 = vld.sshfl [vmem:[#allocation1 + $0x10] sm:$0xff pattern:$0x73625140]
    %v4183 = vld.sshfl [vmem:[#allocation1 + $0x18] sm:$0xff pattern:$0x73625140]
    %v4184 = vld.sshfl [vmem:[#allocation1 + $0x20] sm:$0xff pattern:$0x73625140]
    %v4185 = vld.sshfl [vmem:[#allocation1 + $0x28] sm:$0xff pattern:$0x73625140]
    %4192 = vmatpush.msra.mxu0 %v2339
    %4193 = vmatpush.msra.mxu0 %v2337
    %4194 = vmatpush.msra.mxu0 %v2335
    %4195 = vmatpush.msra.mxu0 %v2333
    %4196 = vmatpush.msra.mxu0 %v2331
    %4197 = vmatpush.msra.mxu0 %v2329
    %4198 = vmatpush.msra.mxu0 %v2327
    %4199 = vmatpush.msra.mxu0 %v2325
    %4200 = vmatpush.msra.mxu0 %v2323
    %4201 = vmatpush.msra.mxu0 %v2321
    %4202 = vmatpush.msra.mxu0 %v2319
    %4203 = vmatpush.msra.mxu0 %v2317
    %4204 = vmatpush.msra.mxu0 %v2315
    %4205 = vmatpush.msra.mxu0 %v2313
    %4206 = vmatpush.msra.mxu0 %v2311
    %4207 = vmatpush.msra.mxu0 %v2309
    %4208 = vmatmul.f32.gmra.mxu0 %v4180
    %v4209 = vpop.f32.mrf.mxu0
    %v4210 = vadd.f32 0.0, %v4209
    %4211 = vdwg.mxu0
    %4212 = vmatpush.msra.mxu0 %v2371
    %4213 = vmatpush.msra.mxu0 %v2369
    %4214 = vmatpush.msra.mxu0 %v2367
    %4215 = vmatpush.msra.mxu0 %v2365
    %4216 = vmatpush.msra.mxu0 %v2363
    %4217 = vmatpush.msra.mxu0 %v2361
    %4218 = vmatpush.msra.mxu0 %v2359
    %4219 = vmatpush.msra.mxu0 %v2357
    %4220 = vmatpush.msra.mxu0 %v2355
    %4221 = vmatpush.msra.mxu0 %v2353
    %4222 = vmatpush.msra.mxu0 %v2351
    %4223 = vmatpush.msra.mxu0 %v2349
    %4224 = vmatpush.msra.mxu0 %v2347
    %4225 = vmatpush.msra.mxu0 %v2345
    %4226 = vmatpush.msra.mxu0 %v2343
    %4227 = vmatpush.msra.mxu0 %v2341
    %4228 = vmatmul.f32.gmra.mxu0 %v4181
    %v4229 = vpop.f32.mrf.mxu0
    %v4230 = vadd.f32 %v4210, %v4229
    %4231 = vdwg.mxu0
    %4232 = vmatpush.msra.mxu0 %v2403
    %4233 = vmatpush.msra.mxu0 %v2401
    %4234 = vmatpush.msra.mxu0 %v2399
    %4235 = vmatpush.msra.mxu0 %v2397
    %4236 = vmatpush.msra.mxu0 %v2395
    %4237 = vmatpush.msra.mxu0 %v2393
    %4238 = vmatpush.msra.mxu0 %v2391
    %4239 = vmatpush.msra.mxu0 %v2389
    %4240 = vmatpush.msra.mxu0 %v2387
    %4241 = vmatpush.msra.mxu0 %v2385
    %4242 = vmatpush.msra.mxu0 %v2383
    %4243 = vmatpush.msra.mxu0 %v2381
    %4244 = vmatpush.msra.mxu0 %v2379
    %4245 = vmatpush.msra.mxu0 %v2377
    %4246 = vmatpush.msra.mxu0 %v2375
    %4247 = vmatpush.msra.mxu0 %v2373
    %4248 = vmatmul.f32.gmra.mxu0 %v4182
    %v4249 = vpop.f32.mrf.mxu0
    %v4250 = vadd.f32 %v4230, %v4249
    %4251 = vdwg.mxu0
    %4252 = vmatpush.msra.mxu0 %v2435
    %4253 = vmatpush.msra.mxu0 %v2433
    %4254 = vmatpush.msra.mxu0 %v2431
    %4255 = vmatpush.msra.mxu0 %v2429
    %4256 = vmatpush.msra.mxu0 %v2427
    %4257 = vmatpush.msra.mxu0 %v2425
    %4258 = vmatpush.msra.mxu0 %v2423
    %4259 = vmatpush.msra.mxu0 %v2421
    %4260 = vmatpush.msra.mxu0 %v2419
    %4261 = vmatpush.msra.mxu0 %v2417
    %4262 = vmatpush.msra.mxu0 %v2415
    %4263 = vmatpush.msra.mxu0 %v2413
    %4264 = vmatpush.msra.mxu0 %v2411
    %4265 = vmatpush.msra.mxu0 %v2409
    %4266 = vmatpush.msra.mxu0 %v2407
    %4267 = vmatpush.msra.mxu0 %v2405
    %4268 = vmatmul.f32.gmra.mxu0 %v4183
    %v4269 = vpop.f32.mrf.mxu0
    %v4270 = vadd.f32 %v4250, %v4269
    %4271 = vdwg.mxu0
    %4272 = vmatpush.msra.mxu0 %v2467
    %4273 = vmatpush.msra.mxu0 %v2465
    %4274 = vmatpush.msra.mxu0 %v2463
    %4275 = vmatpush.msra.mxu0 %v2461
    %4276 = vmatpush.msra.mxu0 %v2459
    %4277 = vmatpush.msra.mxu0 %v2457
    %4278 = vmatpush.msra.mxu0 %v2455
    %4279 = vmatpush.msra.mxu0 %v2453
    %4280 = vmatpush.msra.mxu0 %v2451
    %4281 = vmatpush.msra.mxu0 %v2449
    %4282 = vmatpush.msra.mxu0 %v2447
    %4283 = vmatpush.msra.mxu0 %v2445
    %4284 = vmatpush.msra.mxu0 %v2443
    %4285 = vmatpush.msra.mxu0 %v2441
    %4286 = vmatpush.msra.mxu0 %v2439
    %4287 = vmatpush.msra.mxu0 %v2437
    %4288 = vmatmul.f32.gmra.mxu0 %v4184
    %v4289 = vpop.f32.mrf.mxu0
    %v4290 = vadd.f32 %v4270, %v4289
    %4291 = vdwg.mxu0
    %4292 = vmatpush.msra.mxu0 %v2499
    %4293 = vmatpush.msra.mxu0 %v2497
    %4294 = vmatpush.msra.mxu0 %v2495
    %4295 = vmatpush.msra.mxu0 %v2493
    %4296 = vmatpush.msra.mxu0 %v2491
    %4297 = vmatpush.msra.mxu0 %v2489
    %4298 = vmatpush.msra.mxu0 %v2487
    %4299 = vmatpush.msra.mxu0 %v2485
    %4300 = vmatpush.msra.mxu0 %v2483
    %4301 = vmatpush.msra.mxu0 %v2481
    %4302 = vmatpush.msra.mxu0 %v2479
    %4303 = vmatpush.msra.mxu0 %v2477
    %4304 = vmatpush.msra.mxu0 %v2475
    %4305 = vmatpush.msra.mxu0 %v2473
    %4306 = vmatpush.msra.mxu0 %v2471
    %4307 = vmatpush.msra.mxu0 %v2469
    %4308 = vmatmul.f32.gmra.mxu0 %v4185
    %v4309 = vpop.f32.mrf.mxu0
    %v4310 = vadd.f32 %v4290, %v4309
    %4311 = vdwg.mxu0
    %4312 = vmatpush.msra.mxu0 %v2340
    %4313 = vmatpush.msra.mxu0 %v2338
    %4314 = vmatpush.msra.mxu0 %v2336
    %4315 = vmatpush.msra.mxu0 %v2334
    %4316 = vmatpush.msra.mxu0 %v2332
    %4317 = vmatpush.msra.mxu0 %v2330
    %4318 = vmatpush.msra.mxu0 %v2328
    %4319 = vmatpush.msra.mxu0 %v2326
    %4320 = vmatpush.msra.mxu0 %v2324
    %4321 = vmatpush.msra.mxu0 %v2322
    %4322 = vmatpush.msra.mxu0 %v2320
    %4323 = vmatpush.msra.mxu0 %v2318
    %4324 = vmatpush.msra.mxu0 %v2316
    %4325 = vmatpush.msra.mxu0 %v2314
    %4326 = vmatpush.msra.mxu0 %v2312
    %4327 = vmatpush.msra.mxu0 %v2310
    %4328 = vmatmul.f32.gmra.mxu0 %v4180
    %v4329 = vpop.f32.mrf.mxu0
    %v4330 = vadd.f32 0.0, %v4329
    %4331 = vdwg.mxu0
    %4332 = vmatpush.msra.mxu0 %v2372
    %4333 = vmatpush.msra.mxu0 %v2370
    %4334 = vmatpush.msra.mxu0 %v2368
    %4335 = vmatpush.msra.mxu0 %v2366
    %4336 = vmatpush.msra.mxu0 %v2364
    %4337 = vmatpush.msra.mxu0 %v2362
    %4338 = vmatpush.msra.mxu0 %v2360
    %4339 = vmatpush.msra.mxu0 %v2358
    %4340 = vmatpush.msra.mxu0 %v2356
    %4341 = vmatpush.msra.mxu0 %v2354
    %4342 = vmatpush.msra.mxu0 %v2352
    %4343 = vmatpush.msra.mxu0 %v2350
    %4344 = vmatpush.msra.mxu0 %v2348
    %4345 = vmatpush.msra.mxu0 %v2346
    %4346 = vmatpush.msra.mxu0 %v2344
    %4347 = vmatpush.msra.mxu0 %v2342
    %4348 = vmatmul.f32.gmra.mxu0 %v4181
    %v4349 = vpop.f32.mrf.mxu0
    %v4350 = vadd.f32 %v4330, %v4349
    %4351 = vdwg.mxu0
    %4352 = vmatpush.msra.mxu0 %v2404
    %4353 = vmatpush.msra.mxu0 %v2402
    %4354 = vmatpush.msra.mxu0 %v2400
    %4355 = vmatpush.msra.mxu0 %v2398
    %4356 = vmatpush.msra.mxu0 %v2396
    %4357 = vmatpush.msra.mxu0 %v2394
    %4358 = vmatpush.msra.mxu0 %v2392
    %4359 = vmatpush.msra.mxu0 %v2390
    %4360 = vmatpush.msra.mxu0 %v2388
    %4361 = vmatpush.msra.mxu0 %v2386
    %4362 = vmatpush.msra.mxu0 %v2384
    %4363 = vmatpush.msra.mxu0 %v2382
    %4364 = vmatpush.msra.mxu0 %v2380
    %4365 = vmatpush.msra.mxu0 %v2378
    %4366 = vmatpush.msra.mxu0 %v2376
    %4367 = vmatpush.msra.mxu0 %v2374
    %4368 = vmatmul.f32.gmra.mxu0 %v4182
    %v4369 = vpop.f32.mrf.mxu0
    %v4370 = vadd.f32 %v4350, %v4369
    %4371 = vdwg.mxu0
    %4372 = vmatpush.msra.mxu0 %v2436
    %4373 = vmatpush.msra.mxu0 %v2434
    %4374 = vmatpush.msra.mxu0 %v2432
    %4375 = vmatpush.msra.mxu0 %v2430
    %4376 = vmatpush.msra.mxu0 %v2428
    %4377 = vmatpush.msra.mxu0 %v2426
    %4378 = vmatpush.msra.mxu0 %v2424
    %4379 = vmatpush.msra.mxu0 %v2422
    %4380 = vmatpush.msra.mxu0 %v2420
    %4381 = vmatpush.msra.mxu0 %v2418
    %4382 = vmatpush.msra.mxu0 %v2416
    %4383 = vmatpush.msra.mxu0 %v2414
    %4384 = vmatpush.msra.mxu0 %v2412
    %4385 = vmatpush.msra.mxu0 %v2410
    %4386 = vmatpush.msra.mxu0 %v2408
    %4387 = vmatpush.msra.mxu0 %v2406
    %4388 = vmatmul.f32.gmra.mxu0 %v4183
    %v4389 = vpop.f32.mrf.mxu0
    %v4390 = vadd.f32 %v4370, %v4389
    %4391 = vdwg.mxu0
    %4392 = vmatpush.msra.mxu0 %v2468
    %4393 = vmatpush.msra.mxu0 %v2466
    %4394 = vmatpush.msra.mxu0 %v2464
    %4395 = vmatpush.msra.mxu0 %v2462
    %4396 = vmatpush.msra.mxu0 %v2460
    %4397 = vmatpush.msra.mxu0 %v2458
    %4398 = vmatpush.msra.mxu0 %v2456
    %4399 = vmatpush.msra.mxu0 %v2454
    %4400 = vmatpush.msra.mxu0 %v2452
    %4401 = vmatpush.msra.mxu0 %v2450
    %4402 = vmatpush.msra.mxu0 %v2448
    %4403 = vmatpush.msra.mxu0 %v2446
    %4404 = vmatpush.msra.mxu0 %v2444
    %4405 = vmatpush.msra.mxu0 %v2442
    %4406 = vmatpush.msra.mxu0 %v2440
    %4407 = vmatpush.msra.mxu0 %v2438
    %4408 = vmatmul.f32.gmra.mxu0 %v4184
    %v4409 = vpop.f32.mrf.mxu0
    %v4410 = vadd.f32 %v4390, %v4409
    %4411 = vdwg.mxu0
    %4412 = vmatpush.msra.mxu0 %v2500
    %4413 = vmatpush.msra.mxu0 %v2498
    %4414 = vmatpush.msra.mxu0 %v2496
    %4415 = vmatpush.msra.mxu0 %v2494
    %4416 = vmatpush.msra.mxu0 %v2492
    %4417 = vmatpush.msra.mxu0 %v2490
    %4418 = vmatpush.msra.mxu0 %v2488
    %4419 = vmatpush.msra.mxu0 %v2486
    %4420 = vmatpush.msra.mxu0 %v2484
    %4421 = vmatpush.msra.mxu0 %v2482
    %4422 = vmatpush.msra.mxu0 %v2480
    %4423 = vmatpush.msra.mxu0 %v2478
    %4424 = vmatpush.msra.mxu0 %v2476
    %4425 = vmatpush.msra.mxu0 %v2474
    %4426 = vmatpush.msra.mxu0 %v2472
    %4427 = vmatpush.msra.mxu0 %v2470
    %4428 = vmatmul.f32.gmra.mxu0 %v4185
    %v4429 = vpop.f32.mrf.mxu0
    %v4430 = vadd.f32 %v4410, %v4429
    %4431 = vdwg.mxu0
    %v4432 = vmax.f32 %v4310, 0.0
    %v4433 = vmax.f32 %v4430, 0.0
    %s4434 = scalar_lea.vmem %s3, 1280
    %v4435 = vld [vmem:[%s4434] sm:$0xff]
    %v4436 = vld [vmem:[%s4434 + $0x8] sm:$0xff]
    %v4437 = vld [vmem:[%s4434 + $0x10] sm:$0xff]
    %v4438 = vld [vmem:[%s4434 + $0x18] sm:$0xff]
    %v4439 = vld [vmem:[%s4434 + $0x20] sm:$0xff]
    %v4440 = vld [vmem:[%s4434 + $0x28] sm:$0xff]
    %v4441 = vld [vmem:[%s4434 + $0x30] sm:$0xff]
    %v4442 = vld [vmem:[%s4434 + $0x38] sm:$0xff]
    %v4443 = vld [vmem:[%s4434 + $0x40] sm:$0xff]
    %v4444 = vld [vmem:[%s4434 + $0x48] sm:$0xff]
    %v4445 = vld [vmem:[%s4434 + $0x50] sm:$0xff]
    %v4446 = vld [vmem:[%s4434 + $0x58] sm:$0xff]
    %v4447 = vld [vmem:[%s4434 + $0x60] sm:$0xff]
    %v4448 = vld [vmem:[%s4434 + $0x68] sm:$0xff]
    %v4449 = vld [vmem:[%s4434 + $0x70] sm:$0xff]
    %v4450 = vld [vmem:[%s4434 + $0x78] sm:$0xff]
    %v4451 = vld [vmem:[%s4434 + $0x80] sm:$0xff]
    %v4452 = vld [vmem:[%s4434 + $0x88] sm:$0xff]
    %v4453 = vld [vmem:[%s4434 + $0x90] sm:$0xff]
    %v4454 = vld [vmem:[%s4434 + $0x98] sm:$0xff]
    %v4455 = vld [vmem:[%s4434 + $0xa0] sm:$0xff]
    %v4456 = vld [vmem:[%s4434 + $0xa8] sm:$0xff]
    %v4457 = vld [vmem:[%s4434 + $0xb0] sm:$0xff]
    %v4458 = vld [vmem:[%s4434 + $0xb8] sm:$0xff]
    %v4459 = vld [vmem:[%s4434 + $0xc0] sm:$0xff]
    %v4460 = vld [vmem:[%s4434 + $0xc8] sm:$0xff]
    %v4461 = vld [vmem:[%s4434 + $0xd0] sm:$0xff]
    %v4462 = vld [vmem:[%s4434 + $0xd8] sm:$0xff]
    %v4463 = vld [vmem:[%s4434 + $0xe0] sm:$0xff]
    %v4464 = vld [vmem:[%s4434 + $0xe8] sm:$0xff]
    %v4465 = vld [vmem:[%s4434 + $0xf0] sm:$0xff]
    %v4466 = vld [vmem:[%s4434 + $0xf8] sm:$0xff]
    %4467 = vmatpush.msra.mxu0 %v4450
    %4468 = vmatpush.msra.mxu0 %v4449
    %4469 = vmatpush.msra.mxu0 %v4448
    %4470 = vmatpush.msra.mxu0 %v4447
    %4471 = vmatpush.msra.mxu0 %v4446
    %4472 = vmatpush.msra.mxu0 %v4445
    %4473 = vmatpush.msra.mxu0 %v4444
    %4474 = vmatpush.msra.mxu0 %v4443
    %4475 = vmatpush.msra.mxu0 %v4442
    %4476 = vmatpush.msra.mxu0 %v4441
    %4477 = vmatpush.msra.mxu0 %v4440
    %4478 = vmatpush.msra.mxu0 %v4439
    %4479 = vmatpush.msra.mxu0 %v4438
    %4480 = vmatpush.msra.mxu0 %v4437
    %4481 = vmatpush.msra.mxu0 %v4436
    %4482 = vmatpush.msra.mxu0 %v4435
    %4483 = vmatmul.f32.gmra.mxu0 %v4432
    %v4484 = vpop.f32.mrf.mxu0
    %v4485 = vadd.f32 0.0, %v4484
    %4486 = vdwg.mxu0
    %4487 = vmatpush.msra.mxu0 %v4466
    %4488 = vmatpush.msra.mxu0 %v4465
    %4489 = vmatpush.msra.mxu0 %v4464
    %4490 = vmatpush.msra.mxu0 %v4463
    %4491 = vmatpush.msra.mxu0 %v4462
    %4492 = vmatpush.msra.mxu0 %v4461
    %4493 = vmatpush.msra.mxu0 %v4460
    %4494 = vmatpush.msra.mxu0 %v4459
    %4495 = vmatpush.msra.mxu0 %v4458
    %4496 = vmatpush.msra.mxu0 %v4457
    %4497 = vmatpush.msra.mxu0 %v4456
    %4498 = vmatpush.msra.mxu0 %v4455
    %4499 = vmatpush.msra.mxu0 %v4454
    %4500 = vmatpush.msra.mxu0 %v4453
    %4501 = vmatpush.msra.mxu0 %v4452
    %4502 = vmatpush.msra.mxu0 %v4451
    %4503 = vmatmul.f32.gmra.mxu0 %v4433
    %v4504 = vpop.f32.mrf.mxu0
    %v4505 = vadd.f32 %v4485, %v4504
    %4506 = vdwg.mxu0
    %v4507 = vadd.f32 %v4172, %v4505
    %v4508 = vld [vmem:[#allocation2 + $0x18] sm:$0xff]
    %v4509 = vld [vmem:[#allocation2 + $0x20] sm:$0xf]
    %4512 = vst [vmem:[#allocation1] ss:$4 sm:$0xff] %v4508
    %s4513 = scalar_lea.vmem [#allocation1], 32
    %4514 = vst [vmem:[%s4513] ss:$4 sm:$0xff] %v4509
    %v4515 = vld.sshfl [vmem:[#allocation1] sm:$0xff pattern:$0x73625140]
    %v4516 = vld.sshfl [vmem:[#allocation1 + $0x8] sm:$0xff pattern:$0x73625140]
    %v4517 = vld.sshfl [vmem:[#allocation1 + $0x10] sm:$0xff pattern:$0x73625140]
    %v4518 = vld.sshfl [vmem:[#allocation1 + $0x18] sm:$0xff pattern:$0x73625140]
    %v4519 = vld.sshfl [vmem:[#allocation1 + $0x20] sm:$0xff pattern:$0x73625140]
    %v4520 = vld.sshfl [vmem:[#allocation1 + $0x28] sm:$0xff pattern:$0x73625140]
    %4527 = vmatpush.msra.mxu0 %v2339
    %4528 = vmatpush.msra.mxu0 %v2337
    %4529 = vmatpush.msra.mxu0 %v2335
    %4530 = vmatpush.msra.mxu0 %v2333
    %4531 = vmatpush.msra.mxu0 %v2331
    %4532 = vmatpush.msra.mxu0 %v2329
    %4533 = vmatpush.msra.mxu0 %v2327
    %4534 = vmatpush.msra.mxu0 %v2325
    %4535 = vmatpush.msra.mxu0 %v2323
    %4536 = vmatpush.msra.mxu0 %v2321
    %4537 = vmatpush.msra.mxu0 %v2319
    %4538 = vmatpush.msra.mxu0 %v2317
    %4539 = vmatpush.msra.mxu0 %v2315
    %4540 = vmatpush.msra.mxu0 %v2313
    %4541 = vmatpush.msra.mxu0 %v2311
    %4542 = vmatpush.msra.mxu0 %v2309
    %4543 = vmatmul.f32.gmra.mxu0 %v4515
    %v4544 = vpop.f32.mrf.mxu0
    %v4545 = vadd.f32 0.0, %v4544
    %4546 = vdwg.mxu0
    %4547 = vmatpush.msra.mxu0 %v2371
    %4548 = vmatpush.msra.mxu0 %v2369
    %4549 = vmatpush.msra.mxu0 %v2367
    %4550 = vmatpush.msra.mxu0 %v2365
    %4551 = vmatpush.msra.mxu0 %v2363
    %4552 = vmatpush.msra.mxu0 %v2361
    %4553 = vmatpush.msra.mxu0 %v2359
    %4554 = vmatpush.msra.mxu0 %v2357
    %4555 = vmatpush.msra.mxu0 %v2355
    %4556 = vmatpush.msra.mxu0 %v2353
    %4557 = vmatpush.msra.mxu0 %v2351
    %4558 = vmatpush.msra.mxu0 %v2349
    %4559 = vmatpush.msra.mxu0 %v2347
    %4560 = vmatpush.msra.mxu0 %v2345
    %4561 = vmatpush.msra.mxu0 %v2343
    %4562 = vmatpush.msra.mxu0 %v2341
    %4563 = vmatmul.f32.gmra.mxu0 %v4516
    %v4564 = vpop.f32.mrf.mxu0
    %v4565 = vadd.f32 %v4545, %v4564
    %4566 = vdwg.mxu0
    %4567 = vmatpush.msra.mxu0 %v2403
    %4568 = vmatpush.msra.mxu0 %v2401
    %4569 = vmatpush.msra.mxu0 %v2399
    %4570 = vmatpush.msra.mxu0 %v2397
    %4571 = vmatpush.msra.mxu0 %v2395
    %4572 = vmatpush.msra.mxu0 %v2393
    %4573 = vmatpush.msra.mxu0 %v2391
    %4574 = vmatpush.msra.mxu0 %v2389
    %4575 = vmatpush.msra.mxu0 %v2387
    %4576 = vmatpush.msra.mxu0 %v2385
    %4577 = vmatpush.msra.mxu0 %v2383
    %4578 = vmatpush.msra.mxu0 %v2381
    %4579 = vmatpush.msra.mxu0 %v2379
    %4580 = vmatpush.msra.mxu0 %v2377
    %4581 = vmatpush.msra.mxu0 %v2375
    %4582 = vmatpush.msra.mxu0 %v2373
    %4583 = vmatmul.f32.gmra.mxu0 %v4517
    %v4584 = vpop.f32.mrf.mxu0
    %v4585 = vadd.f32 %v4565, %v4584
    %4586 = vdwg.mxu0
    %4587 = vmatpush.msra.mxu0 %v2435
    %4588 = vmatpush.msra.mxu0 %v2433
    %4589 = vmatpush.msra.mxu0 %v2431
    %4590 = vmatpush.msra.mxu0 %v2429
    %4591 = vmatpush.msra.mxu0 %v2427
    %4592 = vmatpush.msra.mxu0 %v2425
    %4593 = vmatpush.msra.mxu0 %v2423
    %4594 = vmatpush.msra.mxu0 %v2421
    %4595 = vmatpush.msra.mxu0 %v2419
    %4596 = vmatpush.msra.mxu0 %v2417
    %4597 = vmatpush.msra.mxu0 %v2415
    %4598 = vmatpush.msra.mxu0 %v2413
    %4599 = vmatpush.msra.mxu0 %v2411
    %4600 = vmatpush.msra.mxu0 %v2409
    %4601 = vmatpush.msra.mxu0 %v2407
    %4602 = vmatpush.msra.mxu0 %v2405
    %4603 = vmatmul.f32.gmra.mxu0 %v4518
    %v4604 = vpop.f32.mrf.mxu0
    %v4605 = vadd.f32 %v4585, %v4604
    %4606 = vdwg.mxu0
    %4607 = vmatpush.msra.mxu0 %v2467
    %4608 = vmatpush.msra.mxu0 %v2465
    %4609 = vmatpush.msra.mxu0 %v2463
    %4610 = vmatpush.msra.mxu0 %v2461
    %4611 = vmatpush.msra.mxu0 %v2459
    %4612 = vmatpush.msra.mxu0 %v2457
    %4613 = vmatpush.msra.mxu0 %v2455
    %4614 = vmatpush.msra.mxu0 %v2453
    %4615 = vmatpush.msra.mxu0 %v2451
    %4616 = vmatpush.msra.mxu0 %v2449
    %4617 = vmatpush.msra.mxu0 %v2447
    %4618 = vmatpush.msra.mxu0 %v2445
    %4619 = vmatpush.msra.mxu0 %v2443
    %4620 = vmatpush.msra.mxu0 %v2441
    %4621 = vmatpush.msra.mxu0 %v2439
    %4622 = vmatpush.msra.mxu0 %v2437
    %4623 = vmatmul.f32.gmra.mxu0 %v4519
    %v4624 = vpop.f32.mrf.mxu0
    %v4625 = vadd.f32 %v4605, %v4624
    %4626 = vdwg.mxu0
    %4627 = vmatpush.msra.mxu0 %v2499
    %4628 = vmatpush.msra.mxu0 %v2497
    %4629 = vmatpush.msra.mxu0 %v2495
    %4630 = vmatpush.msra.mxu0 %v2493
    %4631 = vmatpush.msra.mxu0 %v2491
    %4632 = vmatpush.msra.mxu0 %v2489
    %4633 = vmatpush.msra.mxu0 %v2487
    %4634 = vmatpush.msra.mxu0 %v2485
    %4635 = vmatpush.msra.mxu0 %v2483
    %4636 = vmatpush.msra.mxu0 %v2481
    %4637 = vmatpush.msra.mxu0 %v2479
    %4638 = vmatpush.msra.mxu0 %v2477
    %4639 = vmatpush.msra.mxu0 %v2475
    %4640 = vmatpush.msra.mxu0 %v2473
    %4641 = vmatpush.msra.mxu0 %v2471
    %4642 = vmatpush.msra.mxu0 %v2469
    %4643 = vmatmul.f32.gmra.mxu0 %v4520
    %v4644 = vpop.f32.mrf.mxu0
    %v4645 = vadd.f32 %v4625, %v4644
    %4646 = vdwg.mxu0
    %4647 = vmatpush.msra.mxu0 %v2340
    %4648 = vmatpush.msra.mxu0 %v2338
    %4649 = vmatpush.msra.mxu0 %v2336
    %4650 = vmatpush.msra.mxu0 %v2334
    %4651 = vmatpush.msra.mxu0 %v2332
    %4652 = vmatpush.msra.mxu0 %v2330
    %4653 = vmatpush.msra.mxu0 %v2328
    %4654 = vmatpush.msra.mxu0 %v2326
    %4655 = vmatpush.msra.mxu0 %v2324
    %4656 = vmatpush.msra.mxu0 %v2322
    %4657 = vmatpush.msra.mxu0 %v2320
    %4658 = vmatpush.msra.mxu0 %v2318
    %4659 = vmatpush.msra.mxu0 %v2316
    %4660 = vmatpush.msra.mxu0 %v2314
    %4661 = vmatpush.msra.mxu0 %v2312
    %4662 = vmatpush.msra.mxu0 %v2310
    %4663 = vmatmul.f32.gmra.mxu0 %v4515
    %v4664 = vpop.f32.mrf.mxu0
    %v4665 = vadd.f32 0.0, %v4664
    %4666 = vdwg.mxu0
    %4667 = vmatpush.msra.mxu0 %v2372
    %4668 = vmatpush.msra.mxu0 %v2370
    %4669 = vmatpush.msra.mxu0 %v2368
    %4670 = vmatpush.msra.mxu0 %v2366
    %4671 = vmatpush.msra.mxu0 %v2364
    %4672 = vmatpush.msra.mxu0 %v2362
    %4673 = vmatpush.msra.mxu0 %v2360
    %4674 = vmatpush.msra.mxu0 %v2358
    %4675 = vmatpush.msra.mxu0 %v2356
    %4676 = vmatpush.msra.mxu0 %v2354
    %4677 = vmatpush.msra.mxu0 %v2352
    %4678 = vmatpush.msra.mxu0 %v2350
    %4679 = vmatpush.msra.mxu0 %v2348
    %4680 = vmatpush.msra.mxu0 %v2346
    %4681 = vmatpush.msra.mxu0 %v2344
    %4682 = vmatpush.msra.mxu0 %v2342
    %4683 = vmatmul.f32.gmra.mxu0 %v4516
    %v4684 = vpop.f32.mrf.mxu0
    %v4685 = vadd.f32 %v4665, %v4684
    %4686 = vdwg.mxu0
    %4687 = vmatpush.msra.mxu0 %v2404
    %4688 = vmatpush.msra.mxu0 %v2402
    %4689 = vmatpush.msra.mxu0 %v2400
    %4690 = vmatpush.msra.mxu0 %v2398
    %4691 = vmatpush.msra.mxu0 %v2396
    %4692 = vmatpush.msra.mxu0 %v2394
    %4693 = vmatpush.msra.mxu0 %v2392
    %4694 = vmatpush.msra.mxu0 %v2390
    %4695 = vmatpush.msra.mxu0 %v2388
    %4696 = vmatpush.msra.mxu0 %v2386
    %4697 = vmatpush.msra.mxu0 %v2384
    %4698 = vmatpush.msra.mxu0 %v2382
    %4699 = vmatpush.msra.mxu0 %v2380
    %4700 = vmatpush.msra.mxu0 %v2378
    %4701 = vmatpush.msra.mxu0 %v2376
    %4702 = vmatpush.msra.mxu0 %v2374
    %4703 = vmatmul.f32.gmra.mxu0 %v4517
    %v4704 = vpop.f32.mrf.mxu0
    %v4705 = vadd.f32 %v4685, %v4704
    %4706 = vdwg.mxu0
    %4707 = vmatpush.msra.mxu0 %v2436
    %4708 = vmatpush.msra.mxu0 %v2434
    %4709 = vmatpush.msra.mxu0 %v2432
    %4710 = vmatpush.msra.mxu0 %v2430
    %4711 = vmatpush.msra.mxu0 %v2428
    %4712 = vmatpush.msra.mxu0 %v2426
    %4713 = vmatpush.msra.mxu0 %v2424
    %4714 = vmatpush.msra.mxu0 %v2422
    %4715 = vmatpush.msra.mxu0 %v2420
    %4716 = vmatpush.msra.mxu0 %v2418
    %4717 = vmatpush.msra.mxu0 %v2416
    %4718 = vmatpush.msra.mxu0 %v2414
    %4719 = vmatpush.msra.mxu0 %v2412
    %4720 = vmatpush.msra.mxu0 %v2410
    %4721 = vmatpush.msra.mxu0 %v2408
    %4722 = vmatpush.msra.mxu0 %v2406
    %4723 = vmatmul.f32.gmra.mxu0 %v4518
    %v4724 = vpop.f32.mrf.mxu0
    %v4725 = vadd.f32 %v4705, %v4724
    %4726 = vdwg.mxu0
    %4727 = vmatpush.msra.mxu0 %v2468
    %4728 = vmatpush.msra.mxu0 %v2466
    %4729 = vmatpush.msra.mxu0 %v2464
    %4730 = vmatpush.msra.mxu0 %v2462
    %4731 = vmatpush.msra.mxu0 %v2460
    %4732 = vmatpush.msra.mxu0 %v2458
    %4733 = vmatpush.msra.mxu0 %v2456
    %4734 = vmatpush.msra.mxu0 %v2454
    %4735 = vmatpush.msra.mxu0 %v2452
    %4736 = vmatpush.msra.mxu0 %v2450
    %4737 = vmatpush.msra.mxu0 %v2448
    %4738 = vmatpush.msra.mxu0 %v2446
    %4739 = vmatpush.msra.mxu0 %v2444
    %4740 = vmatpush.msra.mxu0 %v2442
    %4741 = vmatpush.msra.mxu0 %v2440
    %4742 = vmatpush.msra.mxu0 %v2438
    %4743 = vmatmul.f32.gmra.mxu0 %v4519
    %v4744 = vpop.f32.mrf.mxu0
    %v4745 = vadd.f32 %v4725, %v4744
    %4746 = vdwg.mxu0
    %4747 = vmatpush.msra.mxu0 %v2500
    %4748 = vmatpush.msra.mxu0 %v2498
    %4749 = vmatpush.msra.mxu0 %v2496
    %4750 = vmatpush.msra.mxu0 %v2494
    %4751 = vmatpush.msra.mxu0 %v2492
    %4752 = vmatpush.msra.mxu0 %v2490
    %4753 = vmatpush.msra.mxu0 %v2488
    %4754 = vmatpush.msra.mxu0 %v2486
    %4755 = vmatpush.msra.mxu0 %v2484
    %4756 = vmatpush.msra.mxu0 %v2482
    %4757 = vmatpush.msra.mxu0 %v2480
    %4758 = vmatpush.msra.mxu0 %v2478
    %4759 = vmatpush.msra.mxu0 %v2476
    %4760 = vmatpush.msra.mxu0 %v2474
    %4761 = vmatpush.msra.mxu0 %v2472
    %4762 = vmatpush.msra.mxu0 %v2470
    %4763 = vmatmul.f32.gmra.mxu0 %v4520
    %v4764 = vpop.f32.mrf.mxu0
    %v4765 = vadd.f32 %v4745, %v4764
    %4766 = vdwg.mxu0
    %v4767 = vmax.f32 %v4645, 0.0
    %v4768 = vmax.f32 %v4765, 0.0
    %s4769 = scalar_lea.vmem %s3, 1536
    %v4770 = vld [vmem:[%s4769] sm:$0xff]
    %v4771 = vld [vmem:[%s4769 + $0x8] sm:$0xff]
    %v4772 = vld [vmem:[%s4769 + $0x10] sm:$0xff]
    %v4773 = vld [vmem:[%s4769 + $0x18] sm:$0xff]
    %v4774 = vld [vmem:[%s4769 + $0x20] sm:$0xff]
    %v4775 = vld [vmem:[%s4769 + $0x28] sm:$0xff]
    %v4776 = vld [vmem:[%s4769 + $0x30] sm:$0xff]
    %v4777 = vld [vmem:[%s4769 + $0x38] sm:$0xff]
    %v4778 = vld [vmem:[%s4769 + $0x40] sm:$0xff]
    %v4779 = vld [vmem:[%s4769 + $0x48] sm:$0xff]
    %v4780 = vld [vmem:[%s4769 + $0x50] sm:$0xff]
    %v4781 = vld [vmem:[%s4769 + $0x58] sm:$0xff]
    %v4782 = vld [vmem:[%s4769 + $0x60] sm:$0xff]
    %v4783 = vld [vmem:[%s4769 + $0x68] sm:$0xff]
    %v4784 = vld [vmem:[%s4769 + $0x70] sm:$0xff]
    %v4785 = vld [vmem:[%s4769 + $0x78] sm:$0xff]
    %v4786 = vld [vmem:[%s4769 + $0x80] sm:$0xff]
    %v4787 = vld [vmem:[%s4769 + $0x88] sm:$0xff]
    %v4788 = vld [vmem:[%s4769 + $0x90] sm:$0xff]
    %v4789 = vld [vmem:[%s4769 + $0x98] sm:$0xff]
    %v4790 = vld [vmem:[%s4769 + $0xa0] sm:$0xff]
    %v4791 = vld [vmem:[%s4769 + $0xa8] sm:$0xff]
    %v4792 = vld [vmem:[%s4769 + $0xb0] sm:$0xff]
    %v4793 = vld [vmem:[%s4769 + $0xb8] sm:$0xff]
    %v4794 = vld [vmem:[%s4769 + $0xc0] sm:$0xff]
    %v4795 = vld [vmem:[%s4769 + $0xc8] sm:$0xff]
    %v4796 = vld [vmem:[%s4769 + $0xd0] sm:$0xff]
    %v4797 = vld [vmem:[%s4769 + $0xd8] sm:$0xff]
    %v4798 = vld [vmem:[%s4769 + $0xe0] sm:$0xff]
    %v4799 = vld [vmem:[%s4769 + $0xe8] sm:$0xff]
    %v4800 = vld [vmem:[%s4769 + $0xf0] sm:$0xff]
    %v4801 = vld [vmem:[%s4769 + $0xf8] sm:$0xff]
    %4802 = vmatpush.msra.mxu0 %v4785
    %4803 = vmatpush.msra.mxu0 %v4784
    %4804 = vmatpush.msra.mxu0 %v4783
    %4805 = vmatpush.msra.mxu0 %v4782
    %4806 = vmatpush.msra.mxu0 %v4781
    %4807 = vmatpush.msra.mxu0 %v4780
    %4808 = vmatpush.msra.mxu0 %v4779
    %4809 = vmatpush.msra.mxu0 %v4778
    %4810 = vmatpush.msra.mxu0 %v4777
    %4811 = vmatpush.msra.mxu0 %v4776
    %4812 = vmatpush.msra.mxu0 %v4775
    %4813 = vmatpush.msra.mxu0 %v4774
    %4814 = vmatpush.msra.mxu0 %v4773
    %4815 = vmatpush.msra.mxu0 %v4772
    %4816 = vmatpush.msra.mxu0 %v4771
    %4817 = vmatpush.msra.mxu0 %v4770
    %4818 = vmatmul.f32.gmra.mxu0 %v4767
    %v4819 = vpop.f32.mrf.mxu0
    %v4820 = vadd.f32 0.0, %v4819
    %4821 = vdwg.mxu0
    %4822 = vmatpush.msra.mxu0 %v4801
    %4823 = vmatpush.msra.mxu0 %v4800
    %4824 = vmatpush.msra.mxu0 %v4799
    %4825 = vmatpush.msra.mxu0 %v4798
    %4826 = vmatpush.msra.mxu0 %v4797
    %4827 = vmatpush.msra.mxu0 %v4796
    %4828 = vmatpush.msra.mxu0 %v4795
    %4829 = vmatpush.msra.mxu0 %v4794
    %4830 = vmatpush.msra.mxu0 %v4793
    %4831 = vmatpush.msra.mxu0 %v4792
    %4832 = vmatpush.msra.mxu0 %v4791
    %4833 = vmatpush.msra.mxu0 %v4790
    %4834 = vmatpush.msra.mxu0 %v4789
    %4835 = vmatpush.msra.mxu0 %v4788
    %4836 = vmatpush.msra.mxu0 %v4787
    %4837 = vmatpush.msra.mxu0 %v4786
    %4838 = vmatmul.f32.gmra.mxu0 %v4768
    %v4839 = vpop.f32.mrf.mxu0
    %v4840 = vadd.f32 %v4820, %v4839
    %4841 = vdwg.mxu0
    %v4842 = vadd.f32 %v4507, %v4840
    %v4843 = vld [vmem:[#allocation2 + $0x1c] sm:$0xff]
    %v4844 = vld [vmem:[#allocation2 + $0x24] sm:$0xf]
    %4847 = vst [vmem:[#allocation1] ss:$4 sm:$0xff] %v4843
    %s4848 = scalar_lea.vmem [#allocation1], 32
    %4849 = vst [vmem:[%s4848] ss:$4 sm:$0xff] %v4844
    %v4850 = vld.sshfl [vmem:[#allocation1] sm:$0xff pattern:$0x73625140]
    %v4851 = vld.sshfl [vmem:[#allocation1 + $0x8] sm:$0xff pattern:$0x73625140]
    %v4852 = vld.sshfl [vmem:[#allocation1 + $0x10] sm:$0xff pattern:$0x73625140]
    %v4853 = vld.sshfl [vmem:[#allocation1 + $0x18] sm:$0xff pattern:$0x73625140]
    %v4854 = vld.sshfl [vmem:[#allocation1 + $0x20] sm:$0xff pattern:$0x73625140]
    %v4855 = vld.sshfl [vmem:[#allocation1 + $0x28] sm:$0xff pattern:$0x73625140]
    %4862 = vmatpush.msra.mxu0 %v2339
    %4863 = vmatpush.msra.mxu0 %v2337
    %4864 = vmatpush.msra.mxu0 %v2335
    %4865 = vmatpush.msra.mxu0 %v2333
    %4866 = vmatpush.msra.mxu0 %v2331
    %4867 = vmatpush.msra.mxu0 %v2329
    %4868 = vmatpush.msra.mxu0 %v2327
    %4869 = vmatpush.msra.mxu0 %v2325
    %4870 = vmatpush.msra.mxu0 %v2323
    %4871 = vmatpush.msra.mxu0 %v2321
    %4872 = vmatpush.msra.mxu0 %v2319
    %4873 = vmatpush.msra.mxu0 %v2317
    %4874 = vmatpush.msra.mxu0 %v2315
    %4875 = vmatpush.msra.mxu0 %v2313
    %4876 = vmatpush.msra.mxu0 %v2311
    %4877 = vmatpush.msra.mxu0 %v2309
    %4878 = vmatmul.f32.gmra.mxu0 %v4850
    %v4879 = vpop.f32.mrf.mxu0
    %v4880 = vadd.f32 0.0, %v4879
    %4881 = vdwg.mxu0
    %4882 = vmatpush.msra.mxu0 %v2371
    %4883 = vmatpush.msra.mxu0 %v2369
    %4884 = vmatpush.msra.mxu0 %v2367
    %4885 = vmatpush.msra.mxu0 %v2365
    %4886 = vmatpush.msra.mxu0 %v2363
    %4887 = vmatpush.msra.mxu0 %v2361
    %4888 = vmatpush.msra.mxu0 %v2359
    %4889 = vmatpush.msra.mxu0 %v2357
    %4890 = vmatpush.msra.mxu0 %v2355
    %4891 = vmatpush.msra.mxu0 %v2353
    %4892 = vmatpush.msra.mxu0 %v2351
    %4893 = vmatpush.msra.mxu0 %v2349
    %4894 = vmatpush.msra.mxu0 %v2347
    %4895 = vmatpush.msra.mxu0 %v2345
    %4896 = vmatpush.msra.mxu0 %v2343
    %4897 = vmatpush.msra.mxu0 %v2341
    %4898 = vmatmul.f32.gmra.mxu0 %v4851
    %v4899 = vpop.f32.mrf.mxu0
    %v4900 = vadd.f32 %v4880, %v4899
    %4901 = vdwg.mxu0
    %4902 = vmatpush.msra.mxu0 %v2403
    %4903 = vmatpush.msra.mxu0 %v2401
    %4904 = vmatpush.msra.mxu0 %v2399
    %4905 = vmatpush.msra.mxu0 %v2397
    %4906 = vmatpush.msra.mxu0 %v2395
    %4907 = vmatpush.msra.mxu0 %v2393
    %4908 = vmatpush.msra.mxu0 %v2391
    %4909 = vmatpush.msra.mxu0 %v2389
    %4910 = vmatpush.msra.mxu0 %v2387
    %4911 = vmatpush.msra.mxu0 %v2385
    %4912 = vmatpush.msra.mxu0 %v2383
    %4913 = vmatpush.msra.mxu0 %v2381
    %4914 = vmatpush.msra.mxu0 %v2379
    %4915 = vmatpush.msra.mxu0 %v2377
    %4916 = vmatpush.msra.mxu0 %v2375
    %4917 = vmatpush.msra.mxu0 %v2373
    %4918 = vmatmul.f32.gmra.mxu0 %v4852
    %v4919 = vpop.f32.mrf.mxu0
    %v4920 = vadd.f32 %v4900, %v4919
    %4921 = vdwg.mxu0
    %4922 = vmatpush.msra.mxu0 %v2435
    %4923 = vmatpush.msra.mxu0 %v2433
    %4924 = vmatpush.msra.mxu0 %v2431
    %4925 = vmatpush.msra.mxu0 %v2429
    %4926 = vmatpush.msra.mxu0 %v2427
    %4927 = vmatpush.msra.mxu0 %v2425
    %4928 = vmatpush.msra.mxu0 %v2423
    %4929 = vmatpush.msra.mxu0 %v2421
    %4930 = vmatpush.msra.mxu0 %v2419
    %4931 = vmatpush.msra.mxu0 %v2417
    %4932 = vmatpush.msra.mxu0 %v2415
    %4933 = vmatpush.msra.mxu0 %v2413
    %4934 = vmatpush.msra.mxu0 %v2411
    %4935 = vmatpush.msra.mxu0 %v2409
    %4936 = vmatpush.msra.mxu0 %v2407
    %4937 = vmatpush.msra.mxu0 %v2405
    %4938 = vmatmul.f32.gmra.mxu0 %v4853
    %v4939 = vpop.f32.mrf.mxu0
    %v4940 = vadd.f32 %v4920, %v4939
    %4941 = vdwg.mxu0
    %4942 = vmatpush.msra.mxu0 %v2467
    %4943 = vmatpush.msra.mxu0 %v2465
    %4944 = vmatpush.msra.mxu0 %v2463
    %4945 = vmatpush.msra.mxu0 %v2461
    %4946 = vmatpush.msra.mxu0 %v2459
    %4947 = vmatpush.msra.mxu0 %v2457
    %4948 = vmatpush.msra.mxu0 %v2455
    %4949 = vmatpush.msra.mxu0 %v2453
    %4950 = vmatpush.msra.mxu0 %v2451
    %4951 = vmatpush.msra.mxu0 %v2449
    %4952 = vmatpush.msra.mxu0 %v2447
    %4953 = vmatpush.msra.mxu0 %v2445
    %4954 = vmatpush.msra.mxu0 %v2443
    %4955 = vmatpush.msra.mxu0 %v2441
    %4956 = vmatpush.msra.mxu0 %v2439
    %4957 = vmatpush.msra.mxu0 %v2437
    %4958 = vmatmul.f32.gmra.mxu0 %v4854
    %v4959 = vpop.f32.mrf.mxu0
    %v4960 = vadd.f32 %v4940, %v4959
    %4961 = vdwg.mxu0
    %4962 = vmatpush.msra.mxu0 %v2499
    %4963 = vmatpush.msra.mxu0 %v2497
    %4964 = vmatpush.msra.mxu0 %v2495
    %4965 = vmatpush.msra.mxu0 %v2493
    %4966 = vmatpush.msra.mxu0 %v2491
    %4967 = vmatpush.msra.mxu0 %v2489
    %4968 = vmatpush.msra.mxu0 %v2487
    %4969 = vmatpush.msra.mxu0 %v2485
    %4970 = vmatpush.msra.mxu0 %v2483
    %4971 = vmatpush.msra.mxu0 %v2481
    %4972 = vmatpush.msra.mxu0 %v2479
    %4973 = vmatpush.msra.mxu0 %v2477
    %4974 = vmatpush.msra.mxu0 %v2475
    %4975 = vmatpush.msra.mxu0 %v2473
    %4976 = vmatpush.msra.mxu0 %v2471
    %4977 = vmatpush.msra.mxu0 %v2469
    %4978 = vmatmul.f32.gmra.mxu0 %v4855
    %v4979 = vpop.f32.mrf.mxu0
    %v4980 = vadd.f32 %v4960, %v4979
    %4981 = vdwg.mxu0
    %4982 = vmatpush.msra.mxu0 %v2340
    %4983 = vmatpush.msra.mxu0 %v2338
    %4984 = vmatpush.msra.mxu0 %v2336
    %4985 = vmatpush.msra.mxu0 %v2334
    %4986 = vmatpush.msra.mxu0 %v2332
    %4987 = vmatpush.msra.mxu0 %v2330
    %4988 = vmatpush.msra.mxu0 %v2328
    %4989 = vmatpush.msra.mxu0 %v2326
    %4990 = vmatpush.msra.mxu0 %v2324
    %4991 = vmatpush.msra.mxu0 %v2322
    %4992 = vmatpush.msra.mxu0 %v2320
    %4993 = vmatpush.msra.mxu0 %v2318
    %4994 = vmatpush.msra.mxu0 %v2316
    %4995 = vmatpush.msra.mxu0 %v2314
    %4996 = vmatpush.msra.mxu0 %v2312
    %4997 = vmatpush.msra.mxu0 %v2310
    %4998 = vmatmul.f32.gmra.mxu0 %v4850
    %v4999 = vpop.f32.mrf.mxu0
    %v5000 = vadd.f32 0.0, %v4999
    %5001 = vdwg.mxu0
    %5002 = vmatpush.msra.mxu0 %v2372
    %5003 = vmatpush.msra.mxu0 %v2370
    %5004 = vmatpush.msra.mxu0 %v2368
    %5005 = vmatpush.msra.mxu0 %v2366
    %5006 = vmatpush.msra.mxu0 %v2364
    %5007 = vmatpush.msra.mxu0 %v2362
    %5008 = vmatpush.msra.mxu0 %v2360
    %5009 = vmatpush.msra.mxu0 %v2358
    %5010 = vmatpush.msra.mxu0 %v2356
    %5011 = vmatpush.msra.mxu0 %v2354
    %5012 = vmatpush.msra.mxu0 %v2352
    %5013 = vmatpush.msra.mxu0 %v2350
    %5014 = vmatpush.msra.mxu0 %v2348
    %5015 = vmatpush.msra.mxu0 %v2346
    %5016 = vmatpush.msra.mxu0 %v2344
    %5017 = vmatpush.msra.mxu0 %v2342
    %5018 = vmatmul.f32.gmra.mxu0 %v4851
    %v5019 = vpop.f32.mrf.mxu0
    %v5020 = vadd.f32 %v5000, %v5019
    %5021 = vdwg.mxu0
    %5022 = vmatpush.msra.mxu0 %v2404
    %5023 = vmatpush.msra.mxu0 %v2402
    %5024 = vmatpush.msra.mxu0 %v2400
    %5025 = vmatpush.msra.mxu0 %v2398
    %5026 = vmatpush.msra.mxu0 %v2396
    %5027 = vmatpush.msra.mxu0 %v2394
    %5028 = vmatpush.msra.mxu0 %v2392
    %5029 = vmatpush.msra.mxu0 %v2390
    %5030 = vmatpush.msra.mxu0 %v2388
    %5031 = vmatpush.msra.mxu0 %v2386
    %5032 = vmatpush.msra.mxu0 %v2384
    %5033 = vmatpush.msra.mxu0 %v2382
    %5034 = vmatpush.msra.mxu0 %v2380
    %5035 = vmatpush.msra.mxu0 %v2378
    %5036 = vmatpush.msra.mxu0 %v2376
    %5037 = vmatpush.msra.mxu0 %v2374
    %5038 = vmatmul.f32.gmra.mxu0 %v4852
    %v5039 = vpop.f32.mrf.mxu0
    %v5040 = vadd.f32 %v5020, %v5039
    %5041 = vdwg.mxu0
    %5042 = vmatpush.msra.mxu0 %v2436
    %5043 = vmatpush.msra.mxu0 %v2434
    %5044 = vmatpush.msra.mxu0 %v2432
    %5045 = vmatpush.msra.mxu0 %v2430
    %5046 = vmatpush.msra.mxu0 %v2428
    %5047 = vmatpush.msra.mxu0 %v2426
    %5048 = vmatpush.msra.mxu0 %v2424
    %5049 = vmatpush.msra.mxu0 %v2422
    %5050 = vmatpush.msra.mxu0 %v2420
    %5051 = vmatpush.msra.mxu0 %v2418
    %5052 = vmatpush.msra.mxu0 %v2416
    %5053 = vmatpush.msra.mxu0 %v2414
    %5054 = vmatpush.msra.mxu0 %v2412
    %5055 = vmatpush.msra.mxu0 %v2410
    %5056 = vmatpush.msra.mxu0 %v2408
    %5057 = vmatpush.msra.mxu0 %v2406
    %5058 = vmatmul.f32.gmra.mxu0 %v4853
    %v5059 = vpop.f32.mrf.mxu0
    %v5060 = vadd.f32 %v5040, %v5059
    %5061 = vdwg.mxu0
    %5062 = vmatpush.msra.mxu0 %v2468
    %5063 = vmatpush.msra.mxu0 %v2466
    %5064 = vmatpush.msra.mxu0 %v2464
    %5065 = vmatpush.msra.mxu0 %v2462
    %5066 = vmatpush.msra.mxu0 %v2460
    %5067 = vmatpush.msra.mxu0 %v2458
    %5068 = vmatpush.msra.mxu0 %v2456
    %5069 = vmatpush.msra.mxu0 %v2454
    %5070 = vmatpush.msra.mxu0 %v2452
    %5071 = vmatpush.msra.mxu0 %v2450
    %5072 = vmatpush.msra.mxu0 %v2448
    %5073 = vmatpush.msra.mxu0 %v2446
    %5074 = vmatpush.msra.mxu0 %v2444
    %5075 = vmatpush.msra.mxu0 %v2442
    %5076 = vmatpush.msra.mxu0 %v2440
    %5077 = vmatpush.msra.mxu0 %v2438
    %5078 = vmatmul.f32.gmra.mxu0 %v4854
    %v5079 = vpop.f32.mrf.mxu0
    %v5080 = vadd.f32 %v5060, %v5079
    %5081 = vdwg.mxu0
    %5082 = vmatpush.msra.mxu0 %v2500
    %5083 = vmatpush.msra.mxu0 %v2498
    %5084 = vmatpush.msra.mxu0 %v2496
    %5085 = vmatpush.msra.mxu0 %v2494
    %5086 = vmatpush.msra.mxu0 %v2492
    %5087 = vmatpush.msra.mxu0 %v2490
    %5088 = vmatpush.msra.mxu0 %v2488
    %5089 = vmatpush.msra.mxu0 %v2486
    %5090 = vmatpush.msra.mxu0 %v2484
    %5091 = vmatpush.msra.mxu0 %v2482
    %5092 = vmatpush.msra.mxu0 %v2480
    %5093 = vmatpush.msra.mxu0 %v2478
    %5094 = vmatpush.msra.mxu0 %v2476
    %5095 = vmatpush.msra.mxu0 %v2474
    %5096 = vmatpush.msra.mxu0 %v2472
    %5097 = vmatpush.msra.mxu0 %v2470
    %5098 = vmatmul.f32.gmra.mxu0 %v4855
    %v5099 = vpop.f32.mrf.mxu0
    %v5100 = vadd.f32 %v5080, %v5099
    %5101 = vdwg.mxu0
    %v5102 = vmax.f32 %v4980, 0.0
    %v5103 = vmax.f32 %v5100, 0.0
    %s5104 = scalar_lea.vmem %s3, 1792
    %v5105 = vld [vmem:[%s5104] sm:$0xff]
    %v5106 = vld [vmem:[%s5104 + $0x8] sm:$0xff]
    %v5107 = vld [vmem:[%s5104 + $0x10] sm:$0xff]
    %v5108 = vld [vmem:[%s5104 + $0x18] sm:$0xff]
    %v5109 = vld [vmem:[%s5104 + $0x20] sm:$0xff]
    %v5110 = vld [vmem:[%s5104 + $0x28] sm:$0xff]
    %v5111 = vld [vmem:[%s5104 + $0x30] sm:$0xff]
    %v5112 = vld [vmem:[%s5104 + $0x38] sm:$0xff]
    %v5113 = vld [vmem:[%s5104 + $0x40] sm:$0xff]
    %v5114 = vld [vmem:[%s5104 + $0x48] sm:$0xff]
    %v5115 = vld [vmem:[%s5104 + $0x50] sm:$0xff]
    %v5116 = vld [vmem:[%s5104 + $0x58] sm:$0xff]
    %v5117 = vld [vmem:[%s5104 + $0x60] sm:$0xff]
    %v5118 = vld [vmem:[%s5104 + $0x68] sm:$0xff]
    %v5119 = vld [vmem:[%s5104 + $0x70] sm:$0xff]
    %v5120 = vld [vmem:[%s5104 + $0x78] sm:$0xff]
    %v5121 = vld [vmem:[%s5104 + $0x80] sm:$0xff]
    %v5122 = vld [vmem:[%s5104 + $0x88] sm:$0xff]
    %v5123 = vld [vmem:[%s5104 + $0x90] sm:$0xff]
    %v5124 = vld [vmem:[%s5104 + $0x98] sm:$0xff]
    %v5125 = vld [vmem:[%s5104 + $0xa0] sm:$0xff]
    %v5126 = vld [vmem:[%s5104 + $0xa8] sm:$0xff]
    %v5127 = vld [vmem:[%s5104 + $0xb0] sm:$0xff]
    %v5128 = vld [vmem:[%s5104 + $0xb8] sm:$0xff]
    %v5129 = vld [vmem:[%s5104 + $0xc0] sm:$0xff]
    %v5130 = vld [vmem:[%s5104 + $0xc8] sm:$0xff]
    %v5131 = vld [vmem:[%s5104 + $0xd0] sm:$0xff]
    %v5132 = vld [vmem:[%s5104 + $0xd8] sm:$0xff]
    %v5133 = vld [vmem:[%s5104 + $0xe0] sm:$0xff]
    %v5134 = vld [vmem:[%s5104 + $0xe8] sm:$0xff]
    %v5135 = vld [vmem:[%s5104 + $0xf0] sm:$0xff]
    %v5136 = vld [vmem:[%s5104 + $0xf8] sm:$0xff]
    %5137 = vmatpush.msra.mxu0 %v5120
    %5138 = vmatpush.msra.mxu0 %v5119
    %5139 = vmatpush.msra.mxu0 %v5118
    %5140 = vmatpush.msra.mxu0 %v5117
    %5141 = vmatpush.msra.mxu0 %v5116
    %5142 = vmatpush.msra.mxu0 %v5115
    %5143 = vmatpush.msra.mxu0 %v5114
    %5144 = vmatpush.msra.mxu0 %v5113
    %5145 = vmatpush.msra.mxu0 %v5112
    %5146 = vmatpush.msra.mxu0 %v5111
    %5147 = vmatpush.msra.mxu0 %v5110
    %5148 = vmatpush.msra.mxu0 %v5109
    %5149 = vmatpush.msra.mxu0 %v5108
    %5150 = vmatpush.msra.mxu0 %v5107
    %5151 = vmatpush.msra.mxu0 %v5106
    %5152 = vmatpush.msra.mxu0 %v5105
    %5153 = vmatmul.f32.gmra.mxu0 %v5102
    %v5154 = vpop.f32.mrf.mxu0
    %v5155 = vadd.f32 0.0, %v5154
    %5156 = vdwg.mxu0
    %5157 = vmatpush.msra.mxu0 %v5136
    %5158 = vmatpush.msra.mxu0 %v5135
    %5159 = vmatpush.msra.mxu0 %v5134
    %5160 = vmatpush.msra.mxu0 %v5133
    %5161 = vmatpush.msra.mxu0 %v5132
    %5162 = vmatpush.msra.mxu0 %v5131
    %5163 = vmatpush.msra.mxu0 %v5130
    %5164 = vmatpush.msra.mxu0 %v5129
    %5165 = vmatpush.msra.mxu0 %v5128
    %5166 = vmatpush.msra.mxu0 %v5127
    %5167 = vmatpush.msra.mxu0 %v5126
    %5168 = vmatpush.msra.mxu0 %v5125
    %5169 = vmatpush.msra.mxu0 %v5124
    %5170 = vmatpush.msra.mxu0 %v5123
    %5171 = vmatpush.msra.mxu0 %v5122
    %5172 = vmatpush.msra.mxu0 %v5121
    %5173 = vmatmul.f32.gmra.mxu0 %v5103
    %v5174 = vpop.f32.mrf.mxu0
    %v5175 = vadd.f32 %v5155, %v5174
    %5176 = vdwg.mxu0
    %v5177 = vadd.f32 %v4842, %v5175
    %v5178 = vld [vmem:[#allocation2 + $0x20] sm:$0xff]
    %v5179 = vld [vmem:[#allocation2 + $0x28] sm:$0xf]
    %5182 = vst [vmem:[#allocation1] ss:$4 sm:$0xff] %v5178
    %s5183 = scalar_lea.vmem [#allocation1], 32
    %5184 = vst [vmem:[%s5183] ss:$4 sm:$0xff] %v5179
    %v5185 = vld.sshfl [vmem:[#allocation1] sm:$0xff pattern:$0x73625140]
    %v5186 = vld.sshfl [vmem:[#allocation1 + $0x8] sm:$0xff pattern:$0x73625140]
    %v5187 = vld.sshfl [vmem:[#allocation1 + $0x10] sm:$0xff pattern:$0x73625140]
    %v5188 = vld.sshfl [vmem:[#allocation1 + $0x18] sm:$0xff pattern:$0x73625140]
    %v5189 = vld.sshfl [vmem:[#allocation1 + $0x20] sm:$0xff pattern:$0x73625140]
    %v5190 = vld.sshfl [vmem:[#allocation1 + $0x28] sm:$0xff pattern:$0x73625140]
    %5197 = vmatpush.msra.mxu0 %v2339
    %5198 = vmatpush.msra.mxu0 %v2337
    %5199 = vmatpush.msra.mxu0 %v2335
    %5200 = vmatpush.msra.mxu0 %v2333
    %5201 = vmatpush.msra.mxu0 %v2331
    %5202 = vmatpush.msra.mxu0 %v2329
    %5203 = vmatpush.msra.mxu0 %v2327
    %5204 = vmatpush.msra.mxu0 %v2325
    %5205 = vmatpush.msra.mxu0 %v2323
    %5206 = vmatpush.msra.mxu0 %v2321
    %5207 = vmatpush.msra.mxu0 %v2319
    %5208 = vmatpush.msra.mxu0 %v2317
    %5209 = vmatpush.msra.mxu0 %v2315
    %5210 = vmatpush.msra.mxu0 %v2313
    %5211 = vmatpush.msra.mxu0 %v2311
    %5212 = vmatpush.msra.mxu0 %v2309
    %5213 = vmatmul.f32.gmra.mxu0 %v5185
    %v5214 = vpop.f32.mrf.mxu0
    %v5215 = vadd.f32 0.0, %v5214
    %5216 = vdwg.mxu0
    %5217 = vmatpush.msra.mxu0 %v2371
    %5218 = vmatpush.msra.mxu0 %v2369
    %5219 = vmatpush.msra.mxu0 %v2367
    %5220 = vmatpush.msra.mxu0 %v2365
    %5221 = vmatpush.msra.mxu0 %v2363
    %5222 = vmatpush.msra.mxu0 %v2361
    %5223 = vmatpush.msra.mxu0 %v2359
    %5224 = vmatpush.msra.mxu0 %v2357
    %5225 = vmatpush.msra.mxu0 %v2355
    %5226 = vmatpush.msra.mxu0 %v2353
    %5227 = vmatpush.msra.mxu0 %v2351
    %5228 = vmatpush.msra.mxu0 %v2349
    %5229 = vmatpush.msra.mxu0 %v2347
    %5230 = vmatpush.msra.mxu0 %v2345
    %5231 = vmatpush.msra.mxu0 %v2343
    %5232 = vmatpush.msra.mxu0 %v2341
    %5233 = vmatmul.f32.gmra.mxu0 %v5186
    %v5234 = vpop.f32.mrf.mxu0
    %v5235 = vadd.f32 %v5215, %v5234
    %5236 = vdwg.mxu0
    %5237 = vmatpush.msra.mxu0 %v2403
    %5238 = vmatpush.msra.mxu0 %v2401
    %5239 = vmatpush.msra.mxu0 %v2399
    %5240 = vmatpush.msra.mxu0 %v2397
    %5241 = vmatpush.msra.mxu0 %v2395
    %5242 = vmatpush.msra.mxu0 %v2393
    %5243 = vmatpush.msra.mxu0 %v2391
    %5244 = vmatpush.msra.mxu0 %v2389
    %5245 = vmatpush.msra.mxu0 %v2387
    %5246 = vmatpush.msra.mxu0 %v2385
    %5247 = vmatpush.msra.mxu0 %v2383
    %5248 = vmatpush.msra.mxu0 %v2381
    %5249 = vmatpush.msra.mxu0 %v2379
    %5250 = vmatpush.msra.mxu0 %v2377
    %5251 = vmatpush.msra.mxu0 %v2375
    %5252 = vmatpush.msra.mxu0 %v2373
    %5253 = vmatmul.f32.gmra.mxu0 %v5187
    %v5254 = vpop.f32.mrf.mxu0
    %v5255 = vadd.f32 %v5235, %v5254
    %5256 = vdwg.mxu0
    %5257 = vmatpush.msra.mxu0 %v2435
    %5258 = vmatpush.msra.mxu0 %v2433
    %5259 = vmatpush.msra.mxu0 %v2431
    %5260 = vmatpush.msra.mxu0 %v2429
    %5261 = vmatpush.msra.mxu0 %v2427
    %5262 = vmatpush.msra.mxu0 %v2425
    %5263 = vmatpush.msra.mxu0 %v2423
    %5264 = vmatpush.msra.mxu0 %v2421
    %5265 = vmatpush.msra.mxu0 %v2419
    %5266 = vmatpush.msra.mxu0 %v2417
    %5267 = vmatpush.msra.mxu0 %v2415
    %5268 = vmatpush.msra.mxu0 %v2413
    %5269 = vmatpush.msra.mxu0 %v2411
    %5270 = vmatpush.msra.mxu0 %v2409
    %5271 = vmatpush.msra.mxu0 %v2407
    %5272 = vmatpush.msra.mxu0 %v2405
    %5273 = vmatmul.f32.gmra.mxu0 %v5188
    %v5274 = vpop.f32.mrf.mxu0
    %v5275 = vadd.f32 %v5255, %v5274
    %5276 = vdwg.mxu0
    %5277 = vmatpush.msra.mxu0 %v2467
    %5278 = vmatpush.msra.mxu0 %v2465
    %5279 = vmatpush.msra.mxu0 %v2463
    %5280 = vmatpush.msra.mxu0 %v2461
    %5281 = vmatpush.msra.mxu0 %v2459
    %5282 = vmatpush.msra.mxu0 %v2457
    %5283 = vmatpush.msra.mxu0 %v2455
    %5284 = vmatpush.msra.mxu0 %v2453
    %5285 = vmatpush.msra.mxu0 %v2451
    %5286 = vmatpush.msra.mxu0 %v2449
    %5287 = vmatpush.msra.mxu0 %v2447
    %5288 = vmatpush.msra.mxu0 %v2445
    %5289 = vmatpush.msra.mxu0 %v2443
    %5290 = vmatpush.msra.mxu0 %v2441
    %5291 = vmatpush.msra.mxu0 %v2439
    %5292 = vmatpush.msra.mxu0 %v2437
    %5293 = vmatmul.f32.gmra.mxu0 %v5189
    %v5294 = vpop.f32.mrf.mxu0
    %v5295 = vadd.f32 %v5275, %v5294
    %5296 = vdwg.mxu0
    %5297 = vmatpush.msra.mxu0 %v2499
    %5298 = vmatpush.msra.mxu0 %v2497
    %5299 = vmatpush.msra.mxu0 %v2495
    %5300 = vmatpush.msra.mxu0 %v2493
    %5301 = vmatpush.msra.mxu0 %v2491
    %5302 = vmatpush.msra.mxu0 %v2489
    %5303 = vmatpush.msra.mxu0 %v2487
    %5304 = vmatpush.msra.mxu0 %v2485
    %5305 = vmatpush.msra.mxu0 %v2483
    %5306 = vmatpush.msra.mxu0 %v2481
    %5307 = vmatpush.msra.mxu0 %v2479
    %5308 = vmatpush.msra.mxu0 %v2477
    %5309 = vmatpush.msra.mxu0 %v2475
    %5310 = vmatpush.msra.mxu0 %v2473
    %5311 = vmatpush.msra.mxu0 %v2471
    %5312 = vmatpush.msra.mxu0 %v2469
    %5313 = vmatmul.f32.gmra.mxu0 %v5190
    %v5314 = vpop.f32.mrf.mxu0
    %v5315 = vadd.f32 %v5295, %v5314
    %5316 = vdwg.mxu0
    %5317 = vmatpush.msra.mxu0 %v2340
    %5318 = vmatpush.msra.mxu0 %v2338
    %5319 = vmatpush.msra.mxu0 %v2336
    %5320 = vmatpush.msra.mxu0 %v2334
    %5321 = vmatpush.msra.mxu0 %v2332
    %5322 = vmatpush.msra.mxu0 %v2330
    %5323 = vmatpush.msra.mxu0 %v2328
    %5324 = vmatpush.msra.mxu0 %v2326
    %5325 = vmatpush.msra.mxu0 %v2324
    %5326 = vmatpush.msra.mxu0 %v2322
    %5327 = vmatpush.msra.mxu0 %v2320
    %5328 = vmatpush.msra.mxu0 %v2318
    %5329 = vmatpush.msra.mxu0 %v2316
    %5330 = vmatpush.msra.mxu0 %v2314
    %5331 = vmatpush.msra.mxu0 %v2312
    %5332 = vmatpush.msra.mxu0 %v2310
    %5333 = vmatmul.f32.gmra.mxu0 %v5185
    %v5334 = vpop.f32.mrf.mxu0
    %v5335 = vadd.f32 0.0, %v5334
    %5336 = vdwg.mxu0
    %5337 = vmatpush.msra.mxu0 %v2372
    %5338 = vmatpush.msra.mxu0 %v2370
    %5339 = vmatpush.msra.mxu0 %v2368
    %5340 = vmatpush.msra.mxu0 %v2366
    %5341 = vmatpush.msra.mxu0 %v2364
    %5342 = vmatpush.msra.mxu0 %v2362
    %5343 = vmatpush.msra.mxu0 %v2360
    %5344 = vmatpush.msra.mxu0 %v2358
    %5345 = vmatpush.msra.mxu0 %v2356
    %5346 = vmatpush.msra.mxu0 %v2354
    %5347 = vmatpush.msra.mxu0 %v2352
    %5348 = vmatpush.msra.mxu0 %v2350
    %5349 = vmatpush.msra.mxu0 %v2348
    %5350 = vmatpush.msra.mxu0 %v2346
    %5351 = vmatpush.msra.mxu0 %v2344
    %5352 = vmatpush.msra.mxu0 %v2342
    %5353 = vmatmul.f32.gmra.mxu0 %v5186
    %v5354 = vpop.f32.mrf.mxu0
    %v5355 = vadd.f32 %v5335, %v5354
    %5356 = vdwg.mxu0
    %5357 = vmatpush.msra.mxu0 %v2404
    %5358 = vmatpush.msra.mxu0 %v2402
    %5359 = vmatpush.msra.mxu0 %v2400
    %5360 = vmatpush.msra.mxu0 %v2398
    %5361 = vmatpush.msra.mxu0 %v2396
    %5362 = vmatpush.msra.mxu0 %v2394
    %5363 = vmatpush.msra.mxu0 %v2392
    %5364 = vmatpush.msra.mxu0 %v2390
    %5365 = vmatpush.msra.mxu0 %v2388
    %5366 = vmatpush.msra.mxu0 %v2386
    %5367 = vmatpush.msra.mxu0 %v2384
    %5368 = vmatpush.msra.mxu0 %v2382
    %5369 = vmatpush.msra.mxu0 %v2380
    %5370 = vmatpush.msra.mxu0 %v2378
    %5371 = vmatpush.msra.mxu0 %v2376
    %5372 = vmatpush.msra.mxu0 %v2374
    %5373 = vmatmul.f32.gmra.mxu0 %v5187
    %v5374 = vpop.f32.mrf.mxu0
    %v5375 = vadd.f32 %v5355, %v5374
    %5376 = vdwg.mxu0
    %5377 = vmatpush.msra.mxu0 %v2436
    %5378 = vmatpush.msra.mxu0 %v2434
    %5379 = vmatpush.msra.mxu0 %v2432
    %5380 = vmatpush.msra.mxu0 %v2430
    %5381 = vmatpush.msra.mxu0 %v2428
    %5382 = vmatpush.msra.mxu0 %v2426
    %5383 = vmatpush.msra.mxu0 %v2424
    %5384 = vmatpush.msra.mxu0 %v2422
    %5385 = vmatpush.msra.mxu0 %v2420
    %5386 = vmatpush.msra.mxu0 %v2418
    %5387 = vmatpush.msra.mxu0 %v2416
    %5388 = vmatpush.msra.mxu0 %v2414
    %5389 = vmatpush.msra.mxu0 %v2412
    %5390 = vmatpush.msra.mxu0 %v2410
    %5391 = vmatpush.msra.mxu0 %v2408
    %5392 = vmatpush.msra.mxu0 %v2406
    %5393 = vmatmul.f32.gmra.mxu0 %v5188
    %v5394 = vpop.f32.mrf.mxu0
    %v5395 = vadd.f32 %v5375, %v5394
    %5396 = vdwg.mxu0
    %5397 = vmatpush.msra.mxu0 %v2468
    %5398 = vmatpush.msra.mxu0 %v2466
    %5399 = vmatpush.msra.mxu0 %v2464
    %5400 = vmatpush.msra.mxu0 %v2462
    %5401 = vmatpush.msra.mxu0 %v2460
    %5402 = vmatpush.msra.mxu0 %v2458
    %5403 = vmatpush.msra.mxu0 %v2456
    %5404 = vmatpush.msra.mxu0 %v2454
    %5405 = vmatpush.msra.mxu0 %v2452
    %5406 = vmatpush.msra.mxu0 %v2450
    %5407 = vmatpush.msra.mxu0 %v2448
    %5408 = vmatpush.msra.mxu0 %v2446
    %5409 = vmatpush.msra.mxu0 %v2444
    %5410 = vmatpush.msra.mxu0 %v2442
    %5411 = vmatpush.msra.mxu0 %v2440
    %5412 = vmatpush.msra.mxu0 %v2438
    %5413 = vmatmul.f32.gmra.mxu0 %v5189
    %v5414 = vpop.f32.mrf.mxu0
    %v5415 = vadd.f32 %v5395, %v5414
    %5416 = vdwg.mxu0
    %5417 = vmatpush.msra.mxu0 %v2500
    %5418 = vmatpush.msra.mxu0 %v2498
    %5419 = vmatpush.msra.mxu0 %v2496
    %5420 = vmatpush.msra.mxu0 %v2494
    %5421 = vmatpush.msra.mxu0 %v2492
    %5422 = vmatpush.msra.mxu0 %v2490
    %5423 = vmatpush.msra.mxu0 %v2488
    %5424 = vmatpush.msra.mxu0 %v2486
    %5425 = vmatpush.msra.mxu0 %v2484
    %5426 = vmatpush.msra.mxu0 %v2482
    %5427 = vmatpush.msra.mxu0 %v2480
    %5428 = vmatpush.msra.mxu0 %v2478
    %5429 = vmatpush.msra.mxu0 %v2476
    %5430 = vmatpush.msra.mxu0 %v2474
    %5431 = vmatpush.msra.mxu0 %v2472
    %5432 = vmatpush.msra.mxu0 %v2470
    %5433 = vmatmul.f32.gmra.mxu0 %v5190
    %v5434 = vpop.f32.mrf.mxu0
    %v5435 = vadd.f32 %v5415, %v5434
    %5436 = vdwg.mxu0
    %v5437 = vmax.f32 %v5315, 0.0
    %v5438 = vmax.f32 %v5435, 0.0
    %s5439 = scalar_lea.vmem %s3, 2048
    %v5440 = vld [vmem:[%s5439] sm:$0xff]
    %v5441 = vld [vmem:[%s5439 + $0x8] sm:$0xff]
    %v5442 = vld [vmem:[%s5439 + $0x10] sm:$0xff]
    %v5443 = vld [vmem:[%s5439 + $0x18] sm:$0xff]
    %v5444 = vld [vmem:[%s5439 + $0x20] sm:$0xff]
    %v5445 = vld [vmem:[%s5439 + $0x28] sm:$0xff]
    %v5446 = vld [vmem:[%s5439 + $0x30] sm:$0xff]
    %v5447 = vld [vmem:[%s5439 + $0x38] sm:$0xff]
    %v5448 = vld [vmem:[%s5439 + $0x40] sm:$0xff]
    %v5449 = vld [vmem:[%s5439 + $0x48] sm:$0xff]
    %v5450 = vld [vmem:[%s5439 + $0x50] sm:$0xff]
    %v5451 = vld [vmem:[%s5439 + $0x58] sm:$0xff]
    %v5452 = vld [vmem:[%s5439 + $0x60] sm:$0xff]
    %v5453 = vld [vmem:[%s5439 + $0x68] sm:$0xff]
    %v5454 = vld [vmem:[%s5439 + $0x70] sm:$0xff]
    %v5455 = vld [vmem:[%s5439 + $0x78] sm:$0xff]
    %v5456 = vld [vmem:[%s5439 + $0x80] sm:$0xff]
    %v5457 = vld [vmem:[%s5439 + $0x88] sm:$0xff]
    %v5458 = vld [vmem:[%s5439 + $0x90] sm:$0xff]
    %v5459 = vld [vmem:[%s5439 + $0x98] sm:$0xff]
    %v5460 = vld [vmem:[%s5439 + $0xa0] sm:$0xff]
    %v5461 = vld [vmem:[%s5439 + $0xa8] sm:$0xff]
    %v5462 = vld [vmem:[%s5439 + $0xb0] sm:$0xff]
    %v5463 = vld [vmem:[%s5439 + $0xb8] sm:$0xff]
    %v5464 = vld [vmem:[%s5439 + $0xc0] sm:$0xff]
    %v5465 = vld [vmem:[%s5439 + $0xc8] sm:$0xff]
    %v5466 = vld [vmem:[%s5439 + $0xd0] sm:$0xff]
    %v5467 = vld [vmem:[%s5439 + $0xd8] sm:$0xff]
    %v5468 = vld [vmem:[%s5439 + $0xe0] sm:$0xff]
    %v5469 = vld [vmem:[%s5439 + $0xe8] sm:$0xff]
    %v5470 = vld [vmem:[%s5439 + $0xf0] sm:$0xff]
    %v5471 = vld [vmem:[%s5439 + $0xf8] sm:$0xff]
    %5472 = vmatpush.msra.mxu0 %v5455
    %5473 = vmatpush.msra.mxu0 %v5454
    %5474 = vmatpush.msra.mxu0 %v5453
    %5475 = vmatpush.msra.mxu0 %v5452
    %5476 = vmatpush.msra.mxu0 %v5451
    %5477 = vmatpush.msra.mxu0 %v5450
    %5478 = vmatpush.msra.mxu0 %v5449
    %5479 = vmatpush.msra.mxu0 %v5448
    %5480 = vmatpush.msra.mxu0 %v5447
    %5481 = vmatpush.msra.mxu0 %v5446
    %5482 = vmatpush.msra.mxu0 %v5445
    %5483 = vmatpush.msra.mxu0 %v5444
    %5484 = vmatpush.msra.mxu0 %v5443
    %5485 = vmatpush.msra.mxu0 %v5442
    %5486 = vmatpush.msra.mxu0 %v5441
    %5487 = vmatpush.msra.mxu0 %v5440
    %5488 = vmatmul.f32.gmra.mxu0 %v5437
    %v5489 = vpop.f32.mrf.mxu0
    %v5490 = vadd.f32 0.0, %v5489
    %5491 = vdwg.mxu0
    %5492 = vmatpush.msra.mxu0 %v5471
    %5493 = vmatpush.msra.mxu0 %v5470
    %5494 = vmatpush.msra.mxu0 %v5469
    %5495 = vmatpush.msra.mxu0 %v5468
    %5496 = vmatpush.msra.mxu0 %v5467
    %5497 = vmatpush.msra.mxu0 %v5466
    %5498 = vmatpush.msra.mxu0 %v5465
    %5499 = vmatpush.msra.mxu0 %v5464
    %5500 = vmatpush.msra.mxu0 %v5463
    %5501 = vmatpush.msra.mxu0 %v5462
    %5502 = vmatpush.msra.mxu0 %v5461
    %5503 = vmatpush.msra.mxu0 %v5460
    %5504 = vmatpush.msra.mxu0 %v5459
    %5505 = vmatpush.msra.mxu0 %v5458
    %5506 = vmatpush.msra.mxu0 %v5457
    %5507 = vmatpush.msra.mxu0 %v5456
    %5508 = vmatmul.f32.gmra.mxu0 %v5438
    %v5509 = vpop.f32.mrf.mxu0
    %v5510 = vadd.f32 %v5490, %v5509
    %5511 = vdwg.mxu0
    %v5512 = vadd.f32 %v5177, %v5510
    %v5513 = vld [vmem:[#allocation2 + $0x24] sm:$0xff]
    %v5514 = vld [vmem:[#allocation2 + $0x2c] sm:$0xf]
    %5517 = vst [vmem:[#allocation1] ss:$4 sm:$0xff] %v5513
    %s5518 = scalar_lea.vmem [#allocation1], 32
    %5519 = vst [vmem:[%s5518] ss:$4 sm:$0xff] %v5514
    %v5520 = vld.sshfl [vmem:[#allocation1] sm:$0xff pattern:$0x73625140]
    %v5521 = vld.sshfl [vmem:[#allocation1 + $0x8] sm:$0xff pattern:$0x73625140]
    %v5522 = vld.sshfl [vmem:[#allocation1 + $0x10] sm:$0xff pattern:$0x73625140]
    %v5523 = vld.sshfl [vmem:[#allocation1 + $0x18] sm:$0xff pattern:$0x73625140]
    %v5524 = vld.sshfl [vmem:[#allocation1 + $0x20] sm:$0xff pattern:$0x73625140]
    %v5525 = vld.sshfl [vmem:[#allocation1 + $0x28] sm:$0xff pattern:$0x73625140]
    %5532 = vmatpush.msra.mxu0 %v2339
    %5533 = vmatpush.msra.mxu0 %v2337
    %5534 = vmatpush.msra.mxu0 %v2335
    %5535 = vmatpush.msra.mxu0 %v2333
    %5536 = vmatpush.msra.mxu0 %v2331
    %5537 = vmatpush.msra.mxu0 %v2329
    %5538 = vmatpush.msra.mxu0 %v2327
    %5539 = vmatpush.msra.mxu0 %v2325
    %5540 = vmatpush.msra.mxu0 %v2323
    %5541 = vmatpush.msra.mxu0 %v2321
    %5542 = vmatpush.msra.mxu0 %v2319
    %5543 = vmatpush.msra.mxu0 %v2317
    %5544 = vmatpush.msra.mxu0 %v2315
    %5545 = vmatpush.msra.mxu0 %v2313
    %5546 = vmatpush.msra.mxu0 %v2311
    %5547 = vmatpush.msra.mxu0 %v2309
    %5548 = vmatmul.f32.gmra.mxu0 %v5520
    %v5549 = vpop.f32.mrf.mxu0
    %v5550 = vadd.f32 0.0, %v5549
    %5551 = vdwg.mxu0
    %5552 = vmatpush.msra.mxu0 %v2371
    %5553 = vmatpush.msra.mxu0 %v2369
    %5554 = vmatpush.msra.mxu0 %v2367
    %5555 = vmatpush.msra.mxu0 %v2365
    %5556 = vmatpush.msra.mxu0 %v2363
    %5557 = vmatpush.msra.mxu0 %v2361
    %5558 = vmatpush.msra.mxu0 %v2359
    %5559 = vmatpush.msra.mxu0 %v2357
    %5560 = vmatpush.msra.mxu0 %v2355
    %5561 = vmatpush.msra.mxu0 %v2353
    %5562 = vmatpush.msra.mxu0 %v2351
    %5563 = vmatpush.msra.mxu0 %v2349
    %5564 = vmatpush.msra.mxu0 %v2347
    %5565 = vmatpush.msra.mxu0 %v2345
    %5566 = vmatpush.msra.mxu0 %v2343
    %5567 = vmatpush.msra.mxu0 %v2341
    %5568 = vmatmul.f32.gmra.mxu0 %v5521
    %v5569 = vpop.f32.mrf.mxu0
    %v5570 = vadd.f32 %v5550, %v5569
    %5571 = vdwg.mxu0
    %5572 = vmatpush.msra.mxu0 %v2403
    %5573 = vmatpush.msra.mxu0 %v2401
    %5574 = vmatpush.msra.mxu0 %v2399
    %5575 = vmatpush.msra.mxu0 %v2397
    %5576 = vmatpush.msra.mxu0 %v2395
    %5577 = vmatpush.msra.mxu0 %v2393
    %5578 = vmatpush.msra.mxu0 %v2391
    %5579 = vmatpush.msra.mxu0 %v2389
    %5580 = vmatpush.msra.mxu0 %v2387
    %5581 = vmatpush.msra.mxu0 %v2385
    %5582 = vmatpush.msra.mxu0 %v2383
    %5583 = vmatpush.msra.mxu0 %v2381
    %5584 = vmatpush.msra.mxu0 %v2379
    %5585 = vmatpush.msra.mxu0 %v2377
    %5586 = vmatpush.msra.mxu0 %v2375
    %5587 = vmatpush.msra.mxu0 %v2373
    %5588 = vmatmul.f32.gmra.mxu0 %v5522
    %v5589 = vpop.f32.mrf.mxu0
    %v5590 = vadd.f32 %v5570, %v5589
    %5591 = vdwg.mxu0
    %5592 = vmatpush.msra.mxu0 %v2435
    %5593 = vmatpush.msra.mxu0 %v2433
    %5594 = vmatpush.msra.mxu0 %v2431
    %5595 = vmatpush.msra.mxu0 %v2429
    %5596 = vmatpush.msra.mxu0 %v2427
    %5597 = vmatpush.msra.mxu0 %v2425
    %5598 = vmatpush.msra.mxu0 %v2423
    %5599 = vmatpush.msra.mxu0 %v2421
    %5600 = vmatpush.msra.mxu0 %v2419
    %5601 = vmatpush.msra.mxu0 %v2417
    %5602 = vmatpush.msra.mxu0 %v2415
    %5603 = vmatpush.msra.mxu0 %v2413
    %5604 = vmatpush.msra.mxu0 %v2411
    %5605 = vmatpush.msra.mxu0 %v2409
    %5606 = vmatpush.msra.mxu0 %v2407
    %5607 = vmatpush.msra.mxu0 %v2405
    %5608 = vmatmul.f32.gmra.mxu0 %v5523
    %v5609 = vpop.f32.mrf.mxu0
    %v5610 = vadd.f32 %v5590, %v5609
    %5611 = vdwg.mxu0
    %5612 = vmatpush.msra.mxu0 %v2467
    %5613 = vmatpush.msra.mxu0 %v2465
    %5614 = vmatpush.msra.mxu0 %v2463
    %5615 = vmatpush.msra.mxu0 %v2461
    %5616 = vmatpush.msra.mxu0 %v2459
    %5617 = vmatpush.msra.mxu0 %v2457
    %5618 = vmatpush.msra.mxu0 %v2455
    %5619 = vmatpush.msra.mxu0 %v2453
    %5620 = vmatpush.msra.mxu0 %v2451
    %5621 = vmatpush.msra.mxu0 %v2449
    %5622 = vmatpush.msra.mxu0 %v2447
    %5623 = vmatpush.msra.mxu0 %v2445
    %5624 = vmatpush.msra.mxu0 %v2443
    %5625 = vmatpush.msra.mxu0 %v2441
    %5626 = vmatpush.msra.mxu0 %v2439
    %5627 = vmatpush.msra.mxu0 %v2437
    %5628 = vmatmul.f32.gmra.mxu0 %v5524
    %v5629 = vpop.f32.mrf.mxu0
    %v5630 = vadd.f32 %v5610, %v5629
    %5631 = vdwg.mxu0
    %5632 = vmatpush.msra.mxu0 %v2499
    %5633 = vmatpush.msra.mxu0 %v2497
    %5634 = vmatpush.msra.mxu0 %v2495
    %5635 = vmatpush.msra.mxu0 %v2493
    %5636 = vmatpush.msra.mxu0 %v2491
    %5637 = vmatpush.msra.mxu0 %v2489
    %5638 = vmatpush.msra.mxu0 %v2487
    %5639 = vmatpush.msra.mxu0 %v2485
    %5640 = vmatpush.msra.mxu0 %v2483
    %5641 = vmatpush.msra.mxu0 %v2481
    %5642 = vmatpush.msra.mxu0 %v2479
    %5643 = vmatpush.msra.mxu0 %v2477
    %5644 = vmatpush.msra.mxu0 %v2475
    %5645 = vmatpush.msra.mxu0 %v2473
    %5646 = vmatpush.msra.mxu0 %v2471
    %5647 = vmatpush.msra.mxu0 %v2469
    %5648 = vmatmul.f32.gmra.mxu0 %v5525
    %v5649 = vpop.f32.mrf.mxu0
    %v5650 = vadd.f32 %v5630, %v5649
    %5651 = vdwg.mxu0
    %5652 = vmatpush.msra.mxu0 %v2340
    %5653 = vmatpush.msra.mxu0 %v2338
    %5654 = vmatpush.msra.mxu0 %v2336
    %5655 = vmatpush.msra.mxu0 %v2334
    %5656 = vmatpush.msra.mxu0 %v2332
    %5657 = vmatpush.msra.mxu0 %v2330
    %5658 = vmatpush.msra.mxu0 %v2328
    %5659 = vmatpush.msra.mxu0 %v2326
    %5660 = vmatpush.msra.mxu0 %v2324
    %5661 = vmatpush.msra.mxu0 %v2322
    %5662 = vmatpush.msra.mxu0 %v2320
    %5663 = vmatpush.msra.mxu0 %v2318
    %5664 = vmatpush.msra.mxu0 %v2316
    %5665 = vmatpush.msra.mxu0 %v2314
    %5666 = vmatpush.msra.mxu0 %v2312
    %5667 = vmatpush.msra.mxu0 %v2310
    %5668 = vmatmul.f32.gmra.mxu0 %v5520
    %v5669 = vpop.f32.mrf.mxu0
    %v5670 = vadd.f32 0.0, %v5669
    %5671 = vdwg.mxu0
    %5672 = vmatpush.msra.mxu0 %v2372
    %5673 = vmatpush.msra.mxu0 %v2370
    %5674 = vmatpush.msra.mxu0 %v2368
    %5675 = vmatpush.msra.mxu0 %v2366
    %5676 = vmatpush.msra.mxu0 %v2364
    %5677 = vmatpush.msra.mxu0 %v2362
    %5678 = vmatpush.msra.mxu0 %v2360
    %5679 = vmatpush.msra.mxu0 %v2358
    %5680 = vmatpush.msra.mxu0 %v2356
    %5681 = vmatpush.msra.mxu0 %v2354
    %5682 = vmatpush.msra.mxu0 %v2352
    %5683 = vmatpush.msra.mxu0 %v2350
    %5684 = vmatpush.msra.mxu0 %v2348
    %5685 = vmatpush.msra.mxu0 %v2346
    %5686 = vmatpush.msra.mxu0 %v2344
    %5687 = vmatpush.msra.mxu0 %v2342
    %5688 = vmatmul.f32.gmra.mxu0 %v5521
    %v5689 = vpop.f32.mrf.mxu0
    %v5690 = vadd.f32 %v5670, %v5689
    %5691 = vdwg.mxu0
    %5692 = vmatpush.msra.mxu0 %v2404
    %5693 = vmatpush.msra.mxu0 %v2402
    %5694 = vmatpush.msra.mxu0 %v2400
    %5695 = vmatpush.msra.mxu0 %v2398
    %5696 = vmatpush.msra.mxu0 %v2396
    %5697 = vmatpush.msra.mxu0 %v2394
    %5698 = vmatpush.msra.mxu0 %v2392
    %5699 = vmatpush.msra.mxu0 %v2390
    %5700 = vmatpush.msra.mxu0 %v2388
    %5701 = vmatpush.msra.mxu0 %v2386
    %5702 = vmatpush.msra.mxu0 %v2384
    %5703 = vmatpush.msra.mxu0 %v2382
    %5704 = vmatpush.msra.mxu0 %v2380
    %5705 = vmatpush.msra.mxu0 %v2378
    %5706 = vmatpush.msra.mxu0 %v2376
    %5707 = vmatpush.msra.mxu0 %v2374
    %5708 = vmatmul.f32.gmra.mxu0 %v5522
    %v5709 = vpop.f32.mrf.mxu0
    %v5710 = vadd.f32 %v5690, %v5709
    %5711 = vdwg.mxu0
    %5712 = vmatpush.msra.mxu0 %v2436
    %5713 = vmatpush.msra.mxu0 %v2434
    %5714 = vmatpush.msra.mxu0 %v2432
    %5715 = vmatpush.msra.mxu0 %v2430
    %5716 = vmatpush.msra.mxu0 %v2428
    %5717 = vmatpush.msra.mxu0 %v2426
    %5718 = vmatpush.msra.mxu0 %v2424
    %5719 = vmatpush.msra.mxu0 %v2422
    %5720 = vmatpush.msra.mxu0 %v2420
    %5721 = vmatpush.msra.mxu0 %v2418
    %5722 = vmatpush.msra.mxu0 %v2416
    %5723 = vmatpush.msra.mxu0 %v2414
    %5724 = vmatpush.msra.mxu0 %v2412
    %5725 = vmatpush.msra.mxu0 %v2410
    %5726 = vmatpush.msra.mxu0 %v2408
    %5727 = vmatpush.msra.mxu0 %v2406
    %5728 = vmatmul.f32.gmra.mxu0 %v5523
    %v5729 = vpop.f32.mrf.mxu0
    %v5730 = vadd.f32 %v5710, %v5729
    %5731 = vdwg.mxu0
    %5732 = vmatpush.msra.mxu0 %v2468
    %5733 = vmatpush.msra.mxu0 %v2466
    %5734 = vmatpush.msra.mxu0 %v2464
    %5735 = vmatpush.msra.mxu0 %v2462
    %5736 = vmatpush.msra.mxu0 %v2460
    %5737 = vmatpush.msra.mxu0 %v2458
    %5738 = vmatpush.msra.mxu0 %v2456
    %5739 = vmatpush.msra.mxu0 %v2454
    %5740 = vmatpush.msra.mxu0 %v2452
    %5741 = vmatpush.msra.mxu0 %v2450
    %5742 = vmatpush.msra.mxu0 %v2448
    %5743 = vmatpush.msra.mxu0 %v2446
    %5744 = vmatpush.msra.mxu0 %v2444
    %5745 = vmatpush.msra.mxu0 %v2442
    %5746 = vmatpush.msra.mxu0 %v2440
    %5747 = vmatpush.msra.mxu0 %v2438
    %5748 = vmatmul.f32.gmra.mxu0 %v5524
    %v5749 = vpop.f32.mrf.mxu0
    %v5750 = vadd.f32 %v5730, %v5749
    %5751 = vdwg.mxu0
    %5752 = vmatpush.msra.mxu0 %v2500
    %5753 = vmatpush.msra.mxu0 %v2498
    %5754 = vmatpush.msra.mxu0 %v2496
    %5755 = vmatpush.msra.mxu0 %v2494
    %5756 = vmatpush.msra.mxu0 %v2492
    %5757 = vmatpush.msra.mxu0 %v2490
    %5758 = vmatpush.msra.mxu0 %v2488
    %5759 = vmatpush.msra.mxu0 %v2486
    %5760 = vmatpush.msra.mxu0 %v2484
    %5761 = vmatpush.msra.mxu0 %v2482
    %5762 = vmatpush.msra.mxu0 %v2480
    %5763 = vmatpush.msra.mxu0 %v2478
    %5764 = vmatpush.msra.mxu0 %v2476
    %5765 = vmatpush.msra.mxu0 %v2474
    %5766 = vmatpush.msra.mxu0 %v2472
    %5767 = vmatpush.msra.mxu0 %v2470
    %5768 = vmatmul.f32.gmra.mxu0 %v5525
    %v5769 = vpop.f32.mrf.mxu0
    %v5770 = vadd.f32 %v5750, %v5769
    %5771 = vdwg.mxu0
    %v5772 = vmax.f32 %v5650, 0.0
    %v5773 = vmax.f32 %v5770, 0.0
    %s5774 = scalar_lea.vmem %s3, 2304
    %v5775 = vld [vmem:[%s5774] sm:$0xff]
    %v5776 = vld [vmem:[%s5774 + $0x8] sm:$0xff]
    %v5777 = vld [vmem:[%s5774 + $0x10] sm:$0xff]
    %v5778 = vld [vmem:[%s5774 + $0x18] sm:$0xff]
    %v5779 = vld [vmem:[%s5774 + $0x20] sm:$0xff]
    %v5780 = vld [vmem:[%s5774 + $0x28] sm:$0xff]
    %v5781 = vld [vmem:[%s5774 + $0x30] sm:$0xff]
    %v5782 = vld [vmem:[%s5774 + $0x38] sm:$0xff]
    %v5783 = vld [vmem:[%s5774 + $0x40] sm:$0xff]
    %v5784 = vld [vmem:[%s5774 + $0x48] sm:$0xff]
    %v5785 = vld [vmem:[%s5774 + $0x50] sm:$0xff]
    %v5786 = vld [vmem:[%s5774 + $0x58] sm:$0xff]
    %v5787 = vld [vmem:[%s5774 + $0x60] sm:$0xff]
    %v5788 = vld [vmem:[%s5774 + $0x68] sm:$0xff]
    %v5789 = vld [vmem:[%s5774 + $0x70] sm:$0xff]
    %v5790 = vld [vmem:[%s5774 + $0x78] sm:$0xff]
    %v5791 = vld [vmem:[%s5774 + $0x80] sm:$0xff]
    %v5792 = vld [vmem:[%s5774 + $0x88] sm:$0xff]
    %v5793 = vld [vmem:[%s5774 + $0x90] sm:$0xff]
    %v5794 = vld [vmem:[%s5774 + $0x98] sm:$0xff]
    %v5795 = vld [vmem:[%s5774 + $0xa0] sm:$0xff]
    %v5796 = vld [vmem:[%s5774 + $0xa8] sm:$0xff]
    %v5797 = vld [vmem:[%s5774 + $0xb0] sm:$0xff]
    %v5798 = vld [vmem:[%s5774 + $0xb8] sm:$0xff]
    %v5799 = vld [vmem:[%s5774 + $0xc0] sm:$0xff]
    %v5800 = vld [vmem:[%s5774 + $0xc8] sm:$0xff]
    %v5801 = vld [vmem:[%s5774 + $0xd0] sm:$0xff]
    %v5802 = vld [vmem:[%s5774 + $0xd8] sm:$0xff]
    %v5803 = vld [vmem:[%s5774 + $0xe0] sm:$0xff]
    %v5804 = vld [vmem:[%s5774 + $0xe8] sm:$0xff]
    %v5805 = vld [vmem:[%s5774 + $0xf0] sm:$0xff]
    %v5806 = vld [vmem:[%s5774 + $0xf8] sm:$0xff]
    %5807 = vmatpush.msra.mxu0 %v5790
    %5808 = vmatpush.msra.mxu0 %v5789
    %5809 = vmatpush.msra.mxu0 %v5788
    %5810 = vmatpush.msra.mxu0 %v5787
    %5811 = vmatpush.msra.mxu0 %v5786
    %5812 = vmatpush.msra.mxu0 %v5785
    %5813 = vmatpush.msra.mxu0 %v5784
    %5814 = vmatpush.msra.mxu0 %v5783
    %5815 = vmatpush.msra.mxu0 %v5782
    %5816 = vmatpush.msra.mxu0 %v5781
    %5817 = vmatpush.msra.mxu0 %v5780
    %5818 = vmatpush.msra.mxu0 %v5779
    %5819 = vmatpush.msra.mxu0 %v5778
    %5820 = vmatpush.msra.mxu0 %v5777
    %5821 = vmatpush.msra.mxu0 %v5776
    %5822 = vmatpush.msra.mxu0 %v5775
    %5823 = vmatmul.f32.gmra.mxu0 %v5772
    %v5824 = vpop.f32.mrf.mxu0
    %v5825 = vadd.f32 0.0, %v5824
    %5826 = vdwg.mxu0
    %5827 = vmatpush.msra.mxu0 %v5806
    %5828 = vmatpush.msra.mxu0 %v5805
    %5829 = vmatpush.msra.mxu0 %v5804
    %5830 = vmatpush.msra.mxu0 %v5803
    %5831 = vmatpush.msra.mxu0 %v5802
    %5832 = vmatpush.msra.mxu0 %v5801
    %5833 = vmatpush.msra.mxu0 %v5800
    %5834 = vmatpush.msra.mxu0 %v5799
    %5835 = vmatpush.msra.mxu0 %v5798
    %5836 = vmatpush.msra.mxu0 %v5797
    %5837 = vmatpush.msra.mxu0 %v5796
    %5838 = vmatpush.msra.mxu0 %v5795
    %5839 = vmatpush.msra.mxu0 %v5794
    %5840 = vmatpush.msra.mxu0 %v5793
    %5841 = vmatpush.msra.mxu0 %v5792
    %5842 = vmatpush.msra.mxu0 %v5791
    %5843 = vmatmul.f32.gmra.mxu0 %v5773
    %v5844 = vpop.f32.mrf.mxu0
    %v5845 = vadd.f32 %v5825, %v5844
    %5846 = vdwg.mxu0
    %v5847 = vadd.f32 %v5512, %v5845
    %v5848 = vld [vmem:[#allocation2 + $0x28] sm:$0xff]
    %v5849 = vld [vmem:[#allocation2 + $0x30] sm:$0xf]
    %5852 = vst [vmem:[#allocation1] ss:$4 sm:$0xff] %v5848
    %s5853 = scalar_lea.vmem [#allocation1], 32
    %5854 = vst [vmem:[%s5853] ss:$4 sm:$0xff] %v5849
    %v5855 = vld.sshfl [vmem:[#allocation1] sm:$0xff pattern:$0x73625140]
    %v5856 = vld.sshfl [vmem:[#allocation1 + $0x8] sm:$0xff pattern:$0x73625140]
    %v5857 = vld.sshfl [vmem:[#allocation1 + $0x10] sm:$0xff pattern:$0x73625140]
    %v5858 = vld.sshfl [vmem:[#allocation1 + $0x18] sm:$0xff pattern:$0x73625140]
    %v5859 = vld.sshfl [vmem:[#allocation1 + $0x20] sm:$0xff pattern:$0x73625140]
    %v5860 = vld.sshfl [vmem:[#allocation1 + $0x28] sm:$0xff pattern:$0x73625140]
    %5867 = vmatpush.msra.mxu0 %v2339
    %5868 = vmatpush.msra.mxu0 %v2337
    %5869 = vmatpush.msra.mxu0 %v2335
    %5870 = vmatpush.msra.mxu0 %v2333
    %5871 = vmatpush.msra.mxu0 %v2331
    %5872 = vmatpush.msra.mxu0 %v2329
    %5873 = vmatpush.msra.mxu0 %v2327
    %5874 = vmatpush.msra.mxu0 %v2325
    %5875 = vmatpush.msra.mxu0 %v2323
    %5876 = vmatpush.msra.mxu0 %v2321
    %5877 = vmatpush.msra.mxu0 %v2319
    %5878 = vmatpush.msra.mxu0 %v2317
    %5879 = vmatpush.msra.mxu0 %v2315
    %5880 = vmatpush.msra.mxu0 %v2313
    %5881 = vmatpush.msra.mxu0 %v2311
    %5882 = vmatpush.msra.mxu0 %v2309
    %5883 = vmatmul.f32.gmra.mxu0 %v5855
    %v5884 = vpop.f32.mrf.mxu0
    %v5885 = vadd.f32 0.0, %v5884
    %5886 = vdwg.mxu0
    %5887 = vmatpush.msra.mxu0 %v2371
    %5888 = vmatpush.msra.mxu0 %v2369
    %5889 = vmatpush.msra.mxu0 %v2367
    %5890 = vmatpush.msra.mxu0 %v2365
    %5891 = vmatpush.msra.mxu0 %v2363
    %5892 = vmatpush.msra.mxu0 %v2361
    %5893 = vmatpush.msra.mxu0 %v2359
    %5894 = vmatpush.msra.mxu0 %v2357
    %5895 = vmatpush.msra.mxu0 %v2355
    %5896 = vmatpush.msra.mxu0 %v2353
    %5897 = vmatpush.msra.mxu0 %v2351
    %5898 = vmatpush.msra.mxu0 %v2349
    %5899 = vmatpush.msra.mxu0 %v2347
    %5900 = vmatpush.msra.mxu0 %v2345
    %5901 = vmatpush.msra.mxu0 %v2343
    %5902 = vmatpush.msra.mxu0 %v2341
    %5903 = vmatmul.f32.gmra.mxu0 %v5856
    %v5904 = vpop.f32.mrf.mxu0
    %v5905 = vadd.f32 %v5885, %v5904
    %5906 = vdwg.mxu0
    %5907 = vmatpush.msra.mxu0 %v2403
    %5908 = vmatpush.msra.mxu0 %v2401
    %5909 = vmatpush.msra.mxu0 %v2399
    %5910 = vmatpush.msra.mxu0 %v2397
    %5911 = vmatpush.msra.mxu0 %v2395
    %5912 = vmatpush.msra.mxu0 %v2393
    %5913 = vmatpush.msra.mxu0 %v2391
    %5914 = vmatpush.msra.mxu0 %v2389
    %5915 = vmatpush.msra.mxu0 %v2387
    %5916 = vmatpush.msra.mxu0 %v2385
    %5917 = vmatpush.msra.mxu0 %v2383
    %5918 = vmatpush.msra.mxu0 %v2381
    %5919 = vmatpush.msra.mxu0 %v2379
    %5920 = vmatpush.msra.mxu0 %v2377
    %5921 = vmatpush.msra.mxu0 %v2375
    %5922 = vmatpush.msra.mxu0 %v2373
    %5923 = vmatmul.f32.gmra.mxu0 %v5857
    %v5924 = vpop.f32.mrf.mxu0
    %v5925 = vadd.f32 %v5905, %v5924
    %5926 = vdwg.mxu0
    %5927 = vmatpush.msra.mxu0 %v2435
    %5928 = vmatpush.msra.mxu0 %v2433
    %5929 = vmatpush.msra.mxu0 %v2431
    %5930 = vmatpush.msra.mxu0 %v2429
    %5931 = vmatpush.msra.mxu0 %v2427
    %5932 = vmatpush.msra.mxu0 %v2425
    %5933 = vmatpush.msra.mxu0 %v2423
    %5934 = vmatpush.msra.mxu0 %v2421
    %5935 = vmatpush.msra.mxu0 %v2419
    %5936 = vmatpush.msra.mxu0 %v2417
    %5937 = vmatpush.msra.mxu0 %v2415
    %5938 = vmatpush.msra.mxu0 %v2413
    %5939 = vmatpush.msra.mxu0 %v2411
    %5940 = vmatpush.msra.mxu0 %v2409
    %5941 = vmatpush.msra.mxu0 %v2407
    %5942 = vmatpush.msra.mxu0 %v2405
    %5943 = vmatmul.f32.gmra.mxu0 %v5858
    %v5944 = vpop.f32.mrf.mxu0
    %v5945 = vadd.f32 %v5925, %v5944
    %5946 = vdwg.mxu0
    %5947 = vmatpush.msra.mxu0 %v2467
    %5948 = vmatpush.msra.mxu0 %v2465
    %5949 = vmatpush.msra.mxu0 %v2463
    %5950 = vmatpush.msra.mxu0 %v2461
    %5951 = vmatpush.msra.mxu0 %v2459
    %5952 = vmatpush.msra.mxu0 %v2457
    %5953 = vmatpush.msra.mxu0 %v2455
    %5954 = vmatpush.msra.mxu0 %v2453
    %5955 = vmatpush.msra.mxu0 %v2451
    %5956 = vmatpush.msra.mxu0 %v2449
    %5957 = vmatpush.msra.mxu0 %v2447
    %5958 = vmatpush.msra.mxu0 %v2445
    %5959 = vmatpush.msra.mxu0 %v2443
    %5960 = vmatpush.msra.mxu0 %v2441
    %5961 = vmatpush.msra.mxu0 %v2439
    %5962 = vmatpush.msra.mxu0 %v2437
    %5963 = vmatmul.f32.gmra.mxu0 %v5859
    %v5964 = vpop.f32.mrf.mxu0
    %v5965 = vadd.f32 %v5945, %v5964
    %5966 = vdwg.mxu0
    %5967 = vmatpush.msra.mxu0 %v2499
    %5968 = vmatpush.msra.mxu0 %v2497
    %5969 = vmatpush.msra.mxu0 %v2495
    %5970 = vmatpush.msra.mxu0 %v2493
    %5971 = vmatpush.msra.mxu0 %v2491
    %5972 = vmatpush.msra.mxu0 %v2489
    %5973 = vmatpush.msra.mxu0 %v2487
    %5974 = vmatpush.msra.mxu0 %v2485
    %5975 = vmatpush.msra.mxu0 %v2483
    %5976 = vmatpush.msra.mxu0 %v2481
    %5977 = vmatpush.msra.mxu0 %v2479
    %5978 = vmatpush.msra.mxu0 %v2477
    %5979 = vmatpush.msra.mxu0 %v2475
    %5980 = vmatpush.msra.mxu0 %v2473
    %5981 = vmatpush.msra.mxu0 %v2471
    %5982 = vmatpush.msra.mxu0 %v2469
    %5983 = vmatmul.f32.gmra.mxu0 %v5860
    %v5984 = vpop.f32.mrf.mxu0
    %v5985 = vadd.f32 %v5965, %v5984
    %5986 = vdwg.mxu0
    %5987 = vmatpush.msra.mxu0 %v2340
    %5988 = vmatpush.msra.mxu0 %v2338
    %5989 = vmatpush.msra.mxu0 %v2336
    %5990 = vmatpush.msra.mxu0 %v2334
    %5991 = vmatpush.msra.mxu0 %v2332
    %5992 = vmatpush.msra.mxu0 %v2330
    %5993 = vmatpush.msra.mxu0 %v2328
    %5994 = vmatpush.msra.mxu0 %v2326
    %5995 = vmatpush.msra.mxu0 %v2324
    %5996 = vmatpush.msra.mxu0 %v2322
    %5997 = vmatpush.msra.mxu0 %v2320
    %5998 = vmatpush.msra.mxu0 %v2318
    %5999 = vmatpush.msra.mxu0 %v2316
    %6000 = vmatpush.msra.mxu0 %v2314
    %6001 = vmatpush.msra.mxu0 %v2312
    %6002 = vmatpush.msra.mxu0 %v2310
    %6003 = vmatmul.f32.gmra.mxu0 %v5855
    %v6004 = vpop.f32.mrf.mxu0
    %v6005 = vadd.f32 0.0, %v6004
    %6006 = vdwg.mxu0
    %6007 = vmatpush.msra.mxu0 %v2372
    %6008 = vmatpush.msra.mxu0 %v2370
    %6009 = vmatpush.msra.mxu0 %v2368
    %6010 = vmatpush.msra.mxu0 %v2366
    %6011 = vmatpush.msra.mxu0 %v2364
    %6012 = vmatpush.msra.mxu0 %v2362
    %6013 = vmatpush.msra.mxu0 %v2360
    %6014 = vmatpush.msra.mxu0 %v2358
    %6015 = vmatpush.msra.mxu0 %v2356
    %6016 = vmatpush.msra.mxu0 %v2354
    %6017 = vmatpush.msra.mxu0 %v2352
    %6018 = vmatpush.msra.mxu0 %v2350
    %6019 = vmatpush.msra.mxu0 %v2348
    %6020 = vmatpush.msra.mxu0 %v2346
    %6021 = vmatpush.msra.mxu0 %v2344
    %6022 = vmatpush.msra.mxu0 %v2342
    %6023 = vmatmul.f32.gmra.mxu0 %v5856
    %v6024 = vpop.f32.mrf.mxu0
    %v6025 = vadd.f32 %v6005, %v6024
    %6026 = vdwg.mxu0
    %6027 = vmatpush.msra.mxu0 %v2404
    %6028 = vmatpush.msra.mxu0 %v2402
    %6029 = vmatpush.msra.mxu0 %v2400
    %6030 = vmatpush.msra.mxu0 %v2398
    %6031 = vmatpush.msra.mxu0 %v2396
    %6032 = vmatpush.msra.mxu0 %v2394
    %6033 = vmatpush.msra.mxu0 %v2392
    %6034 = vmatpush.msra.mxu0 %v2390
    %6035 = vmatpush.msra.mxu0 %v2388
    %6036 = vmatpush.msra.mxu0 %v2386
    %6037 = vmatpush.msra.mxu0 %v2384
    %6038 = vmatpush.msra.mxu0 %v2382
    %6039 = vmatpush.msra.mxu0 %v2380
    %6040 = vmatpush.msra.mxu0 %v2378
    %6041 = vmatpush.msra.mxu0 %v2376
    %6042 = vmatpush.msra.mxu0 %v2374
    %6043 = vmatmul.f32.gmra.mxu0 %v5857
    %v6044 = vpop.f32.mrf.mxu0
    %v6045 = vadd.f32 %v6025, %v6044
    %6046 = vdwg.mxu0
    %6047 = vmatpush.msra.mxu0 %v2436
    %6048 = vmatpush.msra.mxu0 %v2434
    %6049 = vmatpush.msra.mxu0 %v2432
    %6050 = vmatpush.msra.mxu0 %v2430
    %6051 = vmatpush.msra.mxu0 %v2428
    %6052 = vmatpush.msra.mxu0 %v2426
    %6053 = vmatpush.msra.mxu0 %v2424
    %6054 = vmatpush.msra.mxu0 %v2422
    %6055 = vmatpush.msra.mxu0 %v2420
    %6056 = vmatpush.msra.mxu0 %v2418
    %6057 = vmatpush.msra.mxu0 %v2416
    %6058 = vmatpush.msra.mxu0 %v2414
    %6059 = vmatpush.msra.mxu0 %v2412
    %6060 = vmatpush.msra.mxu0 %v2410
    %6061 = vmatpush.msra.mxu0 %v2408
    %6062 = vmatpush.msra.mxu0 %v2406
    %6063 = vmatmul.f32.gmra.mxu0 %v5858
    %v6064 = vpop.f32.mrf.mxu0
    %v6065 = vadd.f32 %v6045, %v6064
    %6066 = vdwg.mxu0
    %6067 = vmatpush.msra.mxu0 %v2468
    %6068 = vmatpush.msra.mxu0 %v2466
    %6069 = vmatpush.msra.mxu0 %v2464
    %6070 = vmatpush.msra.mxu0 %v2462
    %6071 = vmatpush.msra.mxu0 %v2460
    %6072 = vmatpush.msra.mxu0 %v2458
    %6073 = vmatpush.msra.mxu0 %v2456
    %6074 = vmatpush.msra.mxu0 %v2454
    %6075 = vmatpush.msra.mxu0 %v2452
    %6076 = vmatpush.msra.mxu0 %v2450
    %6077 = vmatpush.msra.mxu0 %v2448
    %6078 = vmatpush.msra.mxu0 %v2446
    %6079 = vmatpush.msra.mxu0 %v2444
    %6080 = vmatpush.msra.mxu0 %v2442
    %6081 = vmatpush.msra.mxu0 %v2440
    %6082 = vmatpush.msra.mxu0 %v2438
    %6083 = vmatmul.f32.gmra.mxu0 %v5859
    %v6084 = vpop.f32.mrf.mxu0
    %v6085 = vadd.f32 %v6065, %v6084
    %6086 = vdwg.mxu0
    %6087 = vmatpush.msra.mxu0 %v2500
    %6088 = vmatpush.msra.mxu0 %v2498
    %6089 = vmatpush.msra.mxu0 %v2496
    %6090 = vmatpush.msra.mxu0 %v2494
    %6091 = vmatpush.msra.mxu0 %v2492
    %6092 = vmatpush.msra.mxu0 %v2490
    %6093 = vmatpush.msra.mxu0 %v2488
    %6094 = vmatpush.msra.mxu0 %v2486
    %6095 = vmatpush.msra.mxu0 %v2484
    %6096 = vmatpush.msra.mxu0 %v2482
    %6097 = vmatpush.msra.mxu0 %v2480
    %6098 = vmatpush.msra.mxu0 %v2478
    %6099 = vmatpush.msra.mxu0 %v2476
    %6100 = vmatpush.msra.mxu0 %v2474
    %6101 = vmatpush.msra.mxu0 %v2472
    %6102 = vmatpush.msra.mxu0 %v2470
    %6103 = vmatmul.f32.gmra.mxu0 %v5860
    %v6104 = vpop.f32.mrf.mxu0
    %v6105 = vadd.f32 %v6085, %v6104
    %6106 = vdwg.mxu0
    %v6107 = vmax.f32 %v5985, 0.0
    %v6108 = vmax.f32 %v6105, 0.0
    %s6109 = scalar_lea.vmem %s3, 2560
    %v6110 = vld [vmem:[%s6109] sm:$0xff]
    %v6111 = vld [vmem:[%s6109 + $0x8] sm:$0xff]
    %v6112 = vld [vmem:[%s6109 + $0x10] sm:$0xff]
    %v6113 = vld [vmem:[%s6109 + $0x18] sm:$0xff]
    %v6114 = vld [vmem:[%s6109 + $0x20] sm:$0xff]
    %v6115 = vld [vmem:[%s6109 + $0x28] sm:$0xff]
    %v6116 = vld [vmem:[%s6109 + $0x30] sm:$0xff]
    %v6117 = vld [vmem:[%s6109 + $0x38] sm:$0xff]
    %v6118 = vld [vmem:[%s6109 + $0x40] sm:$0xff]
    %v6119 = vld [vmem:[%s6109 + $0x48] sm:$0xff]
    %v6120 = vld [vmem:[%s6109 + $0x50] sm:$0xff]
    %v6121 = vld [vmem:[%s6109 + $0x58] sm:$0xff]
    %v6122 = vld [vmem:[%s6109 + $0x60] sm:$0xff]
    %v6123 = vld [vmem:[%s6109 + $0x68] sm:$0xff]
    %v6124 = vld [vmem:[%s6109 + $0x70] sm:$0xff]
    %v6125 = vld [vmem:[%s6109 + $0x78] sm:$0xff]
    %v6126 = vld [vmem:[%s6109 + $0x80] sm:$0xff]
    %v6127 = vld [vmem:[%s6109 + $0x88] sm:$0xff]
    %v6128 = vld [vmem:[%s6109 + $0x90] sm:$0xff]
    %v6129 = vld [vmem:[%s6109 + $0x98] sm:$0xff]
    %v6130 = vld [vmem:[%s6109 + $0xa0] sm:$0xff]
    %v6131 = vld [vmem:[%s6109 + $0xa8] sm:$0xff]
    %v6132 = vld [vmem:[%s6109 + $0xb0] sm:$0xff]
    %v6133 = vld [vmem:[%s6109 + $0xb8] sm:$0xff]
    %v6134 = vld [vmem:[%s6109 + $0xc0] sm:$0xff]
    %v6135 = vld [vmem:[%s6109 + $0xc8] sm:$0xff]
    %v6136 = vld [vmem:[%s6109 + $0xd0] sm:$0xff]
    %v6137 = vld [vmem:[%s6109 + $0xd8] sm:$0xff]
    %v6138 = vld [vmem:[%s6109 + $0xe0] sm:$0xff]
    %v6139 = vld [vmem:[%s6109 + $0xe8] sm:$0xff]
    %v6140 = vld [vmem:[%s6109 + $0xf0] sm:$0xff]
    %v6141 = vld [vmem:[%s6109 + $0xf8] sm:$0xff]
    %6142 = vmatpush.msra.mxu0 %v6125
    %6143 = vmatpush.msra.mxu0 %v6124
    %6144 = vmatpush.msra.mxu0 %v6123
    %6145 = vmatpush.msra.mxu0 %v6122
    %6146 = vmatpush.msra.mxu0 %v6121
    %6147 = vmatpush.msra.mxu0 %v6120
    %6148 = vmatpush.msra.mxu0 %v6119
    %6149 = vmatpush.msra.mxu0 %v6118
    %6150 = vmatpush.msra.mxu0 %v6117
    %6151 = vmatpush.msra.mxu0 %v6116
    %6152 = vmatpush.msra.mxu0 %v6115
    %6153 = vmatpush.msra.mxu0 %v6114
    %6154 = vmatpush.msra.mxu0 %v6113
    %6155 = vmatpush.msra.mxu0 %v6112
    %6156 = vmatpush.msra.mxu0 %v6111
    %6157 = vmatpush.msra.mxu0 %v6110
    %6158 = vmatmul.f32.gmra.mxu0 %v6107
    %v6159 = vpop.f32.mrf.mxu0
    %v6160 = vadd.f32 0.0, %v6159
    %6161 = vdwg.mxu0
    %6162 = vmatpush.msra.mxu0 %v6141
    %6163 = vmatpush.msra.mxu0 %v6140
    %6164 = vmatpush.msra.mxu0 %v6139
    %6165 = vmatpush.msra.mxu0 %v6138
    %6166 = vmatpush.msra.mxu0 %v6137
    %6167 = vmatpush.msra.mxu0 %v6136
    %6168 = vmatpush.msra.mxu0 %v6135
    %6169 = vmatpush.msra.mxu0 %v6134
    %6170 = vmatpush.msra.mxu0 %v6133
    %6171 = vmatpush.msra.mxu0 %v6132
    %6172 = vmatpush.msra.mxu0 %v6131
    %6173 = vmatpush.msra.mxu0 %v6130
    %6174 = vmatpush.msra.mxu0 %v6129
    %6175 = vmatpush.msra.mxu0 %v6128
    %6176 = vmatpush.msra.mxu0 %v6127
    %6177 = vmatpush.msra.mxu0 %v6126
    %6178 = vmatmul.f32.gmra.mxu0 %v6108
    %v6179 = vpop.f32.mrf.mxu0
    %v6180 = vadd.f32 %v6160, %v6179
    %6181 = vdwg.mxu0
    %v6182 = vadd.f32 %v5847, %v6180
    %v6183 = vld [vmem:[#allocation2 + $0x2c] sm:$0xff]
    %v6184 = vld [vmem:[#allocation2 + $0x34] sm:$0xf]
    %6187 = vst [vmem:[#allocation1] ss:$4 sm:$0xff] %v6183
    %s6188 = scalar_lea.vmem [#allocation1], 32
    %6189 = vst [vmem:[%s6188] ss:$4 sm:$0xff] %v6184
    %v6190 = vld.sshfl [vmem:[#allocation1] sm:$0xff pattern:$0x73625140]
    %v6191 = vld.sshfl [vmem:[#allocation1 + $0x8] sm:$0xff pattern:$0x73625140]
    %v6192 = vld.sshfl [vmem:[#allocation1 + $0x10] sm:$0xff pattern:$0x73625140]
    %v6193 = vld.sshfl [vmem:[#allocation1 + $0x18] sm:$0xff pattern:$0x73625140]
    %v6194 = vld.sshfl [vmem:[#allocation1 + $0x20] sm:$0xff pattern:$0x73625140]
    %v6195 = vld.sshfl [vmem:[#allocation1 + $0x28] sm:$0xff pattern:$0x73625140]
    %6202 = vmatpush.msra.mxu0 %v2339
    %6203 = vmatpush.msra.mxu0 %v2337
    %6204 = vmatpush.msra.mxu0 %v2335
    %6205 = vmatpush.msra.mxu0 %v2333
    %6206 = vmatpush.msra.mxu0 %v2331
    %6207 = vmatpush.msra.mxu0 %v2329
    %6208 = vmatpush.msra.mxu0 %v2327
    %6209 = vmatpush.msra.mxu0 %v2325
    %6210 = vmatpush.msra.mxu0 %v2323
    %6211 = vmatpush.msra.mxu0 %v2321
    %6212 = vmatpush.msra.mxu0 %v2319
    %6213 = vmatpush.msra.mxu0 %v2317
    %6214 = vmatpush.msra.mxu0 %v2315
    %6215 = vmatpush.msra.mxu0 %v2313
    %6216 = vmatpush.msra.mxu0 %v2311
    %6217 = vmatpush.msra.mxu0 %v2309
    %6218 = vmatmul.f32.gmra.mxu0 %v6190
    %v6219 = vpop.f32.mrf.mxu0
    %v6220 = vadd.f32 0.0, %v6219
    %6221 = vdwg.mxu0
    %6222 = vmatpush.msra.mxu0 %v2371
    %6223 = vmatpush.msra.mxu0 %v2369
    %6224 = vmatpush.msra.mxu0 %v2367
    %6225 = vmatpush.msra.mxu0 %v2365
    %6226 = vmatpush.msra.mxu0 %v2363
    %6227 = vmatpush.msra.mxu0 %v2361
    %6228 = vmatpush.msra.mxu0 %v2359
    %6229 = vmatpush.msra.mxu0 %v2357
    %6230 = vmatpush.msra.mxu0 %v2355
    %6231 = vmatpush.msra.mxu0 %v2353
    %6232 = vmatpush.msra.mxu0 %v2351
    %6233 = vmatpush.msra.mxu0 %v2349
    %6234 = vmatpush.msra.mxu0 %v2347
    %6235 = vmatpush.msra.mxu0 %v2345
    %6236 = vmatpush.msra.mxu0 %v2343
    %6237 = vmatpush.msra.mxu0 %v2341
    %6238 = vmatmul.f32.gmra.mxu0 %v6191
    %v6239 = vpop.f32.mrf.mxu0
    %v6240 = vadd.f32 %v6220, %v6239
    %6241 = vdwg.mxu0
    %6242 = vmatpush.msra.mxu0 %v2403
    %6243 = vmatpush.msra.mxu0 %v2401
    %6244 = vmatpush.msra.mxu0 %v2399
    %6245 = vmatpush.msra.mxu0 %v2397
    %6246 = vmatpush.msra.mxu0 %v2395
    %6247 = vmatpush.msra.mxu0 %v2393
    %6248 = vmatpush.msra.mxu0 %v2391
    %6249 = vmatpush.msra.mxu0 %v2389
    %6250 = vmatpush.msra.mxu0 %v2387
    %6251 = vmatpush.msra.mxu0 %v2385
    %6252 = vmatpush.msra.mxu0 %v2383
    %6253 = vmatpush.msra.mxu0 %v2381
    %6254 = vmatpush.msra.mxu0 %v2379
    %6255 = vmatpush.msra.mxu0 %v2377
    %6256 = vmatpush.msra.mxu0 %v2375
    %6257 = vmatpush.msra.mxu0 %v2373
    %6258 = vmatmul.f32.gmra.mxu0 %v6192
    %v6259 = vpop.f32.mrf.mxu0
    %v6260 = vadd.f32 %v6240, %v6259
    %6261 = vdwg.mxu0
    %6262 = vmatpush.msra.mxu0 %v2435
    %6263 = vmatpush.msra.mxu0 %v2433
    %6264 = vmatpush.msra.mxu0 %v2431
    %6265 = vmatpush.msra.mxu0 %v2429
    %6266 = vmatpush.msra.mxu0 %v2427
    %6267 = vmatpush.msra.mxu0 %v2425
    %6268 = vmatpush.msra.mxu0 %v2423
    %6269 = vmatpush.msra.mxu0 %v2421
    %6270 = vmatpush.msra.mxu0 %v2419
    %6271 = vmatpush.msra.mxu0 %v2417
    %6272 = vmatpush.msra.mxu0 %v2415
    %6273 = vmatpush.msra.mxu0 %v2413
    %6274 = vmatpush.msra.mxu0 %v2411
    %6275 = vmatpush.msra.mxu0 %v2409
    %6276 = vmatpush.msra.mxu0 %v2407
    %6277 = vmatpush.msra.mxu0 %v2405
    %6278 = vmatmul.f32.gmra.mxu0 %v6193
    %v6279 = vpop.f32.mrf.mxu0
    %v6280 = vadd.f32 %v6260, %v6279
    %6281 = vdwg.mxu0
    %6282 = vmatpush.msra.mxu0 %v2467
    %6283 = vmatpush.msra.mxu0 %v2465
    %6284 = vmatpush.msra.mxu0 %v2463
    %6285 = vmatpush.msra.mxu0 %v2461
    %6286 = vmatpush.msra.mxu0 %v2459
    %6287 = vmatpush.msra.mxu0 %v2457
    %6288 = vmatpush.msra.mxu0 %v2455
    %6289 = vmatpush.msra.mxu0 %v2453
    %6290 = vmatpush.msra.mxu0 %v2451
    %6291 = vmatpush.msra.mxu0 %v2449
    %6292 = vmatpush.msra.mxu0 %v2447
    %6293 = vmatpush.msra.mxu0 %v2445
    %6294 = vmatpush.msra.mxu0 %v2443
    %6295 = vmatpush.msra.mxu0 %v2441
    %6296 = vmatpush.msra.mxu0 %v2439
    %6297 = vmatpush.msra.mxu0 %v2437
    %6298 = vmatmul.f32.gmra.mxu0 %v6194
    %v6299 = vpop.f32.mrf.mxu0
    %v6300 = vadd.f32 %v6280, %v6299
    %6301 = vdwg.mxu0
    %6302 = vmatpush.msra.mxu0 %v2499
    %6303 = vmatpush.msra.mxu0 %v2497
    %6304 = vmatpush.msra.mxu0 %v2495
    %6305 = vmatpush.msra.mxu0 %v2493
    %6306 = vmatpush.msra.mxu0 %v2491
    %6307 = vmatpush.msra.mxu0 %v2489
    %6308 = vmatpush.msra.mxu0 %v2487
    %6309 = vmatpush.msra.mxu0 %v2485
    %6310 = vmatpush.msra.mxu0 %v2483
    %6311 = vmatpush.msra.mxu0 %v2481
    %6312 = vmatpush.msra.mxu0 %v2479
    %6313 = vmatpush.msra.mxu0 %v2477
    %6314 = vmatpush.msra.mxu0 %v2475
    %6315 = vmatpush.msra.mxu0 %v2473
    %6316 = vmatpush.msra.mxu0 %v2471
    %6317 = vmatpush.msra.mxu0 %v2469
    %6318 = vmatmul.f32.gmra.mxu0 %v6195
    %v6319 = vpop.f32.mrf.mxu0
    %v6320 = vadd.f32 %v6300, %v6319
    %6321 = vdwg.mxu0
    %6322 = vmatpush.msra.mxu0 %v2340
    %6323 = vmatpush.msra.mxu0 %v2338
    %6324 = vmatpush.msra.mxu0 %v2336
    %6325 = vmatpush.msra.mxu0 %v2334
    %6326 = vmatpush.msra.mxu0 %v2332
    %6327 = vmatpush.msra.mxu0 %v2330
    %6328 = vmatpush.msra.mxu0 %v2328
    %6329 = vmatpush.msra.mxu0 %v2326
    %6330 = vmatpush.msra.mxu0 %v2324
    %6331 = vmatpush.msra.mxu0 %v2322
    %6332 = vmatpush.msra.mxu0 %v2320
    %6333 = vmatpush.msra.mxu0 %v2318
    %6334 = vmatpush.msra.mxu0 %v2316
    %6335 = vmatpush.msra.mxu0 %v2314
    %6336 = vmatpush.msra.mxu0 %v2312
    %6337 = vmatpush.msra.mxu0 %v2310
    %6338 = vmatmul.f32.gmra.mxu0 %v6190
    %v6339 = vpop.f32.mrf.mxu0
    %v6340 = vadd.f32 0.0, %v6339
    %6341 = vdwg.mxu0
    %6342 = vmatpush.msra.mxu0 %v2372
    %6343 = vmatpush.msra.mxu0 %v2370
    %6344 = vmatpush.msra.mxu0 %v2368
    %6345 = vmatpush.msra.mxu0 %v2366
    %6346 = vmatpush.msra.mxu0 %v2364
    %6347 = vmatpush.msra.mxu0 %v2362
    %6348 = vmatpush.msra.mxu0 %v2360
    %6349 = vmatpush.msra.mxu0 %v2358
    %6350 = vmatpush.msra.mxu0 %v2356
    %6351 = vmatpush.msra.mxu0 %v2354
    %6352 = vmatpush.msra.mxu0 %v2352
    %6353 = vmatpush.msra.mxu0 %v2350
    %6354 = vmatpush.msra.mxu0 %v2348
    %6355 = vmatpush.msra.mxu0 %v2346
    %6356 = vmatpush.msra.mxu0 %v2344
    %6357 = vmatpush.msra.mxu0 %v2342
    %6358 = vmatmul.f32.gmra.mxu0 %v6191
    %v6359 = vpop.f32.mrf.mxu0
    %v6360 = vadd.f32 %v6340, %v6359
    %6361 = vdwg.mxu0
    %6362 = vmatpush.msra.mxu0 %v2404
    %6363 = vmatpush.msra.mxu0 %v2402
    %6364 = vmatpush.msra.mxu0 %v2400
    %6365 = vmatpush.msra.mxu0 %v2398
    %6366 = vmatpush.msra.mxu0 %v2396
    %6367 = vmatpush.msra.mxu0 %v2394
    %6368 = vmatpush.msra.mxu0 %v2392
    %6369 = vmatpush.msra.mxu0 %v2390
    %6370 = vmatpush.msra.mxu0 %v2388
    %6371 = vmatpush.msra.mxu0 %v2386
    %6372 = vmatpush.msra.mxu0 %v2384
    %6373 = vmatpush.msra.mxu0 %v2382
    %6374 = vmatpush.msra.mxu0 %v2380
    %6375 = vmatpush.msra.mxu0 %v2378
    %6376 = vmatpush.msra.mxu0 %v2376
    %6377 = vmatpush.msra.mxu0 %v2374
    %6378 = vmatmul.f32.gmra.mxu0 %v6192
    %v6379 = vpop.f32.mrf.mxu0
    %v6380 = vadd.f32 %v6360, %v6379
    %6381 = vdwg.mxu0
    %6382 = vmatpush.msra.mxu0 %v2436
    %6383 = vmatpush.msra.mxu0 %v2434
    %6384 = vmatpush.msra.mxu0 %v2432
    %6385 = vmatpush.msra.mxu0 %v2430
    %6386 = vmatpush.msra.mxu0 %v2428
    %6387 = vmatpush.msra.mxu0 %v2426
    %6388 = vmatpush.msra.mxu0 %v2424
    %6389 = vmatpush.msra.mxu0 %v2422
    %6390 = vmatpush.msra.mxu0 %v2420
    %6391 = vmatpush.msra.mxu0 %v2418
    %6392 = vmatpush.msra.mxu0 %v2416
    %6393 = vmatpush.msra.mxu0 %v2414
    %6394 = vmatpush.msra.mxu0 %v2412
    %6395 = vmatpush.msra.mxu0 %v2410
    %6396 = vmatpush.msra.mxu0 %v2408
    %6397 = vmatpush.msra.mxu0 %v2406
    %6398 = vmatmul.f32.gmra.mxu0 %v6193
    %v6399 = vpop.f32.mrf.mxu0
    %v6400 = vadd.f32 %v6380, %v6399
    %6401 = vdwg.mxu0
    %6402 = vmatpush.msra.mxu0 %v2468
    %6403 = vmatpush.msra.mxu0 %v2466
    %6404 = vmatpush.msra.mxu0 %v2464
    %6405 = vmatpush.msra.mxu0 %v2462
    %6406 = vmatpush.msra.mxu0 %v2460
    %6407 = vmatpush.msra.mxu0 %v2458
    %6408 = vmatpush.msra.mxu0 %v2456
    %6409 = vmatpush.msra.mxu0 %v2454
    %6410 = vmatpush.msra.mxu0 %v2452
    %6411 = vmatpush.msra.mxu0 %v2450
    %6412 = vmatpush.msra.mxu0 %v2448
    %6413 = vmatpush.msra.mxu0 %v2446
    %6414 = vmatpush.msra.mxu0 %v2444
    %6415 = vmatpush.msra.mxu0 %v2442
    %6416 = vmatpush.msra.mxu0 %v2440
    %6417 = vmatpush.msra.mxu0 %v2438
    %6418 = vmatmul.f32.gmra.mxu0 %v6194
    %v6419 = vpop.f32.mrf.mxu0
    %v6420 = vadd.f32 %v6400, %v6419
    %6421 = vdwg.mxu0
    %6422 = vmatpush.msra.mxu0 %v2500
    %6423 = vmatpush.msra.mxu0 %v2498
    %6424 = vmatpush.msra.mxu0 %v2496
    %6425 = vmatpush.msra.mxu0 %v2494
    %6426 = vmatpush.msra.mxu0 %v2492
    %6427 = vmatpush.msra.mxu0 %v2490
    %6428 = vmatpush.msra.mxu0 %v2488
    %6429 = vmatpush.msra.mxu0 %v2486
    %6430 = vmatpush.msra.mxu0 %v2484
    %6431 = vmatpush.msra.mxu0 %v2482
    %6432 = vmatpush.msra.mxu0 %v2480
    %6433 = vmatpush.msra.mxu0 %v2478
    %6434 = vmatpush.msra.mxu0 %v2476
    %6435 = vmatpush.msra.mxu0 %v2474
    %6436 = vmatpush.msra.mxu0 %v2472
    %6437 = vmatpush.msra.mxu0 %v2470
    %6438 = vmatmul.f32.gmra.mxu0 %v6195
    %v6439 = vpop.f32.mrf.mxu0
    %v6440 = vadd.f32 %v6420, %v6439
    %6441 = vdwg.mxu0
    %v6442 = vmax.f32 %v6320, 0.0
    %v6443 = vmax.f32 %v6440, 0.0
    %s6444 = scalar_lea.vmem %s3, 2816
    %v6445 = vld [vmem:[%s6444] sm:$0xff]
    %v6446 = vld [vmem:[%s6444 + $0x8] sm:$0xff]
    %v6447 = vld [vmem:[%s6444 + $0x10] sm:$0xff]
    %v6448 = vld [vmem:[%s6444 + $0x18] sm:$0xff]
    %v6449 = vld [vmem:[%s6444 + $0x20] sm:$0xff]
    %v6450 = vld [vmem:[%s6444 + $0x28] sm:$0xff]
    %v6451 = vld [vmem:[%s6444 + $0x30] sm:$0xff]
    %v6452 = vld [vmem:[%s6444 + $0x38] sm:$0xff]
    %v6453 = vld [vmem:[%s6444 + $0x40] sm:$0xff]
    %v6454 = vld [vmem:[%s6444 + $0x48] sm:$0xff]
    %v6455 = vld [vmem:[%s6444 + $0x50] sm:$0xff]
    %v6456 = vld [vmem:[%s6444 + $0x58] sm:$0xff]
    %v6457 = vld [vmem:[%s6444 + $0x60] sm:$0xff]
    %v6458 = vld [vmem:[%s6444 + $0x68] sm:$0xff]
    %v6459 = vld [vmem:[%s6444 + $0x70] sm:$0xff]
    %v6460 = vld [vmem:[%s6444 + $0x78] sm:$0xff]
    %v6461 = vld [vmem:[%s6444 + $0x80] sm:$0xff]
    %v6462 = vld [vmem:[%s6444 + $0x88] sm:$0xff]
    %v6463 = vld [vmem:[%s6444 + $0x90] sm:$0xff]
    %v6464 = vld [vmem:[%s6444 + $0x98] sm:$0xff]
    %v6465 = vld [vmem:[%s6444 + $0xa0] sm:$0xff]
    %v6466 = vld [vmem:[%s6444 + $0xa8] sm:$0xff]
    %v6467 = vld [vmem:[%s6444 + $0xb0] sm:$0xff]
    %v6468 = vld [vmem:[%s6444 + $0xb8] sm:$0xff]
    %v6469 = vld [vmem:[%s6444 + $0xc0] sm:$0xff]
    %v6470 = vld [vmem:[%s6444 + $0xc8] sm:$0xff]
    %v6471 = vld [vmem:[%s6444 + $0xd0] sm:$0xff]
    %v6472 = vld [vmem:[%s6444 + $0xd8] sm:$0xff]
    %v6473 = vld [vmem:[%s6444 + $0xe0] sm:$0xff]
    %v6474 = vld [vmem:[%s6444 + $0xe8] sm:$0xff]
    %v6475 = vld [vmem:[%s6444 + $0xf0] sm:$0xff]
    %v6476 = vld [vmem:[%s6444 + $0xf8] sm:$0xff]
    %6477 = vmatpush.msra.mxu0 %v6460
    %6478 = vmatpush.msra.mxu0 %v6459
    %6479 = vmatpush.msra.mxu0 %v6458
    %6480 = vmatpush.msra.mxu0 %v6457
    %6481 = vmatpush.msra.mxu0 %v6456
    %6482 = vmatpush.msra.mxu0 %v6455
    %6483 = vmatpush.msra.mxu0 %v6454
    %6484 = vmatpush.msra.mxu0 %v6453
    %6485 = vmatpush.msra.mxu0 %v6452
    %6486 = vmatpush.msra.mxu0 %v6451
    %6487 = vmatpush.msra.mxu0 %v6450
    %6488 = vmatpush.msra.mxu0 %v6449
    %6489 = vmatpush.msra.mxu0 %v6448
    %6490 = vmatpush.msra.mxu0 %v6447
    %6491 = vmatpush.msra.mxu0 %v6446
    %6492 = vmatpush.msra.mxu0 %v6445
    %6493 = vmatmul.f32.gmra.mxu0 %v6442
    %v6494 = vpop.f32.mrf.mxu0
    %v6495 = vadd.f32 0.0, %v6494
    %6496 = vdwg.mxu0
    %6497 = vmatpush.msra.mxu0 %v6476
    %6498 = vmatpush.msra.mxu0 %v6475
    %6499 = vmatpush.msra.mxu0 %v6474
    %6500 = vmatpush.msra.mxu0 %v6473
    %6501 = vmatpush.msra.mxu0 %v6472
    %6502 = vmatpush.msra.mxu0 %v6471
    %6503 = vmatpush.msra.mxu0 %v6470
    %6504 = vmatpush.msra.mxu0 %v6469
    %6505 = vmatpush.msra.mxu0 %v6468
    %6506 = vmatpush.msra.mxu0 %v6467
    %6507 = vmatpush.msra.mxu0 %v6466
    %6508 = vmatpush.msra.mxu0 %v6465
    %6509 = vmatpush.msra.mxu0 %v6464
    %6510 = vmatpush.msra.mxu0 %v6463
    %6511 = vmatpush.msra.mxu0 %v6462
    %6512 = vmatpush.msra.mxu0 %v6461
    %6513 = vmatmul.f32.gmra.mxu0 %v6443
    %v6514 = vpop.f32.mrf.mxu0
    %v6515 = vadd.f32 %v6495, %v6514
    %6516 = vdwg.mxu0
    %v6517 = vadd.f32 %v6182, %v6515
    %v6518 = vld [vmem:[#allocation2 + $0x30] sm:$0xff]
    %v6519 = vld [vmem:[#allocation2 + $0x38] sm:$0xf]
    %6522 = vst [vmem:[#allocation1] ss:$4 sm:$0xff] %v6518
    %s6523 = scalar_lea.vmem [#allocation1], 32
    %6524 = vst [vmem:[%s6523] ss:$4 sm:$0xff] %v6519
    %v6525 = vld.sshfl [vmem:[#allocation1] sm:$0xff pattern:$0x73625140]
    %v6526 = vld.sshfl [vmem:[#allocation1 + $0x8] sm:$0xff pattern:$0x73625140]
    %v6527 = vld.sshfl [vmem:[#allocation1 + $0x10] sm:$0xff pattern:$0x73625140]
    %v6528 = vld.sshfl [vmem:[#allocation1 + $0x18] sm:$0xff pattern:$0x73625140]
    %v6529 = vld.sshfl [vmem:[#allocation1 + $0x20] sm:$0xff pattern:$0x73625140]
    %v6530 = vld.sshfl [vmem:[#allocation1 + $0x28] sm:$0xff pattern:$0x73625140]
    %6537 = vmatpush.msra.mxu0 %v2339
    %6538 = vmatpush.msra.mxu0 %v2337
    %6539 = vmatpush.msra.mxu0 %v2335
    %6540 = vmatpush.msra.mxu0 %v2333
    %6541 = vmatpush.msra.mxu0 %v2331
    %6542 = vmatpush.msra.mxu0 %v2329
    %6543 = vmatpush.msra.mxu0 %v2327
    %6544 = vmatpush.msra.mxu0 %v2325
    %6545 = vmatpush.msra.mxu0 %v2323
    %6546 = vmatpush.msra.mxu0 %v2321
    %6547 = vmatpush.msra.mxu0 %v2319
    %6548 = vmatpush.msra.mxu0 %v2317
    %6549 = vmatpush.msra.mxu0 %v2315
    %6550 = vmatpush.msra.mxu0 %v2313
    %6551 = vmatpush.msra.mxu0 %v2311
    %6552 = vmatpush.msra.mxu0 %v2309
    %6553 = vmatmul.f32.gmra.mxu0 %v6525
    %v6554 = vpop.f32.mrf.mxu0
    %v6555 = vadd.f32 0.0, %v6554
    %6556 = vdwg.mxu0
    %6557 = vmatpush.msra.mxu0 %v2371
    %6558 = vmatpush.msra.mxu0 %v2369
    %6559 = vmatpush.msra.mxu0 %v2367
    %6560 = vmatpush.msra.mxu0 %v2365
    %6561 = vmatpush.msra.mxu0 %v2363
    %6562 = vmatpush.msra.mxu0 %v2361
    %6563 = vmatpush.msra.mxu0 %v2359
    %6564 = vmatpush.msra.mxu0 %v2357
    %6565 = vmatpush.msra.mxu0 %v2355
    %6566 = vmatpush.msra.mxu0 %v2353
    %6567 = vmatpush.msra.mxu0 %v2351
    %6568 = vmatpush.msra.mxu0 %v2349
    %6569 = vmatpush.msra.mxu0 %v2347
    %6570 = vmatpush.msra.mxu0 %v2345
    %6571 = vmatpush.msra.mxu0 %v2343
    %6572 = vmatpush.msra.mxu0 %v2341
    %6573 = vmatmul.f32.gmra.mxu0 %v6526
    %v6574 = vpop.f32.mrf.mxu0
    %v6575 = vadd.f32 %v6555, %v6574
    %6576 = vdwg.mxu0
    %6577 = vmatpush.msra.mxu0 %v2403
    %6578 = vmatpush.msra.mxu0 %v2401
    %6579 = vmatpush.msra.mxu0 %v2399
    %6580 = vmatpush.msra.mxu0 %v2397
    %6581 = vmatpush.msra.mxu0 %v2395
    %6582 = vmatpush.msra.mxu0 %v2393
    %6583 = vmatpush.msra.mxu0 %v2391
    %6584 = vmatpush.msra.mxu0 %v2389
    %6585 = vmatpush.msra.mxu0 %v2387
    %6586 = vmatpush.msra.mxu0 %v2385
    %6587 = vmatpush.msra.mxu0 %v2383
    %6588 = vmatpush.msra.mxu0 %v2381
    %6589 = vmatpush.msra.mxu0 %v2379
    %6590 = vmatpush.msra.mxu0 %v2377
    %6591 = vmatpush.msra.mxu0 %v2375
    %6592 = vmatpush.msra.mxu0 %v2373
    %6593 = vmatmul.f32.gmra.mxu0 %v6527
    %v6594 = vpop.f32.mrf.mxu0
    %v6595 = vadd.f32 %v6575, %v6594
    %6596 = vdwg.mxu0
    %6597 = vmatpush.msra.mxu0 %v2435
    %6598 = vmatpush.msra.mxu0 %v2433
    %6599 = vmatpush.msra.mxu0 %v2431
    %6600 = vmatpush.msra.mxu0 %v2429
    %6601 = vmatpush.msra.mxu0 %v2427
    %6602 = vmatpush.msra.mxu0 %v2425
    %6603 = vmatpush.msra.mxu0 %v2423
    %6604 = vmatpush.msra.mxu0 %v2421
    %6605 = vmatpush.msra.mxu0 %v2419
    %6606 = vmatpush.msra.mxu0 %v2417
    %6607 = vmatpush.msra.mxu0 %v2415
    %6608 = vmatpush.msra.mxu0 %v2413
    %6609 = vmatpush.msra.mxu0 %v2411
    %6610 = vmatpush.msra.mxu0 %v2409
    %6611 = vmatpush.msra.mxu0 %v2407
    %6612 = vmatpush.msra.mxu0 %v2405
    %6613 = vmatmul.f32.gmra.mxu0 %v6528
    %v6614 = vpop.f32.mrf.mxu0
    %v6615 = vadd.f32 %v6595, %v6614
    %6616 = vdwg.mxu0
    %6617 = vmatpush.msra.mxu0 %v2467
    %6618 = vmatpush.msra.mxu0 %v2465
    %6619 = vmatpush.msra.mxu0 %v2463
    %6620 = vmatpush.msra.mxu0 %v2461
    %6621 = vmatpush.msra.mxu0 %v2459
    %6622 = vmatpush.msra.mxu0 %v2457
    %6623 = vmatpush.msra.mxu0 %v2455
    %6624 = vmatpush.msra.mxu0 %v2453
    %6625 = vmatpush.msra.mxu0 %v2451
    %6626 = vmatpush.msra.mxu0 %v2449
    %6627 = vmatpush.msra.mxu0 %v2447
    %6628 = vmatpush.msra.mxu0 %v2445
    %6629 = vmatpush.msra.mxu0 %v2443
    %6630 = vmatpush.msra.mxu0 %v2441
    %6631 = vmatpush.msra.mxu0 %v2439
    %6632 = vmatpush.msra.mxu0 %v2437
    %6633 = vmatmul.f32.gmra.mxu0 %v6529
    %v6634 = vpop.f32.mrf.mxu0
    %v6635 = vadd.f32 %v6615, %v6634
    %6636 = vdwg.mxu0
    %6637 = vmatpush.msra.mxu0 %v2499
    %6638 = vmatpush.msra.mxu0 %v2497
    %6639 = vmatpush.msra.mxu0 %v2495
    %6640 = vmatpush.msra.mxu0 %v2493
    %6641 = vmatpush.msra.mxu0 %v2491
    %6642 = vmatpush.msra.mxu0 %v2489
    %6643 = vmatpush.msra.mxu0 %v2487
    %6644 = vmatpush.msra.mxu0 %v2485
    %6645 = vmatpush.msra.mxu0 %v2483
    %6646 = vmatpush.msra.mxu0 %v2481
    %6647 = vmatpush.msra.mxu0 %v2479
    %6648 = vmatpush.msra.mxu0 %v2477
    %6649 = vmatpush.msra.mxu0 %v2475
    %6650 = vmatpush.msra.mxu0 %v2473
    %6651 = vmatpush.msra.mxu0 %v2471
    %6652 = vmatpush.msra.mxu0 %v2469
    %6653 = vmatmul.f32.gmra.mxu0 %v6530
    %v6654 = vpop.f32.mrf.mxu0
    %v6655 = vadd.f32 %v6635, %v6654
    %6656 = vdwg.mxu0
    %6657 = vmatpush.msra.mxu0 %v2340
    %6658 = vmatpush.msra.mxu0 %v2338
    %6659 = vmatpush.msra.mxu0 %v2336
    %6660 = vmatpush.msra.mxu0 %v2334
    %6661 = vmatpush.msra.mxu0 %v2332
    %6662 = vmatpush.msra.mxu0 %v2330
    %6663 = vmatpush.msra.mxu0 %v2328
    %6664 = vmatpush.msra.mxu0 %v2326
    %6665 = vmatpush.msra.mxu0 %v2324
    %6666 = vmatpush.msra.mxu0 %v2322
    %6667 = vmatpush.msra.mxu0 %v2320
    %6668 = vmatpush.msra.mxu0 %v2318
    %6669 = vmatpush.msra.mxu0 %v2316
    %6670 = vmatpush.msra.mxu0 %v2314
    %6671 = vmatpush.msra.mxu0 %v2312
    %6672 = vmatpush.msra.mxu0 %v2310
    %6673 = vmatmul.f32.gmra.mxu0 %v6525
    %v6674 = vpop.f32.mrf.mxu0
    %v6675 = vadd.f32 0.0, %v6674
    %6676 = vdwg.mxu0
    %6677 = vmatpush.msra.mxu0 %v2372
    %6678 = vmatpush.msra.mxu0 %v2370
    %6679 = vmatpush.msra.mxu0 %v2368
    %6680 = vmatpush.msra.mxu0 %v2366
    %6681 = vmatpush.msra.mxu0 %v2364
    %6682 = vmatpush.msra.mxu0 %v2362
    %6683 = vmatpush.msra.mxu0 %v2360
    %6684 = vmatpush.msra.mxu0 %v2358
    %6685 = vmatpush.msra.mxu0 %v2356
    %6686 = vmatpush.msra.mxu0 %v2354
    %6687 = vmatpush.msra.mxu0 %v2352
    %6688 = vmatpush.msra.mxu0 %v2350
    %6689 = vmatpush.msra.mxu0 %v2348
    %6690 = vmatpush.msra.mxu0 %v2346
    %6691 = vmatpush.msra.mxu0 %v2344
    %6692 = vmatpush.msra.mxu0 %v2342
    %6693 = vmatmul.f32.gmra.mxu0 %v6526
    %v6694 = vpop.f32.mrf.mxu0
    %v6695 = vadd.f32 %v6675, %v6694
    %6696 = vdwg.mxu0
    %6697 = vmatpush.msra.mxu0 %v2404
    %6698 = vmatpush.msra.mxu0 %v2402
    %6699 = vmatpush.msra.mxu0 %v2400
    %6700 = vmatpush.msra.mxu0 %v2398
    %6701 = vmatpush.msra.mxu0 %v2396
    %6702 = vmatpush.msra.mxu0 %v2394
    %6703 = vmatpush.msra.mxu0 %v2392
    %6704 = vmatpush.msra.mxu0 %v2390
    %6705 = vmatpush.msra.mxu0 %v2388
    %6706 = vmatpush.msra.mxu0 %v2386
    %6707 = vmatpush.msra.mxu0 %v2384
    %6708 = vmatpush.msra.mxu0 %v2382
    %6709 = vmatpush.msra.mxu0 %v2380
    %6710 = vmatpush.msra.mxu0 %v2378
    %6711 = vmatpush.msra.mxu0 %v2376
    %6712 = vmatpush.msra.mxu0 %v2374
    %6713 = vmatmul.f32.gmra.mxu0 %v6527
    %v6714 = vpop.f32.mrf.mxu0
    %v6715 = vadd.f32 %v6695, %v6714
    %6716 = vdwg.mxu0
    %6717 = vmatpush.msra.mxu0 %v2436
    %6718 = vmatpush.msra.mxu0 %v2434
    %6719 = vmatpush.msra.mxu0 %v2432
    %6720 = vmatpush.msra.mxu0 %v2430
    %6721 = vmatpush.msra.mxu0 %v2428
    %6722 = vmatpush.msra.mxu0 %v2426
    %6723 = vmatpush.msra.mxu0 %v2424
    %6724 = vmatpush.msra.mxu0 %v2422
    %6725 = vmatpush.msra.mxu0 %v2420
    %6726 = vmatpush.msra.mxu0 %v2418
    %6727 = vmatpush.msra.mxu0 %v2416
    %6728 = vmatpush.msra.mxu0 %v2414
    %6729 = vmatpush.msra.mxu0 %v2412
    %6730 = vmatpush.msra.mxu0 %v2410
    %6731 = vmatpush.msra.mxu0 %v2408
    %6732 = vmatpush.msra.mxu0 %v2406
    %6733 = vmatmul.f32.gmra.mxu0 %v6528
    %v6734 = vpop.f32.mrf.mxu0
    %v6735 = vadd.f32 %v6715, %v6734
    %6736 = vdwg.mxu0
    %6737 = vmatpush.msra.mxu0 %v2468
    %6738 = vmatpush.msra.mxu0 %v2466
    %6739 = vmatpush.msra.mxu0 %v2464
    %6740 = vmatpush.msra.mxu0 %v2462
    %6741 = vmatpush.msra.mxu0 %v2460
    %6742 = vmatpush.msra.mxu0 %v2458
    %6743 = vmatpush.msra.mxu0 %v2456
    %6744 = vmatpush.msra.mxu0 %v2454
    %6745 = vmatpush.msra.mxu0 %v2452
    %6746 = vmatpush.msra.mxu0 %v2450
    %6747 = vmatpush.msra.mxu0 %v2448
    %6748 = vmatpush.msra.mxu0 %v2446
    %6749 = vmatpush.msra.mxu0 %v2444
    %6750 = vmatpush.msra.mxu0 %v2442
    %6751 = vmatpush.msra.mxu0 %v2440
    %6752 = vmatpush.msra.mxu0 %v2438
    %6753 = vmatmul.f32.gmra.mxu0 %v6529
    %v6754 = vpop.f32.mrf.mxu0
    %v6755 = vadd.f32 %v6735, %v6754
    %6756 = vdwg.mxu0
    %6757 = vmatpush.msra.mxu0 %v2500
    %6758 = vmatpush.msra.mxu0 %v2498
    %6759 = vmatpush.msra.mxu0 %v2496
    %6760 = vmatpush.msra.mxu0 %v2494
    %6761 = vmatpush.msra.mxu0 %v2492
    %6762 = vmatpush.msra.mxu0 %v2490
    %6763 = vmatpush.msra.mxu0 %v2488
    %6764 = vmatpush.msra.mxu0 %v2486
    %6765 = vmatpush.msra.mxu0 %v2484
    %6766 = vmatpush.msra.mxu0 %v2482
    %6767 = vmatpush.msra.mxu0 %v2480
    %6768 = vmatpush.msra.mxu0 %v2478
    %6769 = vmatpush.msra.mxu0 %v2476
    %6770 = vmatpush.msra.mxu0 %v2474
    %6771 = vmatpush.msra.mxu0 %v2472
    %6772 = vmatpush.msra.mxu0 %v2470
    %6773 = vmatmul.f32.gmra.mxu0 %v6530
    %v6774 = vpop.f32.mrf.mxu0
    %v6775 = vadd.f32 %v6755, %v6774
    %6776 = vdwg.mxu0
    %v6777 = vmax.f32 %v6655, 0.0
    %v6778 = vmax.f32 %v6775, 0.0
    %s6779 = scalar_lea.vmem %s3, 3072
    %v6780 = vld [vmem:[%s6779] sm:$0xff]
    %v6781 = vld [vmem:[%s6779 + $0x8] sm:$0xff]
    %v6782 = vld [vmem:[%s6779 + $0x10] sm:$0xff]
    %v6783 = vld [vmem:[%s6779 + $0x18] sm:$0xff]
    %v6784 = vld [vmem:[%s6779 + $0x20] sm:$0xff]
    %v6785 = vld [vmem:[%s6779 + $0x28] sm:$0xff]
    %v6786 = vld [vmem:[%s6779 + $0x30] sm:$0xff]
    %v6787 = vld [vmem:[%s6779 + $0x38] sm:$0xff]
    %v6788 = vld [vmem:[%s6779 + $0x40] sm:$0xff]
    %v6789 = vld [vmem:[%s6779 + $0x48] sm:$0xff]
    %v6790 = vld [vmem:[%s6779 + $0x50] sm:$0xff]
    %v6791 = vld [vmem:[%s6779 + $0x58] sm:$0xff]
    %v6792 = vld [vmem:[%s6779 + $0x60] sm:$0xff]
    %v6793 = vld [vmem:[%s6779 + $0x68] sm:$0xff]
    %v6794 = vld [vmem:[%s6779 + $0x70] sm:$0xff]
    %v6795 = vld [vmem:[%s6779 + $0x78] sm:$0xff]
    %v6796 = vld [vmem:[%s6779 + $0x80] sm:$0xff]
    %v6797 = vld [vmem:[%s6779 + $0x88] sm:$0xff]
    %v6798 = vld [vmem:[%s6779 + $0x90] sm:$0xff]
    %v6799 = vld [vmem:[%s6779 + $0x98] sm:$0xff]
    %v6800 = vld [vmem:[%s6779 + $0xa0] sm:$0xff]
    %v6801 = vld [vmem:[%s6779 + $0xa8] sm:$0xff]
    %v6802 = vld [vmem:[%s6779 + $0xb0] sm:$0xff]
    %v6803 = vld [vmem:[%s6779 + $0xb8] sm:$0xff]
    %v6804 = vld [vmem:[%s6779 + $0xc0] sm:$0xff]
    %v6805 = vld [vmem:[%s6779 + $0xc8] sm:$0xff]
    %v6806 = vld [vmem:[%s6779 + $0xd0] sm:$0xff]
    %v6807 = vld [vmem:[%s6779 + $0xd8] sm:$0xff]
    %v6808 = vld [vmem:[%s6779 + $0xe0] sm:$0xff]
    %v6809 = vld [vmem:[%s6779 + $0xe8] sm:$0xff]
    %v6810 = vld [vmem:[%s6779 + $0xf0] sm:$0xff]
    %v6811 = vld [vmem:[%s6779 + $0xf8] sm:$0xff]
    %6812 = vmatpush.msra.mxu0 %v6795
    %6813 = vmatpush.msra.mxu0 %v6794
    %6814 = vmatpush.msra.mxu0 %v6793
    %6815 = vmatpush.msra.mxu0 %v6792
    %6816 = vmatpush.msra.mxu0 %v6791
    %6817 = vmatpush.msra.mxu0 %v6790
    %6818 = vmatpush.msra.mxu0 %v6789
    %6819 = vmatpush.msra.mxu0 %v6788
    %6820 = vmatpush.msra.mxu0 %v6787
    %6821 = vmatpush.msra.mxu0 %v6786
    %6822 = vmatpush.msra.mxu0 %v6785
    %6823 = vmatpush.msra.mxu0 %v6784
    %6824 = vmatpush.msra.mxu0 %v6783
    %6825 = vmatpush.msra.mxu0 %v6782
    %6826 = vmatpush.msra.mxu0 %v6781
    %6827 = vmatpush.msra.mxu0 %v6780
    %6828 = vmatmul.f32.gmra.mxu0 %v6777
    %v6829 = vpop.f32.mrf.mxu0
    %v6830 = vadd.f32 0.0, %v6829
    %6831 = vdwg.mxu0
    %6832 = vmatpush.msra.mxu0 %v6811
    %6833 = vmatpush.msra.mxu0 %v6810
    %6834 = vmatpush.msra.mxu0 %v6809
    %6835 = vmatpush.msra.mxu0 %v6808
    %6836 = vmatpush.msra.mxu0 %v6807
    %6837 = vmatpush.msra.mxu0 %v6806
    %6838 = vmatpush.msra.mxu0 %v6805
    %6839 = vmatpush.msra.mxu0 %v6804
    %6840 = vmatpush.msra.mxu0 %v6803
    %6841 = vmatpush.msra.mxu0 %v6802
    %6842 = vmatpush.msra.mxu0 %v6801
    %6843 = vmatpush.msra.mxu0 %v6800
    %6844 = vmatpush.msra.mxu0 %v6799
    %6845 = vmatpush.msra.mxu0 %v6798
    %6846 = vmatpush.msra.mxu0 %v6797
    %6847 = vmatpush.msra.mxu0 %v6796
    %6848 = vmatmul.f32.gmra.mxu0 %v6778
    %v6849 = vpop.f32.mrf.mxu0
    %v6850 = vadd.f32 %v6830, %v6849
    %6851 = vdwg.mxu0
    %v6852 = vadd.f32 %v6517, %v6850
    %v6853 = vld [vmem:[#allocation2 + $0x34] sm:$0xff]
    %v6854 = vld [vmem:[#allocation2 + $0x3c] sm:$0xf]
    %6857 = vst [vmem:[#allocation1] ss:$4 sm:$0xff] %v6853
    %s6858 = scalar_lea.vmem [#allocation1], 32
    %6859 = vst [vmem:[%s6858] ss:$4 sm:$0xff] %v6854
    %v6860 = vld.sshfl [vmem:[#allocation1] sm:$0xff pattern:$0x73625140]
    %v6861 = vld.sshfl [vmem:[#allocation1 + $0x8] sm:$0xff pattern:$0x73625140]
    %v6862 = vld.sshfl [vmem:[#allocation1 + $0x10] sm:$0xff pattern:$0x73625140]
    %v6863 = vld.sshfl [vmem:[#allocation1 + $0x18] sm:$0xff pattern:$0x73625140]
    %v6864 = vld.sshfl [vmem:[#allocation1 + $0x20] sm:$0xff pattern:$0x73625140]
    %v6865 = vld.sshfl [vmem:[#allocation1 + $0x28] sm:$0xff pattern:$0x73625140]
    %6872 = vmatpush.msra.mxu0 %v2339
    %6873 = vmatpush.msra.mxu0 %v2337
    %6874 = vmatpush.msra.mxu0 %v2335
    %6875 = vmatpush.msra.mxu0 %v2333
    %6876 = vmatpush.msra.mxu0 %v2331
    %6877 = vmatpush.msra.mxu0 %v2329
    %6878 = vmatpush.msra.mxu0 %v2327
    %6879 = vmatpush.msra.mxu0 %v2325
    %6880 = vmatpush.msra.mxu0 %v2323
    %6881 = vmatpush.msra.mxu0 %v2321
    %6882 = vmatpush.msra.mxu0 %v2319
    %6883 = vmatpush.msra.mxu0 %v2317
    %6884 = vmatpush.msra.mxu0 %v2315
    %6885 = vmatpush.msra.mxu0 %v2313
    %6886 = vmatpush.msra.mxu0 %v2311
    %6887 = vmatpush.msra.mxu0 %v2309
    %6888 = vmatmul.f32.gmra.mxu0 %v6860
    %v6889 = vpop.f32.mrf.mxu0
    %v6890 = vadd.f32 0.0, %v6889
    %6891 = vdwg.mxu0
    %6892 = vmatpush.msra.mxu0 %v2371
    %6893 = vmatpush.msra.mxu0 %v2369
    %6894 = vmatpush.msra.mxu0 %v2367
    %6895 = vmatpush.msra.mxu0 %v2365
    %6896 = vmatpush.msra.mxu0 %v2363
    %6897 = vmatpush.msra.mxu0 %v2361
    %6898 = vmatpush.msra.mxu0 %v2359
    %6899 = vmatpush.msra.mxu0 %v2357
    %6900 = vmatpush.msra.mxu0 %v2355
    %6901 = vmatpush.msra.mxu0 %v2353
    %6902 = vmatpush.msra.mxu0 %v2351
    %6903 = vmatpush.msra.mxu0 %v2349
    %6904 = vmatpush.msra.mxu0 %v2347
    %6905 = vmatpush.msra.mxu0 %v2345
    %6906 = vmatpush.msra.mxu0 %v2343
    %6907 = vmatpush.msra.mxu0 %v2341
    %6908 = vmatmul.f32.gmra.mxu0 %v6861
    %v6909 = vpop.f32.mrf.mxu0
    %v6910 = vadd.f32 %v6890, %v6909
    %6911 = vdwg.mxu0
    %6912 = vmatpush.msra.mxu0 %v2403
    %6913 = vmatpush.msra.mxu0 %v2401
    %6914 = vmatpush.msra.mxu0 %v2399
    %6915 = vmatpush.msra.mxu0 %v2397
    %6916 = vmatpush.msra.mxu0 %v2395
    %6917 = vmatpush.msra.mxu0 %v2393
    %6918 = vmatpush.msra.mxu0 %v2391
    %6919 = vmatpush.msra.mxu0 %v2389
    %6920 = vmatpush.msra.mxu0 %v2387
    %6921 = vmatpush.msra.mxu0 %v2385
    %6922 = vmatpush.msra.mxu0 %v2383
    %6923 = vmatpush.msra.mxu0 %v2381
    %6924 = vmatpush.msra.mxu0 %v2379
    %6925 = vmatpush.msra.mxu0 %v2377
    %6926 = vmatpush.msra.mxu0 %v2375
    %6927 = vmatpush.msra.mxu0 %v2373
    %6928 = vmatmul.f32.gmra.mxu0 %v6862
    %v6929 = vpop.f32.mrf.mxu0
    %v6930 = vadd.f32 %v6910, %v6929
    %6931 = vdwg.mxu0
    %6932 = vmatpush.msra.mxu0 %v2435
    %6933 = vmatpush.msra.mxu0 %v2433
    %6934 = vmatpush.msra.mxu0 %v2431
    %6935 = vmatpush.msra.mxu0 %v2429
    %6936 = vmatpush.msra.mxu0 %v2427
    %6937 = vmatpush.msra.mxu0 %v2425
    %6938 = vmatpush.msra.mxu0 %v2423
    %6939 = vmatpush.msra.mxu0 %v2421
    %6940 = vmatpush.msra.mxu0 %v2419
    %6941 = vmatpush.msra.mxu0 %v2417
    %6942 = vmatpush.msra.mxu0 %v2415
    %6943 = vmatpush.msra.mxu0 %v2413
    %6944 = vmatpush.msra.mxu0 %v2411
    %6945 = vmatpush.msra.mxu0 %v2409
    %6946 = vmatpush.msra.mxu0 %v2407
    %6947 = vmatpush.msra.mxu0 %v2405
    %6948 = vmatmul.f32.gmra.mxu0 %v6863
    %v6949 = vpop.f32.mrf.mxu0
    %v6950 = vadd.f32 %v6930, %v6949
    %6951 = vdwg.mxu0
    %6952 = vmatpush.msra.mxu0 %v2467
    %6953 = vmatpush.msra.mxu0 %v2465
    %6954 = vmatpush.msra.mxu0 %v2463
    %6955 = vmatpush.msra.mxu0 %v2461
    %6956 = vmatpush.msra.mxu0 %v2459
    %6957 = vmatpush.msra.mxu0 %v2457
    %6958 = vmatpush.msra.mxu0 %v2455
    %6959 = vmatpush.msra.mxu0 %v2453
    %6960 = vmatpush.msra.mxu0 %v2451
    %6961 = vmatpush.msra.mxu0 %v2449
    %6962 = vmatpush.msra.mxu0 %v2447
    %6963 = vmatpush.msra.mxu0 %v2445
    %6964 = vmatpush.msra.mxu0 %v2443
    %6965 = vmatpush.msra.mxu0 %v2441
    %6966 = vmatpush.msra.mxu0 %v2439
    %6967 = vmatpush.msra.mxu0 %v2437
    %6968 = vmatmul.f32.gmra.mxu0 %v6864
    %v6969 = vpop.f32.mrf.mxu0
    %v6970 = vadd.f32 %v6950, %v6969
    %6971 = vdwg.mxu0
    %6972 = vmatpush.msra.mxu0 %v2499
    %6973 = vmatpush.msra.mxu0 %v2497
    %6974 = vmatpush.msra.mxu0 %v2495
    %6975 = vmatpush.msra.mxu0 %v2493
    %6976 = vmatpush.msra.mxu0 %v2491
    %6977 = vmatpush.msra.mxu0 %v2489
    %6978 = vmatpush.msra.mxu0 %v2487
    %6979 = vmatpush.msra.mxu0 %v2485
    %6980 = vmatpush.msra.mxu0 %v2483
    %6981 = vmatpush.msra.mxu0 %v2481
    %6982 = vmatpush.msra.mxu0 %v2479
    %6983 = vmatpush.msra.mxu0 %v2477
    %6984 = vmatpush.msra.mxu0 %v2475
    %6985 = vmatpush.msra.mxu0 %v2473
    %6986 = vmatpush.msra.mxu0 %v2471
    %6987 = vmatpush.msra.mxu0 %v2469
    %6988 = vmatmul.f32.gmra.mxu0 %v6865
    %v6989 = vpop.f32.mrf.mxu0
    %v6990 = vadd.f32 %v6970, %v6989
    %6991 = vdwg.mxu0
    %6992 = vmatpush.msra.mxu0 %v2340
    %6993 = vmatpush.msra.mxu0 %v2338
    %6994 = vmatpush.msra.mxu0 %v2336
    %6995 = vmatpush.msra.mxu0 %v2334
    %6996 = vmatpush.msra.mxu0 %v2332
    %6997 = vmatpush.msra.mxu0 %v2330
    %6998 = vmatpush.msra.mxu0 %v2328
    %6999 = vmatpush.msra.mxu0 %v2326
    %7000 = vmatpush.msra.mxu0 %v2324
    %7001 = vmatpush.msra.mxu0 %v2322
    %7002 = vmatpush.msra.mxu0 %v2320
    %7003 = vmatpush.msra.mxu0 %v2318
    %7004 = vmatpush.msra.mxu0 %v2316
    %7005 = vmatpush.msra.mxu0 %v2314
    %7006 = vmatpush.msra.mxu0 %v2312
    %7007 = vmatpush.msra.mxu0 %v2310
    %7008 = vmatmul.f32.gmra.mxu0 %v6860
    %v7009 = vpop.f32.mrf.mxu0
    %v7010 = vadd.f32 0.0, %v7009
    %7011 = vdwg.mxu0
    %7012 = vmatpush.msra.mxu0 %v2372
    %7013 = vmatpush.msra.mxu0 %v2370
    %7014 = vmatpush.msra.mxu0 %v2368
    %7015 = vmatpush.msra.mxu0 %v2366
    %7016 = vmatpush.msra.mxu0 %v2364
    %7017 = vmatpush.msra.mxu0 %v2362
    %7018 = vmatpush.msra.mxu0 %v2360
    %7019 = vmatpush.msra.mxu0 %v2358
    %7020 = vmatpush.msra.mxu0 %v2356
    %7021 = vmatpush.msra.mxu0 %v2354
    %7022 = vmatpush.msra.mxu0 %v2352
    %7023 = vmatpush.msra.mxu0 %v2350
    %7024 = vmatpush.msra.mxu0 %v2348
    %7025 = vmatpush.msra.mxu0 %v2346
    %7026 = vmatpush.msra.mxu0 %v2344
    %7027 = vmatpush.msra.mxu0 %v2342
    %7028 = vmatmul.f32.gmra.mxu0 %v6861
    %v7029 = vpop.f32.mrf.mxu0
    %v7030 = vadd.f32 %v7010, %v7029
    %7031 = vdwg.mxu0
    %7032 = vmatpush.msra.mxu0 %v2404
    %7033 = vmatpush.msra.mxu0 %v2402
    %7034 = vmatpush.msra.mxu0 %v2400
    %7035 = vmatpush.msra.mxu0 %v2398
    %7036 = vmatpush.msra.mxu0 %v2396
    %7037 = vmatpush.msra.mxu0 %v2394
    %7038 = vmatpush.msra.mxu0 %v2392
    %7039 = vmatpush.msra.mxu0 %v2390
    %7040 = vmatpush.msra.mxu0 %v2388
    %7041 = vmatpush.msra.mxu0 %v2386
    %7042 = vmatpush.msra.mxu0 %v2384
    %7043 = vmatpush.msra.mxu0 %v2382
    %7044 = vmatpush.msra.mxu0 %v2380
    %7045 = vmatpush.msra.mxu0 %v2378
    %7046 = vmatpush.msra.mxu0 %v2376
    %7047 = vmatpush.msra.mxu0 %v2374
    %7048 = vmatmul.f32.gmra.mxu0 %v6862
    %v7049 = vpop.f32.mrf.mxu0
    %v7050 = vadd.f32 %v7030, %v7049
    %7051 = vdwg.mxu0
    %7052 = vmatpush.msra.mxu0 %v2436
    %7053 = vmatpush.msra.mxu0 %v2434
    %7054 = vmatpush.msra.mxu0 %v2432
    %7055 = vmatpush.msra.mxu0 %v2430
    %7056 = vmatpush.msra.mxu0 %v2428
    %7057 = vmatpush.msra.mxu0 %v2426
    %7058 = vmatpush.msra.mxu0 %v2424
    %7059 = vmatpush.msra.mxu0 %v2422
    %7060 = vmatpush.msra.mxu0 %v2420
    %7061 = vmatpush.msra.mxu0 %v2418
    %7062 = vmatpush.msra.mxu0 %v2416
    %7063 = vmatpush.msra.mxu0 %v2414
    %7064 = vmatpush.msra.mxu0 %v2412
    %7065 = vmatpush.msra.mxu0 %v2410
    %7066 = vmatpush.msra.mxu0 %v2408
    %7067 = vmatpush.msra.mxu0 %v2406
    %7068 = vmatmul.f32.gmra.mxu0 %v6863
    %v7069 = vpop.f32.mrf.mxu0
    %v7070 = vadd.f32 %v7050, %v7069
    %7071 = vdwg.mxu0
    %7072 = vmatpush.msra.mxu0 %v2468
    %7073 = vmatpush.msra.mxu0 %v2466
    %7074 = vmatpush.msra.mxu0 %v2464
    %7075 = vmatpush.msra.mxu0 %v2462
    %7076 = vmatpush.msra.mxu0 %v2460
    %7077 = vmatpush.msra.mxu0 %v2458
    %7078 = vmatpush.msra.mxu0 %v2456
    %7079 = vmatpush.msra.mxu0 %v2454
    %7080 = vmatpush.msra.mxu0 %v2452
    %7081 = vmatpush.msra.mxu0 %v2450
    %7082 = vmatpush.msra.mxu0 %v2448
    %7083 = vmatpush.msra.mxu0 %v2446
    %7084 = vmatpush.msra.mxu0 %v2444
    %7085 = vmatpush.msra.mxu0 %v2442
    %7086 = vmatpush.msra.mxu0 %v2440
    %7087 = vmatpush.msra.mxu0 %v2438
    %7088 = vmatmul.f32.gmra.mxu0 %v6864
    %v7089 = vpop.f32.mrf.mxu0
    %v7090 = vadd.f32 %v7070, %v7089
    %7091 = vdwg.mxu0
    %7092 = vmatpush.msra.mxu0 %v2500
    %7093 = vmatpush.msra.mxu0 %v2498
    %7094 = vmatpush.msra.mxu0 %v2496
    %7095 = vmatpush.msra.mxu0 %v2494
    %7096 = vmatpush.msra.mxu0 %v2492
    %7097 = vmatpush.msra.mxu0 %v2490
    %7098 = vmatpush.msra.mxu0 %v2488
    %7099 = vmatpush.msra.mxu0 %v2486
    %7100 = vmatpush.msra.mxu0 %v2484
    %7101 = vmatpush.msra.mxu0 %v2482
    %7102 = vmatpush.msra.mxu0 %v2480
    %7103 = vmatpush.msra.mxu0 %v2478
    %7104 = vmatpush.msra.mxu0 %v2476
    %7105 = vmatpush.msra.mxu0 %v2474
    %7106 = vmatpush.msra.mxu0 %v2472
    %7107 = vmatpush.msra.mxu0 %v2470
    %7108 = vmatmul.f32.gmra.mxu0 %v6865
    %v7109 = vpop.f32.mrf.mxu0
    %v7110 = vadd.f32 %v7090, %v7109
    %7111 = vdwg.mxu0
    %v7112 = vmax.f32 %v6990, 0.0
    %v7113 = vmax.f32 %v7110, 0.0
    %s7114 = scalar_lea.vmem %s3, 3328
    %v7115 = vld [vmem:[%s7114] sm:$0xff]
    %v7116 = vld [vmem:[%s7114 + $0x8] sm:$0xff]
    %v7117 = vld [vmem:[%s7114 + $0x10] sm:$0xff]
    %v7118 = vld [vmem:[%s7114 + $0x18] sm:$0xff]
    %v7119 = vld [vmem:[%s7114 + $0x20] sm:$0xff]
    %v7120 = vld [vmem:[%s7114 + $0x28] sm:$0xff]
    %v7121 = vld [vmem:[%s7114 + $0x30] sm:$0xff]
    %v7122 = vld [vmem:[%s7114 + $0x38] sm:$0xff]
    %v7123 = vld [vmem:[%s7114 + $0x40] sm:$0xff]
    %v7124 = vld [vmem:[%s7114 + $0x48] sm:$0xff]
    %v7125 = vld [vmem:[%s7114 + $0x50] sm:$0xff]
    %v7126 = vld [vmem:[%s7114 + $0x58] sm:$0xff]
    %v7127 = vld [vmem:[%s7114 + $0x60] sm:$0xff]
    %v7128 = vld [vmem:[%s7114 + $0x68] sm:$0xff]
    %v7129 = vld [vmem:[%s7114 + $0x70] sm:$0xff]
    %v7130 = vld [vmem:[%s7114 + $0x78] sm:$0xff]
    %v7131 = vld [vmem:[%s7114 + $0x80] sm:$0xff]
    %v7132 = vld [vmem:[%s7114 + $0x88] sm:$0xff]
    %v7133 = vld [vmem:[%s7114 + $0x90] sm:$0xff]
    %v7134 = vld [vmem:[%s7114 + $0x98] sm:$0xff]
    %v7135 = vld [vmem:[%s7114 + $0xa0] sm:$0xff]
    %v7136 = vld [vmem:[%s7114 + $0xa8] sm:$0xff]
    %v7137 = vld [vmem:[%s7114 + $0xb0] sm:$0xff]
    %v7138 = vld [vmem:[%s7114 + $0xb8] sm:$0xff]
    %v7139 = vld [vmem:[%s7114 + $0xc0] sm:$0xff]
    %v7140 = vld [vmem:[%s7114 + $0xc8] sm:$0xff]
    %v7141 = vld [vmem:[%s7114 + $0xd0] sm:$0xff]
    %v7142 = vld [vmem:[%s7114 + $0xd8] sm:$0xff]
    %v7143 = vld [vmem:[%s7114 + $0xe0] sm:$0xff]
    %v7144 = vld [vmem:[%s7114 + $0xe8] sm:$0xff]
    %v7145 = vld [vmem:[%s7114 + $0xf0] sm:$0xff]
    %v7146 = vld [vmem:[%s7114 + $0xf8] sm:$0xff]
    %7147 = vmatpush.msra.mxu0 %v7130
    %7148 = vmatpush.msra.mxu0 %v7129
    %7149 = vmatpush.msra.mxu0 %v7128
    %7150 = vmatpush.msra.mxu0 %v7127
    %7151 = vmatpush.msra.mxu0 %v7126
    %7152 = vmatpush.msra.mxu0 %v7125
    %7153 = vmatpush.msra.mxu0 %v7124
    %7154 = vmatpush.msra.mxu0 %v7123
    %7155 = vmatpush.msra.mxu0 %v7122
    %7156 = vmatpush.msra.mxu0 %v7121
    %7157 = vmatpush.msra.mxu0 %v7120
    %7158 = vmatpush.msra.mxu0 %v7119
    %7159 = vmatpush.msra.mxu0 %v7118
    %7160 = vmatpush.msra.mxu0 %v7117
    %7161 = vmatpush.msra.mxu0 %v7116
    %7162 = vmatpush.msra.mxu0 %v7115
    %7163 = vmatmul.f32.gmra.mxu0 %v7112
    %v7164 = vpop.f32.mrf.mxu0
    %v7165 = vadd.f32 0.0, %v7164
    %7166 = vdwg.mxu0
    %7167 = vmatpush.msra.mxu0 %v7146
    %7168 = vmatpush.msra.mxu0 %v7145
    %7169 = vmatpush.msra.mxu0 %v7144
    %7170 = vmatpush.msra.mxu0 %v7143
    %7171 = vmatpush.msra.mxu0 %v7142
    %7172 = vmatpush.msra.mxu0 %v7141
    %7173 = vmatpush.msra.mxu0 %v7140
    %7174 = vmatpush.msra.mxu0 %v7139
    %7175 = vmatpush.msra.mxu0 %v7138
    %7176 = vmatpush.msra.mxu0 %v7137
    %7177 = vmatpush.msra.mxu0 %v7136
    %7178 = vmatpush.msra.mxu0 %v7135
    %7179 = vmatpush.msra.mxu0 %v7134
    %7180 = vmatpush.msra.mxu0 %v7133
    %7181 = vmatpush.msra.mxu0 %v7132
    %7182 = vmatpush.msra.mxu0 %v7131
    %7183 = vmatmul.f32.gmra.mxu0 %v7113
    %v7184 = vpop.f32.mrf.mxu0
    %v7185 = vadd.f32 %v7165, %v7184
    %7186 = vdwg.mxu0
    %v7187 = vadd.f32 %v6852, %v7185
    %v7188 = vld [vmem:[#allocation2 + $0x38] sm:$0xff]
    %v7189 = vld [vmem:[#allocation2 + $0x40] sm:$0xf]
    %7192 = vst [vmem:[#allocation1] ss:$4 sm:$0xff] %v7188
    %s7193 = scalar_lea.vmem [#allocation1], 32
    %7194 = vst [vmem:[%s7193] ss:$4 sm:$0xff] %v7189
    %v7195 = vld.sshfl [vmem:[#allocation1] sm:$0xff pattern:$0x73625140]
    %v7196 = vld.sshfl [vmem:[#allocation1 + $0x8] sm:$0xff pattern:$0x73625140]
    %v7197 = vld.sshfl [vmem:[#allocation1 + $0x10] sm:$0xff pattern:$0x73625140]
    %v7198 = vld.sshfl [vmem:[#allocation1 + $0x18] sm:$0xff pattern:$0x73625140]
    %v7199 = vld.sshfl [vmem:[#allocation1 + $0x20] sm:$0xff pattern:$0x73625140]
    %v7200 = vld.sshfl [vmem:[#allocation1 + $0x28] sm:$0xff pattern:$0x73625140]
    %7207 = vmatpush.msra.mxu0 %v2339
    %7208 = vmatpush.msra.mxu0 %v2337
    %7209 = vmatpush.msra.mxu0 %v2335
    %7210 = vmatpush.msra.mxu0 %v2333
    %7211 = vmatpush.msra.mxu0 %v2331
    %7212 = vmatpush.msra.mxu0 %v2329
    %7213 = vmatpush.msra.mxu0 %v2327
    %7214 = vmatpush.msra.mxu0 %v2325
    %7215 = vmatpush.msra.mxu0 %v2323
    %7216 = vmatpush.msra.mxu0 %v2321
    %7217 = vmatpush.msra.mxu0 %v2319
    %7218 = vmatpush.msra.mxu0 %v2317
    %7219 = vmatpush.msra.mxu0 %v2315
    %7220 = vmatpush.msra.mxu0 %v2313
    %7221 = vmatpush.msra.mxu0 %v2311
    %7222 = vmatpush.msra.mxu0 %v2309
    %7223 = vmatmul.f32.gmra.mxu0 %v7195
    %v7224 = vpop.f32.mrf.mxu0
    %v7225 = vadd.f32 0.0, %v7224
    %7226 = vdwg.mxu0
    %7227 = vmatpush.msra.mxu0 %v2371
    %7228 = vmatpush.msra.mxu0 %v2369
    %7229 = vmatpush.msra.mxu0 %v2367
    %7230 = vmatpush.msra.mxu0 %v2365
    %7231 = vmatpush.msra.mxu0 %v2363
    %7232 = vmatpush.msra.mxu0 %v2361
    %7233 = vmatpush.msra.mxu0 %v2359
    %7234 = vmatpush.msra.mxu0 %v2357
    %7235 = vmatpush.msra.mxu0 %v2355
    %7236 = vmatpush.msra.mxu0 %v2353
    %7237 = vmatpush.msra.mxu0 %v2351
    %7238 = vmatpush.msra.mxu0 %v2349
    %7239 = vmatpush.msra.mxu0 %v2347
    %7240 = vmatpush.msra.mxu0 %v2345
    %7241 = vmatpush.msra.mxu0 %v2343
    %7242 = vmatpush.msra.mxu0 %v2341
    %7243 = vmatmul.f32.gmra.mxu0 %v7196
    %v7244 = vpop.f32.mrf.mxu0
    %v7245 = vadd.f32 %v7225, %v7244
    %7246 = vdwg.mxu0
    %7247 = vmatpush.msra.mxu0 %v2403
    %7248 = vmatpush.msra.mxu0 %v2401
    %7249 = vmatpush.msra.mxu0 %v2399
    %7250 = vmatpush.msra.mxu0 %v2397
    %7251 = vmatpush.msra.mxu0 %v2395
    %7252 = vmatpush.msra.mxu0 %v2393
    %7253 = vmatpush.msra.mxu0 %v2391
    %7254 = vmatpush.msra.mxu0 %v2389
    %7255 = vmatpush.msra.mxu0 %v2387
    %7256 = vmatpush.msra.mxu0 %v2385
    %7257 = vmatpush.msra.mxu0 %v2383
    %7258 = vmatpush.msra.mxu0 %v2381
    %7259 = vmatpush.msra.mxu0 %v2379
    %7260 = vmatpush.msra.mxu0 %v2377
    %7261 = vmatpush.msra.mxu0 %v2375
    %7262 = vmatpush.msra.mxu0 %v2373
    %7263 = vmatmul.f32.gmra.mxu0 %v7197
    %v7264 = vpop.f32.mrf.mxu0
    %v7265 = vadd.f32 %v7245, %v7264
    %7266 = vdwg.mxu0
    %7267 = vmatpush.msra.mxu0 %v2435
    %7268 = vmatpush.msra.mxu0 %v2433
    %7269 = vmatpush.msra.mxu0 %v2431
    %7270 = vmatpush.msra.mxu0 %v2429
    %7271 = vmatpush.msra.mxu0 %v2427
    %7272 = vmatpush.msra.mxu0 %v2425
    %7273 = vmatpush.msra.mxu0 %v2423
    %7274 = vmatpush.msra.mxu0 %v2421
    %7275 = vmatpush.msra.mxu0 %v2419
    %7276 = vmatpush.msra.mxu0 %v2417
    %7277 = vmatpush.msra.mxu0 %v2415
    %7278 = vmatpush.msra.mxu0 %v2413
    %7279 = vmatpush.msra.mxu0 %v2411
    %7280 = vmatpush.msra.mxu0 %v2409
    %7281 = vmatpush.msra.mxu0 %v2407
    %7282 = vmatpush.msra.mxu0 %v2405
    %7283 = vmatmul.f32.gmra.mxu0 %v7198
    %v7284 = vpop.f32.mrf.mxu0
    %v7285 = vadd.f32 %v7265, %v7284
    %7286 = vdwg.mxu0
    %7287 = vmatpush.msra.mxu0 %v2467
    %7288 = vmatpush.msra.mxu0 %v2465
    %7289 = vmatpush.msra.mxu0 %v2463
    %7290 = vmatpush.msra.mxu0 %v2461
    %7291 = vmatpush.msra.mxu0 %v2459
    %7292 = vmatpush.msra.mxu0 %v2457
    %7293 = vmatpush.msra.mxu0 %v2455
    %7294 = vmatpush.msra.mxu0 %v2453
    %7295 = vmatpush.msra.mxu0 %v2451
    %7296 = vmatpush.msra.mxu0 %v2449
    %7297 = vmatpush.msra.mxu0 %v2447
    %7298 = vmatpush.msra.mxu0 %v2445
    %7299 = vmatpush.msra.mxu0 %v2443
    %7300 = vmatpush.msra.mxu0 %v2441
    %7301 = vmatpush.msra.mxu0 %v2439
    %7302 = vmatpush.msra.mxu0 %v2437
    %7303 = vmatmul.f32.gmra.mxu0 %v7199
    %v7304 = vpop.f32.mrf.mxu0
    %v7305 = vadd.f32 %v7285, %v7304
    %7306 = vdwg.mxu0
    %7307 = vmatpush.msra.mxu0 %v2499
    %7308 = vmatpush.msra.mxu0 %v2497
    %7309 = vmatpush.msra.mxu0 %v2495
    %7310 = vmatpush.msra.mxu0 %v2493
    %7311 = vmatpush.msra.mxu0 %v2491
    %7312 = vmatpush.msra.mxu0 %v2489
    %7313 = vmatpush.msra.mxu0 %v2487
    %7314 = vmatpush.msra.mxu0 %v2485
    %7315 = vmatpush.msra.mxu0 %v2483
    %7316 = vmatpush.msra.mxu0 %v2481
    %7317 = vmatpush.msra.mxu0 %v2479
    %7318 = vmatpush.msra.mxu0 %v2477
    %7319 = vmatpush.msra.mxu0 %v2475
    %7320 = vmatpush.msra.mxu0 %v2473
    %7321 = vmatpush.msra.mxu0 %v2471
    %7322 = vmatpush.msra.mxu0 %v2469
    %7323 = vmatmul.f32.gmra.mxu0 %v7200
    %v7324 = vpop.f32.mrf.mxu0
    %v7325 = vadd.f32 %v7305, %v7324
    %7326 = vdwg.mxu0
    %7327 = vmatpush.msra.mxu0 %v2340
    %7328 = vmatpush.msra.mxu0 %v2338
    %7329 = vmatpush.msra.mxu0 %v2336
    %7330 = vmatpush.msra.mxu0 %v2334
    %7331 = vmatpush.msra.mxu0 %v2332
    %7332 = vmatpush.msra.mxu0 %v2330
    %7333 = vmatpush.msra.mxu0 %v2328
    %7334 = vmatpush.msra.mxu0 %v2326
    %7335 = vmatpush.msra.mxu0 %v2324
    %7336 = vmatpush.msra.mxu0 %v2322
    %7337 = vmatpush.msra.mxu0 %v2320
    %7338 = vmatpush.msra.mxu0 %v2318
    %7339 = vmatpush.msra.mxu0 %v2316
    %7340 = vmatpush.msra.mxu0 %v2314
    %7341 = vmatpush.msra.mxu0 %v2312
    %7342 = vmatpush.msra.mxu0 %v2310
    %7343 = vmatmul.f32.gmra.mxu0 %v7195
    %v7344 = vpop.f32.mrf.mxu0
    %v7345 = vadd.f32 0.0, %v7344
    %7346 = vdwg.mxu0
    %7347 = vmatpush.msra.mxu0 %v2372
    %7348 = vmatpush.msra.mxu0 %v2370
    %7349 = vmatpush.msra.mxu0 %v2368
    %7350 = vmatpush.msra.mxu0 %v2366
    %7351 = vmatpush.msra.mxu0 %v2364
    %7352 = vmatpush.msra.mxu0 %v2362
    %7353 = vmatpush.msra.mxu0 %v2360
    %7354 = vmatpush.msra.mxu0 %v2358
    %7355 = vmatpush.msra.mxu0 %v2356
    %7356 = vmatpush.msra.mxu0 %v2354
    %7357 = vmatpush.msra.mxu0 %v2352
    %7358 = vmatpush.msra.mxu0 %v2350
    %7359 = vmatpush.msra.mxu0 %v2348
    %7360 = vmatpush.msra.mxu0 %v2346
    %7361 = vmatpush.msra.mxu0 %v2344
    %7362 = vmatpush.msra.mxu0 %v2342
    %7363 = vmatmul.f32.gmra.mxu0 %v7196
    %v7364 = vpop.f32.mrf.mxu0
    %v7365 = vadd.f32 %v7345, %v7364
    %7366 = vdwg.mxu0
    %7367 = vmatpush.msra.mxu0 %v2404
    %7368 = vmatpush.msra.mxu0 %v2402
    %7369 = vmatpush.msra.mxu0 %v2400
    %7370 = vmatpush.msra.mxu0 %v2398
    %7371 = vmatpush.msra.mxu0 %v2396
    %7372 = vmatpush.msra.mxu0 %v2394
    %7373 = vmatpush.msra.mxu0 %v2392
    %7374 = vmatpush.msra.mxu0 %v2390
    %7375 = vmatpush.msra.mxu0 %v2388
    %7376 = vmatpush.msra.mxu0 %v2386
    %7377 = vmatpush.msra.mxu0 %v2384
    %7378 = vmatpush.msra.mxu0 %v2382
    %7379 = vmatpush.msra.mxu0 %v2380
    %7380 = vmatpush.msra.mxu0 %v2378
    %7381 = vmatpush.msra.mxu0 %v2376
    %7382 = vmatpush.msra.mxu0 %v2374
    %7383 = vmatmul.f32.gmra.mxu0 %v7197
    %v7384 = vpop.f32.mrf.mxu0
    %v7385 = vadd.f32 %v7365, %v7384
    %7386 = vdwg.mxu0
    %7387 = vmatpush.msra.mxu0 %v2436
    %7388 = vmatpush.msra.mxu0 %v2434
    %7389 = vmatpush.msra.mxu0 %v2432
    %7390 = vmatpush.msra.mxu0 %v2430
    %7391 = vmatpush.msra.mxu0 %v2428
    %7392 = vmatpush.msra.mxu0 %v2426
    %7393 = vmatpush.msra.mxu0 %v2424
    %7394 = vmatpush.msra.mxu0 %v2422
    %7395 = vmatpush.msra.mxu0 %v2420
    %7396 = vmatpush.msra.mxu0 %v2418
    %7397 = vmatpush.msra.mxu0 %v2416
    %7398 = vmatpush.msra.mxu0 %v2414
    %7399 = vmatpush.msra.mxu0 %v2412
    %7400 = vmatpush.msra.mxu0 %v2410
    %7401 = vmatpush.msra.mxu0 %v2408
    %7402 = vmatpush.msra.mxu0 %v2406
    %7403 = vmatmul.f32.gmra.mxu0 %v7198
    %v7404 = vpop.f32.mrf.mxu0
    %v7405 = vadd.f32 %v7385, %v7404
    %7406 = vdwg.mxu0
    %7407 = vmatpush.msra.mxu0 %v2468
    %7408 = vmatpush.msra.mxu0 %v2466
    %7409 = vmatpush.msra.mxu0 %v2464
    %7410 = vmatpush.msra.mxu0 %v2462
    %7411 = vmatpush.msra.mxu0 %v2460
    %7412 = vmatpush.msra.mxu0 %v2458
    %7413 = vmatpush.msra.mxu0 %v2456
    %7414 = vmatpush.msra.mxu0 %v2454
    %7415 = vmatpush.msra.mxu0 %v2452
    %7416 = vmatpush.msra.mxu0 %v2450
    %7417 = vmatpush.msra.mxu0 %v2448
    %7418 = vmatpush.msra.mxu0 %v2446
    %7419 = vmatpush.msra.mxu0 %v2444
    %7420 = vmatpush.msra.mxu0 %v2442
    %7421 = vmatpush.msra.mxu0 %v2440
    %7422 = vmatpush.msra.mxu0 %v2438
    %7423 = vmatmul.f32.gmra.mxu0 %v7199
    %v7424 = vpop.f32.mrf.mxu0
    %v7425 = vadd.f32 %v7405, %v7424
    %7426 = vdwg.mxu0
    %7427 = vmatpush.msra.mxu0 %v2500
    %7428 = vmatpush.msra.mxu0 %v2498
    %7429 = vmatpush.msra.mxu0 %v2496
    %7430 = vmatpush.msra.mxu0 %v2494
    %7431 = vmatpush.msra.mxu0 %v2492
    %7432 = vmatpush.msra.mxu0 %v2490
    %7433 = vmatpush.msra.mxu0 %v2488
    %7434 = vmatpush.msra.mxu0 %v2486
    %7435 = vmatpush.msra.mxu0 %v2484
    %7436 = vmatpush.msra.mxu0 %v2482
    %7437 = vmatpush.msra.mxu0 %v2480
    %7438 = vmatpush.msra.mxu0 %v2478
    %7439 = vmatpush.msra.mxu0 %v2476
    %7440 = vmatpush.msra.mxu0 %v2474
    %7441 = vmatpush.msra.mxu0 %v2472
    %7442 = vmatpush.msra.mxu0 %v2470
    %7443 = vmatmul.f32.gmra.mxu0 %v7200
    %v7444 = vpop.f32.mrf.mxu0
    %v7445 = vadd.f32 %v7425, %v7444
    %7446 = vdwg.mxu0
    %v7447 = vmax.f32 %v7325, 0.0
    %v7448 = vmax.f32 %v7445, 0.0
    %s7449 = scalar_lea.vmem %s3, 3584
    %v7450 = vld [vmem:[%s7449] sm:$0xff]
    %v7451 = vld [vmem:[%s7449 + $0x8] sm:$0xff]
    %v7452 = vld [vmem:[%s7449 + $0x10] sm:$0xff]
    %v7453 = vld [vmem:[%s7449 + $0x18] sm:$0xff]
    %v7454 = vld [vmem:[%s7449 + $0x20] sm:$0xff]
    %v7455 = vld [vmem:[%s7449 + $0x28] sm:$0xff]
    %v7456 = vld [vmem:[%s7449 + $0x30] sm:$0xff]
    %v7457 = vld [vmem:[%s7449 + $0x38] sm:$0xff]
    %v7458 = vld [vmem:[%s7449 + $0x40] sm:$0xff]
    %v7459 = vld [vmem:[%s7449 + $0x48] sm:$0xff]
    %v7460 = vld [vmem:[%s7449 + $0x50] sm:$0xff]
    %v7461 = vld [vmem:[%s7449 + $0x58] sm:$0xff]
    %v7462 = vld [vmem:[%s7449 + $0x60] sm:$0xff]
    %v7463 = vld [vmem:[%s7449 + $0x68] sm:$0xff]
    %v7464 = vld [vmem:[%s7449 + $0x70] sm:$0xff]
    %v7465 = vld [vmem:[%s7449 + $0x78] sm:$0xff]
    %v7466 = vld [vmem:[%s7449 + $0x80] sm:$0xff]
    %v7467 = vld [vmem:[%s7449 + $0x88] sm:$0xff]
    %v7468 = vld [vmem:[%s7449 + $0x90] sm:$0xff]
    %v7469 = vld [vmem:[%s7449 + $0x98] sm:$0xff]
    %v7470 = vld [vmem:[%s7449 + $0xa0] sm:$0xff]
    %v7471 = vld [vmem:[%s7449 + $0xa8] sm:$0xff]
    %v7472 = vld [vmem:[%s7449 + $0xb0] sm:$0xff]
    %v7473 = vld [vmem:[%s7449 + $0xb8] sm:$0xff]
    %v7474 = vld [vmem:[%s7449 + $0xc0] sm:$0xff]
    %v7475 = vld [vmem:[%s7449 + $0xc8] sm:$0xff]
    %v7476 = vld [vmem:[%s7449 + $0xd0] sm:$0xff]
    %v7477 = vld [vmem:[%s7449 + $0xd8] sm:$0xff]
    %v7478 = vld [vmem:[%s7449 + $0xe0] sm:$0xff]
    %v7479 = vld [vmem:[%s7449 + $0xe8] sm:$0xff]
    %v7480 = vld [vmem:[%s7449 + $0xf0] sm:$0xff]
    %v7481 = vld [vmem:[%s7449 + $0xf8] sm:$0xff]
    %7482 = vmatpush.msra.mxu0 %v7465
    %7483 = vmatpush.msra.mxu0 %v7464
    %7484 = vmatpush.msra.mxu0 %v7463
    %7485 = vmatpush.msra.mxu0 %v7462
    %7486 = vmatpush.msra.mxu0 %v7461
    %7487 = vmatpush.msra.mxu0 %v7460
    %7488 = vmatpush.msra.mxu0 %v7459
    %7489 = vmatpush.msra.mxu0 %v7458
    %7490 = vmatpush.msra.mxu0 %v7457
    %7491 = vmatpush.msra.mxu0 %v7456
    %7492 = vmatpush.msra.mxu0 %v7455
    %7493 = vmatpush.msra.mxu0 %v7454
    %7494 = vmatpush.msra.mxu0 %v7453
    %7495 = vmatpush.msra.mxu0 %v7452
    %7496 = vmatpush.msra.mxu0 %v7451
    %7497 = vmatpush.msra.mxu0 %v7450
    %7498 = vmatmul.f32.gmra.mxu0 %v7447
    %v7499 = vpop.f32.mrf.mxu0
    %v7500 = vadd.f32 0.0, %v7499
    %7501 = vdwg.mxu0
    %7502 = vmatpush.msra.mxu0 %v7481
    %7503 = vmatpush.msra.mxu0 %v7480
    %7504 = vmatpush.msra.mxu0 %v7479
    %7505 = vmatpush.msra.mxu0 %v7478
    %7506 = vmatpush.msra.mxu0 %v7477
    %7507 = vmatpush.msra.mxu0 %v7476
    %7508 = vmatpush.msra.mxu0 %v7475
    %7509 = vmatpush.msra.mxu0 %v7474
    %7510 = vmatpush.msra.mxu0 %v7473
    %7511 = vmatpush.msra.mxu0 %v7472
    %7512 = vmatpush.msra.mxu0 %v7471
    %7513 = vmatpush.msra.mxu0 %v7470
    %7514 = vmatpush.msra.mxu0 %v7469
    %7515 = vmatpush.msra.mxu0 %v7468
    %7516 = vmatpush.msra.mxu0 %v7467
    %7517 = vmatpush.msra.mxu0 %v7466
    %7518 = vmatmul.f32.gmra.mxu0 %v7448
    %v7519 = vpop.f32.mrf.mxu0
    %v7520 = vadd.f32 %v7500, %v7519
    %7521 = vdwg.mxu0
    %v7522 = vadd.f32 %v7187, %v7520
    %v7523 = vld [vmem:[#allocation2 + $0x3c] sm:$0xff]
    %v7524 = vld [vmem:[#allocation2 + $0x44] sm:$0xf]
    %7527 = vst [vmem:[#allocation1] ss:$4 sm:$0xff] %v7523
    %s7528 = scalar_lea.vmem [#allocation1], 32
    %7529 = vst [vmem:[%s7528] ss:$4 sm:$0xff] %v7524
    %v7530 = vld.sshfl [vmem:[#allocation1] sm:$0xff pattern:$0x73625140]
    %v7531 = vld.sshfl [vmem:[#allocation1 + $0x8] sm:$0xff pattern:$0x73625140]
    %v7532 = vld.sshfl [vmem:[#allocation1 + $0x10] sm:$0xff pattern:$0x73625140]
    %v7533 = vld.sshfl [vmem:[#allocation1 + $0x18] sm:$0xff pattern:$0x73625140]
    %v7534 = vld.sshfl [vmem:[#allocation1 + $0x20] sm:$0xff pattern:$0x73625140]
    %v7535 = vld.sshfl [vmem:[#allocation1 + $0x28] sm:$0xff pattern:$0x73625140]
    %7542 = vmatpush.msra.mxu0 %v2339
    %7543 = vmatpush.msra.mxu0 %v2337
    %7544 = vmatpush.msra.mxu0 %v2335
    %7545 = vmatpush.msra.mxu0 %v2333
    %7546 = vmatpush.msra.mxu0 %v2331
    %7547 = vmatpush.msra.mxu0 %v2329
    %7548 = vmatpush.msra.mxu0 %v2327
    %7549 = vmatpush.msra.mxu0 %v2325
    %7550 = vmatpush.msra.mxu0 %v2323
    %7551 = vmatpush.msra.mxu0 %v2321
    %7552 = vmatpush.msra.mxu0 %v2319
    %7553 = vmatpush.msra.mxu0 %v2317
    %7554 = vmatpush.msra.mxu0 %v2315
    %7555 = vmatpush.msra.mxu0 %v2313
    %7556 = vmatpush.msra.mxu0 %v2311
    %7557 = vmatpush.msra.mxu0 %v2309
    %7558 = vmatmul.f32.gmra.mxu0 %v7530
    %v7559 = vpop.f32.mrf.mxu0
    %v7560 = vadd.f32 0.0, %v7559
    %7561 = vdwg.mxu0
    %7562 = vmatpush.msra.mxu0 %v2371
    %7563 = vmatpush.msra.mxu0 %v2369
    %7564 = vmatpush.msra.mxu0 %v2367
    %7565 = vmatpush.msra.mxu0 %v2365
    %7566 = vmatpush.msra.mxu0 %v2363
    %7567 = vmatpush.msra.mxu0 %v2361
    %7568 = vmatpush.msra.mxu0 %v2359
    %7569 = vmatpush.msra.mxu0 %v2357
    %7570 = vmatpush.msra.mxu0 %v2355
    %7571 = vmatpush.msra.mxu0 %v2353
    %7572 = vmatpush.msra.mxu0 %v2351
    %7573 = vmatpush.msra.mxu0 %v2349
    %7574 = vmatpush.msra.mxu0 %v2347
    %7575 = vmatpush.msra.mxu0 %v2345
    %7576 = vmatpush.msra.mxu0 %v2343
    %7577 = vmatpush.msra.mxu0 %v2341
    %7578 = vmatmul.f32.gmra.mxu0 %v7531
    %v7579 = vpop.f32.mrf.mxu0
    %v7580 = vadd.f32 %v7560, %v7579
    %7581 = vdwg.mxu0
    %7582 = vmatpush.msra.mxu0 %v2403
    %7583 = vmatpush.msra.mxu0 %v2401
    %7584 = vmatpush.msra.mxu0 %v2399
    %7585 = vmatpush.msra.mxu0 %v2397
    %7586 = vmatpush.msra.mxu0 %v2395
    %7587 = vmatpush.msra.mxu0 %v2393
    %7588 = vmatpush.msra.mxu0 %v2391
    %7589 = vmatpush.msra.mxu0 %v2389
    %7590 = vmatpush.msra.mxu0 %v2387
    %7591 = vmatpush.msra.mxu0 %v2385
    %7592 = vmatpush.msra.mxu0 %v2383
    %7593 = vmatpush.msra.mxu0 %v2381
    %7594 = vmatpush.msra.mxu0 %v2379
    %7595 = vmatpush.msra.mxu0 %v2377
    %7596 = vmatpush.msra.mxu0 %v2375
    %7597 = vmatpush.msra.mxu0 %v2373
    %7598 = vmatmul.f32.gmra.mxu0 %v7532
    %v7599 = vpop.f32.mrf.mxu0
    %v7600 = vadd.f32 %v7580, %v7599
    %7601 = vdwg.mxu0
    %7602 = vmatpush.msra.mxu0 %v2435
    %7603 = vmatpush.msra.mxu0 %v2433
    %7604 = vmatpush.msra.mxu0 %v2431
    %7605 = vmatpush.msra.mxu0 %v2429
    %7606 = vmatpush.msra.mxu0 %v2427
    %7607 = vmatpush.msra.mxu0 %v2425
    %7608 = vmatpush.msra.mxu0 %v2423
    %7609 = vmatpush.msra.mxu0 %v2421
    %7610 = vmatpush.msra.mxu0 %v2419
    %7611 = vmatpush.msra.mxu0 %v2417
    %7612 = vmatpush.msra.mxu0 %v2415
    %7613 = vmatpush.msra.mxu0 %v2413
    %7614 = vmatpush.msra.mxu0 %v2411
    %7615 = vmatpush.msra.mxu0 %v2409
    %7616 = vmatpush.msra.mxu0 %v2407
    %7617 = vmatpush.msra.mxu0 %v2405
    %7618 = vmatmul.f32.gmra.mxu0 %v7533
    %v7619 = vpop.f32.mrf.mxu0
    %v7620 = vadd.f32 %v7600, %v7619
    %7621 = vdwg.mxu0
    %7622 = vmatpush.msra.mxu0 %v2467
    %7623 = vmatpush.msra.mxu0 %v2465
    %7624 = vmatpush.msra.mxu0 %v2463
    %7625 = vmatpush.msra.mxu0 %v2461
    %7626 = vmatpush.msra.mxu0 %v2459
    %7627 = vmatpush.msra.mxu0 %v2457
    %7628 = vmatpush.msra.mxu0 %v2455
    %7629 = vmatpush.msra.mxu0 %v2453
    %7630 = vmatpush.msra.mxu0 %v2451
    %7631 = vmatpush.msra.mxu0 %v2449
    %7632 = vmatpush.msra.mxu0 %v2447
    %7633 = vmatpush.msra.mxu0 %v2445
    %7634 = vmatpush.msra.mxu0 %v2443
    %7635 = vmatpush.msra.mxu0 %v2441
    %7636 = vmatpush.msra.mxu0 %v2439
    %7637 = vmatpush.msra.mxu0 %v2437
    %7638 = vmatmul.f32.gmra.mxu0 %v7534
    %v7639 = vpop.f32.mrf.mxu0
    %v7640 = vadd.f32 %v7620, %v7639
    %7641 = vdwg.mxu0
    %7642 = vmatpush.msra.mxu0 %v2499
    %7643 = vmatpush.msra.mxu0 %v2497
    %7644 = vmatpush.msra.mxu0 %v2495
    %7645 = vmatpush.msra.mxu0 %v2493
    %7646 = vmatpush.msra.mxu0 %v2491
    %7647 = vmatpush.msra.mxu0 %v2489
    %7648 = vmatpush.msra.mxu0 %v2487
    %7649 = vmatpush.msra.mxu0 %v2485
    %7650 = vmatpush.msra.mxu0 %v2483
    %7651 = vmatpush.msra.mxu0 %v2481
    %7652 = vmatpush.msra.mxu0 %v2479
    %7653 = vmatpush.msra.mxu0 %v2477
    %7654 = vmatpush.msra.mxu0 %v2475
    %7655 = vmatpush.msra.mxu0 %v2473
    %7656 = vmatpush.msra.mxu0 %v2471
    %7657 = vmatpush.msra.mxu0 %v2469
    %7658 = vmatmul.f32.gmra.mxu0 %v7535
    %v7659 = vpop.f32.mrf.mxu0
    %v7660 = vadd.f32 %v7640, %v7659
    %7661 = vdwg.mxu0
    %7662 = vmatpush.msra.mxu0 %v2340
    %7663 = vmatpush.msra.mxu0 %v2338
    %7664 = vmatpush.msra.mxu0 %v2336
    %7665 = vmatpush.msra.mxu0 %v2334
    %7666 = vmatpush.msra.mxu0 %v2332
    %7667 = vmatpush.msra.mxu0 %v2330
    %7668 = vmatpush.msra.mxu0 %v2328
    %7669 = vmatpush.msra.mxu0 %v2326
    %7670 = vmatpush.msra.mxu0 %v2324
    %7671 = vmatpush.msra.mxu0 %v2322
    %7672 = vmatpush.msra.mxu0 %v2320
    %7673 = vmatpush.msra.mxu0 %v2318
    %7674 = vmatpush.msra.mxu0 %v2316
    %7675 = vmatpush.msra.mxu0 %v2314
    %7676 = vmatpush.msra.mxu0 %v2312
    %7677 = vmatpush.msra.mxu0 %v2310
    %7678 = vmatmul.f32.gmra.mxu0 %v7530
    %v7679 = vpop.f32.mrf.mxu0
    %v7680 = vadd.f32 0.0, %v7679
    %7681 = vdwg.mxu0
    %7682 = vmatpush.msra.mxu0 %v2372
    %7683 = vmatpush.msra.mxu0 %v2370
    %7684 = vmatpush.msra.mxu0 %v2368
    %7685 = vmatpush.msra.mxu0 %v2366
    %7686 = vmatpush.msra.mxu0 %v2364
    %7687 = vmatpush.msra.mxu0 %v2362
    %7688 = vmatpush.msra.mxu0 %v2360
    %7689 = vmatpush.msra.mxu0 %v2358
    %7690 = vmatpush.msra.mxu0 %v2356
    %7691 = vmatpush.msra.mxu0 %v2354
    %7692 = vmatpush.msra.mxu0 %v2352
    %7693 = vmatpush.msra.mxu0 %v2350
    %7694 = vmatpush.msra.mxu0 %v2348
    %7695 = vmatpush.msra.mxu0 %v2346
    %7696 = vmatpush.msra.mxu0 %v2344
    %7697 = vmatpush.msra.mxu0 %v2342
    %7698 = vmatmul.f32.gmra.mxu0 %v7531
    %v7699 = vpop.f32.mrf.mxu0
    %v7700 = vadd.f32 %v7680, %v7699
    %7701 = vdwg.mxu0
    %7702 = vmatpush.msra.mxu0 %v2404
    %7703 = vmatpush.msra.mxu0 %v2402
    %7704 = vmatpush.msra.mxu0 %v2400
    %7705 = vmatpush.msra.mxu0 %v2398
    %7706 = vmatpush.msra.mxu0 %v2396
    %7707 = vmatpush.msra.mxu0 %v2394
    %7708 = vmatpush.msra.mxu0 %v2392
    %7709 = vmatpush.msra.mxu0 %v2390
    %7710 = vmatpush.msra.mxu0 %v2388
    %7711 = vmatpush.msra.mxu0 %v2386
    %7712 = vmatpush.msra.mxu0 %v2384
    %7713 = vmatpush.msra.mxu0 %v2382
    %7714 = vmatpush.msra.mxu0 %v2380
    %7715 = vmatpush.msra.mxu0 %v2378
    %7716 = vmatpush.msra.mxu0 %v2376
    %7717 = vmatpush.msra.mxu0 %v2374
    %7718 = vmatmul.f32.gmra.mxu0 %v7532
    %v7719 = vpop.f32.mrf.mxu0
    %v7720 = vadd.f32 %v7700, %v7719
    %7721 = vdwg.mxu0
    %7722 = vmatpush.msra.mxu0 %v2436
    %7723 = vmatpush.msra.mxu0 %v2434
    %7724 = vmatpush.msra.mxu0 %v2432
    %7725 = vmatpush.msra.mxu0 %v2430
    %7726 = vmatpush.msra.mxu0 %v2428
    %7727 = vmatpush.msra.mxu0 %v2426
    %7728 = vmatpush.msra.mxu0 %v2424
    %7729 = vmatpush.msra.mxu0 %v2422
    %7730 = vmatpush.msra.mxu0 %v2420
    %7731 = vmatpush.msra.mxu0 %v2418
    %7732 = vmatpush.msra.mxu0 %v2416
    %7733 = vmatpush.msra.mxu0 %v2414
    %7734 = vmatpush.msra.mxu0 %v2412
    %7735 = vmatpush.msra.mxu0 %v2410
    %7736 = vmatpush.msra.mxu0 %v2408
    %7737 = vmatpush.msra.mxu0 %v2406
    %7738 = vmatmul.f32.gmra.mxu0 %v7533
    %v7739 = vpop.f32.mrf.mxu0
    %v7740 = vadd.f32 %v7720, %v7739
    %7741 = vdwg.mxu0
    %7742 = vmatpush.msra.mxu0 %v2468
    %7743 = vmatpush.msra.mxu0 %v2466
    %7744 = vmatpush.msra.mxu0 %v2464
    %7745 = vmatpush.msra.mxu0 %v2462
    %7746 = vmatpush.msra.mxu0 %v2460
    %7747 = vmatpush.msra.mxu0 %v2458
    %7748 = vmatpush.msra.mxu0 %v2456
    %7749 = vmatpush.msra.mxu0 %v2454
    %7750 = vmatpush.msra.mxu0 %v2452
    %7751 = vmatpush.msra.mxu0 %v2450
    %7752 = vmatpush.msra.mxu0 %v2448
    %7753 = vmatpush.msra.mxu0 %v2446
    %7754 = vmatpush.msra.mxu0 %v2444
    %7755 = vmatpush.msra.mxu0 %v2442
    %7756 = vmatpush.msra.mxu0 %v2440
    %7757 = vmatpush.msra.mxu0 %v2438
    %7758 = vmatmul.f32.gmra.mxu0 %v7534
    %v7759 = vpop.f32.mrf.mxu0
    %v7760 = vadd.f32 %v7740, %v7759
    %7761 = vdwg.mxu0
    %7762 = vmatpush.msra.mxu0 %v2500
    %7763 = vmatpush.msra.mxu0 %v2498
    %7764 = vmatpush.msra.mxu0 %v2496
    %7765 = vmatpush.msra.mxu0 %v2494
    %7766 = vmatpush.msra.mxu0 %v2492
    %7767 = vmatpush.msra.mxu0 %v2490
    %7768 = vmatpush.msra.mxu0 %v2488
    %7769 = vmatpush.msra.mxu0 %v2486
    %7770 = vmatpush.msra.mxu0 %v2484
    %7771 = vmatpush.msra.mxu0 %v2482
    %7772 = vmatpush.msra.mxu0 %v2480
    %7773 = vmatpush.msra.mxu0 %v2478
    %7774 = vmatpush.msra.mxu0 %v2476
    %7775 = vmatpush.msra.mxu0 %v2474
    %7776 = vmatpush.msra.mxu0 %v2472
    %7777 = vmatpush.msra.mxu0 %v2470
    %7778 = vmatmul.f32.gmra.mxu0 %v7535
    %v7779 = vpop.f32.mrf.mxu0
    %v7780 = vadd.f32 %v7760, %v7779
    %7781 = vdwg.mxu0
    %v7782 = vmax.f32 %v7660, 0.0
    %v7783 = vmax.f32 %v7780, 0.0
    %s7784 = scalar_lea.vmem %s3, 3840
    %v7785 = vld [vmem:[%s7784] sm:$0xff]
    %v7786 = vld [vmem:[%s7784 + $0x8] sm:$0xff]
    %v7787 = vld [vmem:[%s7784 + $0x10] sm:$0xff]
    %v7788 = vld [vmem:[%s7784 + $0x18] sm:$0xff]
    %v7789 = vld [vmem:[%s7784 + $0x20] sm:$0xff]
    %v7790 = vld [vmem:[%s7784 + $0x28] sm:$0xff]
    %v7791 = vld [vmem:[%s7784 + $0x30] sm:$0xff]
    %v7792 = vld [vmem:[%s7784 + $0x38] sm:$0xff]
    %v7793 = vld [vmem:[%s7784 + $0x40] sm:$0xff]
    %v7794 = vld [vmem:[%s7784 + $0x48] sm:$0xff]
    %v7795 = vld [vmem:[%s7784 + $0x50] sm:$0xff]
    %v7796 = vld [vmem:[%s7784 + $0x58] sm:$0xff]
    %v7797 = vld [vmem:[%s7784 + $0x60] sm:$0xff]
    %v7798 = vld [vmem:[%s7784 + $0x68] sm:$0xff]
    %v7799 = vld [vmem:[%s7784 + $0x70] sm:$0xff]
    %v7800 = vld [vmem:[%s7784 + $0x78] sm:$0xff]
    %v7801 = vld [vmem:[%s7784 + $0x80] sm:$0xff]
    %v7802 = vld [vmem:[%s7784 + $0x88] sm:$0xff]
    %v7803 = vld [vmem:[%s7784 + $0x90] sm:$0xff]
    %v7804 = vld [vmem:[%s7784 + $0x98] sm:$0xff]
    %v7805 = vld [vmem:[%s7784 + $0xa0] sm:$0xff]
    %v7806 = vld [vmem:[%s7784 + $0xa8] sm:$0xff]
    %v7807 = vld [vmem:[%s7784 + $0xb0] sm:$0xff]
    %v7808 = vld [vmem:[%s7784 + $0xb8] sm:$0xff]
    %v7809 = vld [vmem:[%s7784 + $0xc0] sm:$0xff]
    %v7810 = vld [vmem:[%s7784 + $0xc8] sm:$0xff]
    %v7811 = vld [vmem:[%s7784 + $0xd0] sm:$0xff]
    %v7812 = vld [vmem:[%s7784 + $0xd8] sm:$0xff]
    %v7813 = vld [vmem:[%s7784 + $0xe0] sm:$0xff]
    %v7814 = vld [vmem:[%s7784 + $0xe8] sm:$0xff]
    %v7815 = vld [vmem:[%s7784 + $0xf0] sm:$0xff]
    %v7816 = vld [vmem:[%s7784 + $0xf8] sm:$0xff]
    %7817 = vmatpush.msra.mxu0 %v7800
    %7818 = vmatpush.msra.mxu0 %v7799
    %7819 = vmatpush.msra.mxu0 %v7798
    %7820 = vmatpush.msra.mxu0 %v7797
    %7821 = vmatpush.msra.mxu0 %v7796
    %7822 = vmatpush.msra.mxu0 %v7795
    %7823 = vmatpush.msra.mxu0 %v7794
    %7824 = vmatpush.msra.mxu0 %v7793
    %7825 = vmatpush.msra.mxu0 %v7792
    %7826 = vmatpush.msra.mxu0 %v7791
    %7827 = vmatpush.msra.mxu0 %v7790
    %7828 = vmatpush.msra.mxu0 %v7789
    %7829 = vmatpush.msra.mxu0 %v7788
    %7830 = vmatpush.msra.mxu0 %v7787
    %7831 = vmatpush.msra.mxu0 %v7786
    %7832 = vmatpush.msra.mxu0 %v7785
    %7833 = vmatmul.f32.gmra.mxu0 %v7782
    %v7834 = vpop.f32.mrf.mxu0
    %v7835 = vadd.f32 0.0, %v7834
    %7836 = vdwg.mxu0
    %7837 = vmatpush.msra.mxu0 %v7816
    %7838 = vmatpush.msra.mxu0 %v7815
    %7839 = vmatpush.msra.mxu0 %v7814
    %7840 = vmatpush.msra.mxu0 %v7813
    %7841 = vmatpush.msra.mxu0 %v7812
    %7842 = vmatpush.msra.mxu0 %v7811
    %7843 = vmatpush.msra.mxu0 %v7810
    %7844 = vmatpush.msra.mxu0 %v7809
    %7845 = vmatpush.msra.mxu0 %v7808
    %7846 = vmatpush.msra.mxu0 %v7807
    %7847 = vmatpush.msra.mxu0 %v7806
    %7848 = vmatpush.msra.mxu0 %v7805
    %7849 = vmatpush.msra.mxu0 %v7804
    %7850 = vmatpush.msra.mxu0 %v7803
    %7851 = vmatpush.msra.mxu0 %v7802
    %7852 = vmatpush.msra.mxu0 %v7801
    %7853 = vmatmul.f32.gmra.mxu0 %v7783
    %v7854 = vpop.f32.mrf.mxu0
    %v7855 = vadd.f32 %v7835, %v7854
    %7856 = vdwg.mxu0
    %v7857 = vadd.f32 %v7522, %v7855
    %vm7858 = vcmask 254976
    %7859 = vst.msk [vmem:[#allocation3] sm:$0x3] %vm7858, %v7857
    // Predicated region
    $region18: #{_deep_svdd_forward.1} parent=1 // pred_check
      _
    $region19: #{_deep_svdd_forward.1} parent=1 // pred_check_branch
      %7861 = sbr.rel (0) target = $region21
    $region20: #{_deep_svdd_forward.1} parent=1 // pred_region
      %7863 = vsyncadd [#allocation4], 0
      %s7865 = sshll.u32 [#allocation3], 4
      %s7866 = int_to_ptr.vmem [resolvable:$true] %s7865
      %s7867 = sshll.u32 %s4, 4
      %s7868 = int_to_ptr.hbm [resolvable:$true] %s7867
      %7870 = dma.vmem_to_hbm [thread:$0]  %s7866, 32, %s7868, [#allocation4]
    $region21: #{_deep_svdd_forward.1} parent=1 // pred_fallthru
      _
    // Predicated region
    $region22: #{_deep_svdd_forward.1} parent=1 // pred_check
      _
    $region23: #{_deep_svdd_forward.1} parent=1 // pred_check_branch
      %7872 = sbr.rel (0) target = $region25
    $region24: #{_deep_svdd_forward.1} parent=1 // pred_region
      %7874 = dma.done [#allocation4], 32
    $region25: #{_deep_svdd_forward.1} parent=1 // pred_fallthru
      _
    %7875 = vsyncpa [#allocation4], 1

</llo_original>
